<compile_context>
chip_gen: v6e
topology: v6e:2x2x1
jax: 0.10.0
libtpu: 0.0.40
codegen_flags: <defaults>
</compile_context>

<pallas_src>
import functools

import jax
import jax.numpy as jnp
from jax.experimental import pallas as pl
from jax.experimental.pallas import tpu as pltpu


def _tower_kernel(xin_ref, w0_ref, s0_ref, b0_ref,
                  wr1_ref, sr1_ref, br1_ref,
                  wr2_ref, sr2_ref, br2_ref,
                  wh_ref, bh_ref,
                  o_ref,
                  a_ref, b_ref, *, H, W):
    # xin_ref : (1, (H+4)*(W+2), Cin)  flat zero-padded NHWC input (one image)
    # w0_ref  : (9, Cin, C)   stem 3x3 taps (row-major kh*3+kw)
    # s0/b0   : (1, C)        folded BN scale / bias for the stem ConvBlock
    # wr1/wr2 : (1, 9, C, C)  this residual block's conv taps
    # sr*/br* : (1, 1, C)     folded BN scale / bias
    # wh_ref  : (C, Ch)       1x1 head conv weight,  bh_ref: (1, Ch) head bias
    # o_ref   : (1, H*(W+2), Ch)
    # a_ref/b_ref : flat padded activation scratch, shape (LEAD+(H+4)*(W+2), C)
    Wp = W + 2                      # padded row width
    L = H * Wp                      # rows of a flat conv result (incl. 2 wrap cols/row)
    LEAD = (-(Wp + 1)) % 8          # makes the interior store offset sublane-aligned
    OFF = LEAD + Wp + 1             # flat offset of padded pixel (1, 1); multiple of 8
    C = a_ref.shape[-1]
    rows = a_ref.shape[0]
    r = pl.program_id(1)

    # Mask for the 2 wrap-around ("garbage") columns of each padded row.
    col = jax.lax.broadcasted_iota(jnp.int32, (L, 1), 0) % Wp
    valid = col < W

    def conv3x3(read, w_tap):
        # read(off)  -> (L, Cin) contiguous row-range slice of a flat padded buffer
        # w_tap(k)   -> (Cin, Cout) weights of tap k  (k = kh*3 + kw)
        acc = jnp.zeros((L, C), jnp.float32)
        for k in range(9):
            dy, dx = k // 3, k % 3
            acc = acc + jnp.dot(read(dy * Wp + dx), w_tap(k),
                                preferred_element_type=jnp.float32)
        return acc

    # ---- r == 0: zero the pad borders once, then run the stem ConvBlock ----
    @pl.when(r == 0)
    def _():
        zeros_head = jnp.zeros((OFF, C), jnp.float32)
        zeros_tail = jnp.zeros((rows - (OFF + L), C), jnp.float32)
        a_ref[0:OFF, :] = zeros_head
        b_ref[0:OFF, :] = zeros_head
        a_ref[OFF + L:rows, :] = zeros_tail
        b_ref[OFF + L:rows, :] = zeros_tail

        x_in = xin_ref[0]                                  # (rows_in, Cin), tiny
        acc0 = conv3x3(lambda o: x_in[o:o + L, :], lambda k: w0_ref[k])
        y0 = jnp.maximum(acc0 * s0_ref[0] + b0_ref[0], 0.0)
        a_ref[OFF:OFF + L, :] = jnp.where(valid, y0, 0.0)

    # ---- ResidualBlock r: ConvBlock -> ConvBlock -> +residual -> ReLU ----
    acc1 = conv3x3(lambda o: a_ref[LEAD + o:LEAD + o + L, :],
                   lambda k: wr1_ref[0, k])
    y1 = jnp.maximum(acc1 * sr1_ref[0, 0] + br1_ref[0, 0], 0.0)
    b_ref[OFF:OFF + L, :] = jnp.where(valid, y1, 0.0)

    acc2 = conv3x3(lambda o: b_ref[LEAD + o:LEAD + o + L, :],
                   lambda k: wr2_ref[0, k])
    y2 = jnp.maximum(acc2 * sr2_ref[0, 0] + br2_ref[0, 0], 0.0)
    out = jnp.maximum(jnp.where(valid, y2, 0.0) + a_ref[OFF:OFF + L, :], 0.0)
    # TODO(synk): Dropout2d(0.3) is identity in eval mode; training-mode channel
    # dropout (pltpu.prng_*) is intentionally not faked here.
    a_ref[OFF:OFF + L, :] = out

    # ---- last residual block: 1x1 head conv (C -> Ch) + bias ----
    @pl.when(r == pl.num_programs(1) - 1)
    def _():
        o_ref[0] = jnp.dot(out, wh_ref[...],
                           preferred_element_type=jnp.float32) + bh_ref[0]


@jax.jit
def residual_tower(x_nchw, w0, s0, b0, wr1, sr1, br1, wr2, sr2, br2, wh, bh):
    """Fused ResidualTower forward (eval mode).  x_nchw: (N, Cin, H, W) f32."""
    N, Cin, H, W = x_nchw.shape
    R, _, _, C = wr1.shape
    Ch = wh.shape[1]
    Wp = W + 2
    L = H * Wp
    rows_in = (H + 4) * Wp
    lead = (-(Wp + 1)) % 8
    buf_rows = lead + rows_in

    # Only the tiny Cin-channel input is touched by wrapper-side layout plumbing.
    x = jnp.transpose(x_nchw, (0, 2, 3, 1))                      # NCHW -> NHWC
    # 1 pad row on top, 3 on the bottom (guard rows for the shifted-row conv
    # reads), 1 pad column left/right, then flatten (row, col) so every conv tap
    # is a contiguous row-range slice inside the kernel.
    xpad = jnp.pad(x, ((0, 0), (1, 3), (1, 1), (0, 0)))
    xflat = xpad.reshape(N, rows_in, Cin)

    kernel = functools.partial(_tower_kernel, H=H, W=W)
    out_flat = pl.pallas_call(
        kernel,
        out_shape=jax.ShapeDtypeStruct((N, L, Ch), jnp.float32),
        grid_spec=pltpu.PrefetchScalarGridSpec(
            num_scalar_prefetch=0,
            grid=(N, R),
            in_specs=[
                pl.BlockSpec((1, rows_in, Cin), lambda n, r: (n, 0, 0)),
                pl.BlockSpec((9, Cin, C), lambda n, r: (0, 0, 0)),
                pl.BlockSpec((1, C), lambda n, r: (0, 0)),
                pl.BlockSpec((1, C), lambda n, r: (0, 0)),
                pl.BlockSpec((1, 9, C, C), lambda n, r: (r, 0, 0, 0)),
                pl.BlockSpec((1, 1, C), lambda n, r: (r, 0, 0)),
                pl.BlockSpec((1, 1, C), lambda n, r: (r, 0, 0)),
                pl.BlockSpec((1, 9, C, C), lambda n, r: (r, 0, 0, 0)),
                pl.BlockSpec((1, 1, C), lambda n, r: (r, 0, 0)),
                pl.BlockSpec((1, 1, C), lambda n, r: (r, 0, 0)),
                pl.BlockSpec((C, Ch), lambda n, r: (0, 0)),
                pl.BlockSpec((1, Ch), lambda n, r: (0, 0)),
            ],
            out_specs=pl.BlockSpec((1, L, Ch), lambda n, r: (n, 0, 0)),
            scratch_shapes=[
                pltpu.VMEM((buf_rows, C), jnp.float32),
                pltpu.VMEM((buf_rows, C), jnp.float32),
            ],
        ),
        compiler_params=pltpu.CompilerParams(
            dimension_semantics=("parallel", "arbitrary")),
    )(xflat, w0, s0, b0, wr1, sr1, br1, wr2, sr2, br2, wh, bh)

    # Drop the 2 wrap-around columns, restore NCHW.
    out = out_flat.reshape(N, H, Wp, Ch)[:, :, :W, :]
    return jnp.transpose(out, (0, 3, 1, 2))


def _fold_bn(conv_bias, gamma, beta, mean, var, eps=1e-5):
    """Fold conv bias + BatchNorm (running stats) into per-channel scale/bias."""
    scale = gamma / jnp.sqrt(var + eps)
    bias = beta + scale * (conv_bias - mean)
    return scale.reshape(1, -1), bias.reshape(1, -1)


def _torch_w_to_taps(w_oihw):
    """(Cout, Cin, 3, 3) -> (9, Cin, Cout), tap index = kh*3 + kw."""
    return jnp.transpose(w_oihw, (2, 3, 1, 0)).reshape(
        9, w_oihw.shape[1], w_oihw.shape[0])


def _reference_tower(x, p, eps=1e-5):
    """Pure-XLA reference of ResidualTower eval-mode forward, NCHW."""
    hp = jax.lax.Precision.HIGHEST

    def convblock(x, q):
        y = jax.lax.conv_general_dilated(
            x, q["w"], window_strides=(1, 1), padding=((1, 1), (1, 1)),
            dimension_numbers=("NCHW", "OIHW", "NCHW"), precision=hp)
        y = y + q["b"][None, :, None, None]
        y = (y - q["m"][None, :, None, None]) / jnp.sqrt(
            q["v"][None, :, None, None] + eps)
        y = y * q["g"][None, :, None, None] + q["be"][None, :, None, None]
        return jnp.maximum(y, 0.0)

    y = convblock(x, p["stem"])
    for bk in p["blocks"]:
        res = y
        t = convblock(y, bk["c1"])
        t = convblock(t, bk["c2"])
        y = jnp.maximum(t + res, 0.0)          # Dropout2d = identity in eval mode
    y = jax.lax.conv_general_dilated(
        y, p["wh"], window_strides=(1, 1), padding=((0, 0), (0, 0)),
        dimension_numbers=("NCHW", "OIHW", "NCHW"), precision=hp)
    return y + p["bh"][None, :, None, None]


if __name__ == "__main__":
    N, Cin, H, W = 2, 4, 8, 8
    C = 256          # internal tower width (fixed by the module)
    R = 2            # num_residual_blocks
    Ch = 4           # head output channels (fixed by the module)

    root = jax.random.PRNGKey(0)
    kx, kstem, khw, khb, kblk = jax.random.split(root, 5)

    def conv_bn_params(key, cin, cout, wstd):
        k = jax.random.split(key, 6)
        return dict(
            w=wstd * jax.random.normal(k[0], (cout, cin, 3, 3), jnp.float32),
            b=0.1 * jax.random.normal(k[1], (cout,), jnp.float32),
            g=1.0 + 0.1 * jax.random.normal(k[2], (cout,), jnp.float32),
            be=0.1 * jax.random.normal(k[3], (cout,), jnp.float32),
            m=0.1 * jax.random.normal(k[4], (cout,), jnp.float32),
            v=jax.random.uniform(k[5], (cout,), jnp.float32, 0.5, 1.5),
        )

    x = jax.random.normal(kx, (N, Cin, H, W), jnp.float32)
    stem = conv_bn_params(kstem, Cin, C, 0.15)
    bkeys = jax.random.split(kblk, 2 * R)
    blocks = [dict(c1=conv_bn_params(bkeys[2 * i], C, C, 0.02),
                   c2=conv_bn_params(bkeys[2 * i + 1], C, C, 0.02))
              for i in range(R)]
    wh = 0.06 * jax.random.normal(khw, (Ch, C, 1, 1), jnp.float32)
    bh = 0.05 * jax.random.normal(khb, (Ch,), jnp.float32)

    # Fold BN + reshape conv weights into the kernel layout.
    def prep(q):
        taps = _torch_w_to_taps(q["w"])
        s, b = _fold_bn(q["b"], q["g"], q["be"], q["m"], q["v"])
        return taps, s, b

    w0, s0, b0 = prep(stem)
    p1 = [prep(bk["c1"]) for bk in blocks]
    p2 = [prep(bk["c2"]) for bk in blocks]
    wr1 = jnp.stack([t for t, _, _ in p1])
    sr1 = jnp.stack([s for _, s, _ in p1])
    br1 = jnp.stack([b for _, _, b in p1])
    wr2 = jnp.stack([t for t, _, _ in p2])
    sr2 = jnp.stack([s for _, s, _ in p2])
    br2 = jnp.stack([b for _, _, b in p2])
    wh_k = jnp.transpose(wh.reshape(Ch, C))      # (C, Ch)
    bh_k = bh.reshape(1, Ch)

    out = residual_tower(x, w0, s0, b0, wr1, sr1, br1, wr2, sr2, br2, wh_k, bh_k)
    out = jax.block_until_ready(out)

    ref = jax.block_until_ready(
        _reference_tower(x, dict(stem=stem, blocks=blocks, wh=wh, bh=bh)))

    assert out.shape == (N, Ch, H, W)
    err = float(jnp.max(jnp.abs(out - ref)))
    assert jnp.allclose(out, ref, atol=3e-3, rtol=3e-3), f"max abs diff {err}"
    print("KERNEL_OK")
</pallas_src>

<mosaic_0001>
module attributes {stable_mosaic.version = 11 : i64} {
  func.func @_tower_kernel(%arg0: i32, %arg1: i32, %arg2: memref<1x120x4xf32, #tpu.memory_space<vmem>>, %arg3: memref<9x4x256xf32, #tpu.memory_space<vmem>>, %arg4: memref<1x256xf32, #tpu.memory_space<vmem>>, %arg5: memref<1x256xf32, #tpu.memory_space<vmem>>, %arg6: memref<1x9x256x256xf32, #tpu.memory_space<vmem>>, %arg7: memref<1x1x256xf32, #tpu.memory_space<vmem>>, %arg8: memref<1x1x256xf32, #tpu.memory_space<vmem>>, %arg9: memref<1x9x256x256xf32, #tpu.memory_space<vmem>>, %arg10: memref<1x1x256xf32, #tpu.memory_space<vmem>>, %arg11: memref<1x1x256xf32, #tpu.memory_space<vmem>>, %arg12: memref<256x4xf32, #tpu.memory_space<vmem>>, %arg13: memref<1x4xf32, #tpu.memory_space<vmem>>, %arg14: memref<1x80x4xf32, #tpu.memory_space<vmem>>, %arg15: memref<125x256xf32, #tpu.memory_space<vmem>>, %arg16: memref<125x256xf32, #tpu.memory_space<vmem>>) attributes {dimension_semantics = [#tpu.dimension_semantics<parallel>, #tpu.dimension_semantics<arbitrary>], iteration_bounds = array<i64: 2, 2>, scalar_prefetch = 0 : i64, scratch_operands = 2 : i64, tpu.core_type = #tpu.core_type<tc>, window_params = [{transform_indices = @transform_0, window_bounds = array<i64: 1, 120, 4>}, {pipeline_mode = #tpu.pipeline_mode<synchronous>, transform_indices = @transform_1, window_bounds = array<i64: 9, 4, 256>}, {pipeline_mode = #tpu.pipeline_mode<synchronous>, transform_indices = @transform_2, window_bounds = array<i64: 1, 256>}, {pipeline_mode = #tpu.pipeline_mode<synchronous>, transform_indices = @transform_3, window_bounds = array<i64: 1, 256>}, {transform_indices = @transform_4, window_bounds = array<i64: 1, 9, 256, 256>}, {transform_indices = @transform_5, window_bounds = array<i64: 1, 1, 256>}, {transform_indices = @transform_6, window_bounds = array<i64: 1, 1, 256>}, {transform_indices = @transform_7, window_bounds = array<i64: 1, 9, 256, 256>}, {transform_indices = @transform_8, window_bounds = array<i64: 1, 1, 256>}, {transform_indices = @transform_9, window_bounds = array<i64: 1, 1, 256>}, {pipeline_mode = #tpu.pipeline_mode<synchronous>, transform_indices = @transform_10, window_bounds = array<i64: 256, 4>}, {pipeline_mode = #tpu.pipeline_mode<synchronous>, transform_indices = @transform_11, window_bounds = array<i64: 1, 4>}, {transform_indices = @transform_12, window_bounds = array<i64: 1, 80, 4>}]} {
    %0 = tpu.iota {dimensions = array<i32: 0>} : vector<80x1xi32>
    %c10_i32 = arith.constant 10 : i32
    %c0_i32 = arith.constant 0 : i32
    %1 = arith.cmpi eq, %c10_i32, %c0_i32 : i32
    %c1_i32 = arith.constant 1 : i32
    %2 = arith.select %1, %c1_i32, %c10_i32 : i32
    %3 = vector.broadcast %2 : i32 to vector<80x1xi32>
    %4 = arith.remsi %0, %3 : vector<80x1xi32>
    %c0_i32_0 = arith.constant 0 : i32
    %5 = vector.broadcast %c0_i32_0 : i32 to vector<80x1xi32>
    %6 = arith.cmpi ne, %4, %5 : vector<80x1xi32>
    %c0_i32_1 = arith.constant 0 : i32
    %7 = vector.broadcast %c0_i32_1 : i32 to vector<80x1xi32>
    %8 = arith.cmpi slt, %4, %7 : vector<80x1xi32>
    %c0_i32_2 = arith.constant 0 : i32
    %9 = arith.cmpi slt, %2, %c0_i32_2 : i32
    %10 = vector.broadcast %9 : i1 to vector<80x1xi1>
    %11 = vector.broadcast %10 : vector<80x1xi1> to vector<80x1xi1>
    %12 = arith.xori %8, %11 : vector<80x1xi1>
    %13 = arith.andi %12, %6 : vector<80x1xi1>
    %14 = vector.broadcast %2 : i32 to vector<80x1xi32>
    %15 = arith.addi %4, %14 : vector<80x1xi32>
    %16 = arith.select %13, %15, %4 : vector<80x1xi1>, vector<80x1xi32>
    %c8_i32 = arith.constant 8 : i32
    %17 = vector.broadcast %c8_i32 : i32 to vector<80x1xi32>
    %18 = arith.cmpi slt, %16, %17 : vector<80x1xi32>
    %c0_i32_3 = arith.constant 0 : i32
    %19 = arith.cmpi eq, %arg1, %c0_i32_3 : i32
    %20 = arith.extui %19 : i1 to i32
    %c0_i32_4 = arith.constant 0 : i32
    %21 = arith.cmpi ne, %20, %c0_i32_4 : i32
    scf.if %21 {
      %cst_142 = arith.constant 0.000000e+00 : f32
      %155 = vector.broadcast %cst_142 : f32 to vector<16x256xf32>
      %cst_143 = arith.constant 0.000000e+00 : f32
      %156 = vector.broadcast %cst_143 : f32 to vector<29x256xf32>
      %c0_144 = arith.constant 0 : index
      %c0_145 = arith.constant 0 : index
      %157 = vector.load %arg15[%c0_144, %c0_145] : memref<125x256xf32, #tpu.memory_space<vmem>>, vector<16x256xf32>
      tpu.vector_store %arg15[%c0_144, %c0_145], %155 {strides = array<i32>} : memref<125x256xf32, #tpu.memory_space<vmem>>, vector<16x256xf32>,
      %c0_146 = arith.constant 0 : index
      %c0_147 = arith.constant 0 : index
      %158 = vector.load %arg16[%c0_146, %c0_147] : memref<125x256xf32, #tpu.memory_space<vmem>>, vector<16x256xf32>
      tpu.vector_store %arg16[%c0_146, %c0_147], %155 {strides = array<i32>} : memref<125x256xf32, #tpu.memory_space<vmem>>, vector<16x256xf32>,
      %c96 = arith.constant 96 : index
      %c0_148 = arith.constant 0 : index
      %159 = vector.load %arg15[%c96, %c0_148] : memref<125x256xf32, #tpu.memory_space<vmem>>, vector<29x256xf32>
      tpu.vector_store %arg15[%c96, %c0_148], %156 {strides = array<i32>} : memref<125x256xf32, #tpu.memory_space<vmem>>, vector<29x256xf32>,
      %c96_149 = arith.constant 96 : index
      %c0_150 = arith.constant 0 : index
      %160 = vector.load %arg16[%c96_149, %c0_150] : memref<125x256xf32, #tpu.memory_space<vmem>>, vector<29x256xf32>
      tpu.vector_store %arg16[%c96_149, %c0_150], %156 {strides = array<i32>} : memref<125x256xf32, #tpu.memory_space<vmem>>, vector<29x256xf32>,
      %c0_151 = arith.constant 0 : index
      %c0_152 = arith.constant 0 : index
      %c0_153 = arith.constant 0 : index
      %161 = vector.load %arg2[%c0_151, %c0_152, %c0_153] : memref<1x120x4xf32, #tpu.memory_space<vmem>>, vector<1x120x4xf32>
      %162 = vector.shape_cast %161 : vector<1x120x4xf32> to vector<120x4xf32>
      %cst_154 = arith.constant 0.000000e+00 : f32
      %163 = vector.broadcast %cst_154 : f32 to vector<80x256xf32>
      %164 = vector.extract_strided_slice %162 {offsets = [0, 0], sizes = [80, 4], strides = [1, 1]} : vector<120x4xf32> to vector<80x4xf32>
      %c0_155 = arith.constant 0 : index
      %c0_156 = arith.constant 0 : index
      %c0_157 = arith.constant 0 : index
      %165 = vector.load %arg3[%c0_155, %c0_156, %c0_157] : memref<9x4x256xf32, #tpu.memory_space<vmem>>, vector<1x4x256xf32>
      %166 = vector.shape_cast %165 : vector<1x4x256xf32> to vector<4x256xf32>
      %cst_158 = arith.constant dense<0.000000e+00> : vector<80x256xf32>
      %167 = tpu.matmul %164, %166, %cst_158 {dimension_numbers = #tpu.dot_dimension_numbers<[1], [0], [0], [1], [0, 0, 1, 1], [], []>} : vector<80x4xf32>, vector<4x256xf32>, vector<80x256xf32> -> vector<80x256xf32>
      %168 = arith.addf %163, %167 : vector<80x256xf32>
      %169 = vector.extract_strided_slice %162 {offsets = [1, 0], sizes = [80, 4], strides = [1, 1]} : vector<120x4xf32> to vector<80x4xf32>
      %c1_159 = arith.constant 1 : index
      %c0_160 = arith.constant 0 : index
      %c0_161 = arith.constant 0 : index
      %170 = vector.load %arg3[%c1_159, %c0_160, %c0_161] : memref<9x4x256xf32, #tpu.memory_space<vmem>>, vector<1x4x256xf32>
      %171 = vector.shape_cast %170 : vector<1x4x256xf32> to vector<4x256xf32>
      %cst_162 = arith.constant dense<0.000000e+00> : vector<80x256xf32>
      %172 = tpu.matmul %169, %171, %cst_162 {dimension_numbers = #tpu.dot_dimension_numbers<[1], [0], [0], [1], [0, 0, 1, 1], [], []>} : vector<80x4xf32>, vector<4x256xf32>, vector<80x256xf32> -> vector<80x256xf32>
      %173 = arith.addf %168, %172 : vector<80x256xf32>
      %174 = vector.extract_strided_slice %162 {offsets = [2, 0], sizes = [80, 4], strides = [1, 1]} : vector<120x4xf32> to vector<80x4xf32>
      %c2_163 = arith.constant 2 : index
      %c0_164 = arith.constant 0 : index
      %c0_165 = arith.constant 0 : index
      %175 = vector.load %arg3[%c2_163, %c0_164, %c0_165] : memref<9x4x256xf32, #tpu.memory_space<vmem>>, vector<1x4x256xf32>
      %176 = vector.shape_cast %175 : vector<1x4x256xf32> to vector<4x256xf32>
      %cst_166 = arith.constant dense<0.000000e+00> : vector<80x256xf32>
      %177 = tpu.matmul %174, %176, %cst_166 {dimension_numbers = #tpu.dot_dimension_numbers<[1], [0], [0], [1], [0, 0, 1, 1], [], []>} : vector<80x4xf32>, vector<4x256xf32>, vector<80x256xf32> -> vector<80x256xf32>
      %178 = arith.addf %173, %177 : vector<80x256xf32>
      %179 = vector.extract_strided_slice %162 {offsets = [10, 0], sizes = [80, 4], strides = [1, 1]} : vector<120x4xf32> to vector<80x4xf32>
      %c3_167 = arith.constant 3 : index
      %c0_168 = arith.constant 0 : index
      %c0_169 = arith.constant 0 : index
      %180 = vector.load %arg3[%c3_167, %c0_168, %c0_169] : memref<9x4x256xf32, #tpu.memory_space<vmem>>, vector<1x4x256xf32>
      %181 = vector.shape_cast %180 : vector<1x4x256xf32> to vector<4x256xf32>
      %cst_170 = arith.constant dense<0.000000e+00> : vector<80x256xf32>
      %182 = tpu.matmul %179, %181, %cst_170 {dimension_numbers = #tpu.dot_dimension_numbers<[1], [0], [0], [1], [0, 0, 1, 1], [], []>} : vector<80x4xf32>, vector<4x256xf32>, vector<80x256xf32> -> vector<80x256xf32>
      %183 = arith.addf %178, %182 : vector<80x256xf32>
      %184 = vector.extract_strided_slice %162 {offsets = [11, 0], sizes = [80, 4], strides = [1, 1]} : vector<120x4xf32> to vector<80x4xf32>
      %c4_171 = arith.constant 4 : index
      %c0_172 = arith.constant 0 : index
      %c0_173 = arith.constant 0 : index
      %185 = vector.load %arg3[%c4_171, %c0_172, %c0_173] : memref<9x4x256xf32, #tpu.memory_space<vmem>>, vector<1x4x256xf32>
      %186 = vector.shape_cast %185 : vector<1x4x256xf32> to vector<4x256xf32>
      %cst_174 = arith.constant dense<0.000000e+00> : vector<80x256xf32>
      %187 = tpu.matmul %184, %186, %cst_174 {dimension_numbers = #tpu.dot_dimension_numbers<[1], [0], [0], [1], [0, 0, 1, 1], [], []>} : vector<80x4xf32>, vector<4x256xf32>, vector<80x256xf32> -> vector<80x256xf32>
      %188 = arith.addf %183, %187 : vector<80x256xf32>
      %189 = vector.extract_strided_slice %162 {offsets = [12, 0], sizes = [80, 4], strides = [1, 1]} : vector<120x4xf32> to vector<80x4xf32>
      %c5_175 = arith.constant 5 : index
      %c0_176 = arith.constant 0 : index
      %c0_177 = arith.constant 0 : index
      %190 = vector.load %arg3[%c5_175, %c0_176, %c0_177] : memref<9x4x256xf32, #tpu.memory_space<vmem>>, vector<1x4x256xf32>
      %191 = vector.shape_cast %190 : vector<1x4x256xf32> to vector<4x256xf32>
      %cst_178 = arith.constant dense<0.000000e+00> : vector<80x256xf32>
      %192 = tpu.matmul %189, %191, %cst_178 {dimension_numbers = #tpu.dot_dimension_numbers<[1], [0], [0], [1], [0, 0, 1, 1], [], []>} : vector<80x4xf32>, vector<4x256xf32>, vector<80x256xf32> -> vector<80x256xf32>
      %193 = arith.addf %188, %192 : vector<80x256xf32>
      %194 = vector.extract_strided_slice %162 {offsets = [20, 0], sizes = [80, 4], strides = [1, 1]} : vector<120x4xf32> to vector<80x4xf32>
      %c6_179 = arith.constant 6 : index
      %c0_180 = arith.constant 0 : index
      %c0_181 = arith.constant 0 : index
      %195 = vector.load %arg3[%c6_179, %c0_180, %c0_181] : memref<9x4x256xf32, #tpu.memory_space<vmem>>, vector<1x4x256xf32>
      %196 = vector.shape_cast %195 : vector<1x4x256xf32> to vector<4x256xf32>
      %cst_182 = arith.constant dense<0.000000e+00> : vector<80x256xf32>
      %197 = tpu.matmul %194, %196, %cst_182 {dimension_numbers = #tpu.dot_dimension_numbers<[1], [0], [0], [1], [0, 0, 1, 1], [], []>} : vector<80x4xf32>, vector<4x256xf32>, vector<80x256xf32> -> vector<80x256xf32>
      %198 = arith.addf %193, %197 : vector<80x256xf32>
      %199 = vector.extract_strided_slice %162 {offsets = [21, 0], sizes = [80, 4], strides = [1, 1]} : vector<120x4xf32> to vector<80x4xf32>
      %c7_183 = arith.constant 7 : index
      %c0_184 = arith.constant 0 : index
      %c0_185 = arith.constant 0 : index
      %200 = vector.load %arg3[%c7_183, %c0_184, %c0_185] : memref<9x4x256xf32, #tpu.memory_space<vmem>>, vector<1x4x256xf32>
      %201 = vector.shape_cast %200 : vector<1x4x256xf32> to vector<4x256xf32>
      %cst_186 = arith.constant dense<0.000000e+00> : vector<80x256xf32>
      %202 = tpu.matmul %199, %201, %cst_186 {dimension_numbers = #tpu.dot_dimension_numbers<[1], [0], [0], [1], [0, 0, 1, 1], [], []>} : vector<80x4xf32>, vector<4x256xf32>, vector<80x256xf32> -> vector<80x256xf32>
      %203 = arith.addf %198, %202 : vector<80x256xf32>
      %204 = vector.extract_strided_slice %162 {offsets = [22, 0], sizes = [80, 4], strides = [1, 1]} : vector<120x4xf32> to vector<80x4xf32>
      %c8_187 = arith.constant 8 : index
      %c0_188 = arith.constant 0 : index
      %c0_189 = arith.constant 0 : index
      %205 = vector.load %arg3[%c8_187, %c0_188, %c0_189] : memref<9x4x256xf32, #tpu.memory_space<vmem>>, vector<1x4x256xf32>
      %206 = vector.shape_cast %205 : vector<1x4x256xf32> to vector<4x256xf32>
      %cst_190 = arith.constant dense<0.000000e+00> : vector<80x256xf32>
      %207 = tpu.matmul %204, %206, %cst_190 {dimension_numbers = #tpu.dot_dimension_numbers<[1], [0], [0], [1], [0, 0, 1, 1], [], []>} : vector<80x4xf32>, vector<4x256xf32>, vector<80x256xf32> -> vector<80x256xf32>
      %208 = arith.addf %203, %207 : vector<80x256xf32>
      %c0_191 = arith.constant 0 : index
      %c0_192 = arith.constant 0 : index
      %209 = vector.load %arg4[%c0_191, %c0_192] : memref<1x256xf32, #tpu.memory_space<vmem>>, vector<1x256xf32>
      %210 = vector.shape_cast %209 : vector<1x256xf32> to vector<256xf32>
      %211 = vector.shape_cast %210 : vector<256xf32> to vector<1x256xf32>
      %212 = vector.broadcast %211 : vector<1x256xf32> to vector<80x256xf32>
      %213 = arith.mulf %208, %212 : vector<80x256xf32>
      %c0_193 = arith.constant 0 : index
      %c0_194 = arith.constant 0 : index
      %214 = vector.load %arg5[%c0_193, %c0_194] : memref<1x256xf32, #tpu.memory_space<vmem>>, vector<1x256xf32>
      %215 = vector.shape_cast %214 : vector<1x256xf32> to vector<256xf32>
      %216 = vector.shape_cast %215 : vector<256xf32> to vector<1x256xf32>
      %217 = vector.broadcast %216 : vector<1x256xf32> to vector<80x256xf32>
      %218 = arith.addf %213, %217 : vector<80x256xf32>
      %cst_195 = arith.constant 0.000000e+00 : f32
      %219 = vector.broadcast %cst_195 : f32 to vector<80x256xf32>
      %220 = arith.maximumf %218, %219 : vector<80x256xf32>
      %cst_196 = arith.constant 0.000000e+00 : f32
      %221 = vector.shape_cast %18 : vector<80x1xi1> to vector<80x1xi1>
      %222 = vector.broadcast %221 : vector<80x1xi1> to vector<80x256xi1>
      %223 = vector.broadcast %cst_196 : f32 to vector<80x256xf32>
      %224 = arith.select %222, %220, %223 : vector<80x256xi1>, vector<80x256xf32>
      %c16_197 = arith.constant 16 : index
      %c0_198 = arith.constant 0 : index
      %225 = vector.load %arg15[%c16_197, %c0_198] : memref<125x256xf32, #tpu.memory_space<vmem>>, vector<80x256xf32>
      tpu.vector_store %arg15[%c16_197, %c0_198], %224 {strides = array<i32>} : memref<125x256xf32, #tpu.memory_space<vmem>>, vector<80x256xf32>,
    } else {
    }
    %cst = arith.constant 0.000000e+00 : f32
    %22 = vector.broadcast %cst : f32 to vector<80x256xf32>
    %c5 = arith.constant 5 : index
    %c0 = arith.constant 0 : index
    %23 = vector.load %arg15[%c5, %c0] : memref<125x256xf32, #tpu.memory_space<vmem>>, vector<80x256xf32>
    %c0_5 = arith.constant 0 : index
    %c0_6 = arith.constant 0 : index
    %c0_7 = arith.constant 0 : index
    %c0_8 = arith.constant 0 : index
    %24 = vector.load %arg6[%c0_5, %c0_6, %c0_7, %c0_8] : memref<1x9x256x256xf32, #tpu.memory_space<vmem>>, vector<1x1x256x256xf32>
    %25 = vector.shape_cast %24 : vector<1x1x256x256xf32> to vector<256x256xf32>
    %cst_9 = arith.constant dense<0.000000e+00> : vector<80x256xf32>
    %26 = tpu.matmul %23, %25, %cst_9 {dimension_numbers = #tpu.dot_dimension_numbers<[1], [0], [0], [1], [0, 0, 1, 1], [], []>} : vector<80x256xf32>, vector<256x256xf32>, vector<80x256xf32> -> vector<80x256xf32>
    %27 = arith.addf %22, %26 : vector<80x256xf32>
    %c6 = arith.constant 6 : index
    %c0_10 = arith.constant 0 : index
    %28 = vector.load %arg15[%c6, %c0_10] : memref<125x256xf32, #tpu.memory_space<vmem>>, vector<80x256xf32>
    %c0_11 = arith.constant 0 : index
    %c1 = arith.constant 1 : index
    %c0_12 = arith.constant 0 : index
    %c0_13 = arith.constant 0 : index
    %29 = vector.load %arg6[%c0_11, %c1, %c0_12, %c0_13] : memref<1x9x256x256xf32, #tpu.memory_space<vmem>>, vector<1x1x256x256xf32>
    %30 = vector.shape_cast %29 : vector<1x1x256x256xf32> to vector<256x256xf32>
    %cst_14 = arith.constant dense<0.000000e+00> : vector<80x256xf32>
    %31 = tpu.matmul %28, %30, %cst_14 {dimension_numbers = #tpu.dot_dimension_numbers<[1], [0], [0], [1], [0, 0, 1, 1], [], []>} : vector<80x256xf32>, vector<256x256xf32>, vector<80x256xf32> -> vector<80x256xf32>
    %32 = arith.addf %27, %31 : vector<80x256xf32>
    %c7 = arith.constant 7 : index
    %c0_15 = arith.constant 0 : index
    %33 = vector.load %arg15[%c7, %c0_15] : memref<125x256xf32, #tpu.memory_space<vmem>>, vector<80x256xf32>
    %c0_16 = arith.constant 0 : index
    %c2 = arith.constant 2 : index
    %c0_17 = arith.constant 0 : index
    %c0_18 = arith.constant 0 : index
    %34 = vector.load %arg6[%c0_16, %c2, %c0_17, %c0_18] : memref<1x9x256x256xf32, #tpu.memory_space<vmem>>, vector<1x1x256x256xf32>
    %35 = vector.shape_cast %34 : vector<1x1x256x256xf32> to vector<256x256xf32>
    %cst_19 = arith.constant dense<0.000000e+00> : vector<80x256xf32>
    %36 = tpu.matmul %33, %35, %cst_19 {dimension_numbers = #tpu.dot_dimension_numbers<[1], [0], [0], [1], [0, 0, 1, 1], [], []>} : vector<80x256xf32>, vector<256x256xf32>, vector<80x256xf32> -> vector<80x256xf32>
    %37 = arith.addf %32, %36 : vector<80x256xf32>
    %c15 = arith.constant 15 : index
    %c0_20 = arith.constant 0 : index
    %38 = vector.load %arg15[%c15, %c0_20] : memref<125x256xf32, #tpu.memory_space<vmem>>, vector<80x256xf32>
    %c0_21 = arith.constant 0 : index
    %c3 = arith.constant 3 : index
    %c0_22 = arith.constant 0 : index
    %c0_23 = arith.constant 0 : index
    %39 = vector.load %arg6[%c0_21, %c3, %c0_22, %c0_23] : memref<1x9x256x256xf32, #tpu.memory_space<vmem>>, vector<1x1x256x256xf32>
    %40 = vector.shape_cast %39 : vector<1x1x256x256xf32> to vector<256x256xf32>
    %cst_24 = arith.constant dense<0.000000e+00> : vector<80x256xf32>
    %41 = tpu.matmul %38, %40, %cst_24 {dimension_numbers = #tpu.dot_dimension_numbers<[1], [0], [0], [1], [0, 0, 1, 1], [], []>} : vector<80x256xf32>, vector<256x256xf32>, vector<80x256xf32> -> vector<80x256xf32>
    %42 = arith.addf %37, %41 : vector<80x256xf32>
    %c16 = arith.constant 16 : index
    %c0_25 = arith.constant 0 : index
    %43 = vector.load %arg15[%c16, %c0_25] : memref<125x256xf32, #tpu.memory_space<vmem>>, vector<80x256xf32>
    %c0_26 = arith.constant 0 : index
    %c4 = arith.constant 4 : index
    %c0_27 = arith.constant 0 : index
    %c0_28 = arith.constant 0 : index
    %44 = vector.load %arg6[%c0_26, %c4, %c0_27, %c0_28] : memref<1x9x256x256xf32, #tpu.memory_space<vmem>>, vector<1x1x256x256xf32>
    %45 = vector.shape_cast %44 : vector<1x1x256x256xf32> to vector<256x256xf32>
    %cst_29 = arith.constant dense<0.000000e+00> : vector<80x256xf32>
    %46 = tpu.matmul %43, %45, %cst_29 {dimension_numbers = #tpu.dot_dimension_numbers<[1], [0], [0], [1], [0, 0, 1, 1], [], []>} : vector<80x256xf32>, vector<256x256xf32>, vector<80x256xf32> -> vector<80x256xf32>
    %47 = arith.addf %42, %46 : vector<80x256xf32>
    %c17 = arith.constant 17 : index
    %c0_30 = arith.constant 0 : index
    %48 = vector.load %arg15[%c17, %c0_30] : memref<125x256xf32, #tpu.memory_space<vmem>>, vector<80x256xf32>
    %c0_31 = arith.constant 0 : index
    %c5_32 = arith.constant 5 : index
    %c0_33 = arith.constant 0 : index
    %c0_34 = arith.constant 0 : index
    %49 = vector.load %arg6[%c0_31, %c5_32, %c0_33, %c0_34] : memref<1x9x256x256xf32, #tpu.memory_space<vmem>>, vector<1x1x256x256xf32>
    %50 = vector.shape_cast %49 : vector<1x1x256x256xf32> to vector<256x256xf32>
    %cst_35 = arith.constant dense<0.000000e+00> : vector<80x256xf32>
    %51 = tpu.matmul %48, %50, %cst_35 {dimension_numbers = #tpu.dot_dimension_numbers<[1], [0], [0], [1], [0, 0, 1, 1], [], []>} : vector<80x256xf32>, vector<256x256xf32>, vector<80x256xf32> -> vector<80x256xf32>
    %52 = arith.addf %47, %51 : vector<80x256xf32>
    %c25 = arith.constant 25 : index
    %c0_36 = arith.constant 0 : index
    %53 = vector.load %arg15[%c25, %c0_36] : memref<125x256xf32, #tpu.memory_space<vmem>>, vector<80x256xf32>
    %c0_37 = arith.constant 0 : index
    %c6_38 = arith.constant 6 : index
    %c0_39 = arith.constant 0 : index
    %c0_40 = arith.constant 0 : index
    %54 = vector.load %arg6[%c0_37, %c6_38, %c0_39, %c0_40] : memref<1x9x256x256xf32, #tpu.memory_space<vmem>>, vector<1x1x256x256xf32>
    %55 = vector.shape_cast %54 : vector<1x1x256x256xf32> to vector<256x256xf32>
    %cst_41 = arith.constant dense<0.000000e+00> : vector<80x256xf32>
    %56 = tpu.matmul %53, %55, %cst_41 {dimension_numbers = #tpu.dot_dimension_numbers<[1], [0], [0], [1], [0, 0, 1, 1], [], []>} : vector<80x256xf32>, vector<256x256xf32>, vector<80x256xf32> -> vector<80x256xf32>
    %57 = arith.addf %52, %56 : vector<80x256xf32>
    %c26 = arith.constant 26 : index
    %c0_42 = arith.constant 0 : index
    %58 = vector.load %arg15[%c26, %c0_42] : memref<125x256xf32, #tpu.memory_space<vmem>>, vector<80x256xf32>
    %c0_43 = arith.constant 0 : index
    %c7_44 = arith.constant 7 : index
    %c0_45 = arith.constant 0 : index
    %c0_46 = arith.constant 0 : index
    %59 = vector.load %arg6[%c0_43, %c7_44, %c0_45, %c0_46] : memref<1x9x256x256xf32, #tpu.memory_space<vmem>>, vector<1x1x256x256xf32>
    %60 = vector.shape_cast %59 : vector<1x1x256x256xf32> to vector<256x256xf32>
    %cst_47 = arith.constant dense<0.000000e+00> : vector<80x256xf32>
    %61 = tpu.matmul %58, %60, %cst_47 {dimension_numbers = #tpu.dot_dimension_numbers<[1], [0], [0], [1], [0, 0, 1, 1], [], []>} : vector<80x256xf32>, vector<256x256xf32>, vector<80x256xf32> -> vector<80x256xf32>
    %62 = arith.addf %57, %61 : vector<80x256xf32>
    %c27 = arith.constant 27 : index
    %c0_48 = arith.constant 0 : index
    %63 = vector.load %arg15[%c27, %c0_48] : memref<125x256xf32, #tpu.memory_space<vmem>>, vector<80x256xf32>
    %c0_49 = arith.constant 0 : index
    %c8 = arith.constant 8 : index
    %c0_50 = arith.constant 0 : index
    %c0_51 = arith.constant 0 : index
    %64 = vector.load %arg6[%c0_49, %c8, %c0_50, %c0_51] : memref<1x9x256x256xf32, #tpu.memory_space<vmem>>, vector<1x1x256x256xf32>
    %65 = vector.shape_cast %64 : vector<1x1x256x256xf32> to vector<256x256xf32>
    %cst_52 = arith.constant dense<0.000000e+00> : vector<80x256xf32>
    %66 = tpu.matmul %63, %65, %cst_52 {dimension_numbers = #tpu.dot_dimension_numbers<[1], [0], [0], [1], [0, 0, 1, 1], [], []>} : vector<80x256xf32>, vector<256x256xf32>, vector<80x256xf32> -> vector<80x256xf32>
    %67 = arith.addf %62, %66 : vector<80x256xf32>
    %c0_53 = arith.constant 0 : index
    %c0_54 = arith.constant 0 : index
    %c0_55 = arith.constant 0 : index
    %68 = vector.load %arg7[%c0_53, %c0_54, %c0_55] : memref<1x1x256xf32, #tpu.memory_space<vmem>>, vector<1x1x256xf32>
    %69 = vector.shape_cast %68 : vector<1x1x256xf32> to vector<256xf32>
    %70 = vector.shape_cast %69 : vector<256xf32> to vector<1x256xf32>
    %71 = vector.broadcast %70 : vector<1x256xf32> to vector<80x256xf32>
    %72 = arith.mulf %67, %71 : vector<80x256xf32>
    %c0_56 = arith.constant 0 : index
    %c0_57 = arith.constant 0 : index
    %c0_58 = arith.constant 0 : index
    %73 = vector.load %arg8[%c0_56, %c0_57, %c0_58] : memref<1x1x256xf32, #tpu.memory_space<vmem>>, vector<1x1x256xf32>
    %74 = vector.shape_cast %73 : vector<1x1x256xf32> to vector<256xf32>
    %75 = vector.shape_cast %74 : vector<256xf32> to vector<1x256xf32>
    %76 = vector.broadcast %75 : vector<1x256xf32> to vector<80x256xf32>
    %77 = arith.addf %72, %76 : vector<80x256xf32>
    %cst_59 = arith.constant 0.000000e+00 : f32
    %78 = vector.broadcast %cst_59 : f32 to vector<80x256xf32>
    %79 = arith.maximumf %77, %78 : vector<80x256xf32>
    %cst_60 = arith.constant 0.000000e+00 : f32
    %80 = vector.shape_cast %18 : vector<80x1xi1> to vector<80x1xi1>
    %81 = vector.broadcast %80 : vector<80x1xi1> to vector<80x256xi1>
    %82 = vector.broadcast %cst_60 : f32 to vector<80x256xf32>
    %83 = arith.select %81, %79, %82 : vector<80x256xi1>, vector<80x256xf32>
    %c16_61 = arith.constant 16 : index
    %c0_62 = arith.constant 0 : index
    %84 = vector.load %arg16[%c16_61, %c0_62] : memref<125x256xf32, #tpu.memory_space<vmem>>, vector<80x256xf32>
    tpu.vector_store %arg16[%c16_61, %c0_62], %83 {strides = array<i32>} : memref<125x256xf32, #tpu.memory_space<vmem>>, vector<80x256xf32>,
    %cst_63 = arith.constant 0.000000e+00 : f32
    %85 = vector.broadcast %cst_63 : f32 to vector<80x256xf32>
    %c5_64 = arith.constant 5 : index
    %c0_65 = arith.constant 0 : index
    %86 = vector.load %arg16[%c5_64, %c0_65] : memref<125x256xf32, #tpu.memory_space<vmem>>, vector<80x256xf32>
    %c0_66 = arith.constant 0 : index
    %c0_67 = arith.constant 0 : index
    %c0_68 = arith.constant 0 : index
    %c0_69 = arith.constant 0 : index
    %87 = vector.load %arg9[%c0_66, %c0_67, %c0_68, %c0_69] : memref<1x9x256x256xf32, #tpu.memory_space<vmem>>, vector<1x1x256x256xf32>
    %88 = vector.shape_cast %87 : vector<1x1x256x256xf32> to vector<256x256xf32>
    %cst_70 = arith.constant dense<0.000000e+00> : vector<80x256xf32>
    %89 = tpu.matmul %86, %88, %cst_70 {dimension_numbers = #tpu.dot_dimension_numbers<[1], [0], [0], [1], [0, 0, 1, 1], [], []>} : vector<80x256xf32>, vector<256x256xf32>, vector<80x256xf32> -> vector<80x256xf32>
    %90 = arith.addf %85, %89 : vector<80x256xf32>
    %c6_71 = arith.constant 6 : index
    %c0_72 = arith.constant 0 : index
    %91 = vector.load %arg16[%c6_71, %c0_72] : memref<125x256xf32, #tpu.memory_space<vmem>>, vector<80x256xf32>
    %c0_73 = arith.constant 0 : index
    %c1_74 = arith.constant 1 : index
    %c0_75 = arith.constant 0 : index
    %c0_76 = arith.constant 0 : index
    %92 = vector.load %arg9[%c0_73, %c1_74, %c0_75, %c0_76] : memref<1x9x256x256xf32, #tpu.memory_space<vmem>>, vector<1x1x256x256xf32>
    %93 = vector.shape_cast %92 : vector<1x1x256x256xf32> to vector<256x256xf32>
    %cst_77 = arith.constant dense<0.000000e+00> : vector<80x256xf32>
    %94 = tpu.matmul %91, %93, %cst_77 {dimension_numbers = #tpu.dot_dimension_numbers<[1], [0], [0], [1], [0, 0, 1, 1], [], []>} : vector<80x256xf32>, vector<256x256xf32>, vector<80x256xf32> -> vector<80x256xf32>
    %95 = arith.addf %90, %94 : vector<80x256xf32>
    %c7_78 = arith.constant 7 : index
    %c0_79 = arith.constant 0 : index
    %96 = vector.load %arg16[%c7_78, %c0_79] : memref<125x256xf32, #tpu.memory_space<vmem>>, vector<80x256xf32>
    %c0_80 = arith.constant 0 : index
    %c2_81 = arith.constant 2 : index
    %c0_82 = arith.constant 0 : index
    %c0_83 = arith.constant 0 : index
    %97 = vector.load %arg9[%c0_80, %c2_81, %c0_82, %c0_83] : memref<1x9x256x256xf32, #tpu.memory_space<vmem>>, vector<1x1x256x256xf32>
    %98 = vector.shape_cast %97 : vector<1x1x256x256xf32> to vector<256x256xf32>
    %cst_84 = arith.constant dense<0.000000e+00> : vector<80x256xf32>
    %99 = tpu.matmul %96, %98, %cst_84 {dimension_numbers = #tpu.dot_dimension_numbers<[1], [0], [0], [1], [0, 0, 1, 1], [], []>} : vector<80x256xf32>, vector<256x256xf32>, vector<80x256xf32> -> vector<80x256xf32>
    %100 = arith.addf %95, %99 : vector<80x256xf32>
    %c15_85 = arith.constant 15 : index
    %c0_86 = arith.constant 0 : index
    %101 = vector.load %arg16[%c15_85, %c0_86] : memref<125x256xf32, #tpu.memory_space<vmem>>, vector<80x256xf32>
    %c0_87 = arith.constant 0 : index
    %c3_88 = arith.constant 3 : index
    %c0_89 = arith.constant 0 : index
    %c0_90 = arith.constant 0 : index
    %102 = vector.load %arg9[%c0_87, %c3_88, %c0_89, %c0_90] : memref<1x9x256x256xf32, #tpu.memory_space<vmem>>, vector<1x1x256x256xf32>
    %103 = vector.shape_cast %102 : vector<1x1x256x256xf32> to vector<256x256xf32>
    %cst_91 = arith.constant dense<0.000000e+00> : vector<80x256xf32>
    %104 = tpu.matmul %101, %103, %cst_91 {dimension_numbers = #tpu.dot_dimension_numbers<[1], [0], [0], [1], [0, 0, 1, 1], [], []>} : vector<80x256xf32>, vector<256x256xf32>, vector<80x256xf32> -> vector<80x256xf32>
    %105 = arith.addf %100, %104 : vector<80x256xf32>
    %c16_92 = arith.constant 16 : index
    %c0_93 = arith.constant 0 : index
    %106 = vector.load %arg16[%c16_92, %c0_93] : memref<125x256xf32, #tpu.memory_space<vmem>>, vector<80x256xf32>
    %c0_94 = arith.constant 0 : index
    %c4_95 = arith.constant 4 : index
    %c0_96 = arith.constant 0 : index
    %c0_97 = arith.constant 0 : index
    %107 = vector.load %arg9[%c0_94, %c4_95, %c0_96, %c0_97] : memref<1x9x256x256xf32, #tpu.memory_space<vmem>>, vector<1x1x256x256xf32>
    %108 = vector.shape_cast %107 : vector<1x1x256x256xf32> to vector<256x256xf32>
    %cst_98 = arith.constant dense<0.000000e+00> : vector<80x256xf32>
    %109 = tpu.matmul %106, %108, %cst_98 {dimension_numbers = #tpu.dot_dimension_numbers<[1], [0], [0], [1], [0, 0, 1, 1], [], []>} : vector<80x256xf32>, vector<256x256xf32>, vector<80x256xf32> -> vector<80x256xf32>
    %110 = arith.addf %105, %109 : vector<80x256xf32>
    %c17_99 = arith.constant 17 : index
    %c0_100 = arith.constant 0 : index
    %111 = vector.load %arg16[%c17_99, %c0_100] : memref<125x256xf32, #tpu.memory_space<vmem>>, vector<80x256xf32>
    %c0_101 = arith.constant 0 : index
    %c5_102 = arith.constant 5 : index
    %c0_103 = arith.constant 0 : index
    %c0_104 = arith.constant 0 : index
    %112 = vector.load %arg9[%c0_101, %c5_102, %c0_103, %c0_104] : memref<1x9x256x256xf32, #tpu.memory_space<vmem>>, vector<1x1x256x256xf32>
    %113 = vector.shape_cast %112 : vector<1x1x256x256xf32> to vector<256x256xf32>
    %cst_105 = arith.constant dense<0.000000e+00> : vector<80x256xf32>
    %114 = tpu.matmul %111, %113, %cst_105 {dimension_numbers = #tpu.dot_dimension_numbers<[1], [0], [0], [1], [0, 0, 1, 1], [], []>} : vector<80x256xf32>, vector<256x256xf32>, vector<80x256xf32> -> vector<80x256xf32>
    %115 = arith.addf %110, %114 : vector<80x256xf32>
    %c25_106 = arith.constant 25 : index
    %c0_107 = arith.constant 0 : index
    %116 = vector.load %arg16[%c25_106, %c0_107] : memref<125x256xf32, #tpu.memory_space<vmem>>, vector<80x256xf32>
    %c0_108 = arith.constant 0 : index
    %c6_109 = arith.constant 6 : index
    %c0_110 = arith.constant 0 : index
    %c0_111 = arith.constant 0 : index
    %117 = vector.load %arg9[%c0_108, %c6_109, %c0_110, %c0_111] : memref<1x9x256x256xf32, #tpu.memory_space<vmem>>, vector<1x1x256x256xf32>
    %118 = vector.shape_cast %117 : vector<1x1x256x256xf32> to vector<256x256xf32>
    %cst_112 = arith.constant dense<0.000000e+00> : vector<80x256xf32>
    %119 = tpu.matmul %116, %118, %cst_112 {dimension_numbers = #tpu.dot_dimension_numbers<[1], [0], [0], [1], [0, 0, 1, 1], [], []>} : vector<80x256xf32>, vector<256x256xf32>, vector<80x256xf32> -> vector<80x256xf32>
    %120 = arith.addf %115, %119 : vector<80x256xf32>
    %c26_113 = arith.constant 26 : index
    %c0_114 = arith.constant 0 : index
    %121 = vector.load %arg16[%c26_113, %c0_114] : memref<125x256xf32, #tpu.memory_space<vmem>>, vector<80x256xf32>
    %c0_115 = arith.constant 0 : index
    %c7_116 = arith.constant 7 : index
    %c0_117 = arith.constant 0 : index
    %c0_118 = arith.constant 0 : index
    %122 = vector.load %arg9[%c0_115, %c7_116, %c0_117, %c0_118] : memref<1x9x256x256xf32, #tpu.memory_space<vmem>>, vector<1x1x256x256xf32>
    %123 = vector.shape_cast %122 : vector<1x1x256x256xf32> to vector<256x256xf32>
    %cst_119 = arith.constant dense<0.000000e+00> : vector<80x256xf32>
    %124 = tpu.matmul %121, %123, %cst_119 {dimension_numbers = #tpu.dot_dimension_numbers<[1], [0], [0], [1], [0, 0, 1, 1], [], []>} : vector<80x256xf32>, vector<256x256xf32>, vector<80x256xf32> -> vector<80x256xf32>
    %125 = arith.addf %120, %124 : vector<80x256xf32>
    %c27_120 = arith.constant 27 : index
    %c0_121 = arith.constant 0 : index
    %126 = vector.load %arg16[%c27_120, %c0_121] : memref<125x256xf32, #tpu.memory_space<vmem>>, vector<80x256xf32>
    %c0_122 = arith.constant 0 : index
    %c8_123 = arith.constant 8 : index
    %c0_124 = arith.constant 0 : index
    %c0_125 = arith.constant 0 : index
    %127 = vector.load %arg9[%c0_122, %c8_123, %c0_124, %c0_125] : memref<1x9x256x256xf32, #tpu.memory_space<vmem>>, vector<1x1x256x256xf32>
    %128 = vector.shape_cast %127 : vector<1x1x256x256xf32> to vector<256x256xf32>
    %cst_126 = arith.constant dense<0.000000e+00> : vector<80x256xf32>
    %129 = tpu.matmul %126, %128, %cst_126 {dimension_numbers = #tpu.dot_dimension_numbers<[1], [0], [0], [1], [0, 0, 1, 1], [], []>} : vector<80x256xf32>, vector<256x256xf32>, vector<80x256xf32> -> vector<80x256xf32>
    %130 = arith.addf %125, %129 : vector<80x256xf32>
    %c0_127 = arith.constant 0 : index
    %c0_128 = arith.constant 0 : index
    %c0_129 = arith.constant 0 : index
    %131 = vector.load %arg10[%c0_127, %c0_128, %c0_129] : memref<1x1x256xf32, #tpu.memory_space<vmem>>, vector<1x1x256xf32>
    %132 = vector.shape_cast %131 : vector<1x1x256xf32> to vector<256xf32>
    %133 = vector.shape_cast %132 : vector<256xf32> to vector<1x256xf32>
    %134 = vector.broadcast %133 : vector<1x256xf32> to vector<80x256xf32>
    %135 = arith.mulf %130, %134 : vector<80x256xf32>
    %c0_130 = arith.constant 0 : index
    %c0_131 = arith.constant 0 : index
    %c0_132 = arith.constant 0 : index
    %136 = vector.load %arg11[%c0_130, %c0_131, %c0_132] : memref<1x1x256xf32, #tpu.memory_space<vmem>>, vector<1x1x256xf32>
    %137 = vector.shape_cast %136 : vector<1x1x256xf32> to vector<256xf32>
    %138 = vector.shape_cast %137 : vector<256xf32> to vector<1x256xf32>
    %139 = vector.broadcast %138 : vector<1x256xf32> to vector<80x256xf32>
    %140 = arith.addf %135, %139 : vector<80x256xf32>
    %cst_133 = arith.constant 0.000000e+00 : f32
    %141 = vector.broadcast %cst_133 : f32 to vector<80x256xf32>
    %142 = arith.maximumf %140, %141 : vector<80x256xf32>
    %cst_134 = arith.constant 0.000000e+00 : f32
    %143 = vector.shape_cast %18 : vector<80x1xi1> to vector<80x1xi1>
    %144 = vector.broadcast %143 : vector<80x1xi1> to vector<80x256xi1>
    %145 = vector.broadcast %cst_134 : f32 to vector<80x256xf32>
    %146 = arith.select %144, %142, %145 : vector<80x256xi1>, vector<80x256xf32>
    %c16_135 = arith.constant 16 : index
    %c0_136 = arith.constant 0 : index
    %147 = vector.load %arg15[%c16_135, %c0_136] : memref<125x256xf32, #tpu.memory_space<vmem>>, vector<80x256xf32>
    %148 = arith.addf %146, %147 : vector<80x256xf32>
    %cst_137 = arith.constant 0.000000e+00 : f32
    %149 = vector.broadcast %cst_137 : f32 to vector<80x256xf32>
    %150 = arith.maximumf %148, %149 : vector<80x256xf32>
    %c16_138 = arith.constant 16 : index
    %c0_139 = arith.constant 0 : index
    %151 = vector.load %arg15[%c16_138, %c0_139] : memref<125x256xf32, #tpu.memory_space<vmem>>, vector<80x256xf32>
    tpu.vector_store %arg15[%c16_138, %c0_139], %150 {strides = array<i32>} : memref<125x256xf32, #tpu.memory_space<vmem>>, vector<80x256xf32>,
    %c1_i32_140 = arith.constant 1 : i32
    %152 = arith.cmpi eq, %arg1, %c1_i32_140 : i32
    %153 = arith.extui %152 : i1 to i32
    %c0_i32_141 = arith.constant 0 : i32
    %154 = arith.cmpi ne, %153, %c0_i32_141 : i32
    scf.if %154 {
      %c0_142 = arith.constant 0 : index
      %c0_143 = arith.constant 0 : index
      %155 = vector.load %arg12[%c0_142, %c0_143] : memref<256x4xf32, #tpu.memory_space<vmem>>, vector<256x4xf32>
      %cst_144 = arith.constant dense<0.000000e+00> : vector<80x4xf32>
      %156 = tpu.matmul %150, %155, %cst_144 {dimension_numbers = #tpu.dot_dimension_numbers<[1], [0], [0], [1], [0, 0, 1, 1], [], []>} : vector<80x256xf32>, vector<256x4xf32>, vector<80x4xf32> -> vector<80x4xf32>
      %c0_145 = arith.constant 0 : index
      %c0_146 = arith.constant 0 : index
      %157 = vector.load %arg13[%c0_145, %c0_146] : memref<1x4xf32, #tpu.memory_space<vmem>>, vector<1x4xf32>
      %158 = vector.shape_cast %157 : vector<1x4xf32> to vector<4xf32>
      %159 = vector.shape_cast %158 : vector<4xf32> to vector<1x4xf32>
      %160 = vector.broadcast %159 : vector<1x4xf32> to vector<80x4xf32>
      %161 = arith.addf %156, %160 : vector<80x4xf32>
      %c0_147 = arith.constant 0 : index
      %c0_148 = arith.constant 0 : index
      %c0_149 = arith.constant 0 : index
      %162 = vector.load %arg14[%c0_147, %c0_148, %c0_149] : memref<1x80x4xf32, #tpu.memory_space<vmem>>, vector<1x80x4xf32>
      %163 = vector.shape_cast %162 : vector<1x80x4xf32> to vector<80x4xf32>
      %164 = vector.shape_cast %161 : vector<80x4xf32> to vector<1x80x4xf32>
      tpu.vector_store %arg14[%c0_147, %c0_148, %c0_149], %164 {strides = array<i32>} : memref<1x80x4xf32, #tpu.memory_space<vmem>>, vector<1x80x4xf32>,
    } else {
    }
    return
  }
  func.func @transform_0(%arg0: i32, %arg1: i32) -> (i32, i32, i32) {
    %c0_i32 = arith.constant 0 : i32
    %c0_i32_0 = arith.constant 0 : i32
    %c0_i32_1 = arith.constant 0 : i32
    return %arg0, %c0_i32, %c0_i32_0 : i32, i32, i32
  }
  func.func @transform_1(%arg0: i32, %arg1: i32) -> (i32, i32, i32) {
    %c0_i32 = arith.constant 0 : i32
    %c0_i32_0 = arith.constant 0 : i32
    %c0_i32_1 = arith.constant 0 : i32
    %c0_i32_2 = arith.constant 0 : i32
    return %c0_i32, %c0_i32_0, %c0_i32_1 : i32, i32, i32
  }
  func.func @transform_2(%arg0: i32, %arg1: i32) -> (i32, i32) {
    %c0_i32 = arith.constant 0 : i32
    %c0_i32_0 = arith.constant 0 : i32
    %c0_i32_1 = arith.constant 0 : i32
    return %c0_i32, %c0_i32_0 : i32, i32
  }
  func.func @transform_3(%arg0: i32, %arg1: i32) -> (i32, i32) {
    %c0_i32 = arith.constant 0 : i32
    %c0_i32_0 = arith.constant 0 : i32
    %c0_i32_1 = arith.constant 0 : i32
    return %c0_i32, %c0_i32_0 : i32, i32
  }
  func.func @transform_4(%arg0: i32, %arg1: i32) -> (i32, i32, i32, i32) {
    %c0_i32 = arith.constant 0 : i32
    %c0_i32_0 = arith.constant 0 : i32
    %c0_i32_1 = arith.constant 0 : i32
    %c0_i32_2 = arith.constant 0 : i32
    return %arg1, %c0_i32, %c0_i32_0, %c0_i32_1 : i32, i32, i32, i32
  }
  func.func @transform_5(%arg0: i32, %arg1: i32) -> (i32, i32, i32) {
    %c0_i32 = arith.constant 0 : i32
    %c0_i32_0 = arith.constant 0 : i32
    %c0_i32_1 = arith.constant 0 : i32
    return %arg1, %c0_i32, %c0_i32_0 : i32, i32, i32
  }
  func.func @transform_6(%arg0: i32, %arg1: i32) -> (i32, i32, i32) {
    %c0_i32 = arith.constant 0 : i32
    %c0_i32_0 = arith.constant 0 : i32
    %c0_i32_1 = arith.constant 0 : i32
    return %arg1, %c0_i32, %c0_i32_0 : i32, i32, i32
  }
  func.func @transform_7(%arg0: i32, %arg1: i32) -> (i32, i32, i32, i32) {
    %c0_i32 = arith.constant 0 : i32
    %c0_i32_0 = arith.constant 0 : i32
    %c0_i32_1 = arith.constant 0 : i32
    %c0_i32_2 = arith.constant 0 : i32
    return %arg1, %c0_i32, %c0_i32_0, %c0_i32_1 : i32, i32, i32, i32
  }
  func.func @transform_8(%arg0: i32, %arg1: i32) -> (i32, i32, i32) {
    %c0_i32 = arith.constant 0 : i32
    %c0_i32_0 = arith.constant 0 : i32
    %c0_i32_1 = arith.constant 0 : i32
    return %arg1, %c0_i32, %c0_i32_0 : i32, i32, i32
  }
  func.func @transform_9(%arg0: i32, %arg1: i32) -> (i32, i32, i32) {
    %c0_i32 = arith.constant 0 : i32
    %c0_i32_0 = arith.constant 0 : i32
    %c0_i32_1 = arith.constant 0 : i32
    return %arg1, %c0_i32, %c0_i32_0 : i32, i32, i32
  }
  func.func @transform_10(%arg0: i32, %arg1: i32) -> (i32, i32) {
    %c0_i32 = arith.constant 0 : i32
    %c0_i32_0 = arith.constant 0 : i32
    %c0_i32_1 = arith.constant 0 : i32
    return %c0_i32, %c0_i32_0 : i32, i32
  }
  func.func @transform_11(%arg0: i32, %arg1: i32) -> (i32, i32) {
    %c0_i32 = arith.constant 0 : i32
    %c0_i32_0 = arith.constant 0 : i32
    %c0_i32_1 = arith.constant 0 : i32
    return %c0_i32, %c0_i32_0 : i32, i32
  }
  func.func @transform_12(%arg0: i32, %arg1: i32) -> (i32, i32, i32) {
    %c0_i32 = arith.constant 0 : i32
    %c0_i32_0 = arith.constant 0 : i32
    %c0_i32_1 = arith.constant 0 : i32
    return %arg0, %c0_i32, %c0_i32_0 : i32, i32, i32
  }
}

</mosaic_0001>

<llo_original>
// kernel: residual_tower.1
$region0: #{residual_tower.1}
  #allocation0 [shape = 'u32[]', space=smem, size = 0x4, offset = 0x4, fixed_abs, tag = 'smem constant byte address 0x4 - core index']
  #allocation1 [shape = 'u32[144,128]{1,0:T(1,128)}', space=vmem, size = 0x12000, scoped, tag = 'internal scratch']
  #allocation2 [shape = 'f32[125,256]{1,0:T(8,128)}', space=vmem, size = 0x20000, scoped, tag = 'scratch operand']
  #allocation3 [shape = 'f32[125,256]{1,0:T(8,128)}', space=vmem, size = 0x20000, scoped, tag = 'scratch operand']
  %s0 = inlined_call_operand.vmem [shape: f32[2,120,4], index: 0, kind: input, shape index: {}]
  %s1 = inlined_call_operand.hbm [shape: f32[9,4,256], index: 1, kind: input, shape index: {}]
  %s2 = inlined_call_operand.hbm [shape: f32[1,256], index: 2, kind: input, shape index: {}]
  %s3 = inlined_call_operand.hbm [shape: f32[1,256], index: 3, kind: input, shape index: {}]
  %s4 = inlined_call_operand.hbm [shape: f32[2,9,256,256], index: 4, kind: input, shape index: {}]
  %s5 = inlined_call_operand.hbm [shape: f32[2,1,256], index: 5, kind: input, shape index: {}]
  %s6 = inlined_call_operand.hbm [shape: f32[2,1,256], index: 6, kind: input, shape index: {}]
  %s7 = inlined_call_operand.hbm [shape: f32[2,9,256,256], index: 7, kind: input, shape index: {}]
  %s8 = inlined_call_operand.hbm [shape: f32[2,1,256], index: 8, kind: input, shape index: {}]
  %s9 = inlined_call_operand.hbm [shape: f32[2,1,256], index: 9, kind: input, shape index: {}]
  %s10 = inlined_call_operand.vmem [shape: f32[256,4], index: 10, kind: input, shape index: {}]
  %s11 = inlined_call_operand.hbm [shape: f32[1,4], index: 11, kind: input, shape index: {}]
  %s12 = inlined_call_operand.vmem [shape: f32[2,80,4], index: 12, kind: output, shape index: {}]
  %s13 = sld [smem:[#allocation0]]
  $region129: #{residual_tower.1} parent=0
    _
  %s15 = ssub.s32 1, %s13
  %s16 = scalar_select 0, %s15, %s13
  $region1: #{residual_tower.1} parent=0
    #allocation4 [shape = 'u8[36864]{0}', space=vmem, size = 0x9000, scoped, tag = 'input window, operand 1, single buffered']
    #allocation5 [shape = 's32[2]{0}', space=sflag, size = 0x8, scoped, tag = 'scoped memory for residual_tower.1']
    #allocation6 [shape = 'u8[1024]{0}', space=vmem, size = 0x400, scoped, tag = 'input window, operand 2, single buffered']
    #allocation7 [shape = 's32[1]{0}', space=sflag, size = 0x4, scoped, tag = 'scoped memory for residual_tower.1']
    #allocation8 [shape = 'u8[1024]{0}', space=vmem, size = 0x400, scoped, tag = 'input window, operand 3, single buffered']
    #allocation9 [shape = 'u8[4718592]{0}', space=vmem, size = 0x480000, scoped, tag = 'input window, operand 4']
    #allocation10 [shape = 's32[2]{0}', space=sflag, size = 0x8, scoped, tag = 'scoped memory for residual_tower.1']
    #allocation11 [shape = 'u8[2048]{0}', space=vmem, size = 0x800, scoped, tag = 'input window, operand 5']
    #allocation12 [shape = 'u8[2048]{0}', space=vmem, size = 0x800, scoped, tag = 'input window, operand 6']
    #allocation13 [shape = 's32[2]{0}', space=sflag, size = 0x8, scoped, tag = 'scoped memory for residual_tower.1']
    #allocation14 [shape = 'u8[4718592]{0}', space=vmem, size = 0x480000, scoped, tag = 'input window, operand 7']
    #allocation15 [shape = 'u8[2048]{0}', space=vmem, size = 0x800, scoped, tag = 'input window, operand 8']
    #allocation16 [shape = 's32[2]{0}', space=sflag, size = 0x8, scoped, tag = 'scoped memory for residual_tower.1']
    #allocation17 [shape = 'u8[2048]{0}', space=vmem, size = 0x800, scoped, tag = 'input window, operand 9']
    #allocation18 [shape = 'u8[512]{0}', space=vmem, size = 0x400, scoped, tag = 'input window, operand 11, single buffered']
    #allocation19 [shape = 's32[1]{0}', space=sflag, size = 0x4, scoped, tag = 'scoped memory for residual_tower.1']
    %17 = vsyncpa [#allocation5], 0
    %18 = vsyncpa [#allocation7], 0
    %19 = vsyncpa [#allocation10], 0
    %s20 = scalar_lea.sflag [#allocation10], 1
    %21 = vsyncpa %s20, 0
    %22 = vsyncpa [#allocation13], 0
    %s23 = scalar_lea.sflag [#allocation13], 1
    %24 = vsyncpa %s23, 0
    %25 = vsyncpa [#allocation16], 0
    %s26 = scalar_lea.sflag [#allocation16], 1
    %27 = vsyncpa %s26, 0
    %28 = vsyncpa [#allocation19], 0
    loop: start=0, step=1, limit=6
    $region2: #{residual_tower.1} parent=1 // loop_pre_header
      _
    $region3: #{residual_tower.1} parent=1 // loop_header
      %s30 = sphi 0, %s34
      %p31 = scmp.ge.s32.totalorder %s30, 6
      %s37 = sphi 0, %s49
      %s38 = sphi 0, %s45
      %s39 = sphi 0, %s37
      %s40 = sphi 0, %s38
      %s41 = sphi 0, %s39
      %s42 = sphi 0, %s40
      %s52 = sphi 0, %s54
      %s55 = sphi 0, %s52
      %s56 = sphi 0, %s55
      %s72 = sphi 0, %s56
      %s76 = sphi 0, %s76
      %s78 = sphi 0, %s76
      %s79 = sphi 0, %s78
      %s93 = sphi 0, %s79
      %s97 = sphi 0, %s97
      %s99 = sphi 0, %s97
      %s100 = sphi 0, %s99
      %s114 = sphi 0, %s100
      %s118 = sphi 0, %s118
      %s120 = sphi 0, %s118
      %s121 = sphi 0, %s120
      %s135 = sphi 0, %s121
      %s141 = sphi 0, %s143
      %s144 = sphi 0, %s141
      %s145 = sphi 0, %s144
      %s161 = sphi 0, %s145
      %s167 = sphi 0, %s169
      %s170 = sphi 0, %s167
      %s171 = sphi 0, %s170
      %s187 = sphi 0, %s171
      %s193 = sphi 0, %s195
      %s196 = sphi 0, %s193
      %s197 = sphi 0, %s196
      %s213 = sphi 0, %s197
      %s219 = sphi 0, %s221
      %s222 = sphi 0, %s219
      %s223 = sphi 0, %s222
      %s239 = sphi 0, %s223
      %s245 = sphi 0, %s247
      %s248 = sphi 0, %s245
      %s249 = sphi 0, %s248
      %s265 = sphi 0, %s249
      %s271 = sphi 0, %s273
      %s274 = sphi 0, %s271
      %s275 = sphi 0, %s274
      %s291 = sphi 0, %s275
      %s295 = sphi 0, %s295
      %s297 = sphi 0, %s295
      %s298 = sphi 0, %s297
      %s312 = sphi 0, %s298
      %s316 = sphi 0, %s316
      %s318 = sphi 0, %s316
      %s319 = sphi 0, %s318
      %s333 = sphi 0, %s319
      %s339 = sphi 0, %s341
      %s342 = sphi 0, %s339
      %s343 = sphi 0, %s342
      %s359 = sphi 0, %s343
    $region4: #{residual_tower.1} parent=1 // loop_header_branch
      %33 = sbr.rel (%p31) target = $region8
    $region5: #{residual_tower.1} parent=1 // loop_body
      %s35 = ssub.s32 %s30, 1
      %s36 = ssub.s32 %s30, 2
      %s43 = sadd.s32 1, %s38
      %p44 = scmp.ge.s32.totalorder %s43, 2
      %s45 = scalar_select %p44, 0, %s43
      %s46 = sadd.s32 1, %s37
      %s47 = scalar_select %p44, %s46, %s37
      %p48 = scmp.ge.s32.totalorder %s47, 2
      %s49 = scalar_select %p48, 0, %s47
      %s50 = ssub.s32 %s37, %s49
      %p51 = scmp.eq.s32.totalorder %s50, 0
      %s53 = sadd.s32 %s52, 1
      %s54 = scalar_select %p51, %s52, %s53
      %p57 = pneg %p51
      %p58 = scmp.eq.s32.totalorder %s30, 3
      %p59 = por %p57, %p58
      %p60 = scmp.ne.s32.totalorder %s52, %s55
      %p61 = scmp.eq.s32.totalorder %s30, 0
      %p62 = por %p60, %p61
      %p63 = scmp.ne.s32.totalorder %s52, %s55
      %p64 = scmp.eq.s32.totalorder %s35, 3
      %p65 = por %p63, %p64
      %p66 = scmp.ne.s32.totalorder %s55, %s56
      %p67 = scmp.eq.s32.totalorder %s35, 0
      %p68 = por %p66, %p67
      %p69 = scmp.ne.s32.totalorder %s55, %s56
      %p70 = scmp.eq.s32.totalorder %s36, 3
      %p71 = por %p69, %p70
      %p73 = scmp.ne.s32.totalorder %s56, %s72
      %p74 = scmp.eq.s32.totalorder %s36, 0
      %p75 = por %p73, %p74
      %s77 = sadd.s32 %s76, 1
      %p80 = scmp.eq.s32.totalorder %s30, 3
      %p81 = scmp.ne.s32.totalorder %s76, %s78
      %p82 = scmp.eq.s32.totalorder %s30, 0
      %p83 = por %p81, %p82
      %p84 = scmp.ne.s32.totalorder %s76, %s78
      %p85 = scmp.eq.s32.totalorder %s35, 3
      %p86 = por %p84, %p85
      %p87 = scmp.ne.s32.totalorder %s78, %s79
      %p88 = scmp.eq.s32.totalorder %s35, 0
      %p89 = por %p87, %p88
      %p90 = scmp.ne.s32.totalorder %s78, %s79
      %p91 = scmp.eq.s32.totalorder %s36, 3
      %p92 = por %p90, %p91
      %p94 = scmp.ne.s32.totalorder %s79, %s93
      %p95 = scmp.eq.s32.totalorder %s36, 0
      %p96 = por %p94, %p95
      %s98 = sadd.s32 %s97, 1
      %p101 = scmp.eq.s32.totalorder %s30, 3
      %p102 = scmp.ne.s32.totalorder %s97, %s99
      %p103 = scmp.eq.s32.totalorder %s30, 0
      %p104 = por %p102, %p103
      %p105 = scmp.ne.s32.totalorder %s97, %s99
      %p106 = scmp.eq.s32.totalorder %s35, 3
      %p107 = por %p105, %p106
      %p108 = scmp.ne.s32.totalorder %s99, %s100
      %p109 = scmp.eq.s32.totalorder %s35, 0
      %p110 = por %p108, %p109
      %p111 = scmp.ne.s32.totalorder %s99, %s100
      %p112 = scmp.eq.s32.totalorder %s36, 3
      %p113 = por %p111, %p112
      %p115 = scmp.ne.s32.totalorder %s100, %s114
      %p116 = scmp.eq.s32.totalorder %s36, 0
      %p117 = por %p115, %p116
      %s119 = sadd.s32 %s118, 1
      %p122 = scmp.eq.s32.totalorder %s30, 3
      %p123 = scmp.ne.s32.totalorder %s118, %s120
      %p124 = scmp.eq.s32.totalorder %s30, 0
      %p125 = por %p123, %p124
      %p126 = scmp.ne.s32.totalorder %s118, %s120
      %p127 = scmp.eq.s32.totalorder %s35, 3
      %p128 = por %p126, %p127
      %p129 = scmp.ne.s32.totalorder %s120, %s121
      %p130 = scmp.eq.s32.totalorder %s35, 0
      %p131 = por %p129, %p130
      %p132 = scmp.ne.s32.totalorder %s120, %s121
      %p133 = scmp.eq.s32.totalorder %s36, 3
      %p134 = por %p132, %p133
      %p136 = scmp.ne.s32.totalorder %s121, %s135
      %p137 = scmp.eq.s32.totalorder %s36, 0
      %p138 = por %p136, %p137
      %s139 = ssub.s32 %s38, %s45
      %p140 = scmp.eq.s32.totalorder %s139, 0
      %s142 = sadd.s32 %s141, 1
      %s143 = scalar_select %p140, %s141, %s142
      %p146 = pneg %p140
      %p147 = scmp.eq.s32.totalorder %s30, 3
      %p148 = por %p146, %p147
      %p149 = scmp.ne.s32.totalorder %s141, %s144
      %p150 = scmp.eq.s32.totalorder %s30, 0
      %p151 = por %p149, %p150
      %p152 = scmp.ne.s32.totalorder %s141, %s144
      %p153 = scmp.eq.s32.totalorder %s35, 3
      %p154 = por %p152, %p153
      %p155 = scmp.ne.s32.totalorder %s144, %s145
      %p156 = scmp.eq.s32.totalorder %s35, 0
      %p157 = por %p155, %p156
      %p158 = scmp.ne.s32.totalorder %s144, %s145
      %p159 = scmp.eq.s32.totalorder %s36, 3
      %p160 = por %p158, %p159
      %p162 = scmp.ne.s32.totalorder %s145, %s161
      %p163 = scmp.eq.s32.totalorder %s36, 0
      %p164 = por %p162, %p163
      %s165 = ssub.s32 %s38, %s45
      %p166 = scmp.eq.s32.totalorder %s165, 0
      %s168 = sadd.s32 %s167, 1
      %s169 = scalar_select %p166, %s167, %s168
      %p172 = pneg %p166
      %p173 = scmp.eq.s32.totalorder %s30, 3
      %p174 = por %p172, %p173
      %p175 = scmp.ne.s32.totalorder %s167, %s170
      %p176 = scmp.eq.s32.totalorder %s30, 0
      %p177 = por %p175, %p176
      %p178 = scmp.ne.s32.totalorder %s167, %s170
      %p179 = scmp.eq.s32.totalorder %s35, 3
      %p180 = por %p178, %p179
      %p181 = scmp.ne.s32.totalorder %s170, %s171
      %p182 = scmp.eq.s32.totalorder %s35, 0
      %p183 = por %p181, %p182
      %p184 = scmp.ne.s32.totalorder %s170, %s171
      %p185 = scmp.eq.s32.totalorder %s36, 3
      %p186 = por %p184, %p185
      %p188 = scmp.ne.s32.totalorder %s171, %s187
      %p189 = scmp.eq.s32.totalorder %s36, 0
      %p190 = por %p188, %p189
      %s191 = ssub.s32 %s38, %s45
      %p192 = scmp.eq.s32.totalorder %s191, 0
      %s194 = sadd.s32 %s193, 1
      %s195 = scalar_select %p192, %s193, %s194
      %p198 = pneg %p192
      %p199 = scmp.eq.s32.totalorder %s30, 3
      %p200 = por %p198, %p199
      %p201 = scmp.ne.s32.totalorder %s193, %s196
      %p202 = scmp.eq.s32.totalorder %s30, 0
      %p203 = por %p201, %p202
      %p204 = scmp.ne.s32.totalorder %s193, %s196
      %p205 = scmp.eq.s32.totalorder %s35, 3
      %p206 = por %p204, %p205
      %p207 = scmp.ne.s32.totalorder %s196, %s197
      %p208 = scmp.eq.s32.totalorder %s35, 0
      %p209 = por %p207, %p208
      %p210 = scmp.ne.s32.totalorder %s196, %s197
      %p211 = scmp.eq.s32.totalorder %s36, 3
      %p212 = por %p210, %p211
      %p214 = scmp.ne.s32.totalorder %s197, %s213
      %p215 = scmp.eq.s32.totalorder %s36, 0
      %p216 = por %p214, %p215
      %s217 = ssub.s32 %s38, %s45
      %p218 = scmp.eq.s32.totalorder %s217, 0
      %s220 = sadd.s32 %s219, 1
      %s221 = scalar_select %p218, %s219, %s220
      %p224 = pneg %p218
      %p225 = scmp.eq.s32.totalorder %s30, 3
      %p226 = por %p224, %p225
      %p227 = scmp.ne.s32.totalorder %s219, %s222
      %p228 = scmp.eq.s32.totalorder %s30, 0
      %p229 = por %p227, %p228
      %p230 = scmp.ne.s32.totalorder %s219, %s222
      %p231 = scmp.eq.s32.totalorder %s35, 3
      %p232 = por %p230, %p231
      %p233 = scmp.ne.s32.totalorder %s222, %s223
      %p234 = scmp.eq.s32.totalorder %s35, 0
      %p235 = por %p233, %p234
      %p236 = scmp.ne.s32.totalorder %s222, %s223
      %p237 = scmp.eq.s32.totalorder %s36, 3
      %p238 = por %p236, %p237
      %p240 = scmp.ne.s32.totalorder %s223, %s239
      %p241 = scmp.eq.s32.totalorder %s36, 0
      %p242 = por %p240, %p241
      %s243 = ssub.s32 %s38, %s45
      %p244 = scmp.eq.s32.totalorder %s243, 0
      %s246 = sadd.s32 %s245, 1
      %s247 = scalar_select %p244, %s245, %s246
      %p250 = pneg %p244
      %p251 = scmp.eq.s32.totalorder %s30, 3
      %p252 = por %p250, %p251
      %p253 = scmp.ne.s32.totalorder %s245, %s248
      %p254 = scmp.eq.s32.totalorder %s30, 0
      %p255 = por %p253, %p254
      %p256 = scmp.ne.s32.totalorder %s245, %s248
      %p257 = scmp.eq.s32.totalorder %s35, 3
      %p258 = por %p256, %p257
      %p259 = scmp.ne.s32.totalorder %s248, %s249
      %p260 = scmp.eq.s32.totalorder %s35, 0
      %p261 = por %p259, %p260
      %p262 = scmp.ne.s32.totalorder %s248, %s249
      %p263 = scmp.eq.s32.totalorder %s36, 3
      %p264 = por %p262, %p263
      %p266 = scmp.ne.s32.totalorder %s249, %s265
      %p267 = scmp.eq.s32.totalorder %s36, 0
      %p268 = por %p266, %p267
      %s269 = ssub.s32 %s38, %s45
      %p270 = scmp.eq.s32.totalorder %s269, 0
      %s272 = sadd.s32 %s271, 1
      %s273 = scalar_select %p270, %s271, %s272
      %p276 = pneg %p270
      %p277 = scmp.eq.s32.totalorder %s30, 3
      %p278 = por %p276, %p277
      %p279 = scmp.ne.s32.totalorder %s271, %s274
      %p280 = scmp.eq.s32.totalorder %s30, 0
      %p281 = por %p279, %p280
      %p282 = scmp.ne.s32.totalorder %s271, %s274
      %p283 = scmp.eq.s32.totalorder %s35, 3
      %p284 = por %p282, %p283
      %p285 = scmp.ne.s32.totalorder %s274, %s275
      %p286 = scmp.eq.s32.totalorder %s35, 0
      %p287 = por %p285, %p286
      %p288 = scmp.ne.s32.totalorder %s274, %s275
      %p289 = scmp.eq.s32.totalorder %s36, 3
      %p290 = por %p288, %p289
      %p292 = scmp.ne.s32.totalorder %s275, %s291
      %p293 = scmp.eq.s32.totalorder %s36, 0
      %p294 = por %p292, %p293
      %s296 = sadd.s32 %s295, 1
      %p299 = scmp.eq.s32.totalorder %s30, 3
      %p300 = scmp.ne.s32.totalorder %s295, %s297
      %p301 = scmp.eq.s32.totalorder %s30, 0
      %p302 = por %p300, %p301
      %p303 = scmp.ne.s32.totalorder %s295, %s297
      %p304 = scmp.eq.s32.totalorder %s35, 3
      %p305 = por %p303, %p304
      %p306 = scmp.ne.s32.totalorder %s297, %s298
      %p307 = scmp.eq.s32.totalorder %s35, 0
      %p308 = por %p306, %p307
      %p309 = scmp.ne.s32.totalorder %s297, %s298
      %p310 = scmp.eq.s32.totalorder %s36, 3
      %p311 = por %p309, %p310
      %p313 = scmp.ne.s32.totalorder %s298, %s312
      %p314 = scmp.eq.s32.totalorder %s36, 0
      %p315 = por %p313, %p314
      %s317 = sadd.s32 %s316, 1
      %p320 = scmp.eq.s32.totalorder %s30, 3
      %p321 = scmp.ne.s32.totalorder %s316, %s318
      %p322 = scmp.eq.s32.totalorder %s30, 0
      %p323 = por %p321, %p322
      %p324 = scmp.ne.s32.totalorder %s316, %s318
      %p325 = scmp.eq.s32.totalorder %s35, 3
      %p326 = por %p324, %p325
      %p327 = scmp.ne.s32.totalorder %s318, %s319
      %p328 = scmp.eq.s32.totalorder %s35, 0
      %p329 = por %p327, %p328
      %p330 = scmp.ne.s32.totalorder %s318, %s319
      %p331 = scmp.eq.s32.totalorder %s36, 3
      %p332 = por %p330, %p331
      %p334 = scmp.ne.s32.totalorder %s319, %s333
      %p335 = scmp.eq.s32.totalorder %s36, 0
      %p336 = por %p334, %p335
      %s337 = ssub.s32 %s37, %s49
      %p338 = scmp.eq.s32.totalorder %s337, 0
      %s340 = sadd.s32 %s339, 1
      %s341 = scalar_select %p338, %s339, %s340
      %p344 = pneg %p338
      %p345 = scmp.eq.s32.totalorder %s30, 3
      %p346 = por %p344, %p345
      %p347 = scmp.ne.s32.totalorder %s339, %s342
      %p348 = scmp.eq.s32.totalorder %s30, 0
      %p349 = por %p347, %p348
      %p350 = scmp.ne.s32.totalorder %s339, %s342
      %p351 = scmp.eq.s32.totalorder %s35, 3
      %p352 = por %p350, %p351
      %p353 = scmp.ne.s32.totalorder %s342, %s343
      %p354 = scmp.eq.s32.totalorder %s35, 0
      %p355 = por %p353, %p354
      %p356 = scmp.ne.s32.totalorder %s342, %s343
      %p357 = scmp.eq.s32.totalorder %s36, 3
      %p358 = por %p356, %p357
      %p360 = scmp.ne.s32.totalorder %s343, %s359
      %p361 = scmp.eq.s32.totalorder %s36, 0
      %p362 = por %p360, %p361
      %p363 = scmp.le.s32.totalorder 1, %s30
      %p364 = scmp.lt.s32.totalorder %s30, 5
      %p365 = pnand %p363, %p364
      %p366 = pneg %p365
      // Predicated region
      $region9: #{residual_tower.1} parent=5 // pred_check
        _
      $region10: #{residual_tower.1} parent=5 // pred_check_branch
        %368 = sbr.rel (%p365) target = $region12
      $region11: #{residual_tower.1} parent=5 // pred_region
        %s369 = ssub.s32 %s30, 1
        // Predicated region
        $region13: #{residual_tower.1} parent=11 // pred_check
          %p370 = pneg %p89
        $region14: #{residual_tower.1} parent=11 // pred_check_branch
          %372 = sbr.rel (%p370) target = $region16
        $region15: #{residual_tower.1} parent=11 // pred_region
          %s374 = ssub.s32 1152, 1152
          %375 = vsyncadd [#allocation5], %s374
          %s376 = sshll.u32 [#allocation4], 4
          %s377 = int_to_ptr.vmem [resolvable:$true] %s376
          %382 = dma.hbm_to_vmem [thread:$0]  %s1, 1152, %s377, [#allocation5], 128, 128, 8
        $region16: #{residual_tower.1} parent=11 // pred_fallthru
          _
        // Predicated region
        $region17: #{residual_tower.1} parent=11 // pred_check
          %p383 = pneg %p110
        $region18: #{residual_tower.1} parent=11 // pred_check_branch
          %385 = sbr.rel (%p383) target = $region20
        $region19: #{residual_tower.1} parent=11 // pred_region
          %s387 = ssub.s32 32, 32
          %388 = vsyncadd [#allocation7], %s387
          %s390 = sshll.u32 [#allocation6], 4
          %s391 = int_to_ptr.vmem [resolvable:$true] %s390
          %393 = dma.hbm_to_vmem [thread:$0]  %s2, 32, %s391, [#allocation7]
        $region20: #{residual_tower.1} parent=11 // pred_fallthru
          _
        // Predicated region
        $region21: #{residual_tower.1} parent=11 // pred_check
          %p394 = pneg %p131
        $region22: #{residual_tower.1} parent=11 // pred_check_branch
          %396 = sbr.rel (%p394) target = $region24
        $region23: #{residual_tower.1} parent=11 // pred_region
          %s398 = ssub.s32 32, 32
          %399 = vsyncadd [#allocation7], %s398
          %s401 = sshll.u32 [#allocation8], 4
          %s402 = int_to_ptr.vmem [resolvable:$true] %s401
          %404 = dma.hbm_to_vmem [thread:$0]  %s3, 32, %s402, [#allocation7]
        $region24: #{residual_tower.1} parent=11 // pred_fallthru
          _
        // Predicated region
        $region25: #{residual_tower.1} parent=11 // pred_check
          %p405 = pneg %p308
        $region26: #{residual_tower.1} parent=11 // pred_check_branch
          %407 = sbr.rel (%p405) target = $region28
        $region27: #{residual_tower.1} parent=11 // pred_region
          _
        $region28: #{residual_tower.1} parent=11 // pred_fallthru
          _
        // Predicated region
        $region29: #{residual_tower.1} parent=11 // pred_check
          %p408 = pneg %p329
        $region30: #{residual_tower.1} parent=11 // pred_check_branch
          %410 = sbr.rel (%p408) target = $region32
        $region31: #{residual_tower.1} parent=11 // pred_region
          %s412 = ssub.s32 16, 16
          %413 = vsyncadd [#allocation19], %s412
          %s415 = sshll.u32 [#allocation18], 4
          %s416 = int_to_ptr.vmem [resolvable:$true] %s415
          %418 = dma.hbm_to_vmem [thread:$0]  %s11, 16, %s416, [#allocation19]
        $region32: #{residual_tower.1} parent=11 // pred_fallthru
          _
      $region12: #{residual_tower.1} parent=5 // pred_fallthru
        _
      %p419 = scmp.lt.s32.totalorder %s30, 4
      // Predicated region
      $region33: #{residual_tower.1} parent=5 // pred_check
        %p420 = pneg %p419
      $region34: #{residual_tower.1} parent=5 // pred_check_branch
        %422 = sbr.rel (%p420) target = $region36
      $region35: #{residual_tower.1} parent=5 // pred_region
        // Predicated region
        $region37: #{residual_tower.1} parent=35 // pred_check
          %p423 = pneg %p62
        $region38: #{residual_tower.1} parent=35 // pred_check_branch
          %425 = sbr.rel (%p423) target = $region40
        $region39: #{residual_tower.1} parent=35 // pred_region
          %p426 = scmp.lt.s32.totalorder %s37, 1
          %s427 = scalar_select %p426, %s37, 1
          %s428 = smul.addr %s427, 15
          %s429 = smul.addr %s428, 8
          %s430 = scalar_lea.vmem %s0, %s429
        $region40: #{residual_tower.1} parent=35 // pred_fallthru
          _
        // Predicated region
        $region41: #{residual_tower.1} parent=35 // pred_check
          %p431 = pneg %p151
        $region42: #{residual_tower.1} parent=35 // pred_check_branch
          %433 = sbr.rel (%p431) target = $region44
        $region43: #{residual_tower.1} parent=35 // pred_region
          %s434 = sand.u32 %s30, 1
          %s435 = scalar_lea.sflag [#allocation10], %s434
          %s436 = sand.u32 %s141, 1
          %s437 = smul.addr %s436, 4608
          %s438 = scalar_lea.vmem [#allocation9], %s437
          %s440 = ssub.s32 73728, 73728
          %441 = vsyncadd %s435, %s440
          %s442 = smul.addr %s38, 576
          %s443 = smul.addr %s442, 128
          %s444 = scalar_lea.hbm %s4, %s443
          %s445 = sshll.u32 %s438, 4
          %s446 = int_to_ptr.vmem [resolvable:$true] %s445
          %451 = dma.hbm_to_vmem [thread:$0]  %s444, 73728, %s446, %s435, 256, 256, 16
        $region44: #{residual_tower.1} parent=35 // pred_fallthru
          _
        // Predicated region
        $region45: #{residual_tower.1} parent=35 // pred_check
          %p452 = pneg %p177
        $region46: #{residual_tower.1} parent=35 // pred_check_branch
          %454 = sbr.rel (%p452) target = $region48
        $region47: #{residual_tower.1} parent=35 // pred_region
          %s455 = sand.u32 %s30, 1
          %s456 = scalar_lea.sflag [#allocation10], %s455
          %s457 = sand.u32 %s167, 1
          %s458 = smul.addr %s457, 2
          %s459 = scalar_lea.vmem [#allocation11], %s458
          %s461 = ssub.s32 32, 32
          %462 = vsyncadd %s456, %s461
          %s463 = smul.addr %s38, 2
          %s464 = smul.addr %s463, 16
          %s465 = scalar_lea.hbm %s5, %s464
          %s467 = sshll.u32 %s459, 4
          %s468 = int_to_ptr.vmem [resolvable:$true] %s467
          %470 = dma.hbm_to_vmem [thread:$0]  %s465, 32, %s468, %s456
        $region48: #{residual_tower.1} parent=35 // pred_fallthru
          _
        // Predicated region
        $region49: #{residual_tower.1} parent=35 // pred_check
          %p471 = pneg %p203
        $region50: #{residual_tower.1} parent=35 // pred_check_branch
          %473 = sbr.rel (%p471) target = $region52
        $region51: #{residual_tower.1} parent=35 // pred_region
          %s474 = sand.u32 %s30, 1
          %s475 = scalar_lea.sflag [#allocation13], %s474
          %s476 = sand.u32 %s193, 1
          %s477 = smul.addr %s476, 2
          %s478 = scalar_lea.vmem [#allocation12], %s477
          %s480 = ssub.s32 32, 32
          %481 = vsyncadd %s475, %s480
          %s482 = smul.addr %s38, 2
          %s483 = smul.addr %s482, 16
          %s484 = scalar_lea.hbm %s6, %s483
          %s486 = sshll.u32 %s478, 4
          %s487 = int_to_ptr.vmem [resolvable:$true] %s486
          %489 = dma.hbm_to_vmem [thread:$0]  %s484, 32, %s487, %s475
        $region52: #{residual_tower.1} parent=35 // pred_fallthru
          _
        // Predicated region
        $region53: #{residual_tower.1} parent=35 // pred_check
          %p490 = pneg %p229
        $region54: #{residual_tower.1} parent=35 // pred_check_branch
          %492 = sbr.rel (%p490) target = $region56
        $region55: #{residual_tower.1} parent=35 // pred_region
          %s493 = sand.u32 %s30, 1
          %s494 = scalar_lea.sflag [#allocation13], %s493
          %s495 = sand.u32 %s219, 1
          %s496 = smul.addr %s495, 4608
          %s497 = scalar_lea.vmem [#allocation14], %s496
          %s499 = ssub.s32 73728, 73728
          %500 = vsyncadd %s494, %s499
          %s501 = smul.addr %s38, 576
          %s502 = smul.addr %s501, 128
          %s503 = scalar_lea.hbm %s7, %s502
          %s504 = sshll.u32 %s497, 4
          %s505 = int_to_ptr.vmem [resolvable:$true] %s504
          %510 = dma.hbm_to_vmem [thread:$0]  %s503, 73728, %s505, %s494, 256, 256, 16
        $region56: #{residual_tower.1} parent=35 // pred_fallthru
          _
        // Predicated region
        $region57: #{residual_tower.1} parent=35 // pred_check
          %p511 = pneg %p255
        $region58: #{residual_tower.1} parent=35 // pred_check_branch
          %513 = sbr.rel (%p511) target = $region60
        $region59: #{residual_tower.1} parent=35 // pred_region
          %s514 = sand.u32 %s30, 1
          %s515 = scalar_lea.sflag [#allocation16], %s514
          %s516 = sand.u32 %s245, 1
          %s517 = smul.addr %s516, 2
          %s518 = scalar_lea.vmem [#allocation15], %s517
          %s520 = ssub.s32 32, 32
          %521 = vsyncadd %s515, %s520
          %s522 = smul.addr %s38, 2
          %s523 = smul.addr %s522, 16
          %s524 = scalar_lea.hbm %s8, %s523
          %s526 = sshll.u32 %s518, 4
          %s527 = int_to_ptr.vmem [resolvable:$true] %s526
          %529 = dma.hbm_to_vmem [thread:$0]  %s524, 32, %s527, %s515
        $region60: #{residual_tower.1} parent=35 // pred_fallthru
          _
        // Predicated region
        $region61: #{residual_tower.1} parent=35 // pred_check
          %p530 = pneg %p281
        $region62: #{residual_tower.1} parent=35 // pred_check_branch
          %532 = sbr.rel (%p530) target = $region64
        $region63: #{residual_tower.1} parent=35 // pred_region
          %s533 = sand.u32 %s30, 1
          %s534 = scalar_lea.sflag [#allocation16], %s533
          %s535 = sand.u32 %s271, 1
          %s536 = smul.addr %s535, 2
          %s537 = scalar_lea.vmem [#allocation17], %s536
          %s539 = ssub.s32 32, 32
          %540 = vsyncadd %s534, %s539
          %s541 = smul.addr %s38, 2
          %s542 = smul.addr %s541, 16
          %s543 = scalar_lea.hbm %s9, %s542
          %s545 = sshll.u32 %s537, 4
          %s546 = int_to_ptr.vmem [resolvable:$true] %s545
          %548 = dma.hbm_to_vmem [thread:$0]  %s543, 32, %s546, %s534
        $region64: #{residual_tower.1} parent=35 // pred_fallthru
          _
      $region36: #{residual_tower.1} parent=5 // pred_fallthru
        _
      %p549 = scmp.le.s32.totalorder 1, %s30
      %p550 = scmp.lt.s32.totalorder %s30, 5
      %p551 = pnand %p549, %p550
      %p552 = pneg %p551
      // Predicated region
      $region65: #{residual_tower.1} parent=5 // pred_check
        _
      $region66: #{residual_tower.1} parent=5 // pred_check_branch
        %554 = sbr.rel (%p551) target = $region68
      $region67: #{residual_tower.1} parent=5 // pred_region
        %s555 = ssub.s32 %s30, 1
        // Predicated region
        $region69: #{residual_tower.1} parent=67 // pred_check
          %p556 = pneg %p89
        $region70: #{residual_tower.1} parent=67 // pred_check_branch
          %558 = sbr.rel (%p556) target = $region72
        $region71: #{residual_tower.1} parent=67 // pred_region
          %559 = dma.done [#allocation5], 1152
        $region72: #{residual_tower.1} parent=67 // pred_fallthru
          _
        // Predicated region
        $region73: #{residual_tower.1} parent=67 // pred_check
          %p560 = pneg %p110
        $region74: #{residual_tower.1} parent=67 // pred_check_branch
          %562 = sbr.rel (%p560) target = $region76
        $region75: #{residual_tower.1} parent=67 // pred_region
          %563 = dma.done [#allocation7], 32
        $region76: #{residual_tower.1} parent=67 // pred_fallthru
          _
        // Predicated region
        $region77: #{residual_tower.1} parent=67 // pred_check
          %p564 = pneg %p131
        $region78: #{residual_tower.1} parent=67 // pred_check_branch
          %566 = sbr.rel (%p564) target = $region80
        $region79: #{residual_tower.1} parent=67 // pred_region
          %567 = dma.done [#allocation7], 32
        $region80: #{residual_tower.1} parent=67 // pred_fallthru
          _
        %s568 = sand.u32 %s35, 1
        %s569 = scalar_lea.sflag [#allocation10], %s568
        %s570 = sand.u32 %s144, 1
        %s571 = smul.addr %s570, 4608
        %s572 = scalar_lea.vmem [#allocation9], %s571
        // Predicated region
        $region81: #{residual_tower.1} parent=67 // pred_check
          %p573 = pneg %p157
        $region82: #{residual_tower.1} parent=67 // pred_check_branch
          %575 = sbr.rel (%p573) target = $region84
        $region83: #{residual_tower.1} parent=67 // pred_region
          %576 = dma.done %s569, 73728
        $region84: #{residual_tower.1} parent=67 // pred_fallthru
          _
        %s577 = sand.u32 %s35, 1
        %s578 = scalar_lea.sflag [#allocation10], %s577
        %s579 = sand.u32 %s170, 1
        %s580 = smul.addr %s579, 2
        %s581 = scalar_lea.vmem [#allocation11], %s580
        // Predicated region
        $region85: #{residual_tower.1} parent=67 // pred_check
          %p582 = pneg %p183
        $region86: #{residual_tower.1} parent=67 // pred_check_branch
          %584 = sbr.rel (%p582) target = $region88
        $region87: #{residual_tower.1} parent=67 // pred_region
          %585 = dma.done %s578, 32
        $region88: #{residual_tower.1} parent=67 // pred_fallthru
          _
        %s586 = sand.u32 %s35, 1
        %s587 = scalar_lea.sflag [#allocation13], %s586
        %s588 = sand.u32 %s196, 1
        %s589 = smul.addr %s588, 2
        %s590 = scalar_lea.vmem [#allocation12], %s589
        // Predicated region
        $region89: #{residual_tower.1} parent=67 // pred_check
          %p591 = pneg %p209
        $region90: #{residual_tower.1} parent=67 // pred_check_branch
          %593 = sbr.rel (%p591) target = $region92
        $region91: #{residual_tower.1} parent=67 // pred_region
          %594 = dma.done %s587, 32
        $region92: #{residual_tower.1} parent=67 // pred_fallthru
          _
        %s595 = sand.u32 %s35, 1
        %s596 = scalar_lea.sflag [#allocation13], %s595
        %s597 = sand.u32 %s222, 1
        %s598 = smul.addr %s597, 4608
        %s599 = scalar_lea.vmem [#allocation14], %s598
        // Predicated region
        $region93: #{residual_tower.1} parent=67 // pred_check
          %p600 = pneg %p235
        $region94: #{residual_tower.1} parent=67 // pred_check_branch
          %602 = sbr.rel (%p600) target = $region96
        $region95: #{residual_tower.1} parent=67 // pred_region
          %603 = dma.done %s596, 73728
        $region96: #{residual_tower.1} parent=67 // pred_fallthru
          _
        %s604 = sand.u32 %s35, 1
        %s605 = scalar_lea.sflag [#allocation16], %s604
        %s606 = sand.u32 %s248, 1
        %s607 = smul.addr %s606, 2
        %s608 = scalar_lea.vmem [#allocation15], %s607
        // Predicated region
        $region97: #{residual_tower.1} parent=67 // pred_check
          %p609 = pneg %p261
        $region98: #{residual_tower.1} parent=67 // pred_check_branch
          %611 = sbr.rel (%p609) target = $region100
        $region99: #{residual_tower.1} parent=67 // pred_region
          %612 = dma.done %s605, 32
        $region100: #{residual_tower.1} parent=67 // pred_fallthru
          _
        %s613 = sand.u32 %s35, 1
        %s614 = scalar_lea.sflag [#allocation16], %s613
        %s615 = sand.u32 %s274, 1
        %s616 = smul.addr %s615, 2
        %s617 = scalar_lea.vmem [#allocation17], %s616
        // Predicated region
        $region101: #{residual_tower.1} parent=67 // pred_check
          %p618 = pneg %p287
        $region102: #{residual_tower.1} parent=67 // pred_check_branch
          %620 = sbr.rel (%p618) target = $region104
        $region103: #{residual_tower.1} parent=67 // pred_region
          %621 = dma.done %s614, 32
        $region104: #{residual_tower.1} parent=67 // pred_fallthru
          _
        // Predicated region
        $region105: #{residual_tower.1} parent=67 // pred_check
          %p622 = pneg %p329
        $region106: #{residual_tower.1} parent=67 // pred_check_branch
          %624 = sbr.rel (%p622) target = $region108
        $region107: #{residual_tower.1} parent=67 // pred_region
          %625 = dma.done [#allocation19], 16
        $region108: #{residual_tower.1} parent=67 // pred_fallthru
          _
        %p626 = scmp.lt.s32.totalorder %s39, 1
        %s627 = scalar_select %p626, %s39, 1
        %s628 = smul.addr %s627, 15
        %s629 = smul.addr %s628, 8
        %s630 = scalar_lea.vmem %s0, %s629
        %p631 = pneg %p68
        %p632 = pneg %p65
        %p633 = pneg %p89
        %p634 = pneg %p86
        %p635 = pneg %p110
        %p636 = pneg %p107
        %p637 = pneg %p131
        %p638 = pneg %p128
        %s639 = sand.u32 %s35, 1
        %s640 = scalar_lea.sflag [#allocation10], %s639
        %s641 = sand.u32 %s144, 1
        %s642 = smul.addr %s641, 4608
        %s643 = scalar_lea.vmem [#allocation9], %s642
        %p644 = pneg %p157
        %p645 = pneg %p154
        %s646 = sand.u32 %s35, 1
        %s647 = scalar_lea.sflag [#allocation10], %s646
        %s648 = sand.u32 %s170, 1
        %s649 = smul.addr %s648, 2
        %s650 = scalar_lea.vmem [#allocation11], %s649
        %p651 = pneg %p183
        %p652 = pneg %p180
        %s653 = sand.u32 %s35, 1
        %s654 = scalar_lea.sflag [#allocation13], %s653
        %s655 = sand.u32 %s196, 1
        %s656 = smul.addr %s655, 2
        %s657 = scalar_lea.vmem [#allocation12], %s656
        %p658 = pneg %p209
        %p659 = pneg %p206
        %s660 = sand.u32 %s35, 1
        %s661 = scalar_lea.sflag [#allocation13], %s660
        %s662 = sand.u32 %s222, 1
        %s663 = smul.addr %s662, 4608
        %s664 = scalar_lea.vmem [#allocation14], %s663
        %p665 = pneg %p235
        %p666 = pneg %p232
        %s667 = sand.u32 %s35, 1
        %s668 = scalar_lea.sflag [#allocation16], %s667
        %s669 = sand.u32 %s248, 1
        %s670 = smul.addr %s669, 2
        %s671 = scalar_lea.vmem [#allocation15], %s670
        %p672 = pneg %p261
        %p673 = pneg %p258
        %s674 = sand.u32 %s35, 1
        %s675 = scalar_lea.sflag [#allocation16], %s674
        %s676 = sand.u32 %s274, 1
        %s677 = smul.addr %s676, 2
        %s678 = scalar_lea.vmem [#allocation17], %s677
        %p679 = pneg %p287
        %p680 = pneg %p284
        %p681 = pneg %p308
        %p682 = pneg %p305
        %p683 = pneg %p329
        %p684 = pneg %p326
        %p685 = pneg %p355
        %p686 = pneg %p352
        %p687 = scmp.lt.s32.totalorder %s39, 1
        %s688 = scalar_select %p687, %s39, 1
        %s689 = smul.addr %s688, 10
        %s690 = smul.addr %s689, 8
        %s691 = scalar_lea.vmem %s12, %s690
        %p692 = scmp.lt.s32.totalorder %s39, 1
        %s693 = scalar_select %p692, %s39, 1
        %s694 = smul.addr %s693, 15
        %s695 = smul.addr %s694, 8
        %s696 = scalar_lea.vmem %s0, %s695
        %p697 = scmp.lt.s32.totalorder %s39, 1
        %s698 = scalar_select %p697, %s39, 1
        %s699 = smul.addr %s698, 10
        %s700 = smul.addr %s699, 8
        %s701 = scalar_lea.vmem %s12, %s700
        %v702 = vlaneseq
        %v703 = vshrl.u32 %v702, 7
        %v704 = vadd.s32 %v703, 8
        %v705 = vadd.s32 %v703, 16
        %v706 = vadd.s32 %v703, 24
        %v707 = vadd.s32 %v703, 32
        %v708 = vadd.s32 %v703, 40
        %v709 = vadd.s32 %v703, 48
        %v710 = vadd.s32 %v703, 56
        %v711 = vadd.s32 %v703, 64
        %v712 = vadd.s32 %v703, 72
        %vm713 = vcmp.lt.s32.totalorder %v703, 0
        %v714 = vsub.s32 0, %v703
        %v715 = vsel %vm713, %v714, %v703
        %v716 = vmul.u32.u64.compose %v715, 3435973837
        %v717 = vextract.low.u32 %v716
        %v718 = vextract.high.u32 %v716
        %v719 = vshrl.u32 %v718, 3
        %v720 = vmul.u32 %v719, 10
        %v721 = vsub.s32 %v715, %v720
        %v722 = vsub.s32 0, %v721
        %v723 = vsel %vm713, %v722, %v721
        %vm724 = vcmp.lt.s32.totalorder %v704, 0
        %v725 = vsub.s32 0, %v704
        %v726 = vsel %vm724, %v725, %v704
        %v727 = vmul.u32.u64.compose %v726, 3435973837
        %v728 = vextract.low.u32 %v727
        %v729 = vextract.high.u32 %v727
        %v730 = vshrl.u32 %v729, 3
        %v731 = vmul.u32 %v730, 10
        %v732 = vsub.s32 %v726, %v731
        %v733 = vsub.s32 0, %v732
        %v734 = vsel %vm724, %v733, %v732
        %vm735 = vcmp.lt.s32.totalorder %v705, 0
        %v736 = vsub.s32 0, %v705
        %v737 = vsel %vm735, %v736, %v705
        %v738 = vmul.u32.u64.compose %v737, 3435973837
        %v739 = vextract.low.u32 %v738
        %v740 = vextract.high.u32 %v738
        %v741 = vshrl.u32 %v740, 3
        %v742 = vmul.u32 %v741, 10
        %v743 = vsub.s32 %v737, %v742
        %v744 = vsub.s32 0, %v743
        %v745 = vsel %vm735, %v744, %v743
        %vm746 = vcmp.lt.s32.totalorder %v706, 0
        %v747 = vsub.s32 0, %v706
        %v748 = vsel %vm746, %v747, %v706
        %v749 = vmul.u32.u64.compose %v748, 3435973837
        %v750 = vextract.low.u32 %v749
        %v751 = vextract.high.u32 %v749
        %v752 = vshrl.u32 %v751, 3
        %v753 = vmul.u32 %v752, 10
        %v754 = vsub.s32 %v748, %v753
        %v755 = vsub.s32 0, %v754
        %v756 = vsel %vm746, %v755, %v754
        %vm757 = vcmp.lt.s32.totalorder %v707, 0
        %v758 = vsub.s32 0, %v707
        %v759 = vsel %vm757, %v758, %v707
        %v760 = vmul.u32.u64.compose %v759, 3435973837
        %v761 = vextract.low.u32 %v760
        %v762 = vextract.high.u32 %v760
        %v763 = vshrl.u32 %v762, 3
        %v764 = vmul.u32 %v763, 10
        %v765 = vsub.s32 %v759, %v764
        %v766 = vsub.s32 0, %v765
        %v767 = vsel %vm757, %v766, %v765
        %vm768 = vcmp.lt.s32.totalorder %v708, 0
        %v769 = vsub.s32 0, %v708
        %v770 = vsel %vm768, %v769, %v708
        %v771 = vmul.u32.u64.compose %v770, 3435973837
        %v772 = vextract.low.u32 %v771
        %v773 = vextract.high.u32 %v771
        %v774 = vshrl.u32 %v773, 3
        %v775 = vmul.u32 %v774, 10
        %v776 = vsub.s32 %v770, %v775
        %v777 = vsub.s32 0, %v776
        %v778 = vsel %vm768, %v777, %v776
        %vm779 = vcmp.lt.s32.totalorder %v709, 0
        %v780 = vsub.s32 0, %v709
        %v781 = vsel %vm779, %v780, %v709
        %v782 = vmul.u32.u64.compose %v781, 3435973837
        %v783 = vextract.low.u32 %v782
        %v784 = vextract.high.u32 %v782
        %v785 = vshrl.u32 %v784, 3
        %v786 = vmul.u32 %v785, 10
        %v787 = vsub.s32 %v781, %v786
        %v788 = vsub.s32 0, %v787
        %v789 = vsel %vm779, %v788, %v787
        %vm790 = vcmp.lt.s32.totalorder %v710, 0
        %v791 = vsub.s32 0, %v710
        %v792 = vsel %vm790, %v791, %v710
        %v793 = vmul.u32.u64.compose %v792, 3435973837
        %v794 = vextract.low.u32 %v793
        %v795 = vextract.high.u32 %v793
        %v796 = vshrl.u32 %v795, 3
        %v797 = vmul.u32 %v796, 10
        %v798 = vsub.s32 %v792, %v797
        %v799 = vsub.s32 0, %v798
        %v800 = vsel %vm790, %v799, %v798
        %vm801 = vcmp.lt.s32.totalorder %v711, 0
        %v802 = vsub.s32 0, %v711
        %v803 = vsel %vm801, %v802, %v711
        %v804 = vmul.u32.u64.compose %v803, 3435973837
        %v805 = vextract.low.u32 %v804
        %v806 = vextract.high.u32 %v804
        %v807 = vshrl.u32 %v806, 3
        %v808 = vmul.u32 %v807, 10
        %v809 = vsub.s32 %v803, %v808
        %v810 = vsub.s32 0, %v809
        %v811 = vsel %vm801, %v810, %v809
        %vm812 = vcmp.lt.s32.totalorder %v712, 0
        %v813 = vsub.s32 0, %v712
        %v814 = vsel %vm812, %v813, %v712
        %v815 = vmul.u32.u64.compose %v814, 3435973837
        %v816 = vextract.low.u32 %v815
        %v817 = vextract.high.u32 %v815
        %v818 = vshrl.u32 %v817, 3
        %v819 = vmul.u32 %v818, 10
        %v820 = vsub.s32 %v814, %v819
        %v821 = vsub.s32 0, %v820
        %v822 = vsel %vm812, %v821, %v820
        %vm823 = vcmp.ne.s32.totalorder %v723, 0
        %vm824 = vcmp.ne.s32.totalorder %v734, 0
        %vm825 = vcmp.ne.s32.totalorder %v745, 0
        %vm826 = vcmp.ne.s32.totalorder %v756, 0
        %vm827 = vcmp.ne.s32.totalorder %v767, 0
        %vm828 = vcmp.ne.s32.totalorder %v778, 0
        %vm829 = vcmp.ne.s32.totalorder %v789, 0
        %vm830 = vcmp.ne.s32.totalorder %v800, 0
        %vm831 = vcmp.ne.s32.totalorder %v811, 0
        %vm832 = vcmp.ne.s32.totalorder %v822, 0
        %vm833 = vcmp.lt.s32.totalorder %v723, 0
        %vm834 = vcmp.lt.s32.totalorder %v734, 0
        %vm835 = vcmp.lt.s32.totalorder %v745, 0
        %vm836 = vcmp.lt.s32.totalorder %v756, 0
        %vm837 = vcmp.lt.s32.totalorder %v767, 0
        %vm838 = vcmp.lt.s32.totalorder %v778, 0
        %vm839 = vcmp.lt.s32.totalorder %v789, 0
        %vm840 = vcmp.lt.s32.totalorder %v800, 0
        %vm841 = vcmp.lt.s32.totalorder %v811, 0
        %vm842 = vcmp.lt.s32.totalorder %v822, 0
        %vm843 = vmand %vm833, %vm823
        %vm844 = vmand %vm834, %vm824
        %vm845 = vmand %vm835, %vm825
        %vm846 = vmand %vm836, %vm826
        %vm847 = vmand %vm837, %vm827
        %vm848 = vmand %vm838, %vm828
        %vm849 = vmand %vm839, %vm829
        %vm850 = vmand %vm840, %vm830
        %vm851 = vmand %vm841, %vm831
        %vm852 = vmand %vm842, %vm832
        %v853 = vadd.s32 %v723, 10
        %v854 = vadd.s32 %v734, 10
        %v855 = vadd.s32 %v745, 10
        %v856 = vadd.s32 %v756, 10
        %v857 = vadd.s32 %v767, 10
        %v858 = vadd.s32 %v778, 10
        %v859 = vadd.s32 %v789, 10
        %v860 = vadd.s32 %v800, 10
        %v861 = vadd.s32 %v811, 10
        %v862 = vadd.s32 %v822, 10
        %v863 = vsel %vm843, %v853, %v723
        %v864 = vsel %vm844, %v854, %v734
        %v865 = vsel %vm845, %v855, %v745
        %v866 = vsel %vm846, %v856, %v756
        %v867 = vsel %vm847, %v857, %v767
        %v868 = vsel %vm848, %v858, %v778
        %v869 = vsel %vm849, %v859, %v789
        %v870 = vsel %vm850, %v860, %v800
        %v871 = vsel %vm851, %v861, %v811
        %v872 = vsel %vm852, %v862, %v822
        %vm873 = vcmp.lt.s32.totalorder %v863, 8
        %vm874 = vcmp.lt.s32.totalorder %v864, 8
        %vm875 = vcmp.lt.s32.totalorder %v865, 8
        %vm876 = vcmp.lt.s32.totalorder %v866, 8
        %vm877 = vcmp.lt.s32.totalorder %v867, 8
        %vm878 = vcmp.lt.s32.totalorder %v868, 8
        %vm879 = vcmp.lt.s32.totalorder %v869, 8
        %vm880 = vcmp.lt.s32.totalorder %v870, 8
        %vm881 = vcmp.lt.s32.totalorder %v871, 8
        %vm882 = vcmp.lt.s32.totalorder %v872, 8
        %p883 = scmp.eq.s32.totalorder %s40, 0
        // Predicated region
        $region109: #{residual_tower.1} parent=67 // pred_check
          %p884 = pneg %p883
        $region110: #{residual_tower.1} parent=67 // pred_check_branch
          %886 = sbr.rel (%p884) target = $region112
        $region111: #{residual_tower.1} parent=67 // pred_region
          %887 = vst [vmem:[#allocation2] sm:$0xff] 0.0
          %888 = vst [vmem:[#allocation2 + $0x8] sm:$0xff] 0.0
          %889 = vst [vmem:[#allocation2 + $0x10] sm:$0xff] 0.0
          %890 = vst [vmem:[#allocation2 + $0x18] sm:$0xff] 0.0
          %891 = vst [vmem:[#allocation3] sm:$0xff] 0.0
          %892 = vst [vmem:[#allocation3 + $0x8] sm:$0xff] 0.0
          %893 = vst [vmem:[#allocation3 + $0x10] sm:$0xff] 0.0
          %894 = vst [vmem:[#allocation3 + $0x18] sm:$0xff] 0.0
          %895 = vst [vmem:[#allocation2 + $0xc0] sm:$0xff] 0.0
          %896 = vst [vmem:[#allocation2 + $0xc8] sm:$0xff] 0.0
          %897 = vst [vmem:[#allocation2 + $0xd0] sm:$0xff] 0.0
          %898 = vst [vmem:[#allocation2 + $0xd8] sm:$0xff] 0.0
          %899 = vst [vmem:[#allocation2 + $0xe0] sm:$0xff] 0.0
          %900 = vst [vmem:[#allocation2 + $0xe8] sm:$0xff] 0.0
          %901 = vst [vmem:[#allocation2 + $0xf0] sm:$0x1f] 0.0
          %902 = vst [vmem:[#allocation2 + $0xf8] sm:$0x1f] 0.0
          %903 = vst [vmem:[#allocation3 + $0xc0] sm:$0xff] 0.0
          %904 = vst [vmem:[#allocation3 + $0xc8] sm:$0xff] 0.0
          %905 = vst [vmem:[#allocation3 + $0xd0] sm:$0xff] 0.0
          %906 = vst [vmem:[#allocation3 + $0xd8] sm:$0xff] 0.0
          %907 = vst [vmem:[#allocation3 + $0xe0] sm:$0xff] 0.0
          %908 = vst [vmem:[#allocation3 + $0xe8] sm:$0xff] 0.0
          %909 = vst [vmem:[#allocation3 + $0xf0] sm:$0x1f] 0.0
          %910 = vst [vmem:[#allocation3 + $0xf8] sm:$0x1f] 0.0
          %v911 = vld [vmem:[%s696] sm:$0xff]
          %v912 = vld [vmem:[%s696 + $0x8] sm:$0xff]
          %v913 = vld [vmem:[%s696 + $0x10] sm:$0xff]
          %v914 = vld [vmem:[%s696 + $0x18] sm:$0xff]
          %v915 = vld [vmem:[%s696 + $0x20] sm:$0xff]
          %v916 = vld [vmem:[%s696 + $0x28] sm:$0xff]
          %v917 = vld [vmem:[%s696 + $0x30] sm:$0xff]
          %v918 = vld [vmem:[%s696 + $0x38] sm:$0xff]
          %v919 = vld [vmem:[%s696 + $0x40] sm:$0xff]
          %v920 = vld [vmem:[%s696 + $0x48] sm:$0xff]
          %v921 = vld [vmem:[%s696 + $0x50] sm:$0xff]
          %v922 = vld [vmem:[%s696 + $0x58] sm:$0xff]
          %v923 = vld [vmem:[%s696 + $0x60] sm:$0xff]
          %v924 = vld [vmem:[#allocation4] sm:$0xff]
          %s925 = scalar_lea.vmem [#allocation4], 8
          %v926 = vld [vmem:[%s925] sm:$0xff]
          %vm938 = vcmask 1046528
          %v939 = vrot.slane %v911, 1
          %v940 = vrot.slane %v912, 1
          %v941 = vsel %vm938, %v939, %v940
          %v942 = vrot.slane %v913, 1
          %v943 = vsel %vm938, %v940, %v942
          %v944 = vrot.slane %v914, 1
          %v945 = vsel %vm938, %v942, %v944
          %v946 = vrot.slane %v915, 1
          %v947 = vsel %vm938, %v944, %v946
          %v948 = vrot.slane %v916, 1
          %v949 = vsel %vm938, %v946, %v948
          %v950 = vrot.slane %v917, 1
          %v951 = vsel %vm938, %v948, %v950
          %v952 = vrot.slane %v918, 1
          %v953 = vsel %vm938, %v950, %v952
          %v954 = vrot.slane %v919, 1
          %v955 = vsel %vm938, %v952, %v954
          %v956 = vrot.slane %v920, 1
          %v957 = vsel %vm938, %v954, %v956
          %v958 = vrot.slane %v921, 1
          %v959 = vsel %vm938, %v956, %v958
          %v961 = vcombine.high %v926, %v926
          %vm962 = vcmask 31744
          %v963 = vsel %vm962, %v941, 0
          %v965 = vsel %vm962, %v943, 0
          %v967 = vsel %vm962, %v945, 0
          %v969 = vsel %vm962, %v947, 0
          %v971 = vsel %vm962, %v949, 0
          %v973 = vsel %vm962, %v951, 0
          %v975 = vsel %vm962, %v953, 0
          %v977 = vsel %vm962, %v955, 0
          %v979 = vsel %vm962, %v957, 0
          %v981 = vsel %vm962, %v959, 0
          %vm983 = vcmask 1043456
          %v984 = vsel %vm983, %v926, 0
          %v986 = vsel %vm983, %v961, 0
          %988 = vmatprep.subr.mxu0 0.0
          %989 = vmatpush1.msra.mxu0 0.0
          %990 = vmatprep.subr.mxu0 0.0
          %991 = vmatpush1.msra.mxu0 0.0
          %992 = vmatprep.subr.mxu0 0.0
          %993 = vmatpush1.msra.mxu0 0.0
          %994 = vmatprep.subr.mxu0 0.0
          %995 = vmatpush1.msra.mxu0 0.0
          %996 = vmatprep.subr.mxu0 0.0
          %997 = vmatpush1.msra.mxu0 0.0
          %998 = vmatprep.subr.mxu0 0.0
          %999 = vmatpush1.msra.mxu0 0.0
          %1000 = vmatprep.subr.mxu0 0.0
          %1001 = vmatpush1.msra.mxu0 0.0
          %1002 = vmatprep.subr.mxu0 0.0
          %1003 = vmatpush1.msra.mxu0 0.0
          %1004 = vmatprep.subr.mxu0 0.0
          %1005 = vmatpush1.msra.mxu0 0.0
          %1006 = vmatprep.subr.mxu0 0.0
          %1007 = vmatpush1.msra.mxu0 0.0
          %1008 = vmatprep.subr.mxu0 0.0
          %1009 = vmatpush1.msra.mxu0 0.0
          %1010 = vmatprep.subr.mxu0 0.0
          %1011 = vmatpush1.msra.mxu0 0.0
          %1012 = vmatprep.subr.mxu0 0.0
          %1013 = vmatpush1.msra.mxu0 0.0
          %1014 = vmatprep.subr.mxu0 0.0
          %1015 = vmatpush1.msra.mxu0 0.0
          %1016 = vmatprep.subr.mxu0 0.0
          %1017 = vmatpush1.msra.mxu0 0.0
          %1018 = vmatprep.subr.mxu0 %v986
          %1019 = vmatpush1.msra.mxu0 %v984
          %1020 = vmatprep.subr.mxu0 0.0
          %1021 = vmatpush2.msra.mxu0 0.0
          %1022 = vmatprep.subr.mxu0 0.0
          %1023 = vmatpush2.msra.mxu0 0.0
          %1024 = vmatprep.subr.mxu0 0.0
          %1025 = vmatpush2.msra.mxu0 0.0
          %1026 = vmatprep.subr.mxu0 0.0
          %1027 = vmatpush2.msra.mxu0 0.0
          %1028 = vmatprep.subr.mxu0 0.0
          %1029 = vmatpush2.msra.mxu0 0.0
          %1030 = vmatprep.subr.mxu0 0.0
          %1031 = vmatpush2.msra.mxu0 0.0
          %1032 = vmatprep.subr.mxu0 0.0
          %1033 = vmatpush2.msra.mxu0 0.0
          %1034 = vmatprep.subr.mxu0 0.0
          %1035 = vmatpush2.msra.mxu0 0.0
          %1036 = vmatprep.subr.mxu0 0.0
          %1037 = vmatpush2.msra.mxu0 0.0
          %1038 = vmatprep.subr.mxu0 0.0
          %1039 = vmatpush2.msra.mxu0 0.0
          %1040 = vmatprep.subr.mxu0 0.0
          %1041 = vmatpush2.msra.mxu0 0.0
          %1042 = vmatprep.subr.mxu0 0.0
          %1043 = vmatpush2.msra.mxu0 0.0
          %1044 = vmatprep.subr.mxu0 0.0
          %1045 = vmatpush2.msra.mxu0 0.0
          %1046 = vmatprep.subr.mxu0 0.0
          %1047 = vmatpush2.msra.mxu0 0.0
          %1048 = vmatprep.subr.mxu0 0.0
          %1049 = vmatpush2.msra.mxu0 0.0
          %1050 = vmatprep.subr.mxu0 0.0
          %1051 = vmatpush2.msra.mxu0 0.0
          %1052 = vmatprep.mubr.f32.mxu0 0.0
          %1053 = vmatmul.mubr.f32.gmra.mxu0 %v963
          %v1054 = vpop.f32.mrf.mxu0
          %v1055 = vadd.f32 0.0, %v1054
          %v1056 = vpop.f32.mrf.mxu0
          %v1057 = vadd.f32 0.0, %v1056
          %1058 = vmatprep.mubr.f32.mxu0 0.0
          %1059 = vmatmul.mubr.f32.gmra.mxu0 %v965
          %v1060 = vpop.f32.mrf.mxu0
          %v1061 = vadd.f32 0.0, %v1060
          %v1062 = vpop.f32.mrf.mxu0
          %v1063 = vadd.f32 0.0, %v1062
          %1064 = vmatprep.mubr.f32.mxu0 0.0
          %1065 = vmatmul.mubr.f32.gmra.mxu0 %v967
          %v1066 = vpop.f32.mrf.mxu0
          %v1067 = vadd.f32 0.0, %v1066
          %v1068 = vpop.f32.mrf.mxu0
          %v1069 = vadd.f32 0.0, %v1068
          %1070 = vmatprep.mubr.f32.mxu0 0.0
          %1071 = vmatmul.mubr.f32.gmra.mxu0 %v969
          %v1072 = vpop.f32.mrf.mxu0
          %v1073 = vadd.f32 0.0, %v1072
          %v1074 = vpop.f32.mrf.mxu0
          %v1075 = vadd.f32 0.0, %v1074
          %1076 = vmatprep.mubr.f32.mxu0 0.0
          %1077 = vmatmul.mubr.f32.gmra.mxu0 %v971
          %v1078 = vpop.f32.mrf.mxu0
          %v1079 = vadd.f32 0.0, %v1078
          %v1080 = vpop.f32.mrf.mxu0
          %v1081 = vadd.f32 0.0, %v1080
          %1082 = vmatprep.mubr.f32.mxu0 0.0
          %1083 = vmatmul.mubr.f32.gmra.mxu0 %v973
          %v1084 = vpop.f32.mrf.mxu0
          %v1085 = vadd.f32 0.0, %v1084
          %v1086 = vpop.f32.mrf.mxu0
          %v1087 = vadd.f32 0.0, %v1086
          %1088 = vmatprep.mubr.f32.mxu0 0.0
          %1089 = vmatmul.mubr.f32.gmra.mxu0 %v975
          %v1090 = vpop.f32.mrf.mxu0
          %v1091 = vadd.f32 0.0, %v1090
          %v1092 = vpop.f32.mrf.mxu0
          %v1093 = vadd.f32 0.0, %v1092
          %1094 = vmatprep.mubr.f32.mxu0 0.0
          %1095 = vmatmul.mubr.f32.gmra.mxu0 %v977
          %v1096 = vpop.f32.mrf.mxu0
          %v1097 = vadd.f32 0.0, %v1096
          %v1098 = vpop.f32.mrf.mxu0
          %v1099 = vadd.f32 0.0, %v1098
          %1100 = vmatprep.mubr.f32.mxu0 0.0
          %1101 = vmatmul.mubr.f32.gmra.mxu0 %v979
          %v1102 = vpop.f32.mrf.mxu0
          %v1103 = vadd.f32 0.0, %v1102
          %v1104 = vpop.f32.mrf.mxu0
          %v1105 = vadd.f32 0.0, %v1104
          %1106 = vmatprep.mubr.f32.mxu0 0.0
          %1107 = vmatmul.mubr.f32.gmra.mxu0 %v981
          %v1108 = vpop.f32.mrf.mxu0
          %v1109 = vadd.f32 0.0, %v1108
          %v1110 = vpop.f32.mrf.mxu0
          %v1111 = vadd.f32 0.0, %v1110
          %1112 = vdwg.mxu0
          %v1114 = vcombine.high %v924, %v924
          %v1115 = vsel %vm962, %v911, 0
          %v1117 = vsel %vm962, %v912, 0
          %v1119 = vsel %vm962, %v913, 0
          %v1121 = vsel %vm962, %v914, 0
          %v1123 = vsel %vm962, %v915, 0
          %v1125 = vsel %vm962, %v916, 0
          %v1127 = vsel %vm962, %v917, 0
          %v1129 = vsel %vm962, %v918, 0
          %v1131 = vsel %vm962, %v919, 0
          %v1133 = vsel %vm962, %v920, 0
          %v1135 = vsel %vm983, %v924, 0
          %v1137 = vsel %vm983, %v1114, 0
          %1139 = vmatprep.subr.mxu0 0.0
          %1140 = vmatpush1.msra.mxu0 0.0
          %1141 = vmatprep.subr.mxu0 0.0
          %1142 = vmatpush1.msra.mxu0 0.0
          %1143 = vmatprep.subr.mxu0 0.0
          %1144 = vmatpush1.msra.mxu0 0.0
          %1145 = vmatprep.subr.mxu0 0.0
          %1146 = vmatpush1.msra.mxu0 0.0
          %1147 = vmatprep.subr.mxu0 0.0
          %1148 = vmatpush1.msra.mxu0 0.0
          %1149 = vmatprep.subr.mxu0 0.0
          %1150 = vmatpush1.msra.mxu0 0.0
          %1151 = vmatprep.subr.mxu0 0.0
          %1152 = vmatpush1.msra.mxu0 0.0
          %1153 = vmatprep.subr.mxu0 0.0
          %1154 = vmatpush1.msra.mxu0 0.0
          %1155 = vmatprep.subr.mxu0 0.0
          %1156 = vmatpush1.msra.mxu0 0.0
          %1157 = vmatprep.subr.mxu0 0.0
          %1158 = vmatpush1.msra.mxu0 0.0
          %1159 = vmatprep.subr.mxu0 0.0
          %1160 = vmatpush1.msra.mxu0 0.0
          %1161 = vmatprep.subr.mxu0 0.0
          %1162 = vmatpush1.msra.mxu0 0.0
          %1163 = vmatprep.subr.mxu0 0.0
          %1164 = vmatpush1.msra.mxu0 0.0
          %1165 = vmatprep.subr.mxu0 0.0
          %1166 = vmatpush1.msra.mxu0 0.0
          %1167 = vmatprep.subr.mxu0 0.0
          %1168 = vmatpush1.msra.mxu0 0.0
          %1169 = vmatprep.subr.mxu0 %v1137
          %1170 = vmatpush1.msra.mxu0 %v1135
          %1171 = vmatprep.subr.mxu0 0.0
          %1172 = vmatpush2.msra.mxu0 0.0
          %1173 = vmatprep.subr.mxu0 0.0
          %1174 = vmatpush2.msra.mxu0 0.0
          %1175 = vmatprep.subr.mxu0 0.0
          %1176 = vmatpush2.msra.mxu0 0.0
          %1177 = vmatprep.subr.mxu0 0.0
          %1178 = vmatpush2.msra.mxu0 0.0
          %1179 = vmatprep.subr.mxu0 0.0
          %1180 = vmatpush2.msra.mxu0 0.0
          %1181 = vmatprep.subr.mxu0 0.0
          %1182 = vmatpush2.msra.mxu0 0.0
          %1183 = vmatprep.subr.mxu0 0.0
          %1184 = vmatpush2.msra.mxu0 0.0
          %1185 = vmatprep.subr.mxu0 0.0
          %1186 = vmatpush2.msra.mxu0 0.0
          %1187 = vmatprep.subr.mxu0 0.0
          %1188 = vmatpush2.msra.mxu0 0.0
          %1189 = vmatprep.subr.mxu0 0.0
          %1190 = vmatpush2.msra.mxu0 0.0
          %1191 = vmatprep.subr.mxu0 0.0
          %1192 = vmatpush2.msra.mxu0 0.0
          %1193 = vmatprep.subr.mxu0 0.0
          %1194 = vmatpush2.msra.mxu0 0.0
          %1195 = vmatprep.subr.mxu0 0.0
          %1196 = vmatpush2.msra.mxu0 0.0
          %1197 = vmatprep.subr.mxu0 0.0
          %1198 = vmatpush2.msra.mxu0 0.0
          %1199 = vmatprep.subr.mxu0 0.0
          %1200 = vmatpush2.msra.mxu0 0.0
          %1201 = vmatprep.subr.mxu0 0.0
          %1202 = vmatpush2.msra.mxu0 0.0
          %1203 = vmatprep.mubr.f32.mxu0 0.0
          %1204 = vmatmul.mubr.f32.gmra.mxu0 %v1115
          %v1205 = vpop.f32.mrf.mxu0
          %v1206 = vadd.f32 %v1055, %v1205
          %v1207 = vpop.f32.mrf.mxu0
          %v1208 = vadd.f32 %v1057, %v1207
          %1209 = vmatprep.mubr.f32.mxu0 0.0
          %1210 = vmatmul.mubr.f32.gmra.mxu0 %v1117
          %v1211 = vpop.f32.mrf.mxu0
          %v1212 = vadd.f32 %v1061, %v1211
          %v1213 = vpop.f32.mrf.mxu0
          %v1214 = vadd.f32 %v1063, %v1213
          %1215 = vmatprep.mubr.f32.mxu0 0.0
          %1216 = vmatmul.mubr.f32.gmra.mxu0 %v1119
          %v1217 = vpop.f32.mrf.mxu0
          %v1218 = vadd.f32 %v1067, %v1217
          %v1219 = vpop.f32.mrf.mxu0
          %v1220 = vadd.f32 %v1069, %v1219
          %1221 = vmatprep.mubr.f32.mxu0 0.0
          %1222 = vmatmul.mubr.f32.gmra.mxu0 %v1121
          %v1223 = vpop.f32.mrf.mxu0
          %v1224 = vadd.f32 %v1073, %v1223
          %v1225 = vpop.f32.mrf.mxu0
          %v1226 = vadd.f32 %v1075, %v1225
          %1227 = vmatprep.mubr.f32.mxu0 0.0
          %1228 = vmatmul.mubr.f32.gmra.mxu0 %v1123
          %v1229 = vpop.f32.mrf.mxu0
          %v1230 = vadd.f32 %v1079, %v1229
          %v1231 = vpop.f32.mrf.mxu0
          %v1232 = vadd.f32 %v1081, %v1231
          %1233 = vmatprep.mubr.f32.mxu0 0.0
          %1234 = vmatmul.mubr.f32.gmra.mxu0 %v1125
          %v1235 = vpop.f32.mrf.mxu0
          %v1236 = vadd.f32 %v1085, %v1235
          %v1237 = vpop.f32.mrf.mxu0
          %v1238 = vadd.f32 %v1087, %v1237
          %1239 = vmatprep.mubr.f32.mxu0 0.0
          %1240 = vmatmul.mubr.f32.gmra.mxu0 %v1127
          %v1241 = vpop.f32.mrf.mxu0
          %v1242 = vadd.f32 %v1091, %v1241
          %v1243 = vpop.f32.mrf.mxu0
          %v1244 = vadd.f32 %v1093, %v1243
          %1245 = vmatprep.mubr.f32.mxu0 0.0
          %1246 = vmatmul.mubr.f32.gmra.mxu0 %v1129
          %v1247 = vpop.f32.mrf.mxu0
          %v1248 = vadd.f32 %v1097, %v1247
          %v1249 = vpop.f32.mrf.mxu0
          %v1250 = vadd.f32 %v1099, %v1249
          %1251 = vmatprep.mubr.f32.mxu0 0.0
          %1252 = vmatmul.mubr.f32.gmra.mxu0 %v1131
          %v1253 = vpop.f32.mrf.mxu0
          %v1254 = vadd.f32 %v1103, %v1253
          %v1255 = vpop.f32.mrf.mxu0
          %v1256 = vadd.f32 %v1105, %v1255
          %1257 = vmatprep.mubr.f32.mxu0 0.0
          %1258 = vmatmul.mubr.f32.gmra.mxu0 %v1133
          %v1259 = vpop.f32.mrf.mxu0
          %v1260 = vadd.f32 %v1109, %v1259
          %v1261 = vpop.f32.mrf.mxu0
          %v1262 = vadd.f32 %v1111, %v1261
          %1263 = vdwg.mxu0
          %s1264 = scalar_lea.vmem [#allocation4], 16
          %v1265 = vld [vmem:[%s1264] sm:$0xff]
          %vm1266 = vcmask 1045504
          %v1267 = vrot.slane %v911, 2
          %v1268 = vrot.slane %v912, 2
          %v1269 = vsel %vm1266, %v1267, %v1268
          %v1270 = vrot.slane %v913, 2
          %v1271 = vsel %vm1266, %v1268, %v1270
          %v1272 = vrot.slane %v914, 2
          %v1273 = vsel %vm1266, %v1270, %v1272
          %v1274 = vrot.slane %v915, 2
          %v1275 = vsel %vm1266, %v1272, %v1274
          %v1276 = vrot.slane %v916, 2
          %v1277 = vsel %vm1266, %v1274, %v1276
          %v1278 = vrot.slane %v917, 2
          %v1279 = vsel %vm1266, %v1276, %v1278
          %v1280 = vrot.slane %v918, 2
          %v1281 = vsel %vm1266, %v1278, %v1280
          %v1282 = vrot.slane %v919, 2
          %v1283 = vsel %vm1266, %v1280, %v1282
          %v1284 = vrot.slane %v920, 2
          %v1285 = vsel %vm1266, %v1282, %v1284
          %v1286 = vrot.slane %v921, 2
          %v1287 = vsel %vm1266, %v1284, %v1286
          %v1289 = vcombine.high %v1265, %v1265
          %v1290 = vsel %vm962, %v1269, 0
          %v1292 = vsel %vm962, %v1271, 0
          %v1294 = vsel %vm962, %v1273, 0
          %v1296 = vsel %vm962, %v1275, 0
          %v1298 = vsel %vm962, %v1277, 0
          %v1300 = vsel %vm962, %v1279, 0
          %v1302 = vsel %vm962, %v1281, 0
          %v1304 = vsel %vm962, %v1283, 0
          %v1306 = vsel %vm962, %v1285, 0
          %v1308 = vsel %vm962, %v1287, 0
          %v1310 = vsel %vm983, %v1265, 0
          %v1312 = vsel %vm983, %v1289, 0
          %1314 = vmatprep.subr.mxu0 0.0
          %1315 = vmatpush1.msra.mxu0 0.0
          %1316 = vmatprep.subr.mxu0 0.0
          %1317 = vmatpush1.msra.mxu0 0.0
          %1318 = vmatprep.subr.mxu0 0.0
          %1319 = vmatpush1.msra.mxu0 0.0
          %1320 = vmatprep.subr.mxu0 0.0
          %1321 = vmatpush1.msra.mxu0 0.0
          %1322 = vmatprep.subr.mxu0 0.0
          %1323 = vmatpush1.msra.mxu0 0.0
          %1324 = vmatprep.subr.mxu0 0.0
          %1325 = vmatpush1.msra.mxu0 0.0
          %1326 = vmatprep.subr.mxu0 0.0
          %1327 = vmatpush1.msra.mxu0 0.0
          %1328 = vmatprep.subr.mxu0 0.0
          %1329 = vmatpush1.msra.mxu0 0.0
          %1330 = vmatprep.subr.mxu0 0.0
          %1331 = vmatpush1.msra.mxu0 0.0
          %1332 = vmatprep.subr.mxu0 0.0
          %1333 = vmatpush1.msra.mxu0 0.0
          %1334 = vmatprep.subr.mxu0 0.0
          %1335 = vmatpush1.msra.mxu0 0.0
          %1336 = vmatprep.subr.mxu0 0.0
          %1337 = vmatpush1.msra.mxu0 0.0
          %1338 = vmatprep.subr.mxu0 0.0
          %1339 = vmatpush1.msra.mxu0 0.0
          %1340 = vmatprep.subr.mxu0 0.0
          %1341 = vmatpush1.msra.mxu0 0.0
          %1342 = vmatprep.subr.mxu0 0.0
          %1343 = vmatpush1.msra.mxu0 0.0
          %1344 = vmatprep.subr.mxu0 %v1312
          %1345 = vmatpush1.msra.mxu0 %v1310
          %1346 = vmatprep.subr.mxu0 0.0
          %1347 = vmatpush2.msra.mxu0 0.0
          %1348 = vmatprep.subr.mxu0 0.0
          %1349 = vmatpush2.msra.mxu0 0.0
          %1350 = vmatprep.subr.mxu0 0.0
          %1351 = vmatpush2.msra.mxu0 0.0
          %1352 = vmatprep.subr.mxu0 0.0
          %1353 = vmatpush2.msra.mxu0 0.0
          %1354 = vmatprep.subr.mxu0 0.0
          %1355 = vmatpush2.msra.mxu0 0.0
          %1356 = vmatprep.subr.mxu0 0.0
          %1357 = vmatpush2.msra.mxu0 0.0
          %1358 = vmatprep.subr.mxu0 0.0
          %1359 = vmatpush2.msra.mxu0 0.0
          %1360 = vmatprep.subr.mxu0 0.0
          %1361 = vmatpush2.msra.mxu0 0.0
          %1362 = vmatprep.subr.mxu0 0.0
          %1363 = vmatpush2.msra.mxu0 0.0
          %1364 = vmatprep.subr.mxu0 0.0
          %1365 = vmatpush2.msra.mxu0 0.0
          %1366 = vmatprep.subr.mxu0 0.0
          %1367 = vmatpush2.msra.mxu0 0.0
          %1368 = vmatprep.subr.mxu0 0.0
          %1369 = vmatpush2.msra.mxu0 0.0
          %1370 = vmatprep.subr.mxu0 0.0
          %1371 = vmatpush2.msra.mxu0 0.0
          %1372 = vmatprep.subr.mxu0 0.0
          %1373 = vmatpush2.msra.mxu0 0.0
          %1374 = vmatprep.subr.mxu0 0.0
          %1375 = vmatpush2.msra.mxu0 0.0
          %1376 = vmatprep.subr.mxu0 0.0
          %1377 = vmatpush2.msra.mxu0 0.0
          %1378 = vmatprep.mubr.f32.mxu0 0.0
          %1379 = vmatmul.mubr.f32.gmra.mxu0 %v1290
          %v1380 = vpop.f32.mrf.mxu0
          %v1381 = vadd.f32 0.0, %v1380
          %v1382 = vpop.f32.mrf.mxu0
          %v1383 = vadd.f32 0.0, %v1382
          %1384 = vmatprep.mubr.f32.mxu0 0.0
          %1385 = vmatmul.mubr.f32.gmra.mxu0 %v1292
          %v1386 = vpop.f32.mrf.mxu0
          %v1387 = vadd.f32 0.0, %v1386
          %v1388 = vpop.f32.mrf.mxu0
          %v1389 = vadd.f32 0.0, %v1388
          %1390 = vmatprep.mubr.f32.mxu0 0.0
          %1391 = vmatmul.mubr.f32.gmra.mxu0 %v1294
          %v1392 = vpop.f32.mrf.mxu0
          %v1393 = vadd.f32 0.0, %v1392
          %v1394 = vpop.f32.mrf.mxu0
          %v1395 = vadd.f32 0.0, %v1394
          %1396 = vmatprep.mubr.f32.mxu0 0.0
          %1397 = vmatmul.mubr.f32.gmra.mxu0 %v1296
          %v1398 = vpop.f32.mrf.mxu0
          %v1399 = vadd.f32 0.0, %v1398
          %v1400 = vpop.f32.mrf.mxu0
          %v1401 = vadd.f32 0.0, %v1400
          %1402 = vmatprep.mubr.f32.mxu0 0.0
          %1403 = vmatmul.mubr.f32.gmra.mxu0 %v1298
          %v1404 = vpop.f32.mrf.mxu0
          %v1405 = vadd.f32 0.0, %v1404
          %v1406 = vpop.f32.mrf.mxu0
          %v1407 = vadd.f32 0.0, %v1406
          %1408 = vmatprep.mubr.f32.mxu0 0.0
          %1409 = vmatmul.mubr.f32.gmra.mxu0 %v1300
          %v1410 = vpop.f32.mrf.mxu0
          %v1411 = vadd.f32 0.0, %v1410
          %v1412 = vpop.f32.mrf.mxu0
          %v1413 = vadd.f32 0.0, %v1412
          %1414 = vmatprep.mubr.f32.mxu0 0.0
          %1415 = vmatmul.mubr.f32.gmra.mxu0 %v1302
          %v1416 = vpop.f32.mrf.mxu0
          %v1417 = vadd.f32 0.0, %v1416
          %v1418 = vpop.f32.mrf.mxu0
          %v1419 = vadd.f32 0.0, %v1418
          %1420 = vmatprep.mubr.f32.mxu0 0.0
          %1421 = vmatmul.mubr.f32.gmra.mxu0 %v1304
          %v1422 = vpop.f32.mrf.mxu0
          %v1423 = vadd.f32 0.0, %v1422
          %v1424 = vpop.f32.mrf.mxu0
          %v1425 = vadd.f32 0.0, %v1424
          %1426 = vmatprep.mubr.f32.mxu0 0.0
          %1427 = vmatmul.mubr.f32.gmra.mxu0 %v1306
          %v1428 = vpop.f32.mrf.mxu0
          %v1429 = vadd.f32 0.0, %v1428
          %v1430 = vpop.f32.mrf.mxu0
          %v1431 = vadd.f32 0.0, %v1430
          %1432 = vmatprep.mubr.f32.mxu0 0.0
          %1433 = vmatmul.mubr.f32.gmra.mxu0 %v1308
          %v1434 = vpop.f32.mrf.mxu0
          %v1435 = vadd.f32 0.0, %v1434
          %v1436 = vpop.f32.mrf.mxu0
          %v1437 = vadd.f32 0.0, %v1436
          %1438 = vdwg.mxu0
          %v1439 = vadd.f32 %v1206, %v1381
          %v1440 = vadd.f32 %v1208, %v1383
          %v1441 = vadd.f32 %v1212, %v1387
          %v1442 = vadd.f32 %v1214, %v1389
          %v1443 = vadd.f32 %v1218, %v1393
          %v1444 = vadd.f32 %v1220, %v1395
          %v1445 = vadd.f32 %v1224, %v1399
          %v1446 = vadd.f32 %v1226, %v1401
          %v1447 = vadd.f32 %v1230, %v1405
          %v1448 = vadd.f32 %v1232, %v1407
          %v1449 = vadd.f32 %v1236, %v1411
          %v1450 = vadd.f32 %v1238, %v1413
          %v1451 = vadd.f32 %v1242, %v1417
          %v1452 = vadd.f32 %v1244, %v1419
          %v1453 = vadd.f32 %v1248, %v1423
          %v1454 = vadd.f32 %v1250, %v1425
          %v1455 = vadd.f32 %v1254, %v1429
          %v1456 = vadd.f32 %v1256, %v1431
          %v1457 = vadd.f32 %v1260, %v1435
          %v1458 = vadd.f32 %v1262, %v1437
          %s1459 = scalar_lea.vmem [#allocation4], 24
          %v1460 = vld [vmem:[%s1459] sm:$0xff]
          %v1462 = vrot.slane %v922, 2
          %v1463 = vsel %vm1266, %v1286, %v1462
          %v1465 = vcombine.high %v1460, %v1460
          %v1466 = vsel %vm962, %v1463, 0
          %v1468 = vsel %vm983, %v1460, 0
          %v1470 = vsel %vm983, %v1465, 0
          %1472 = vmatprep.subr.mxu0 0.0
          %1473 = vmatpush1.msra.mxu0 0.0
          %1474 = vmatprep.subr.mxu0 0.0
          %1475 = vmatpush1.msra.mxu0 0.0
          %1476 = vmatprep.subr.mxu0 0.0
          %1477 = vmatpush1.msra.mxu0 0.0
          %1478 = vmatprep.subr.mxu0 0.0
          %1479 = vmatpush1.msra.mxu0 0.0
          %1480 = vmatprep.subr.mxu0 0.0
          %1481 = vmatpush1.msra.mxu0 0.0
          %1482 = vmatprep.subr.mxu0 0.0
          %1483 = vmatpush1.msra.mxu0 0.0
          %1484 = vmatprep.subr.mxu0 0.0
          %1485 = vmatpush1.msra.mxu0 0.0
          %1486 = vmatprep.subr.mxu0 0.0
          %1487 = vmatpush1.msra.mxu0 0.0
          %1488 = vmatprep.subr.mxu0 0.0
          %1489 = vmatpush1.msra.mxu0 0.0
          %1490 = vmatprep.subr.mxu0 0.0
          %1491 = vmatpush1.msra.mxu0 0.0
          %1492 = vmatprep.subr.mxu0 0.0
          %1493 = vmatpush1.msra.mxu0 0.0
          %1494 = vmatprep.subr.mxu0 0.0
          %1495 = vmatpush1.msra.mxu0 0.0
          %1496 = vmatprep.subr.mxu0 0.0
          %1497 = vmatpush1.msra.mxu0 0.0
          %1498 = vmatprep.subr.mxu0 0.0
          %1499 = vmatpush1.msra.mxu0 0.0
          %1500 = vmatprep.subr.mxu0 0.0
          %1501 = vmatpush1.msra.mxu0 0.0
          %1502 = vmatprep.subr.mxu0 %v1470
          %1503 = vmatpush1.msra.mxu0 %v1468
          %1504 = vmatprep.subr.mxu0 0.0
          %1505 = vmatpush2.msra.mxu0 0.0
          %1506 = vmatprep.subr.mxu0 0.0
          %1507 = vmatpush2.msra.mxu0 0.0
          %1508 = vmatprep.subr.mxu0 0.0
          %1509 = vmatpush2.msra.mxu0 0.0
          %1510 = vmatprep.subr.mxu0 0.0
          %1511 = vmatpush2.msra.mxu0 0.0
          %1512 = vmatprep.subr.mxu0 0.0
          %1513 = vmatpush2.msra.mxu0 0.0
          %1514 = vmatprep.subr.mxu0 0.0
          %1515 = vmatpush2.msra.mxu0 0.0
          %1516 = vmatprep.subr.mxu0 0.0
          %1517 = vmatpush2.msra.mxu0 0.0
          %1518 = vmatprep.subr.mxu0 0.0
          %1519 = vmatpush2.msra.mxu0 0.0
          %1520 = vmatprep.subr.mxu0 0.0
          %1521 = vmatpush2.msra.mxu0 0.0
          %1522 = vmatprep.subr.mxu0 0.0
          %1523 = vmatpush2.msra.mxu0 0.0
          %1524 = vmatprep.subr.mxu0 0.0
          %1525 = vmatpush2.msra.mxu0 0.0
          %1526 = vmatprep.subr.mxu0 0.0
          %1527 = vmatpush2.msra.mxu0 0.0
          %1528 = vmatprep.subr.mxu0 0.0
          %1529 = vmatpush2.msra.mxu0 0.0
          %1530 = vmatprep.subr.mxu0 0.0
          %1531 = vmatpush2.msra.mxu0 0.0
          %1532 = vmatprep.subr.mxu0 0.0
          %1533 = vmatpush2.msra.mxu0 0.0
          %1534 = vmatprep.subr.mxu0 0.0
          %1535 = vmatpush2.msra.mxu0 0.0
          %1536 = vmatprep.mubr.f32.mxu0 0.0
          %1537 = vmatmul.mubr.f32.gmra.mxu0 %v1292
          %v1538 = vpop.f32.mrf.mxu0
          %v1539 = vadd.f32 0.0, %v1538
          %v1540 = vpop.f32.mrf.mxu0
          %v1541 = vadd.f32 0.0, %v1540
          %1542 = vmatprep.mubr.f32.mxu0 0.0
          %1543 = vmatmul.mubr.f32.gmra.mxu0 %v1294
          %v1544 = vpop.f32.mrf.mxu0
          %v1545 = vadd.f32 0.0, %v1544
          %v1546 = vpop.f32.mrf.mxu0
          %v1547 = vadd.f32 0.0, %v1546
          %1548 = vmatprep.mubr.f32.mxu0 0.0
          %1549 = vmatmul.mubr.f32.gmra.mxu0 %v1296
          %v1550 = vpop.f32.mrf.mxu0
          %v1551 = vadd.f32 0.0, %v1550
          %v1552 = vpop.f32.mrf.mxu0
          %v1553 = vadd.f32 0.0, %v1552
          %1554 = vmatprep.mubr.f32.mxu0 0.0
          %1555 = vmatmul.mubr.f32.gmra.mxu0 %v1298
          %v1556 = vpop.f32.mrf.mxu0
          %v1557 = vadd.f32 0.0, %v1556
          %v1558 = vpop.f32.mrf.mxu0
          %v1559 = vadd.f32 0.0, %v1558
          %1560 = vmatprep.mubr.f32.mxu0 0.0
          %1561 = vmatmul.mubr.f32.gmra.mxu0 %v1300
          %v1562 = vpop.f32.mrf.mxu0
          %v1563 = vadd.f32 0.0, %v1562
          %v1564 = vpop.f32.mrf.mxu0
          %v1565 = vadd.f32 0.0, %v1564
          %1566 = vmatprep.mubr.f32.mxu0 0.0
          %1567 = vmatmul.mubr.f32.gmra.mxu0 %v1302
          %v1568 = vpop.f32.mrf.mxu0
          %v1569 = vadd.f32 0.0, %v1568
          %v1570 = vpop.f32.mrf.mxu0
          %v1571 = vadd.f32 0.0, %v1570
          %1572 = vmatprep.mubr.f32.mxu0 0.0
          %1573 = vmatmul.mubr.f32.gmra.mxu0 %v1304
          %v1574 = vpop.f32.mrf.mxu0
          %v1575 = vadd.f32 0.0, %v1574
          %v1576 = vpop.f32.mrf.mxu0
          %v1577 = vadd.f32 0.0, %v1576
          %1578 = vmatprep.mubr.f32.mxu0 0.0
          %1579 = vmatmul.mubr.f32.gmra.mxu0 %v1306
          %v1580 = vpop.f32.mrf.mxu0
          %v1581 = vadd.f32 0.0, %v1580
          %v1582 = vpop.f32.mrf.mxu0
          %v1583 = vadd.f32 0.0, %v1582
          %1584 = vmatprep.mubr.f32.mxu0 0.0
          %1585 = vmatmul.mubr.f32.gmra.mxu0 %v1308
          %v1586 = vpop.f32.mrf.mxu0
          %v1587 = vadd.f32 0.0, %v1586
          %v1588 = vpop.f32.mrf.mxu0
          %v1589 = vadd.f32 0.0, %v1588
          %1590 = vmatprep.mubr.f32.mxu0 0.0
          %1591 = vmatmul.mubr.f32.gmra.mxu0 %v1466
          %v1592 = vpop.f32.mrf.mxu0
          %v1593 = vadd.f32 0.0, %v1592
          %v1594 = vpop.f32.mrf.mxu0
          %v1595 = vadd.f32 0.0, %v1594
          %1596 = vdwg.mxu0
          %v1597 = vadd.f32 %v1439, %v1539
          %v1598 = vadd.f32 %v1440, %v1541
          %v1599 = vadd.f32 %v1441, %v1545
          %v1600 = vadd.f32 %v1442, %v1547
          %v1601 = vadd.f32 %v1443, %v1551
          %v1602 = vadd.f32 %v1444, %v1553
          %v1603 = vadd.f32 %v1445, %v1557
          %v1604 = vadd.f32 %v1446, %v1559
          %v1605 = vadd.f32 %v1447, %v1563
          %v1606 = vadd.f32 %v1448, %v1565
          %v1607 = vadd.f32 %v1449, %v1569
          %v1608 = vadd.f32 %v1450, %v1571
          %v1609 = vadd.f32 %v1451, %v1575
          %v1610 = vadd.f32 %v1452, %v1577
          %v1611 = vadd.f32 %v1453, %v1581
          %v1612 = vadd.f32 %v1454, %v1583
          %v1613 = vadd.f32 %v1455, %v1587
          %v1614 = vadd.f32 %v1456, %v1589
          %v1615 = vadd.f32 %v1457, %v1593
          %v1616 = vadd.f32 %v1458, %v1595
          %s1617 = scalar_lea.vmem [#allocation4], 32
          %v1618 = vld [vmem:[%s1617] sm:$0xff]
          %vm1619 = vcmask 1044480
          %v1620 = vrot.slane %v912, 3
          %v1621 = vrot.slane %v913, 3
          %v1622 = vsel %vm1619, %v1620, %v1621
          %v1623 = vrot.slane %v914, 3
          %v1624 = vsel %vm1619, %v1621, %v1623
          %v1625 = vrot.slane %v915, 3
          %v1626 = vsel %vm1619, %v1623, %v1625
          %v1627 = vrot.slane %v916, 3
          %v1628 = vsel %vm1619, %v1625, %v1627
          %v1629 = vrot.slane %v917, 3
          %v1630 = vsel %vm1619, %v1627, %v1629
          %v1631 = vrot.slane %v918, 3
          %v1632 = vsel %vm1619, %v1629, %v1631
          %v1633 = vrot.slane %v919, 3
          %v1634 = vsel %vm1619, %v1631, %v1633
          %v1635 = vrot.slane %v920, 3
          %v1636 = vsel %vm1619, %v1633, %v1635
          %v1637 = vrot.slane %v921, 3
          %v1638 = vsel %vm1619, %v1635, %v1637
          %v1639 = vrot.slane %v922, 3
          %v1640 = vsel %vm1619, %v1637, %v1639
          %v1642 = vcombine.high %v1618, %v1618
          %v1643 = vsel %vm962, %v1622, 0
          %v1645 = vsel %vm962, %v1624, 0
          %v1647 = vsel %vm962, %v1626, 0
          %v1649 = vsel %vm962, %v1628, 0
          %v1651 = vsel %vm962, %v1630, 0
          %v1653 = vsel %vm962, %v1632, 0
          %v1655 = vsel %vm962, %v1634, 0
          %v1657 = vsel %vm962, %v1636, 0
          %v1659 = vsel %vm962, %v1638, 0
          %v1661 = vsel %vm962, %v1640, 0
          %v1663 = vsel %vm983, %v1618, 0
          %v1665 = vsel %vm983, %v1642, 0
          %1667 = vmatprep.subr.mxu0 0.0
          %1668 = vmatpush1.msra.mxu0 0.0
          %1669 = vmatprep.subr.mxu0 0.0
          %1670 = vmatpush1.msra.mxu0 0.0
          %1671 = vmatprep.subr.mxu0 0.0
          %1672 = vmatpush1.msra.mxu0 0.0
          %1673 = vmatprep.subr.mxu0 0.0
          %1674 = vmatpush1.msra.mxu0 0.0
          %1675 = vmatprep.subr.mxu0 0.0
          %1676 = vmatpush1.msra.mxu0 0.0
          %1677 = vmatprep.subr.mxu0 0.0
          %1678 = vmatpush1.msra.mxu0 0.0
          %1679 = vmatprep.subr.mxu0 0.0
          %1680 = vmatpush1.msra.mxu0 0.0
          %1681 = vmatprep.subr.mxu0 0.0
          %1682 = vmatpush1.msra.mxu0 0.0
          %1683 = vmatprep.subr.mxu0 0.0
          %1684 = vmatpush1.msra.mxu0 0.0
          %1685 = vmatprep.subr.mxu0 0.0
          %1686 = vmatpush1.msra.mxu0 0.0
          %1687 = vmatprep.subr.mxu0 0.0
          %1688 = vmatpush1.msra.mxu0 0.0
          %1689 = vmatprep.subr.mxu0 0.0
          %1690 = vmatpush1.msra.mxu0 0.0
          %1691 = vmatprep.subr.mxu0 0.0
          %1692 = vmatpush1.msra.mxu0 0.0
          %1693 = vmatprep.subr.mxu0 0.0
          %1694 = vmatpush1.msra.mxu0 0.0
          %1695 = vmatprep.subr.mxu0 0.0
          %1696 = vmatpush1.msra.mxu0 0.0
          %1697 = vmatprep.subr.mxu0 %v1665
          %1698 = vmatpush1.msra.mxu0 %v1663
          %1699 = vmatprep.subr.mxu0 0.0
          %1700 = vmatpush2.msra.mxu0 0.0
          %1701 = vmatprep.subr.mxu0 0.0
          %1702 = vmatpush2.msra.mxu0 0.0
          %1703 = vmatprep.subr.mxu0 0.0
          %1704 = vmatpush2.msra.mxu0 0.0
          %1705 = vmatprep.subr.mxu0 0.0
          %1706 = vmatpush2.msra.mxu0 0.0
          %1707 = vmatprep.subr.mxu0 0.0
          %1708 = vmatpush2.msra.mxu0 0.0
          %1709 = vmatprep.subr.mxu0 0.0
          %1710 = vmatpush2.msra.mxu0 0.0
          %1711 = vmatprep.subr.mxu0 0.0
          %1712 = vmatpush2.msra.mxu0 0.0
          %1713 = vmatprep.subr.mxu0 0.0
          %1714 = vmatpush2.msra.mxu0 0.0
          %1715 = vmatprep.subr.mxu0 0.0
          %1716 = vmatpush2.msra.mxu0 0.0
          %1717 = vmatprep.subr.mxu0 0.0
          %1718 = vmatpush2.msra.mxu0 0.0
          %1719 = vmatprep.subr.mxu0 0.0
          %1720 = vmatpush2.msra.mxu0 0.0
          %1721 = vmatprep.subr.mxu0 0.0
          %1722 = vmatpush2.msra.mxu0 0.0
          %1723 = vmatprep.subr.mxu0 0.0
          %1724 = vmatpush2.msra.mxu0 0.0
          %1725 = vmatprep.subr.mxu0 0.0
          %1726 = vmatpush2.msra.mxu0 0.0
          %1727 = vmatprep.subr.mxu0 0.0
          %1728 = vmatpush2.msra.mxu0 0.0
          %1729 = vmatprep.subr.mxu0 0.0
          %1730 = vmatpush2.msra.mxu0 0.0
          %1731 = vmatprep.mubr.f32.mxu0 0.0
          %1732 = vmatmul.mubr.f32.gmra.mxu0 %v1643
          %v1733 = vpop.f32.mrf.mxu0
          %v1734 = vadd.f32 0.0, %v1733
          %v1735 = vpop.f32.mrf.mxu0
          %v1736 = vadd.f32 0.0, %v1735
          %1737 = vmatprep.mubr.f32.mxu0 0.0
          %1738 = vmatmul.mubr.f32.gmra.mxu0 %v1645
          %v1739 = vpop.f32.mrf.mxu0
          %v1740 = vadd.f32 0.0, %v1739
          %v1741 = vpop.f32.mrf.mxu0
          %v1742 = vadd.f32 0.0, %v1741
          %1743 = vmatprep.mubr.f32.mxu0 0.0
          %1744 = vmatmul.mubr.f32.gmra.mxu0 %v1647
          %v1745 = vpop.f32.mrf.mxu0
          %v1746 = vadd.f32 0.0, %v1745
          %v1747 = vpop.f32.mrf.mxu0
          %v1748 = vadd.f32 0.0, %v1747
          %1749 = vmatprep.mubr.f32.mxu0 0.0
          %1750 = vmatmul.mubr.f32.gmra.mxu0 %v1649
          %v1751 = vpop.f32.mrf.mxu0
          %v1752 = vadd.f32 0.0, %v1751
          %v1753 = vpop.f32.mrf.mxu0
          %v1754 = vadd.f32 0.0, %v1753
          %1755 = vmatprep.mubr.f32.mxu0 0.0
          %1756 = vmatmul.mubr.f32.gmra.mxu0 %v1651
          %v1757 = vpop.f32.mrf.mxu0
          %v1758 = vadd.f32 0.0, %v1757
          %v1759 = vpop.f32.mrf.mxu0
          %v1760 = vadd.f32 0.0, %v1759
          %1761 = vmatprep.mubr.f32.mxu0 0.0
          %1762 = vmatmul.mubr.f32.gmra.mxu0 %v1653
          %v1763 = vpop.f32.mrf.mxu0
          %v1764 = vadd.f32 0.0, %v1763
          %v1765 = vpop.f32.mrf.mxu0
          %v1766 = vadd.f32 0.0, %v1765
          %1767 = vmatprep.mubr.f32.mxu0 0.0
          %1768 = vmatmul.mubr.f32.gmra.mxu0 %v1655
          %v1769 = vpop.f32.mrf.mxu0
          %v1770 = vadd.f32 0.0, %v1769
          %v1771 = vpop.f32.mrf.mxu0
          %v1772 = vadd.f32 0.0, %v1771
          %1773 = vmatprep.mubr.f32.mxu0 0.0
          %1774 = vmatmul.mubr.f32.gmra.mxu0 %v1657
          %v1775 = vpop.f32.mrf.mxu0
          %v1776 = vadd.f32 0.0, %v1775
          %v1777 = vpop.f32.mrf.mxu0
          %v1778 = vadd.f32 0.0, %v1777
          %1779 = vmatprep.mubr.f32.mxu0 0.0
          %1780 = vmatmul.mubr.f32.gmra.mxu0 %v1659
          %v1781 = vpop.f32.mrf.mxu0
          %v1782 = vadd.f32 0.0, %v1781
          %v1783 = vpop.f32.mrf.mxu0
          %v1784 = vadd.f32 0.0, %v1783
          %1785 = vmatprep.mubr.f32.mxu0 0.0
          %1786 = vmatmul.mubr.f32.gmra.mxu0 %v1661
          %v1787 = vpop.f32.mrf.mxu0
          %v1788 = vadd.f32 0.0, %v1787
          %v1789 = vpop.f32.mrf.mxu0
          %v1790 = vadd.f32 0.0, %v1789
          %1791 = vdwg.mxu0
          %v1792 = vadd.f32 %v1597, %v1734
          %v1793 = vadd.f32 %v1598, %v1736
          %v1794 = vadd.f32 %v1599, %v1740
          %v1795 = vadd.f32 %v1600, %v1742
          %v1796 = vadd.f32 %v1601, %v1746
          %v1797 = vadd.f32 %v1602, %v1748
          %v1798 = vadd.f32 %v1603, %v1752
          %v1799 = vadd.f32 %v1604, %v1754
          %v1800 = vadd.f32 %v1605, %v1758
          %v1801 = vadd.f32 %v1606, %v1760
          %v1802 = vadd.f32 %v1607, %v1764
          %v1803 = vadd.f32 %v1608, %v1766
          %v1804 = vadd.f32 %v1609, %v1770
          %v1805 = vadd.f32 %v1610, %v1772
          %v1806 = vadd.f32 %v1611, %v1776
          %v1807 = vadd.f32 %v1612, %v1778
          %v1808 = vadd.f32 %v1613, %v1782
          %v1809 = vadd.f32 %v1614, %v1784
          %v1810 = vadd.f32 %v1615, %v1788
          %v1811 = vadd.f32 %v1616, %v1790
          %s1812 = scalar_lea.vmem [#allocation4], 40
          %v1813 = vld [vmem:[%s1812] sm:$0xff]
          %v1814 = vrot.slane %v912, 4
          %v1815 = vrot.slane %v913, 4
          %v1816 = vsel %vm983, %v1814, %v1815
          %v1817 = vrot.slane %v914, 4
          %v1818 = vsel %vm983, %v1815, %v1817
          %v1819 = vrot.slane %v915, 4
          %v1820 = vsel %vm983, %v1817, %v1819
          %v1821 = vrot.slane %v916, 4
          %v1822 = vsel %vm983, %v1819, %v1821
          %v1823 = vrot.slane %v917, 4
          %v1824 = vsel %vm983, %v1821, %v1823
          %v1825 = vrot.slane %v918, 4
          %v1826 = vsel %vm983, %v1823, %v1825
          %v1827 = vrot.slane %v919, 4
          %v1828 = vsel %vm983, %v1825, %v1827
          %v1829 = vrot.slane %v920, 4
          %v1830 = vsel %vm983, %v1827, %v1829
          %v1831 = vrot.slane %v921, 4
          %v1832 = vsel %vm983, %v1829, %v1831
          %v1833 = vrot.slane %v922, 4
          %v1834 = vsel %vm983, %v1831, %v1833
          %v1836 = vcombine.high %v1813, %v1813
          %v1837 = vsel %vm962, %v1816, 0
          %v1839 = vsel %vm962, %v1818, 0
          %v1841 = vsel %vm962, %v1820, 0
          %v1843 = vsel %vm962, %v1822, 0
          %v1845 = vsel %vm962, %v1824, 0
          %v1847 = vsel %vm962, %v1826, 0
          %v1849 = vsel %vm962, %v1828, 0
          %v1851 = vsel %vm962, %v1830, 0
          %v1853 = vsel %vm962, %v1832, 0
          %v1855 = vsel %vm962, %v1834, 0
          %v1857 = vsel %vm983, %v1813, 0
          %v1859 = vsel %vm983, %v1836, 0
          %1861 = vmatprep.subr.mxu0 0.0
          %1862 = vmatpush1.msra.mxu0 0.0
          %1863 = vmatprep.subr.mxu0 0.0
          %1864 = vmatpush1.msra.mxu0 0.0
          %1865 = vmatprep.subr.mxu0 0.0
          %1866 = vmatpush1.msra.mxu0 0.0
          %1867 = vmatprep.subr.mxu0 0.0
          %1868 = vmatpush1.msra.mxu0 0.0
          %1869 = vmatprep.subr.mxu0 0.0
          %1870 = vmatpush1.msra.mxu0 0.0
          %1871 = vmatprep.subr.mxu0 0.0
          %1872 = vmatpush1.msra.mxu0 0.0
          %1873 = vmatprep.subr.mxu0 0.0
          %1874 = vmatpush1.msra.mxu0 0.0
          %1875 = vmatprep.subr.mxu0 0.0
          %1876 = vmatpush1.msra.mxu0 0.0
          %1877 = vmatprep.subr.mxu0 0.0
          %1878 = vmatpush1.msra.mxu0 0.0
          %1879 = vmatprep.subr.mxu0 0.0
          %1880 = vmatpush1.msra.mxu0 0.0
          %1881 = vmatprep.subr.mxu0 0.0
          %1882 = vmatpush1.msra.mxu0 0.0
          %1883 = vmatprep.subr.mxu0 0.0
          %1884 = vmatpush1.msra.mxu0 0.0
          %1885 = vmatprep.subr.mxu0 0.0
          %1886 = vmatpush1.msra.mxu0 0.0
          %1887 = vmatprep.subr.mxu0 0.0
          %1888 = vmatpush1.msra.mxu0 0.0
          %1889 = vmatprep.subr.mxu0 0.0
          %1890 = vmatpush1.msra.mxu0 0.0
          %1891 = vmatprep.subr.mxu0 %v1859
          %1892 = vmatpush1.msra.mxu0 %v1857
          %1893 = vmatprep.subr.mxu0 0.0
          %1894 = vmatpush2.msra.mxu0 0.0
          %1895 = vmatprep.subr.mxu0 0.0
          %1896 = vmatpush2.msra.mxu0 0.0
          %1897 = vmatprep.subr.mxu0 0.0
          %1898 = vmatpush2.msra.mxu0 0.0
          %1899 = vmatprep.subr.mxu0 0.0
          %1900 = vmatpush2.msra.mxu0 0.0
          %1901 = vmatprep.subr.mxu0 0.0
          %1902 = vmatpush2.msra.mxu0 0.0
          %1903 = vmatprep.subr.mxu0 0.0
          %1904 = vmatpush2.msra.mxu0 0.0
          %1905 = vmatprep.subr.mxu0 0.0
          %1906 = vmatpush2.msra.mxu0 0.0
          %1907 = vmatprep.subr.mxu0 0.0
          %1908 = vmatpush2.msra.mxu0 0.0
          %1909 = vmatprep.subr.mxu0 0.0
          %1910 = vmatpush2.msra.mxu0 0.0
          %1911 = vmatprep.subr.mxu0 0.0
          %1912 = vmatpush2.msra.mxu0 0.0
          %1913 = vmatprep.subr.mxu0 0.0
          %1914 = vmatpush2.msra.mxu0 0.0
          %1915 = vmatprep.subr.mxu0 0.0
          %1916 = vmatpush2.msra.mxu0 0.0
          %1917 = vmatprep.subr.mxu0 0.0
          %1918 = vmatpush2.msra.mxu0 0.0
          %1919 = vmatprep.subr.mxu0 0.0
          %1920 = vmatpush2.msra.mxu0 0.0
          %1921 = vmatprep.subr.mxu0 0.0
          %1922 = vmatpush2.msra.mxu0 0.0
          %1923 = vmatprep.subr.mxu0 0.0
          %1924 = vmatpush2.msra.mxu0 0.0
          %1925 = vmatprep.mubr.f32.mxu0 0.0
          %1926 = vmatmul.mubr.f32.gmra.mxu0 %v1837
          %v1927 = vpop.f32.mrf.mxu0
          %v1928 = vadd.f32 0.0, %v1927
          %v1929 = vpop.f32.mrf.mxu0
          %v1930 = vadd.f32 0.0, %v1929
          %1931 = vmatprep.mubr.f32.mxu0 0.0
          %1932 = vmatmul.mubr.f32.gmra.mxu0 %v1839
          %v1933 = vpop.f32.mrf.mxu0
          %v1934 = vadd.f32 0.0, %v1933
          %v1935 = vpop.f32.mrf.mxu0
          %v1936 = vadd.f32 0.0, %v1935
          %1937 = vmatprep.mubr.f32.mxu0 0.0
          %1938 = vmatmul.mubr.f32.gmra.mxu0 %v1841
          %v1939 = vpop.f32.mrf.mxu0
          %v1940 = vadd.f32 0.0, %v1939
          %v1941 = vpop.f32.mrf.mxu0
          %v1942 = vadd.f32 0.0, %v1941
          %1943 = vmatprep.mubr.f32.mxu0 0.0
          %1944 = vmatmul.mubr.f32.gmra.mxu0 %v1843
          %v1945 = vpop.f32.mrf.mxu0
          %v1946 = vadd.f32 0.0, %v1945
          %v1947 = vpop.f32.mrf.mxu0
          %v1948 = vadd.f32 0.0, %v1947
          %1949 = vmatprep.mubr.f32.mxu0 0.0
          %1950 = vmatmul.mubr.f32.gmra.mxu0 %v1845
          %v1951 = vpop.f32.mrf.mxu0
          %v1952 = vadd.f32 0.0, %v1951
          %v1953 = vpop.f32.mrf.mxu0
          %v1954 = vadd.f32 0.0, %v1953
          %1955 = vmatprep.mubr.f32.mxu0 0.0
          %1956 = vmatmul.mubr.f32.gmra.mxu0 %v1847
          %v1957 = vpop.f32.mrf.mxu0
          %v1958 = vadd.f32 0.0, %v1957
          %v1959 = vpop.f32.mrf.mxu0
          %v1960 = vadd.f32 0.0, %v1959
          %1961 = vmatprep.mubr.f32.mxu0 0.0
          %1962 = vmatmul.mubr.f32.gmra.mxu0 %v1849
          %v1963 = vpop.f32.mrf.mxu0
          %v1964 = vadd.f32 0.0, %v1963
          %v1965 = vpop.f32.mrf.mxu0
          %v1966 = vadd.f32 0.0, %v1965
          %1967 = vmatprep.mubr.f32.mxu0 0.0
          %1968 = vmatmul.mubr.f32.gmra.mxu0 %v1851
          %v1969 = vpop.f32.mrf.mxu0
          %v1970 = vadd.f32 0.0, %v1969
          %v1971 = vpop.f32.mrf.mxu0
          %v1972 = vadd.f32 0.0, %v1971
          %1973 = vmatprep.mubr.f32.mxu0 0.0
          %1974 = vmatmul.mubr.f32.gmra.mxu0 %v1853
          %v1975 = vpop.f32.mrf.mxu0
          %v1976 = vadd.f32 0.0, %v1975
          %v1977 = vpop.f32.mrf.mxu0
          %v1978 = vadd.f32 0.0, %v1977
          %1979 = vmatprep.mubr.f32.mxu0 0.0
          %1980 = vmatmul.mubr.f32.gmra.mxu0 %v1855
          %v1981 = vpop.f32.mrf.mxu0
          %v1982 = vadd.f32 0.0, %v1981
          %v1983 = vpop.f32.mrf.mxu0
          %v1984 = vadd.f32 0.0, %v1983
          %1985 = vdwg.mxu0
          %v1986 = vadd.f32 %v1792, %v1928
          %v1987 = vadd.f32 %v1793, %v1930
          %v1988 = vadd.f32 %v1794, %v1934
          %v1989 = vadd.f32 %v1795, %v1936
          %v1990 = vadd.f32 %v1796, %v1940
          %v1991 = vadd.f32 %v1797, %v1942
          %v1992 = vadd.f32 %v1798, %v1946
          %v1993 = vadd.f32 %v1799, %v1948
          %v1994 = vadd.f32 %v1800, %v1952
          %v1995 = vadd.f32 %v1801, %v1954
          %v1996 = vadd.f32 %v1802, %v1958
          %v1997 = vadd.f32 %v1803, %v1960
          %v1998 = vadd.f32 %v1804, %v1964
          %v1999 = vadd.f32 %v1805, %v1966
          %v2000 = vadd.f32 %v1806, %v1970
          %v2001 = vadd.f32 %v1807, %v1972
          %v2002 = vadd.f32 %v1808, %v1976
          %v2003 = vadd.f32 %v1809, %v1978
          %v2004 = vadd.f32 %v1810, %v1982
          %v2005 = vadd.f32 %v1811, %v1984
          %s2006 = scalar_lea.vmem [#allocation4], 48
          %v2007 = vld [vmem:[%s2006] sm:$0xff]
          %v2009 = vrot.slane %v923, 4
          %v2010 = vsel %vm983, %v1833, %v2009
          %v2012 = vcombine.high %v2007, %v2007
          %v2013 = vsel %vm962, %v2010, 0
          %v2015 = vsel %vm983, %v2007, 0
          %v2017 = vsel %vm983, %v2012, 0
          %2019 = vmatprep.subr.mxu0 0.0
          %2020 = vmatpush1.msra.mxu0 0.0
          %2021 = vmatprep.subr.mxu0 0.0
          %2022 = vmatpush1.msra.mxu0 0.0
          %2023 = vmatprep.subr.mxu0 0.0
          %2024 = vmatpush1.msra.mxu0 0.0
          %2025 = vmatprep.subr.mxu0 0.0
          %2026 = vmatpush1.msra.mxu0 0.0
          %2027 = vmatprep.subr.mxu0 0.0
          %2028 = vmatpush1.msra.mxu0 0.0
          %2029 = vmatprep.subr.mxu0 0.0
          %2030 = vmatpush1.msra.mxu0 0.0
          %2031 = vmatprep.subr.mxu0 0.0
          %2032 = vmatpush1.msra.mxu0 0.0
          %2033 = vmatprep.subr.mxu0 0.0
          %2034 = vmatpush1.msra.mxu0 0.0
          %2035 = vmatprep.subr.mxu0 0.0
          %2036 = vmatpush1.msra.mxu0 0.0
          %2037 = vmatprep.subr.mxu0 0.0
          %2038 = vmatpush1.msra.mxu0 0.0
          %2039 = vmatprep.subr.mxu0 0.0
          %2040 = vmatpush1.msra.mxu0 0.0
          %2041 = vmatprep.subr.mxu0 0.0
          %2042 = vmatpush1.msra.mxu0 0.0
          %2043 = vmatprep.subr.mxu0 0.0
          %2044 = vmatpush1.msra.mxu0 0.0
          %2045 = vmatprep.subr.mxu0 0.0
          %2046 = vmatpush1.msra.mxu0 0.0
          %2047 = vmatprep.subr.mxu0 0.0
          %2048 = vmatpush1.msra.mxu0 0.0
          %2049 = vmatprep.subr.mxu0 %v2017
          %2050 = vmatpush1.msra.mxu0 %v2015
          %2051 = vmatprep.subr.mxu0 0.0
          %2052 = vmatpush2.msra.mxu0 0.0
          %2053 = vmatprep.subr.mxu0 0.0
          %2054 = vmatpush2.msra.mxu0 0.0
          %2055 = vmatprep.subr.mxu0 0.0
          %2056 = vmatpush2.msra.mxu0 0.0
          %2057 = vmatprep.subr.mxu0 0.0
          %2058 = vmatpush2.msra.mxu0 0.0
          %2059 = vmatprep.subr.mxu0 0.0
          %2060 = vmatpush2.msra.mxu0 0.0
          %2061 = vmatprep.subr.mxu0 0.0
          %2062 = vmatpush2.msra.mxu0 0.0
          %2063 = vmatprep.subr.mxu0 0.0
          %2064 = vmatpush2.msra.mxu0 0.0
          %2065 = vmatprep.subr.mxu0 0.0
          %2066 = vmatpush2.msra.mxu0 0.0
          %2067 = vmatprep.subr.mxu0 0.0
          %2068 = vmatpush2.msra.mxu0 0.0
          %2069 = vmatprep.subr.mxu0 0.0
          %2070 = vmatpush2.msra.mxu0 0.0
          %2071 = vmatprep.subr.mxu0 0.0
          %2072 = vmatpush2.msra.mxu0 0.0
          %2073 = vmatprep.subr.mxu0 0.0
          %2074 = vmatpush2.msra.mxu0 0.0
          %2075 = vmatprep.subr.mxu0 0.0
          %2076 = vmatpush2.msra.mxu0 0.0
          %2077 = vmatprep.subr.mxu0 0.0
          %2078 = vmatpush2.msra.mxu0 0.0
          %2079 = vmatprep.subr.mxu0 0.0
          %2080 = vmatpush2.msra.mxu0 0.0
          %2081 = vmatprep.subr.mxu0 0.0
          %2082 = vmatpush2.msra.mxu0 0.0
          %2083 = vmatprep.mubr.f32.mxu0 0.0
          %2084 = vmatmul.mubr.f32.gmra.mxu0 %v1839
          %v2085 = vpop.f32.mrf.mxu0
          %v2086 = vadd.f32 0.0, %v2085
          %v2087 = vpop.f32.mrf.mxu0
          %v2088 = vadd.f32 0.0, %v2087
          %2089 = vmatprep.mubr.f32.mxu0 0.0
          %2090 = vmatmul.mubr.f32.gmra.mxu0 %v1841
          %v2091 = vpop.f32.mrf.mxu0
          %v2092 = vadd.f32 0.0, %v2091
          %v2093 = vpop.f32.mrf.mxu0
          %v2094 = vadd.f32 0.0, %v2093
          %2095 = vmatprep.mubr.f32.mxu0 0.0
          %2096 = vmatmul.mubr.f32.gmra.mxu0 %v1843
          %v2097 = vpop.f32.mrf.mxu0
          %v2098 = vadd.f32 0.0, %v2097
          %v2099 = vpop.f32.mrf.mxu0
          %v2100 = vadd.f32 0.0, %v2099
          %2101 = vmatprep.mubr.f32.mxu0 0.0
          %2102 = vmatmul.mubr.f32.gmra.mxu0 %v1845
          %v2103 = vpop.f32.mrf.mxu0
          %v2104 = vadd.f32 0.0, %v2103
          %v2105 = vpop.f32.mrf.mxu0
          %v2106 = vadd.f32 0.0, %v2105
          %2107 = vmatprep.mubr.f32.mxu0 0.0
          %2108 = vmatmul.mubr.f32.gmra.mxu0 %v1847
          %v2109 = vpop.f32.mrf.mxu0
          %v2110 = vadd.f32 0.0, %v2109
          %v2111 = vpop.f32.mrf.mxu0
          %v2112 = vadd.f32 0.0, %v2111
          %2113 = vmatprep.mubr.f32.mxu0 0.0
          %2114 = vmatmul.mubr.f32.gmra.mxu0 %v1849
          %v2115 = vpop.f32.mrf.mxu0
          %v2116 = vadd.f32 0.0, %v2115
          %v2117 = vpop.f32.mrf.mxu0
          %v2118 = vadd.f32 0.0, %v2117
          %2119 = vmatprep.mubr.f32.mxu0 0.0
          %2120 = vmatmul.mubr.f32.gmra.mxu0 %v1851
          %v2121 = vpop.f32.mrf.mxu0
          %v2122 = vadd.f32 0.0, %v2121
          %v2123 = vpop.f32.mrf.mxu0
          %v2124 = vadd.f32 0.0, %v2123
          %2125 = vmatprep.mubr.f32.mxu0 0.0
          %2126 = vmatmul.mubr.f32.gmra.mxu0 %v1853
          %v2127 = vpop.f32.mrf.mxu0
          %v2128 = vadd.f32 0.0, %v2127
          %v2129 = vpop.f32.mrf.mxu0
          %v2130 = vadd.f32 0.0, %v2129
          %2131 = vmatprep.mubr.f32.mxu0 0.0
          %2132 = vmatmul.mubr.f32.gmra.mxu0 %v1855
          %v2133 = vpop.f32.mrf.mxu0
          %v2134 = vadd.f32 0.0, %v2133
          %v2135 = vpop.f32.mrf.mxu0
          %v2136 = vadd.f32 0.0, %v2135
          %2137 = vmatprep.mubr.f32.mxu0 0.0
          %2138 = vmatmul.mubr.f32.gmra.mxu0 %v2013
          %v2139 = vpop.f32.mrf.mxu0
          %v2140 = vadd.f32 0.0, %v2139
          %v2141 = vpop.f32.mrf.mxu0
          %v2142 = vadd.f32 0.0, %v2141
          %2143 = vdwg.mxu0
          %v2144 = vadd.f32 %v1986, %v2086
          %v2145 = vadd.f32 %v1987, %v2088
          %v2146 = vadd.f32 %v1988, %v2092
          %v2147 = vadd.f32 %v1989, %v2094
          %v2148 = vadd.f32 %v1990, %v2098
          %v2149 = vadd.f32 %v1991, %v2100
          %v2150 = vadd.f32 %v1992, %v2104
          %v2151 = vadd.f32 %v1993, %v2106
          %v2152 = vadd.f32 %v1994, %v2110
          %v2153 = vadd.f32 %v1995, %v2112
          %v2154 = vadd.f32 %v1996, %v2116
          %v2155 = vadd.f32 %v1997, %v2118
          %v2156 = vadd.f32 %v1998, %v2122
          %v2157 = vadd.f32 %v1999, %v2124
          %v2158 = vadd.f32 %v2000, %v2128
          %v2159 = vadd.f32 %v2001, %v2130
          %v2160 = vadd.f32 %v2002, %v2134
          %v2161 = vadd.f32 %v2003, %v2136
          %v2162 = vadd.f32 %v2004, %v2140
          %v2163 = vadd.f32 %v2005, %v2142
          %s2164 = scalar_lea.vmem [#allocation4], 56
          %v2165 = vld [vmem:[%s2164] sm:$0xff]
          %vm2166 = vcmask 1042432
          %v2167 = vrot.slane %v913, 5
          %v2168 = vrot.slane %v914, 5
          %v2169 = vsel %vm2166, %v2167, %v2168
          %v2170 = vrot.slane %v915, 5
          %v2171 = vsel %vm2166, %v2168, %v2170
          %v2172 = vrot.slane %v916, 5
          %v2173 = vsel %vm2166, %v2170, %v2172
          %v2174 = vrot.slane %v917, 5
          %v2175 = vsel %vm2166, %v2172, %v2174
          %v2176 = vrot.slane %v918, 5
          %v2177 = vsel %vm2166, %v2174, %v2176
          %v2178 = vrot.slane %v919, 5
          %v2179 = vsel %vm2166, %v2176, %v2178
          %v2180 = vrot.slane %v920, 5
          %v2181 = vsel %vm2166, %v2178, %v2180
          %v2182 = vrot.slane %v921, 5
          %v2183 = vsel %vm2166, %v2180, %v2182
          %v2184 = vrot.slane %v922, 5
          %v2185 = vsel %vm2166, %v2182, %v2184
          %v2186 = vrot.slane %v923, 5
          %v2187 = vsel %vm2166, %v2184, %v2186
          %v2189 = vcombine.high %v2165, %v2165
          %v2190 = vsel %vm962, %v2169, 0
          %v2192 = vsel %vm962, %v2171, 0
          %v2194 = vsel %vm962, %v2173, 0
          %v2196 = vsel %vm962, %v2175, 0
          %v2198 = vsel %vm962, %v2177, 0
          %v2200 = vsel %vm962, %v2179, 0
          %v2202 = vsel %vm962, %v2181, 0
          %v2204 = vsel %vm962, %v2183, 0
          %v2206 = vsel %vm962, %v2185, 0
          %v2208 = vsel %vm962, %v2187, 0
          %v2210 = vsel %vm983, %v2165, 0
          %v2212 = vsel %vm983, %v2189, 0
          %2214 = vmatprep.subr.mxu0 0.0
          %2215 = vmatpush1.msra.mxu0 0.0
          %2216 = vmatprep.subr.mxu0 0.0
          %2217 = vmatpush1.msra.mxu0 0.0
          %2218 = vmatprep.subr.mxu0 0.0
          %2219 = vmatpush1.msra.mxu0 0.0
          %2220 = vmatprep.subr.mxu0 0.0
          %2221 = vmatpush1.msra.mxu0 0.0
          %2222 = vmatprep.subr.mxu0 0.0
          %2223 = vmatpush1.msra.mxu0 0.0
          %2224 = vmatprep.subr.mxu0 0.0
          %2225 = vmatpush1.msra.mxu0 0.0
          %2226 = vmatprep.subr.mxu0 0.0
          %2227 = vmatpush1.msra.mxu0 0.0
          %2228 = vmatprep.subr.mxu0 0.0
          %2229 = vmatpush1.msra.mxu0 0.0
          %2230 = vmatprep.subr.mxu0 0.0
          %2231 = vmatpush1.msra.mxu0 0.0
          %2232 = vmatprep.subr.mxu0 0.0
          %2233 = vmatpush1.msra.mxu0 0.0
          %2234 = vmatprep.subr.mxu0 0.0
          %2235 = vmatpush1.msra.mxu0 0.0
          %2236 = vmatprep.subr.mxu0 0.0
          %2237 = vmatpush1.msra.mxu0 0.0
          %2238 = vmatprep.subr.mxu0 0.0
          %2239 = vmatpush1.msra.mxu0 0.0
          %2240 = vmatprep.subr.mxu0 0.0
          %2241 = vmatpush1.msra.mxu0 0.0
          %2242 = vmatprep.subr.mxu0 0.0
          %2243 = vmatpush1.msra.mxu0 0.0
          %2244 = vmatprep.subr.mxu0 %v2212
          %2245 = vmatpush1.msra.mxu0 %v2210
          %2246 = vmatprep.subr.mxu0 0.0
          %2247 = vmatpush2.msra.mxu0 0.0
          %2248 = vmatprep.subr.mxu0 0.0
          %2249 = vmatpush2.msra.mxu0 0.0
          %2250 = vmatprep.subr.mxu0 0.0
          %2251 = vmatpush2.msra.mxu0 0.0
          %2252 = vmatprep.subr.mxu0 0.0
          %2253 = vmatpush2.msra.mxu0 0.0
          %2254 = vmatprep.subr.mxu0 0.0
          %2255 = vmatpush2.msra.mxu0 0.0
          %2256 = vmatprep.subr.mxu0 0.0
          %2257 = vmatpush2.msra.mxu0 0.0
          %2258 = vmatprep.subr.mxu0 0.0
          %2259 = vmatpush2.msra.mxu0 0.0
          %2260 = vmatprep.subr.mxu0 0.0
          %2261 = vmatpush2.msra.mxu0 0.0
          %2262 = vmatprep.subr.mxu0 0.0
          %2263 = vmatpush2.msra.mxu0 0.0
          %2264 = vmatprep.subr.mxu0 0.0
          %2265 = vmatpush2.msra.mxu0 0.0
          %2266 = vmatprep.subr.mxu0 0.0
          %2267 = vmatpush2.msra.mxu0 0.0
          %2268 = vmatprep.subr.mxu0 0.0
          %2269 = vmatpush2.msra.mxu0 0.0
          %2270 = vmatprep.subr.mxu0 0.0
          %2271 = vmatpush2.msra.mxu0 0.0
          %2272 = vmatprep.subr.mxu0 0.0
          %2273 = vmatpush2.msra.mxu0 0.0
          %2274 = vmatprep.subr.mxu0 0.0
          %2275 = vmatpush2.msra.mxu0 0.0
          %2276 = vmatprep.subr.mxu0 0.0
          %2277 = vmatpush2.msra.mxu0 0.0
          %2278 = vmatprep.mubr.f32.mxu0 0.0
          %2279 = vmatmul.mubr.f32.gmra.mxu0 %v2190
          %v2280 = vpop.f32.mrf.mxu0
          %v2281 = vadd.f32 0.0, %v2280
          %v2282 = vpop.f32.mrf.mxu0
          %v2283 = vadd.f32 0.0, %v2282
          %2284 = vmatprep.mubr.f32.mxu0 0.0
          %2285 = vmatmul.mubr.f32.gmra.mxu0 %v2192
          %v2286 = vpop.f32.mrf.mxu0
          %v2287 = vadd.f32 0.0, %v2286
          %v2288 = vpop.f32.mrf.mxu0
          %v2289 = vadd.f32 0.0, %v2288
          %2290 = vmatprep.mubr.f32.mxu0 0.0
          %2291 = vmatmul.mubr.f32.gmra.mxu0 %v2194
          %v2292 = vpop.f32.mrf.mxu0
          %v2293 = vadd.f32 0.0, %v2292
          %v2294 = vpop.f32.mrf.mxu0
          %v2295 = vadd.f32 0.0, %v2294
          %2296 = vmatprep.mubr.f32.mxu0 0.0
          %2297 = vmatmul.mubr.f32.gmra.mxu0 %v2196
          %v2298 = vpop.f32.mrf.mxu0
          %v2299 = vadd.f32 0.0, %v2298
          %v2300 = vpop.f32.mrf.mxu0
          %v2301 = vadd.f32 0.0, %v2300
          %2302 = vmatprep.mubr.f32.mxu0 0.0
          %2303 = vmatmul.mubr.f32.gmra.mxu0 %v2198
          %v2304 = vpop.f32.mrf.mxu0
          %v2305 = vadd.f32 0.0, %v2304
          %v2306 = vpop.f32.mrf.mxu0
          %v2307 = vadd.f32 0.0, %v2306
          %2308 = vmatprep.mubr.f32.mxu0 0.0
          %2309 = vmatmul.mubr.f32.gmra.mxu0 %v2200
          %v2310 = vpop.f32.mrf.mxu0
          %v2311 = vadd.f32 0.0, %v2310
          %v2312 = vpop.f32.mrf.mxu0
          %v2313 = vadd.f32 0.0, %v2312
          %2314 = vmatprep.mubr.f32.mxu0 0.0
          %2315 = vmatmul.mubr.f32.gmra.mxu0 %v2202
          %v2316 = vpop.f32.mrf.mxu0
          %v2317 = vadd.f32 0.0, %v2316
          %v2318 = vpop.f32.mrf.mxu0
          %v2319 = vadd.f32 0.0, %v2318
          %2320 = vmatprep.mubr.f32.mxu0 0.0
          %2321 = vmatmul.mubr.f32.gmra.mxu0 %v2204
          %v2322 = vpop.f32.mrf.mxu0
          %v2323 = vadd.f32 0.0, %v2322
          %v2324 = vpop.f32.mrf.mxu0
          %v2325 = vadd.f32 0.0, %v2324
          %2326 = vmatprep.mubr.f32.mxu0 0.0
          %2327 = vmatmul.mubr.f32.gmra.mxu0 %v2206
          %v2328 = vpop.f32.mrf.mxu0
          %v2329 = vadd.f32 0.0, %v2328
          %v2330 = vpop.f32.mrf.mxu0
          %v2331 = vadd.f32 0.0, %v2330
          %2332 = vmatprep.mubr.f32.mxu0 0.0
          %2333 = vmatmul.mubr.f32.gmra.mxu0 %v2208
          %v2334 = vpop.f32.mrf.mxu0
          %v2335 = vadd.f32 0.0, %v2334
          %v2336 = vpop.f32.mrf.mxu0
          %v2337 = vadd.f32 0.0, %v2336
          %2338 = vdwg.mxu0
          %v2339 = vadd.f32 %v2144, %v2281
          %v2340 = vadd.f32 %v2145, %v2283
          %v2341 = vadd.f32 %v2146, %v2287
          %v2342 = vadd.f32 %v2147, %v2289
          %v2343 = vadd.f32 %v2148, %v2293
          %v2344 = vadd.f32 %v2149, %v2295
          %v2345 = vadd.f32 %v2150, %v2299
          %v2346 = vadd.f32 %v2151, %v2301
          %v2347 = vadd.f32 %v2152, %v2305
          %v2348 = vadd.f32 %v2153, %v2307
          %v2349 = vadd.f32 %v2154, %v2311
          %v2350 = vadd.f32 %v2155, %v2313
          %v2351 = vadd.f32 %v2156, %v2317
          %v2352 = vadd.f32 %v2157, %v2319
          %v2353 = vadd.f32 %v2158, %v2323
          %v2354 = vadd.f32 %v2159, %v2325
          %v2355 = vadd.f32 %v2160, %v2329
          %v2356 = vadd.f32 %v2161, %v2331
          %v2357 = vadd.f32 %v2162, %v2335
          %v2358 = vadd.f32 %v2163, %v2337
          %s2359 = scalar_lea.vmem [#allocation4], 64
          %v2360 = vld [vmem:[%s2359] sm:$0xff]
          %vm2361 = vcmask 1041408
          %v2362 = vrot.slane %v913, 6
          %v2363 = vrot.slane %v914, 6
          %v2364 = vsel %vm2361, %v2362, %v2363
          %v2365 = vrot.slane %v915, 6
          %v2366 = vsel %vm2361, %v2363, %v2365
          %v2367 = vrot.slane %v916, 6
          %v2368 = vsel %vm2361, %v2365, %v2367
          %v2369 = vrot.slane %v917, 6
          %v2370 = vsel %vm2361, %v2367, %v2369
          %v2371 = vrot.slane %v918, 6
          %v2372 = vsel %vm2361, %v2369, %v2371
          %v2373 = vrot.slane %v919, 6
          %v2374 = vsel %vm2361, %v2371, %v2373
          %v2375 = vrot.slane %v920, 6
          %v2376 = vsel %vm2361, %v2373, %v2375
          %v2377 = vrot.slane %v921, 6
          %v2378 = vsel %vm2361, %v2375, %v2377
          %v2379 = vrot.slane %v922, 6
          %v2380 = vsel %vm2361, %v2377, %v2379
          %v2381 = vrot.slane %v923, 6
          %v2382 = vsel %vm2361, %v2379, %v2381
          %v2384 = vcombine.high %v2360, %v2360
          %v2385 = vsel %vm962, %v2364, 0
          %v2387 = vsel %vm962, %v2366, 0
          %v2389 = vsel %vm962, %v2368, 0
          %v2391 = vsel %vm962, %v2370, 0
          %v2393 = vsel %vm962, %v2372, 0
          %v2395 = vsel %vm962, %v2374, 0
          %v2397 = vsel %vm962, %v2376, 0
          %v2399 = vsel %vm962, %v2378, 0
          %v2401 = vsel %vm962, %v2380, 0
          %v2403 = vsel %vm962, %v2382, 0
          %v2405 = vsel %vm983, %v2360, 0
          %v2407 = vsel %vm983, %v2384, 0
          %2409 = vmatprep.subr.mxu0 0.0
          %2410 = vmatpush1.msra.mxu0 0.0
          %2411 = vmatprep.subr.mxu0 0.0
          %2412 = vmatpush1.msra.mxu0 0.0
          %2413 = vmatprep.subr.mxu0 0.0
          %2414 = vmatpush1.msra.mxu0 0.0
          %2415 = vmatprep.subr.mxu0 0.0
          %2416 = vmatpush1.msra.mxu0 0.0
          %2417 = vmatprep.subr.mxu0 0.0
          %2418 = vmatpush1.msra.mxu0 0.0
          %2419 = vmatprep.subr.mxu0 0.0
          %2420 = vmatpush1.msra.mxu0 0.0
          %2421 = vmatprep.subr.mxu0 0.0
          %2422 = vmatpush1.msra.mxu0 0.0
          %2423 = vmatprep.subr.mxu0 0.0
          %2424 = vmatpush1.msra.mxu0 0.0
          %2425 = vmatprep.subr.mxu0 0.0
          %2426 = vmatpush1.msra.mxu0 0.0
          %2427 = vmatprep.subr.mxu0 0.0
          %2428 = vmatpush1.msra.mxu0 0.0
          %2429 = vmatprep.subr.mxu0 0.0
          %2430 = vmatpush1.msra.mxu0 0.0
          %2431 = vmatprep.subr.mxu0 0.0
          %2432 = vmatpush1.msra.mxu0 0.0
          %2433 = vmatprep.subr.mxu0 0.0
          %2434 = vmatpush1.msra.mxu0 0.0
          %2435 = vmatprep.subr.mxu0 0.0
          %2436 = vmatpush1.msra.mxu0 0.0
          %2437 = vmatprep.subr.mxu0 0.0
          %2438 = vmatpush1.msra.mxu0 0.0
          %2439 = vmatprep.subr.mxu0 %v2407
          %2440 = vmatpush1.msra.mxu0 %v2405
          %2441 = vmatprep.subr.mxu0 0.0
          %2442 = vmatpush2.msra.mxu0 0.0
          %2443 = vmatprep.subr.mxu0 0.0
          %2444 = vmatpush2.msra.mxu0 0.0
          %2445 = vmatprep.subr.mxu0 0.0
          %2446 = vmatpush2.msra.mxu0 0.0
          %2447 = vmatprep.subr.mxu0 0.0
          %2448 = vmatpush2.msra.mxu0 0.0
          %2449 = vmatprep.subr.mxu0 0.0
          %2450 = vmatpush2.msra.mxu0 0.0
          %2451 = vmatprep.subr.mxu0 0.0
          %2452 = vmatpush2.msra.mxu0 0.0
          %2453 = vmatprep.subr.mxu0 0.0
          %2454 = vmatpush2.msra.mxu0 0.0
          %2455 = vmatprep.subr.mxu0 0.0
          %2456 = vmatpush2.msra.mxu0 0.0
          %2457 = vmatprep.subr.mxu0 0.0
          %2458 = vmatpush2.msra.mxu0 0.0
          %2459 = vmatprep.subr.mxu0 0.0
          %2460 = vmatpush2.msra.mxu0 0.0
          %2461 = vmatprep.subr.mxu0 0.0
          %2462 = vmatpush2.msra.mxu0 0.0
          %2463 = vmatprep.subr.mxu0 0.0
          %2464 = vmatpush2.msra.mxu0 0.0
          %2465 = vmatprep.subr.mxu0 0.0
          %2466 = vmatpush2.msra.mxu0 0.0
          %2467 = vmatprep.subr.mxu0 0.0
          %2468 = vmatpush2.msra.mxu0 0.0
          %2469 = vmatprep.subr.mxu0 0.0
          %2470 = vmatpush2.msra.mxu0 0.0
          %2471 = vmatprep.subr.mxu0 0.0
          %2472 = vmatpush2.msra.mxu0 0.0
          %2473 = vmatprep.mubr.f32.mxu0 0.0
          %2474 = vmatmul.mubr.f32.gmra.mxu0 %v2385
          %v2475 = vpop.f32.mrf.mxu0
          %v2476 = vadd.f32 0.0, %v2475
          %v2477 = vpop.f32.mrf.mxu0
          %v2478 = vadd.f32 0.0, %v2477
          %2479 = vmatprep.mubr.f32.mxu0 0.0
          %2480 = vmatmul.mubr.f32.gmra.mxu0 %v2387
          %v2481 = vpop.f32.mrf.mxu0
          %v2482 = vadd.f32 0.0, %v2481
          %v2483 = vpop.f32.mrf.mxu0
          %v2484 = vadd.f32 0.0, %v2483
          %2485 = vmatprep.mubr.f32.mxu0 0.0
          %2486 = vmatmul.mubr.f32.gmra.mxu0 %v2389
          %v2487 = vpop.f32.mrf.mxu0
          %v2488 = vadd.f32 0.0, %v2487
          %v2489 = vpop.f32.mrf.mxu0
          %v2490 = vadd.f32 0.0, %v2489
          %2491 = vmatprep.mubr.f32.mxu0 0.0
          %2492 = vmatmul.mubr.f32.gmra.mxu0 %v2391
          %v2493 = vpop.f32.mrf.mxu0
          %v2494 = vadd.f32 0.0, %v2493
          %v2495 = vpop.f32.mrf.mxu0
          %v2496 = vadd.f32 0.0, %v2495
          %2497 = vmatprep.mubr.f32.mxu0 0.0
          %2498 = vmatmul.mubr.f32.gmra.mxu0 %v2393
          %v2499 = vpop.f32.mrf.mxu0
          %v2500 = vadd.f32 0.0, %v2499
          %v2501 = vpop.f32.mrf.mxu0
          %v2502 = vadd.f32 0.0, %v2501
          %2503 = vmatprep.mubr.f32.mxu0 0.0
          %2504 = vmatmul.mubr.f32.gmra.mxu0 %v2395
          %v2505 = vpop.f32.mrf.mxu0
          %v2506 = vadd.f32 0.0, %v2505
          %v2507 = vpop.f32.mrf.mxu0
          %v2508 = vadd.f32 0.0, %v2507
          %2509 = vmatprep.mubr.f32.mxu0 0.0
          %2510 = vmatmul.mubr.f32.gmra.mxu0 %v2397
          %v2511 = vpop.f32.mrf.mxu0
          %v2512 = vadd.f32 0.0, %v2511
          %v2513 = vpop.f32.mrf.mxu0
          %v2514 = vadd.f32 0.0, %v2513
          %2515 = vmatprep.mubr.f32.mxu0 0.0
          %2516 = vmatmul.mubr.f32.gmra.mxu0 %v2399
          %v2517 = vpop.f32.mrf.mxu0
          %v2518 = vadd.f32 0.0, %v2517
          %v2519 = vpop.f32.mrf.mxu0
          %v2520 = vadd.f32 0.0, %v2519
          %2521 = vmatprep.mubr.f32.mxu0 0.0
          %2522 = vmatmul.mubr.f32.gmra.mxu0 %v2401
          %v2523 = vpop.f32.mrf.mxu0
          %v2524 = vadd.f32 0.0, %v2523
          %v2525 = vpop.f32.mrf.mxu0
          %v2526 = vadd.f32 0.0, %v2525
          %2527 = vmatprep.mubr.f32.mxu0 0.0
          %2528 = vmatmul.mubr.f32.gmra.mxu0 %v2403
          %v2529 = vpop.f32.mrf.mxu0
          %v2530 = vadd.f32 0.0, %v2529
          %v2531 = vpop.f32.mrf.mxu0
          %v2532 = vadd.f32 0.0, %v2531
          %2533 = vdwg.mxu0
          %v2534 = vadd.f32 %v2339, %v2476
          %v2535 = vadd.f32 %v2340, %v2478
          %v2536 = vadd.f32 %v2341, %v2482
          %v2537 = vadd.f32 %v2342, %v2484
          %v2538 = vadd.f32 %v2343, %v2488
          %v2539 = vadd.f32 %v2344, %v2490
          %v2540 = vadd.f32 %v2345, %v2494
          %v2541 = vadd.f32 %v2346, %v2496
          %v2542 = vadd.f32 %v2347, %v2500
          %v2543 = vadd.f32 %v2348, %v2502
          %v2544 = vadd.f32 %v2349, %v2506
          %v2545 = vadd.f32 %v2350, %v2508
          %v2546 = vadd.f32 %v2351, %v2512
          %v2547 = vadd.f32 %v2352, %v2514
          %v2548 = vadd.f32 %v2353, %v2518
          %v2549 = vadd.f32 %v2354, %v2520
          %v2550 = vadd.f32 %v2355, %v2524
          %v2551 = vadd.f32 %v2356, %v2526
          %v2552 = vadd.f32 %v2357, %v2530
          %v2553 = vadd.f32 %v2358, %v2532
          %v2554 = vld [vmem:[#allocation6] sm:$0x3]
          %v2556 = vlaneseq
          %v2557 = vshrl.u32 %v2556, 7
          %v2558 = vsub.s32 0, %v2557
          %v2559 = vrot.slane %v2554, %v2558
          %v2560 = vlaneseq
          %v2561 = vshrl.u32 %v2560, 7
          %v2562 = vsub.s32 1, %v2561
          %v2563 = vrot.slane %v2554, %v2562
          %v2566 = vmul.f32 %v2534, %v2559
          %v2567 = vmul.f32 %v2535, %v2563
          %v2568 = vmul.f32 %v2536, %v2559
          %v2569 = vmul.f32 %v2537, %v2563
          %v2570 = vmul.f32 %v2538, %v2559
          %v2571 = vmul.f32 %v2539, %v2563
          %v2572 = vmul.f32 %v2540, %v2559
          %v2573 = vmul.f32 %v2541, %v2563
          %v2574 = vmul.f32 %v2542, %v2559
          %v2575 = vmul.f32 %v2543, %v2563
          %v2576 = vmul.f32 %v2544, %v2559
          %v2577 = vmul.f32 %v2545, %v2563
          %v2578 = vmul.f32 %v2546, %v2559
          %v2579 = vmul.f32 %v2547, %v2563
          %v2580 = vmul.f32 %v2548, %v2559
          %v2581 = vmul.f32 %v2549, %v2563
          %v2582 = vmul.f32 %v2550, %v2559
          %v2583 = vmul.f32 %v2551, %v2563
          %v2584 = vmul.f32 %v2552, %v2559
          %v2585 = vmul.f32 %v2553, %v2563
          %v2586 = vld [vmem:[#allocation8] sm:$0x3]
          %v2588 = vlaneseq
          %v2589 = vshrl.u32 %v2588, 7
          %v2590 = vsub.s32 0, %v2589
          %v2591 = vrot.slane %v2586, %v2590
          %v2592 = vlaneseq
          %v2593 = vshrl.u32 %v2592, 7
          %v2594 = vsub.s32 1, %v2593
          %v2595 = vrot.slane %v2586, %v2594
          %v2598 = vadd.f32 %v2566, %v2591
          %v2599 = vadd.f32 %v2567, %v2595
          %v2600 = vadd.f32 %v2568, %v2591
          %v2601 = vadd.f32 %v2569, %v2595
          %v2602 = vadd.f32 %v2570, %v2591
          %v2603 = vadd.f32 %v2571, %v2595
          %v2604 = vadd.f32 %v2572, %v2591
          %v2605 = vadd.f32 %v2573, %v2595
          %v2606 = vadd.f32 %v2574, %v2591
          %v2607 = vadd.f32 %v2575, %v2595
          %v2608 = vadd.f32 %v2576, %v2591
          %v2609 = vadd.f32 %v2577, %v2595
          %v2610 = vadd.f32 %v2578, %v2591
          %v2611 = vadd.f32 %v2579, %v2595
          %v2612 = vadd.f32 %v2580, %v2591
          %v2613 = vadd.f32 %v2581, %v2595
          %v2614 = vadd.f32 %v2582, %v2591
          %v2615 = vadd.f32 %v2583, %v2595
          %v2616 = vadd.f32 %v2584, %v2591
          %v2617 = vadd.f32 %v2585, %v2595
          %v2618 = vmax.f32 %v2598, 0.0
          %v2619 = vmax.f32 %v2599, 0.0
          %v2620 = vmax.f32 %v2600, 0.0
          %v2621 = vmax.f32 %v2601, 0.0
          %v2622 = vmax.f32 %v2602, 0.0
          %v2623 = vmax.f32 %v2603, 0.0
          %v2624 = vmax.f32 %v2604, 0.0
          %v2625 = vmax.f32 %v2605, 0.0
          %v2626 = vmax.f32 %v2606, 0.0
          %v2627 = vmax.f32 %v2607, 0.0
          %v2628 = vmax.f32 %v2608, 0.0
          %v2629 = vmax.f32 %v2609, 0.0
          %v2630 = vmax.f32 %v2610, 0.0
          %v2631 = vmax.f32 %v2611, 0.0
          %v2632 = vmax.f32 %v2612, 0.0
          %v2633 = vmax.f32 %v2613, 0.0
          %v2634 = vmax.f32 %v2614, 0.0
          %v2635 = vmax.f32 %v2615, 0.0
          %v2636 = vmax.f32 %v2616, 0.0
          %v2637 = vmax.f32 %v2617, 0.0
          %v2638 = vsel %vm873, 1, 0
          %v2639 = vsel %vm874, 1, 0
          %v2640 = vsel %vm875, 1, 0
          %v2641 = vsel %vm876, 1, 0
          %v2642 = vsel %vm877, 1, 0
          %v2643 = vsel %vm878, 1, 0
          %v2644 = vsel %vm879, 1, 0
          %v2645 = vsel %vm880, 1, 0
          %v2646 = vsel %vm881, 1, 0
          %v2647 = vsel %vm882, 1, 0
          %vm2648 = vcmp.eq.s32.totalorder %v2638, 1
          %vm2649 = vcmp.eq.s32.totalorder %v2639, 1
          %vm2650 = vcmp.eq.s32.totalorder %v2640, 1
          %vm2651 = vcmp.eq.s32.totalorder %v2641, 1
          %vm2652 = vcmp.eq.s32.totalorder %v2642, 1
          %vm2653 = vcmp.eq.s32.totalorder %v2643, 1
          %vm2654 = vcmp.eq.s32.totalorder %v2644, 1
          %vm2655 = vcmp.eq.s32.totalorder %v2645, 1
          %vm2656 = vcmp.eq.s32.totalorder %v2646, 1
          %vm2657 = vcmp.eq.s32.totalorder %v2647, 1
          %v2658 = vsel %vm2648, %v2618, 0.0
          %v2659 = vsel %vm2648, %v2619, 0.0
          %v2660 = vsel %vm2649, %v2620, 0.0
          %v2661 = vsel %vm2649, %v2621, 0.0
          %v2662 = vsel %vm2650, %v2622, 0.0
          %v2663 = vsel %vm2650, %v2623, 0.0
          %v2664 = vsel %vm2651, %v2624, 0.0
          %v2665 = vsel %vm2651, %v2625, 0.0
          %v2666 = vsel %vm2652, %v2626, 0.0
          %v2667 = vsel %vm2652, %v2627, 0.0
          %v2668 = vsel %vm2653, %v2628, 0.0
          %v2669 = vsel %vm2653, %v2629, 0.0
          %v2670 = vsel %vm2654, %v2630, 0.0
          %v2671 = vsel %vm2654, %v2631, 0.0
          %v2672 = vsel %vm2655, %v2632, 0.0
          %v2673 = vsel %vm2655, %v2633, 0.0
          %v2674 = vsel %vm2656, %v2634, 0.0
          %v2675 = vsel %vm2656, %v2635, 0.0
          %v2676 = vsel %vm2657, %v2636, 0.0
          %v2677 = vsel %vm2657, %v2637, 0.0
          %2678 = vst [vmem:[#allocation2 + $0x20] sm:$0xff] %v2658
          %2679 = vst [vmem:[#allocation2 + $0x28] sm:$0xff] %v2659
          %2680 = vst [vmem:[#allocation2 + $0x30] sm:$0xff] %v2660
          %2681 = vst [vmem:[#allocation2 + $0x38] sm:$0xff] %v2661
          %2682 = vst [vmem:[#allocation2 + $0x40] sm:$0xff] %v2662
          %2683 = vst [vmem:[#allocation2 + $0x48] sm:$0xff] %v2663
          %2684 = vst [vmem:[#allocation2 + $0x50] sm:$0xff] %v2664
          %2685 = vst [vmem:[#allocation2 + $0x58] sm:$0xff] %v2665
          %2686 = vst [vmem:[#allocation2 + $0x60] sm:$0xff] %v2666
          %2687 = vst [vmem:[#allocation2 + $0x68] sm:$0xff] %v2667
          %2688 = vst [vmem:[#allocation2 + $0x70] sm:$0xff] %v2668
          %2689 = vst [vmem:[#allocation2 + $0x78] sm:$0xff] %v2669
          %2690 = vst [vmem:[#allocation2 + $0x80] sm:$0xff] %v2670
          %2691 = vst [vmem:[#allocation2 + $0x88] sm:$0xff] %v2671
          %2692 = vst [vmem:[#allocation2 + $0x90] sm:$0xff] %v2672
          %2693 = vst [vmem:[#allocation2 + $0x98] sm:$0xff] %v2673
          %2694 = vst [vmem:[#allocation2 + $0xa0] sm:$0xff] %v2674
          %2695 = vst [vmem:[#allocation2 + $0xa8] sm:$0xff] %v2675
          %2696 = vst [vmem:[#allocation2 + $0xb0] sm:$0xff] %v2676
          %2697 = vst [vmem:[#allocation2 + $0xb8] sm:$0xff] %v2677
        $region112: #{residual_tower.1} parent=67 // pred_fallthru
          _
        %v2698 = vld [vmem:[#allocation2] sm:$0xe0]
        %v2699 = vld [vmem:[#allocation2 + $0x8] sm:$0xe0]
        %v2700 = vld [vmem:[#allocation2 + $0x10] sm:$0xff]
        %v2701 = vld [vmem:[#allocation2 + $0x18] sm:$0xff]
        %v2702 = vld [vmem:[#allocation2 + $0x20] sm:$0xff]
        %v2703 = vld [vmem:[#allocation2 + $0x28] sm:$0xff]
        %v2704 = vld [vmem:[#allocation2 + $0x30] sm:$0xff]
        %v2705 = vld [vmem:[#allocation2 + $0x38] sm:$0xff]
        %v2706 = vld [vmem:[#allocation2 + $0x40] sm:$0xff]
        %v2707 = vld [vmem:[#allocation2 + $0x48] sm:$0xff]
        %v2708 = vld [vmem:[#allocation2 + $0x50] sm:$0xff]
        %v2709 = vld [vmem:[#allocation2 + $0x58] sm:$0xff]
        %v2710 = vld [vmem:[#allocation2 + $0x60] sm:$0xff]
        %v2711 = vld [vmem:[#allocation2 + $0x68] sm:$0xff]
        %v2712 = vld [vmem:[#allocation2 + $0x70] sm:$0xff]
        %v2713 = vld [vmem:[#allocation2 + $0x78] sm:$0xff]
        %v2714 = vld [vmem:[#allocation2 + $0x80] sm:$0xff]
        %v2715 = vld [vmem:[#allocation2 + $0x88] sm:$0xff]
        %v2716 = vld [vmem:[#allocation2 + $0x90] sm:$0xff]
        %v2717 = vld [vmem:[#allocation2 + $0x98] sm:$0xff]
        %v2718 = vld [vmem:[#allocation2 + $0xa0] sm:$0x1f]
        %v2719 = vld [vmem:[#allocation2 + $0xa8] sm:$0x1f]
        %v2720 = vld [vmem:[%s572] sm:$0xff]
        %v2721 = vld [vmem:[%s572 + $0x8] sm:$0xff]
        %v2722 = vld [vmem:[%s572 + $0x10] sm:$0xff]
        %v2723 = vld [vmem:[%s572 + $0x18] sm:$0xff]
        %v2724 = vld [vmem:[%s572 + $0x20] sm:$0xff]
        %v2725 = vld [vmem:[%s572 + $0x28] sm:$0xff]
        %v2726 = vld [vmem:[%s572 + $0x30] sm:$0xff]
        %v2727 = vld [vmem:[%s572 + $0x38] sm:$0xff]
        %v2728 = vld [vmem:[%s572 + $0x40] sm:$0xff]
        %v2729 = vld [vmem:[%s572 + $0x48] sm:$0xff]
        %v2730 = vld [vmem:[%s572 + $0x50] sm:$0xff]
        %v2731 = vld [vmem:[%s572 + $0x58] sm:$0xff]
        %v2732 = vld [vmem:[%s572 + $0x60] sm:$0xff]
        %v2733 = vld [vmem:[%s572 + $0x68] sm:$0xff]
        %v2734 = vld [vmem:[%s572 + $0x70] sm:$0xff]
        %v2735 = vld [vmem:[%s572 + $0x78] sm:$0xff]
        %v2736 = vld [vmem:[%s572 + $0x80] sm:$0xff]
        %v2737 = vld [vmem:[%s572 + $0x88] sm:$0xff]
        %v2738 = vld [vmem:[%s572 + $0x90] sm:$0xff]
        %v2739 = vld [vmem:[%s572 + $0x98] sm:$0xff]
        %v2740 = vld [vmem:[%s572 + $0xa0] sm:$0xff]
        %v2741 = vld [vmem:[%s572 + $0xa8] sm:$0xff]
        %v2742 = vld [vmem:[%s572 + $0xb0] sm:$0xff]
        %v2743 = vld [vmem:[%s572 + $0xb8] sm:$0xff]
        %v2744 = vld [vmem:[%s572 + $0xc0] sm:$0xff]
        %v2745 = vld [vmem:[%s572 + $0xc8] sm:$0xff]
        %v2746 = vld [vmem:[%s572 + $0xd0] sm:$0xff]
        %v2747 = vld [vmem:[%s572 + $0xd8] sm:$0xff]
        %v2748 = vld [vmem:[%s572 + $0xe0] sm:$0xff]
        %v2749 = vld [vmem:[%s572 + $0xe8] sm:$0xff]
        %v2750 = vld [vmem:[%s572 + $0xf0] sm:$0xff]
        %v2751 = vld [vmem:[%s572 + $0xf8] sm:$0xff]
        %v2752 = vld [vmem:[%s572 + $0x100] sm:$0xff]
        %v2753 = vld [vmem:[%s572 + $0x108] sm:$0xff]
        %v2754 = vld [vmem:[%s572 + $0x110] sm:$0xff]
        %v2755 = vld [vmem:[%s572 + $0x118] sm:$0xff]
        %v2756 = vld [vmem:[%s572 + $0x120] sm:$0xff]
        %v2757 = vld [vmem:[%s572 + $0x128] sm:$0xff]
        %v2758 = vld [vmem:[%s572 + $0x130] sm:$0xff]
        %v2759 = vld [vmem:[%s572 + $0x138] sm:$0xff]
        %v2760 = vld [vmem:[%s572 + $0x140] sm:$0xff]
        %v2761 = vld [vmem:[%s572 + $0x148] sm:$0xff]
        %v2762 = vld [vmem:[%s572 + $0x150] sm:$0xff]
        %v2763 = vld [vmem:[%s572 + $0x158] sm:$0xff]
        %v2764 = vld [vmem:[%s572 + $0x160] sm:$0xff]
        %v2765 = vld [vmem:[%s572 + $0x168] sm:$0xff]
        %v2766 = vld [vmem:[%s572 + $0x170] sm:$0xff]
        %v2767 = vld [vmem:[%s572 + $0x178] sm:$0xff]
        %v2768 = vld [vmem:[%s572 + $0x180] sm:$0xff]
        %v2769 = vld [vmem:[%s572 + $0x188] sm:$0xff]
        %v2770 = vld [vmem:[%s572 + $0x190] sm:$0xff]
        %v2771 = vld [vmem:[%s572 + $0x198] sm:$0xff]
        %v2772 = vld [vmem:[%s572 + $0x1a0] sm:$0xff]
        %v2773 = vld [vmem:[%s572 + $0x1a8] sm:$0xff]
        %v2774 = vld [vmem:[%s572 + $0x1b0] sm:$0xff]
        %v2775 = vld [vmem:[%s572 + $0x1b8] sm:$0xff]
        %v2776 = vld [vmem:[%s572 + $0x1c0] sm:$0xff]
        %v2777 = vld [vmem:[%s572 + $0x1c8] sm:$0xff]
        %v2778 = vld [vmem:[%s572 + $0x1d0] sm:$0xff]
        %v2779 = vld [vmem:[%s572 + $0x1d8] sm:$0xff]
        %v2780 = vld [vmem:[%s572 + $0x1e0] sm:$0xff]
        %v2781 = vld [vmem:[%s572 + $0x1e8] sm:$0xff]
        %v2782 = vld [vmem:[%s572 + $0x1f0] sm:$0xff]
        %v2783 = vld [vmem:[%s572 + $0x1f8] sm:$0xff]
        %v2784 = vld [vmem:[#allocation2] sm:$0xc0]
        %v2785 = vld [vmem:[#allocation2 + $0x8] sm:$0xc0]
        %v2786 = vld [vmem:[#allocation2 + $0xa0] sm:$0x3f]
        %v2787 = vld [vmem:[#allocation2 + $0xa8] sm:$0x3f]
        %s2788 = scalar_lea.vmem %s572, 512 [#allocation9]
        %v2789 = vld [vmem:[%s2788] sm:$0xff]
        %v2790 = vld [vmem:[%s2788 + $0x8] sm:$0xff]
        %v2791 = vld [vmem:[%s2788 + $0x10] sm:$0xff]
        %v2792 = vld [vmem:[%s2788 + $0x18] sm:$0xff]
        %v2793 = vld [vmem:[%s2788 + $0x20] sm:$0xff]
        %v2794 = vld [vmem:[%s2788 + $0x28] sm:$0xff]
        %v2795 = vld [vmem:[%s2788 + $0x30] sm:$0xff]
        %v2796 = vld [vmem:[%s2788 + $0x38] sm:$0xff]
        %v2797 = vld [vmem:[%s2788 + $0x40] sm:$0xff]
        %v2798 = vld [vmem:[%s2788 + $0x48] sm:$0xff]
        %v2799 = vld [vmem:[%s2788 + $0x50] sm:$0xff]
        %v2800 = vld [vmem:[%s2788 + $0x58] sm:$0xff]
        %v2801 = vld [vmem:[%s2788 + $0x60] sm:$0xff]
        %v2802 = vld [vmem:[%s2788 + $0x68] sm:$0xff]
        %v2803 = vld [vmem:[%s2788 + $0x70] sm:$0xff]
        %v2804 = vld [vmem:[%s2788 + $0x78] sm:$0xff]
        %v2805 = vld [vmem:[%s2788 + $0x80] sm:$0xff]
        %v2806 = vld [vmem:[%s2788 + $0x88] sm:$0xff]
        %v2807 = vld [vmem:[%s2788 + $0x90] sm:$0xff]
        %v2808 = vld [vmem:[%s2788 + $0x98] sm:$0xff]
        %v2809 = vld [vmem:[%s2788 + $0xa0] sm:$0xff]
        %v2810 = vld [vmem:[%s2788 + $0xa8] sm:$0xff]
        %v2811 = vld [vmem:[%s2788 + $0xb0] sm:$0xff]
        %v2812 = vld [vmem:[%s2788 + $0xb8] sm:$0xff]
        %v2813 = vld [vmem:[%s2788 + $0xc0] sm:$0xff]
        %v2814 = vld [vmem:[%s2788 + $0xc8] sm:$0xff]
        %v2815 = vld [vmem:[%s2788 + $0xd0] sm:$0xff]
        %v2816 = vld [vmem:[%s2788 + $0xd8] sm:$0xff]
        %v2817 = vld [vmem:[%s2788 + $0xe0] sm:$0xff]
        %v2818 = vld [vmem:[%s2788 + $0xe8] sm:$0xff]
        %v2819 = vld [vmem:[%s2788 + $0xf0] sm:$0xff]
        %v2820 = vld [vmem:[%s2788 + $0xf8] sm:$0xff]
        %v2821 = vld [vmem:[%s2788 + $0x100] sm:$0xff]
        %v2822 = vld [vmem:[%s2788 + $0x108] sm:$0xff]
        %v2823 = vld [vmem:[%s2788 + $0x110] sm:$0xff]
        %v2824 = vld [vmem:[%s2788 + $0x118] sm:$0xff]
        %v2825 = vld [vmem:[%s2788 + $0x120] sm:$0xff]
        %v2826 = vld [vmem:[%s2788 + $0x128] sm:$0xff]
        %v2827 = vld [vmem:[%s2788 + $0x130] sm:$0xff]
        %v2828 = vld [vmem:[%s2788 + $0x138] sm:$0xff]
        %v2829 = vld [vmem:[%s2788 + $0x140] sm:$0xff]
        %v2830 = vld [vmem:[%s2788 + $0x148] sm:$0xff]
        %v2831 = vld [vmem:[%s2788 + $0x150] sm:$0xff]
        %v2832 = vld [vmem:[%s2788 + $0x158] sm:$0xff]
        %v2833 = vld [vmem:[%s2788 + $0x160] sm:$0xff]
        %v2834 = vld [vmem:[%s2788 + $0x168] sm:$0xff]
        %v2835 = vld [vmem:[%s2788 + $0x170] sm:$0xff]
        %v2836 = vld [vmem:[%s2788 + $0x178] sm:$0xff]
        %v2837 = vld [vmem:[%s2788 + $0x180] sm:$0xff]
        %v2838 = vld [vmem:[%s2788 + $0x188] sm:$0xff]
        %v2839 = vld [vmem:[%s2788 + $0x190] sm:$0xff]
        %v2840 = vld [vmem:[%s2788 + $0x198] sm:$0xff]
        %v2841 = vld [vmem:[%s2788 + $0x1a0] sm:$0xff]
        %v2842 = vld [vmem:[%s2788 + $0x1a8] sm:$0xff]
        %v2843 = vld [vmem:[%s2788 + $0x1b0] sm:$0xff]
        %v2844 = vld [vmem:[%s2788 + $0x1b8] sm:$0xff]
        %v2845 = vld [vmem:[%s2788 + $0x1c0] sm:$0xff]
        %v2846 = vld [vmem:[%s2788 + $0x1c8] sm:$0xff]
        %v2847 = vld [vmem:[%s2788 + $0x1d0] sm:$0xff]
        %v2848 = vld [vmem:[%s2788 + $0x1d8] sm:$0xff]
        %v2849 = vld [vmem:[%s2788 + $0x1e0] sm:$0xff]
        %v2850 = vld [vmem:[%s2788 + $0x1e8] sm:$0xff]
        %v2851 = vld [vmem:[%s2788 + $0x1f0] sm:$0xff]
        %v2852 = vld [vmem:[%s2788 + $0x1f8] sm:$0xff]
        %vm2875 = vcmask 1041408
        %v2876 = vrot.slane %v2784, 6
        %v2877 = vrot.slane %v2700, 6
        %v2878 = vsel %vm2875, %v2876, %v2877
        %v2879 = vrot.slane %v2785, 6
        %v2880 = vrot.slane %v2701, 6
        %v2881 = vsel %vm2875, %v2879, %v2880
        %v2882 = vrot.slane %v2702, 6
        %v2883 = vsel %vm2875, %v2877, %v2882
        %v2884 = vrot.slane %v2703, 6
        %v2885 = vsel %vm2875, %v2880, %v2884
        %v2886 = vrot.slane %v2704, 6
        %v2887 = vsel %vm2875, %v2882, %v2886
        %v2888 = vrot.slane %v2705, 6
        %v2889 = vsel %vm2875, %v2884, %v2888
        %v2890 = vrot.slane %v2706, 6
        %v2891 = vsel %vm2875, %v2886, %v2890
        %v2892 = vrot.slane %v2707, 6
        %v2893 = vsel %vm2875, %v2888, %v2892
        %v2894 = vrot.slane %v2708, 6
        %v2895 = vsel %vm2875, %v2890, %v2894
        %v2896 = vrot.slane %v2709, 6
        %v2897 = vsel %vm2875, %v2892, %v2896
        %v2898 = vrot.slane %v2710, 6
        %v2899 = vsel %vm2875, %v2894, %v2898
        %v2900 = vrot.slane %v2711, 6
        %v2901 = vsel %vm2875, %v2896, %v2900
        %v2902 = vrot.slane %v2712, 6
        %v2903 = vsel %vm2875, %v2898, %v2902
        %v2904 = vrot.slane %v2713, 6
        %v2905 = vsel %vm2875, %v2900, %v2904
        %v2906 = vrot.slane %v2714, 6
        %v2907 = vsel %vm2875, %v2902, %v2906
        %v2908 = vrot.slane %v2715, 6
        %v2909 = vsel %vm2875, %v2904, %v2908
        %v2910 = vrot.slane %v2716, 6
        %v2911 = vsel %vm2875, %v2906, %v2910
        %v2912 = vrot.slane %v2717, 6
        %v2913 = vsel %vm2875, %v2908, %v2912
        %v2914 = vrot.slane %v2786, 6
        %v2915 = vsel %vm2875, %v2910, %v2914
        %v2916 = vrot.slane %v2787, 6
        %v2917 = vsel %vm2875, %v2912, %v2916
        %2938 = vmatprep.subr.mxu0 %v2820
        %2939 = vmatpush1.msra.mxu0 %v2819
        %2940 = vmatprep.subr.mxu0 %v2818
        %2941 = vmatpush1.msra.mxu0 %v2817
        %2942 = vmatprep.subr.mxu0 %v2816
        %2943 = vmatpush1.msra.mxu0 %v2815
        %2944 = vmatprep.subr.mxu0 %v2814
        %2945 = vmatpush1.msra.mxu0 %v2813
        %2946 = vmatprep.subr.mxu0 %v2812
        %2947 = vmatpush1.msra.mxu0 %v2811
        %2948 = vmatprep.subr.mxu0 %v2810
        %2949 = vmatpush1.msra.mxu0 %v2809
        %2950 = vmatprep.subr.mxu0 %v2808
        %2951 = vmatpush1.msra.mxu0 %v2807
        %2952 = vmatprep.subr.mxu0 %v2806
        %2953 = vmatpush1.msra.mxu0 %v2805
        %2954 = vmatprep.subr.mxu0 %v2804
        %2955 = vmatpush1.msra.mxu0 %v2803
        %2956 = vmatprep.subr.mxu0 %v2802
        %2957 = vmatpush1.msra.mxu0 %v2801
        %2958 = vmatprep.subr.mxu0 %v2800
        %2959 = vmatpush1.msra.mxu0 %v2799
        %2960 = vmatprep.subr.mxu0 %v2798
        %2961 = vmatpush1.msra.mxu0 %v2797
        %2962 = vmatprep.subr.mxu0 %v2796
        %2963 = vmatpush1.msra.mxu0 %v2795
        %2964 = vmatprep.subr.mxu0 %v2794
        %2965 = vmatpush1.msra.mxu0 %v2793
        %2966 = vmatprep.subr.mxu0 %v2792
        %2967 = vmatpush1.msra.mxu0 %v2791
        %2968 = vmatprep.subr.mxu0 %v2790
        %2969 = vmatpush1.msra.mxu0 %v2789
        %2970 = vmatprep.subr.mxu0 %v2852
        %2971 = vmatpush2.msra.mxu0 %v2851
        %2972 = vmatprep.subr.mxu0 %v2850
        %2973 = vmatpush2.msra.mxu0 %v2849
        %2974 = vmatprep.subr.mxu0 %v2848
        %2975 = vmatpush2.msra.mxu0 %v2847
        %2976 = vmatprep.subr.mxu0 %v2846
        %2977 = vmatpush2.msra.mxu0 %v2845
        %2978 = vmatprep.subr.mxu0 %v2844
        %2979 = vmatpush2.msra.mxu0 %v2843
        %2980 = vmatprep.subr.mxu0 %v2842
        %2981 = vmatpush2.msra.mxu0 %v2841
        %2982 = vmatprep.subr.mxu0 %v2840
        %2983 = vmatpush2.msra.mxu0 %v2839
        %2984 = vmatprep.subr.mxu0 %v2838
        %2985 = vmatpush2.msra.mxu0 %v2837
        %2986 = vmatprep.subr.mxu0 %v2836
        %2987 = vmatpush2.msra.mxu0 %v2835
        %2988 = vmatprep.subr.mxu0 %v2834
        %2989 = vmatpush2.msra.mxu0 %v2833
        %2990 = vmatprep.subr.mxu0 %v2832
        %2991 = vmatpush2.msra.mxu0 %v2831
        %2992 = vmatprep.subr.mxu0 %v2830
        %2993 = vmatpush2.msra.mxu0 %v2829
        %2994 = vmatprep.subr.mxu0 %v2828
        %2995 = vmatpush2.msra.mxu0 %v2827
        %2996 = vmatprep.subr.mxu0 %v2826
        %2997 = vmatpush2.msra.mxu0 %v2825
        %2998 = vmatprep.subr.mxu0 %v2824
        %2999 = vmatpush2.msra.mxu0 %v2823
        %3000 = vmatprep.subr.mxu0 %v2822
        %3001 = vmatpush2.msra.mxu0 %v2821
        %3002 = vmatprep.mubr.f32.mxu0 %v2881
        %3003 = vmatmul.mubr.f32.gmra.mxu0 %v2878
        %v3004 = vpop.f32.mrf.mxu0
        %v3005 = vadd.f32 0.0, %v3004
        %v3006 = vpop.f32.mrf.mxu0
        %v3007 = vadd.f32 0.0, %v3006
        %3008 = vmatprep.mubr.f32.mxu0 %v2885
        %3009 = vmatmul.mubr.f32.gmra.mxu0 %v2883
        %v3010 = vpop.f32.mrf.mxu0
        %v3011 = vadd.f32 0.0, %v3010
        %v3012 = vpop.f32.mrf.mxu0
        %v3013 = vadd.f32 0.0, %v3012
        %3014 = vmatprep.mubr.f32.mxu0 %v2889
        %3015 = vmatmul.mubr.f32.gmra.mxu0 %v2887
        %v3016 = vpop.f32.mrf.mxu0
        %v3017 = vadd.f32 0.0, %v3016
        %v3018 = vpop.f32.mrf.mxu0
        %v3019 = vadd.f32 0.0, %v3018
        %3020 = vmatprep.mubr.f32.mxu0 %v2893
        %3021 = vmatmul.mubr.f32.gmra.mxu0 %v2891
        %v3022 = vpop.f32.mrf.mxu0
        %v3023 = vadd.f32 0.0, %v3022
        %v3024 = vpop.f32.mrf.mxu0
        %v3025 = vadd.f32 0.0, %v3024
        %3026 = vmatprep.mubr.f32.mxu0 %v2897
        %3027 = vmatmul.mubr.f32.gmra.mxu0 %v2895
        %v3028 = vpop.f32.mrf.mxu0
        %v3029 = vadd.f32 0.0, %v3028
        %v3030 = vpop.f32.mrf.mxu0
        %v3031 = vadd.f32 0.0, %v3030
        %3032 = vmatprep.mubr.f32.mxu0 %v2901
        %3033 = vmatmul.mubr.f32.gmra.mxu0 %v2899
        %v3034 = vpop.f32.mrf.mxu0
        %v3035 = vadd.f32 0.0, %v3034
        %v3036 = vpop.f32.mrf.mxu0
        %v3037 = vadd.f32 0.0, %v3036
        %3038 = vmatprep.mubr.f32.mxu0 %v2905
        %3039 = vmatmul.mubr.f32.gmra.mxu0 %v2903
        %v3040 = vpop.f32.mrf.mxu0
        %v3041 = vadd.f32 0.0, %v3040
        %v3042 = vpop.f32.mrf.mxu0
        %v3043 = vadd.f32 0.0, %v3042
        %3044 = vmatprep.mubr.f32.mxu0 %v2909
        %3045 = vmatmul.mubr.f32.gmra.mxu0 %v2907
        %v3046 = vpop.f32.mrf.mxu0
        %v3047 = vadd.f32 0.0, %v3046
        %v3048 = vpop.f32.mrf.mxu0
        %v3049 = vadd.f32 0.0, %v3048
        %3050 = vmatprep.mubr.f32.mxu0 %v2913
        %3051 = vmatmul.mubr.f32.gmra.mxu0 %v2911
        %v3052 = vpop.f32.mrf.mxu0
        %v3053 = vadd.f32 0.0, %v3052
        %v3054 = vpop.f32.mrf.mxu0
        %v3055 = vadd.f32 0.0, %v3054
        %3056 = vmatprep.mubr.f32.mxu0 %v2917
        %3057 = vmatmul.mubr.f32.gmra.mxu0 %v2915
        %v3058 = vpop.f32.mrf.mxu0
        %v3059 = vadd.f32 0.0, %v3058
        %v3060 = vpop.f32.mrf.mxu0
        %v3061 = vadd.f32 0.0, %v3060
        %3062 = vdwg.mxu0
        %vm3067 = vcmask 1042432
        %v3068 = vrot.slane %v2698, 5
        %v3069 = vrot.slane %v2700, 5
        %v3070 = vsel %vm3067, %v3068, %v3069
        %v3071 = vrot.slane %v2699, 5
        %v3072 = vrot.slane %v2701, 5
        %v3073 = vsel %vm3067, %v3071, %v3072
        %v3074 = vrot.slane %v2702, 5
        %v3075 = vsel %vm3067, %v3069, %v3074
        %v3076 = vrot.slane %v2703, 5
        %v3077 = vsel %vm3067, %v3072, %v3076
        %v3078 = vrot.slane %v2704, 5
        %v3079 = vsel %vm3067, %v3074, %v3078
        %v3080 = vrot.slane %v2705, 5
        %v3081 = vsel %vm3067, %v3076, %v3080
        %v3082 = vrot.slane %v2706, 5
        %v3083 = vsel %vm3067, %v3078, %v3082
        %v3084 = vrot.slane %v2707, 5
        %v3085 = vsel %vm3067, %v3080, %v3084
        %v3086 = vrot.slane %v2708, 5
        %v3087 = vsel %vm3067, %v3082, %v3086
        %v3088 = vrot.slane %v2709, 5
        %v3089 = vsel %vm3067, %v3084, %v3088
        %v3090 = vrot.slane %v2710, 5
        %v3091 = vsel %vm3067, %v3086, %v3090
        %v3092 = vrot.slane %v2711, 5
        %v3093 = vsel %vm3067, %v3088, %v3092
        %v3094 = vrot.slane %v2712, 5
        %v3095 = vsel %vm3067, %v3090, %v3094
        %v3096 = vrot.slane %v2713, 5
        %v3097 = vsel %vm3067, %v3092, %v3096
        %v3098 = vrot.slane %v2714, 5
        %v3099 = vsel %vm3067, %v3094, %v3098
        %v3100 = vrot.slane %v2715, 5
        %v3101 = vsel %vm3067, %v3096, %v3100
        %v3102 = vrot.slane %v2716, 5
        %v3103 = vsel %vm3067, %v3098, %v3102
        %v3104 = vrot.slane %v2717, 5
        %v3105 = vsel %vm3067, %v3100, %v3104
        %v3106 = vrot.slane %v2718, 5
        %v3107 = vsel %vm3067, %v3102, %v3106
        %v3108 = vrot.slane %v2719, 5
        %v3109 = vsel %vm3067, %v3104, %v3108
        %3130 = vmatprep.subr.mxu0 %v2751
        %3131 = vmatpush1.msra.mxu0 %v2750
        %3132 = vmatprep.subr.mxu0 %v2749
        %3133 = vmatpush1.msra.mxu0 %v2748
        %3134 = vmatprep.subr.mxu0 %v2747
        %3135 = vmatpush1.msra.mxu0 %v2746
        %3136 = vmatprep.subr.mxu0 %v2745
        %3137 = vmatpush1.msra.mxu0 %v2744
        %3138 = vmatprep.subr.mxu0 %v2743
        %3139 = vmatpush1.msra.mxu0 %v2742
        %3140 = vmatprep.subr.mxu0 %v2741
        %3141 = vmatpush1.msra.mxu0 %v2740
        %3142 = vmatprep.subr.mxu0 %v2739
        %3143 = vmatpush1.msra.mxu0 %v2738
        %3144 = vmatprep.subr.mxu0 %v2737
        %3145 = vmatpush1.msra.mxu0 %v2736
        %3146 = vmatprep.subr.mxu0 %v2735
        %3147 = vmatpush1.msra.mxu0 %v2734
        %3148 = vmatprep.subr.mxu0 %v2733
        %3149 = vmatpush1.msra.mxu0 %v2732
        %3150 = vmatprep.subr.mxu0 %v2731
        %3151 = vmatpush1.msra.mxu0 %v2730
        %3152 = vmatprep.subr.mxu0 %v2729
        %3153 = vmatpush1.msra.mxu0 %v2728
        %3154 = vmatprep.subr.mxu0 %v2727
        %3155 = vmatpush1.msra.mxu0 %v2726
        %3156 = vmatprep.subr.mxu0 %v2725
        %3157 = vmatpush1.msra.mxu0 %v2724
        %3158 = vmatprep.subr.mxu0 %v2723
        %3159 = vmatpush1.msra.mxu0 %v2722
        %3160 = vmatprep.subr.mxu0 %v2721
        %3161 = vmatpush1.msra.mxu0 %v2720
        %3162 = vmatprep.subr.mxu0 %v2783
        %3163 = vmatpush2.msra.mxu0 %v2782
        %3164 = vmatprep.subr.mxu0 %v2781
        %3165 = vmatpush2.msra.mxu0 %v2780
        %3166 = vmatprep.subr.mxu0 %v2779
        %3167 = vmatpush2.msra.mxu0 %v2778
        %3168 = vmatprep.subr.mxu0 %v2777
        %3169 = vmatpush2.msra.mxu0 %v2776
        %3170 = vmatprep.subr.mxu0 %v2775
        %3171 = vmatpush2.msra.mxu0 %v2774
        %3172 = vmatprep.subr.mxu0 %v2773
        %3173 = vmatpush2.msra.mxu0 %v2772
        %3174 = vmatprep.subr.mxu0 %v2771
        %3175 = vmatpush2.msra.mxu0 %v2770
        %3176 = vmatprep.subr.mxu0 %v2769
        %3177 = vmatpush2.msra.mxu0 %v2768
        %3178 = vmatprep.subr.mxu0 %v2767
        %3179 = vmatpush2.msra.mxu0 %v2766
        %3180 = vmatprep.subr.mxu0 %v2765
        %3181 = vmatpush2.msra.mxu0 %v2764
        %3182 = vmatprep.subr.mxu0 %v2763
        %3183 = vmatpush2.msra.mxu0 %v2762
        %3184 = vmatprep.subr.mxu0 %v2761
        %3185 = vmatpush2.msra.mxu0 %v2760
        %3186 = vmatprep.subr.mxu0 %v2759
        %3187 = vmatpush2.msra.mxu0 %v2758
        %3188 = vmatprep.subr.mxu0 %v2757
        %3189 = vmatpush2.msra.mxu0 %v2756
        %3190 = vmatprep.subr.mxu0 %v2755
        %3191 = vmatpush2.msra.mxu0 %v2754
        %3192 = vmatprep.subr.mxu0 %v2753
        %3193 = vmatpush2.msra.mxu0 %v2752
        %3194 = vmatprep.mubr.f32.mxu0 %v3073
        %3195 = vmatmul.mubr.f32.gmra.mxu0 %v3070
        %v3196 = vpop.f32.mrf.mxu0
        %v3197 = vadd.f32 %v3005, %v3196
        %v3198 = vpop.f32.mrf.mxu0
        %v3199 = vadd.f32 %v3007, %v3198
        %3200 = vmatprep.mubr.f32.mxu0 %v3077
        %3201 = vmatmul.mubr.f32.gmra.mxu0 %v3075
        %v3202 = vpop.f32.mrf.mxu0
        %v3203 = vadd.f32 %v3011, %v3202
        %v3204 = vpop.f32.mrf.mxu0
        %v3205 = vadd.f32 %v3013, %v3204
        %3206 = vmatprep.mubr.f32.mxu0 %v3081
        %3207 = vmatmul.mubr.f32.gmra.mxu0 %v3079
        %v3208 = vpop.f32.mrf.mxu0
        %v3209 = vadd.f32 %v3017, %v3208
        %v3210 = vpop.f32.mrf.mxu0
        %v3211 = vadd.f32 %v3019, %v3210
        %3212 = vmatprep.mubr.f32.mxu0 %v3085
        %3213 = vmatmul.mubr.f32.gmra.mxu0 %v3083
        %v3214 = vpop.f32.mrf.mxu0
        %v3215 = vadd.f32 %v3023, %v3214
        %v3216 = vpop.f32.mrf.mxu0
        %v3217 = vadd.f32 %v3025, %v3216
        %3218 = vmatprep.mubr.f32.mxu0 %v3089
        %3219 = vmatmul.mubr.f32.gmra.mxu0 %v3087
        %v3220 = vpop.f32.mrf.mxu0
        %v3221 = vadd.f32 %v3029, %v3220
        %v3222 = vpop.f32.mrf.mxu0
        %v3223 = vadd.f32 %v3031, %v3222
        %3224 = vmatprep.mubr.f32.mxu0 %v3093
        %3225 = vmatmul.mubr.f32.gmra.mxu0 %v3091
        %v3226 = vpop.f32.mrf.mxu0
        %v3227 = vadd.f32 %v3035, %v3226
        %v3228 = vpop.f32.mrf.mxu0
        %v3229 = vadd.f32 %v3037, %v3228
        %3230 = vmatprep.mubr.f32.mxu0 %v3097
        %3231 = vmatmul.mubr.f32.gmra.mxu0 %v3095
        %v3232 = vpop.f32.mrf.mxu0
        %v3233 = vadd.f32 %v3041, %v3232
        %v3234 = vpop.f32.mrf.mxu0
        %v3235 = vadd.f32 %v3043, %v3234
        %3236 = vmatprep.mubr.f32.mxu0 %v3101
        %3237 = vmatmul.mubr.f32.gmra.mxu0 %v3099
        %v3238 = vpop.f32.mrf.mxu0
        %v3239 = vadd.f32 %v3047, %v3238
        %v3240 = vpop.f32.mrf.mxu0
        %v3241 = vadd.f32 %v3049, %v3240
        %3242 = vmatprep.mubr.f32.mxu0 %v3105
        %3243 = vmatmul.mubr.f32.gmra.mxu0 %v3103
        %v3244 = vpop.f32.mrf.mxu0
        %v3245 = vadd.f32 %v3053, %v3244
        %v3246 = vpop.f32.mrf.mxu0
        %v3247 = vadd.f32 %v3055, %v3246
        %3248 = vmatprep.mubr.f32.mxu0 %v3109
        %3249 = vmatmul.mubr.f32.gmra.mxu0 %v3107
        %v3250 = vpop.f32.mrf.mxu0
        %v3251 = vadd.f32 %v3059, %v3250
        %v3252 = vpop.f32.mrf.mxu0
        %v3253 = vadd.f32 %v3061, %v3252
        %3254 = vdwg.mxu0
        %v3255 = vld [vmem:[#allocation2] sm:$0x80]
        %v3256 = vld [vmem:[#allocation2 + $0x8] sm:$0x80]
        %v3257 = vld [vmem:[#allocation2 + $0xa0] sm:$0x7f]
        %v3258 = vld [vmem:[#allocation2 + $0xa8] sm:$0x7f]
        %s3259 = scalar_lea.vmem %s572, 1024 [#allocation9]
        %v3260 = vld [vmem:[%s3259] sm:$0xff]
        %v3261 = vld [vmem:[%s3259 + $0x8] sm:$0xff]
        %v3262 = vld [vmem:[%s3259 + $0x10] sm:$0xff]
        %v3263 = vld [vmem:[%s3259 + $0x18] sm:$0xff]
        %v3264 = vld [vmem:[%s3259 + $0x20] sm:$0xff]
        %v3265 = vld [vmem:[%s3259 + $0x28] sm:$0xff]
        %v3266 = vld [vmem:[%s3259 + $0x30] sm:$0xff]
        %v3267 = vld [vmem:[%s3259 + $0x38] sm:$0xff]
        %v3268 = vld [vmem:[%s3259 + $0x40] sm:$0xff]
        %v3269 = vld [vmem:[%s3259 + $0x48] sm:$0xff]
        %v3270 = vld [vmem:[%s3259 + $0x50] sm:$0xff]
        %v3271 = vld [vmem:[%s3259 + $0x58] sm:$0xff]
        %v3272 = vld [vmem:[%s3259 + $0x60] sm:$0xff]
        %v3273 = vld [vmem:[%s3259 + $0x68] sm:$0xff]
        %v3274 = vld [vmem:[%s3259 + $0x70] sm:$0xff]
        %v3275 = vld [vmem:[%s3259 + $0x78] sm:$0xff]
        %v3276 = vld [vmem:[%s3259 + $0x80] sm:$0xff]
        %v3277 = vld [vmem:[%s3259 + $0x88] sm:$0xff]
        %v3278 = vld [vmem:[%s3259 + $0x90] sm:$0xff]
        %v3279 = vld [vmem:[%s3259 + $0x98] sm:$0xff]
        %v3280 = vld [vmem:[%s3259 + $0xa0] sm:$0xff]
        %v3281 = vld [vmem:[%s3259 + $0xa8] sm:$0xff]
        %v3282 = vld [vmem:[%s3259 + $0xb0] sm:$0xff]
        %v3283 = vld [vmem:[%s3259 + $0xb8] sm:$0xff]
        %v3284 = vld [vmem:[%s3259 + $0xc0] sm:$0xff]
        %v3285 = vld [vmem:[%s3259 + $0xc8] sm:$0xff]
        %v3286 = vld [vmem:[%s3259 + $0xd0] sm:$0xff]
        %v3287 = vld [vmem:[%s3259 + $0xd8] sm:$0xff]
        %v3288 = vld [vmem:[%s3259 + $0xe0] sm:$0xff]
        %v3289 = vld [vmem:[%s3259 + $0xe8] sm:$0xff]
        %v3290 = vld [vmem:[%s3259 + $0xf0] sm:$0xff]
        %v3291 = vld [vmem:[%s3259 + $0xf8] sm:$0xff]
        %v3292 = vld [vmem:[%s3259 + $0x100] sm:$0xff]
        %v3293 = vld [vmem:[%s3259 + $0x108] sm:$0xff]
        %v3294 = vld [vmem:[%s3259 + $0x110] sm:$0xff]
        %v3295 = vld [vmem:[%s3259 + $0x118] sm:$0xff]
        %v3296 = vld [vmem:[%s3259 + $0x120] sm:$0xff]
        %v3297 = vld [vmem:[%s3259 + $0x128] sm:$0xff]
        %v3298 = vld [vmem:[%s3259 + $0x130] sm:$0xff]
        %v3299 = vld [vmem:[%s3259 + $0x138] sm:$0xff]
        %v3300 = vld [vmem:[%s3259 + $0x140] sm:$0xff]
        %v3301 = vld [vmem:[%s3259 + $0x148] sm:$0xff]
        %v3302 = vld [vmem:[%s3259 + $0x150] sm:$0xff]
        %v3303 = vld [vmem:[%s3259 + $0x158] sm:$0xff]
        %v3304 = vld [vmem:[%s3259 + $0x160] sm:$0xff]
        %v3305 = vld [vmem:[%s3259 + $0x168] sm:$0xff]
        %v3306 = vld [vmem:[%s3259 + $0x170] sm:$0xff]
        %v3307 = vld [vmem:[%s3259 + $0x178] sm:$0xff]
        %v3308 = vld [vmem:[%s3259 + $0x180] sm:$0xff]
        %v3309 = vld [vmem:[%s3259 + $0x188] sm:$0xff]
        %v3310 = vld [vmem:[%s3259 + $0x190] sm:$0xff]
        %v3311 = vld [vmem:[%s3259 + $0x198] sm:$0xff]
        %v3312 = vld [vmem:[%s3259 + $0x1a0] sm:$0xff]
        %v3313 = vld [vmem:[%s3259 + $0x1a8] sm:$0xff]
        %v3314 = vld [vmem:[%s3259 + $0x1b0] sm:$0xff]
        %v3315 = vld [vmem:[%s3259 + $0x1b8] sm:$0xff]
        %v3316 = vld [vmem:[%s3259 + $0x1c0] sm:$0xff]
        %v3317 = vld [vmem:[%s3259 + $0x1c8] sm:$0xff]
        %v3318 = vld [vmem:[%s3259 + $0x1d0] sm:$0xff]
        %v3319 = vld [vmem:[%s3259 + $0x1d8] sm:$0xff]
        %v3320 = vld [vmem:[%s3259 + $0x1e0] sm:$0xff]
        %v3321 = vld [vmem:[%s3259 + $0x1e8] sm:$0xff]
        %v3322 = vld [vmem:[%s3259 + $0x1f0] sm:$0xff]
        %v3323 = vld [vmem:[%s3259 + $0x1f8] sm:$0xff]
        %vm3328 = vcmask 1040384
        %v3329 = vrot.slane %v3255, 7
        %v3330 = vrot.slane %v2700, 7
        %v3331 = vsel %vm3328, %v3329, %v3330
        %v3332 = vrot.slane %v3256, 7
        %v3333 = vrot.slane %v2701, 7
        %v3334 = vsel %vm3328, %v3332, %v3333
        %v3335 = vrot.slane %v2702, 7
        %v3336 = vsel %vm3328, %v3330, %v3335
        %v3337 = vrot.slane %v2703, 7
        %v3338 = vsel %vm3328, %v3333, %v3337
        %v3339 = vrot.slane %v2704, 7
        %v3340 = vsel %vm3328, %v3335, %v3339
        %v3341 = vrot.slane %v2705, 7
        %v3342 = vsel %vm3328, %v3337, %v3341
        %v3343 = vrot.slane %v2706, 7
        %v3344 = vsel %vm3328, %v3339, %v3343
        %v3345 = vrot.slane %v2707, 7
        %v3346 = vsel %vm3328, %v3341, %v3345
        %v3347 = vrot.slane %v2708, 7
        %v3348 = vsel %vm3328, %v3343, %v3347
        %v3349 = vrot.slane %v2709, 7
        %v3350 = vsel %vm3328, %v3345, %v3349
        %v3351 = vrot.slane %v2710, 7
        %v3352 = vsel %vm3328, %v3347, %v3351
        %v3353 = vrot.slane %v2711, 7
        %v3354 = vsel %vm3328, %v3349, %v3353
        %v3355 = vrot.slane %v2712, 7
        %v3356 = vsel %vm3328, %v3351, %v3355
        %v3357 = vrot.slane %v2713, 7
        %v3358 = vsel %vm3328, %v3353, %v3357
        %v3359 = vrot.slane %v2714, 7
        %v3360 = vsel %vm3328, %v3355, %v3359
        %v3361 = vrot.slane %v2715, 7
        %v3362 = vsel %vm3328, %v3357, %v3361
        %v3363 = vrot.slane %v2716, 7
        %v3364 = vsel %vm3328, %v3359, %v3363
        %v3365 = vrot.slane %v2717, 7
        %v3366 = vsel %vm3328, %v3361, %v3365
        %v3367 = vrot.slane %v3257, 7
        %v3368 = vsel %vm3328, %v3363, %v3367
        %v3369 = vrot.slane %v3258, 7
        %v3370 = vsel %vm3328, %v3365, %v3369
        %3391 = vmatprep.subr.mxu0 %v3291
        %3392 = vmatpush1.msra.mxu0 %v3290
        %3393 = vmatprep.subr.mxu0 %v3289
        %3394 = vmatpush1.msra.mxu0 %v3288
        %3395 = vmatprep.subr.mxu0 %v3287
        %3396 = vmatpush1.msra.mxu0 %v3286
        %3397 = vmatprep.subr.mxu0 %v3285
        %3398 = vmatpush1.msra.mxu0 %v3284
        %3399 = vmatprep.subr.mxu0 %v3283
        %3400 = vmatpush1.msra.mxu0 %v3282
        %3401 = vmatprep.subr.mxu0 %v3281
        %3402 = vmatpush1.msra.mxu0 %v3280
        %3403 = vmatprep.subr.mxu0 %v3279
        %3404 = vmatpush1.msra.mxu0 %v3278
        %3405 = vmatprep.subr.mxu0 %v3277
        %3406 = vmatpush1.msra.mxu0 %v3276
        %3407 = vmatprep.subr.mxu0 %v3275
        %3408 = vmatpush1.msra.mxu0 %v3274
        %3409 = vmatprep.subr.mxu0 %v3273
        %3410 = vmatpush1.msra.mxu0 %v3272
        %3411 = vmatprep.subr.mxu0 %v3271
        %3412 = vmatpush1.msra.mxu0 %v3270
        %3413 = vmatprep.subr.mxu0 %v3269
        %3414 = vmatpush1.msra.mxu0 %v3268
        %3415 = vmatprep.subr.mxu0 %v3267
        %3416 = vmatpush1.msra.mxu0 %v3266
        %3417 = vmatprep.subr.mxu0 %v3265
        %3418 = vmatpush1.msra.mxu0 %v3264
        %3419 = vmatprep.subr.mxu0 %v3263
        %3420 = vmatpush1.msra.mxu0 %v3262
        %3421 = vmatprep.subr.mxu0 %v3261
        %3422 = vmatpush1.msra.mxu0 %v3260
        %3423 = vmatprep.subr.mxu0 %v3323
        %3424 = vmatpush2.msra.mxu0 %v3322
        %3425 = vmatprep.subr.mxu0 %v3321
        %3426 = vmatpush2.msra.mxu0 %v3320
        %3427 = vmatprep.subr.mxu0 %v3319
        %3428 = vmatpush2.msra.mxu0 %v3318
        %3429 = vmatprep.subr.mxu0 %v3317
        %3430 = vmatpush2.msra.mxu0 %v3316
        %3431 = vmatprep.subr.mxu0 %v3315
        %3432 = vmatpush2.msra.mxu0 %v3314
        %3433 = vmatprep.subr.mxu0 %v3313
        %3434 = vmatpush2.msra.mxu0 %v3312
        %3435 = vmatprep.subr.mxu0 %v3311
        %3436 = vmatpush2.msra.mxu0 %v3310
        %3437 = vmatprep.subr.mxu0 %v3309
        %3438 = vmatpush2.msra.mxu0 %v3308
        %3439 = vmatprep.subr.mxu0 %v3307
        %3440 = vmatpush2.msra.mxu0 %v3306
        %3441 = vmatprep.subr.mxu0 %v3305
        %3442 = vmatpush2.msra.mxu0 %v3304
        %3443 = vmatprep.subr.mxu0 %v3303
        %3444 = vmatpush2.msra.mxu0 %v3302
        %3445 = vmatprep.subr.mxu0 %v3301
        %3446 = vmatpush2.msra.mxu0 %v3300
        %3447 = vmatprep.subr.mxu0 %v3299
        %3448 = vmatpush2.msra.mxu0 %v3298
        %3449 = vmatprep.subr.mxu0 %v3297
        %3450 = vmatpush2.msra.mxu0 %v3296
        %3451 = vmatprep.subr.mxu0 %v3295
        %3452 = vmatpush2.msra.mxu0 %v3294
        %3453 = vmatprep.subr.mxu0 %v3293
        %3454 = vmatpush2.msra.mxu0 %v3292
        %3455 = vmatprep.mubr.f32.mxu0 %v3334
        %3456 = vmatmul.mubr.f32.gmra.mxu0 %v3331
        %v3457 = vpop.f32.mrf.mxu0
        %v3458 = vadd.f32 0.0, %v3457
        %v3459 = vpop.f32.mrf.mxu0
        %v3460 = vadd.f32 0.0, %v3459
        %3461 = vmatprep.mubr.f32.mxu0 %v3338
        %3462 = vmatmul.mubr.f32.gmra.mxu0 %v3336
        %v3463 = vpop.f32.mrf.mxu0
        %v3464 = vadd.f32 0.0, %v3463
        %v3465 = vpop.f32.mrf.mxu0
        %v3466 = vadd.f32 0.0, %v3465
        %3467 = vmatprep.mubr.f32.mxu0 %v3342
        %3468 = vmatmul.mubr.f32.gmra.mxu0 %v3340
        %v3469 = vpop.f32.mrf.mxu0
        %v3470 = vadd.f32 0.0, %v3469
        %v3471 = vpop.f32.mrf.mxu0
        %v3472 = vadd.f32 0.0, %v3471
        %3473 = vmatprep.mubr.f32.mxu0 %v3346
        %3474 = vmatmul.mubr.f32.gmra.mxu0 %v3344
        %v3475 = vpop.f32.mrf.mxu0
        %v3476 = vadd.f32 0.0, %v3475
        %v3477 = vpop.f32.mrf.mxu0
        %v3478 = vadd.f32 0.0, %v3477
        %3479 = vmatprep.mubr.f32.mxu0 %v3350
        %3480 = vmatmul.mubr.f32.gmra.mxu0 %v3348
        %v3481 = vpop.f32.mrf.mxu0
        %v3482 = vadd.f32 0.0, %v3481
        %v3483 = vpop.f32.mrf.mxu0
        %v3484 = vadd.f32 0.0, %v3483
        %3485 = vmatprep.mubr.f32.mxu0 %v3354
        %3486 = vmatmul.mubr.f32.gmra.mxu0 %v3352
        %v3487 = vpop.f32.mrf.mxu0
        %v3488 = vadd.f32 0.0, %v3487
        %v3489 = vpop.f32.mrf.mxu0
        %v3490 = vadd.f32 0.0, %v3489
        %3491 = vmatprep.mubr.f32.mxu0 %v3358
        %3492 = vmatmul.mubr.f32.gmra.mxu0 %v3356
        %v3493 = vpop.f32.mrf.mxu0
        %v3494 = vadd.f32 0.0, %v3493
        %v3495 = vpop.f32.mrf.mxu0
        %v3496 = vadd.f32 0.0, %v3495
        %3497 = vmatprep.mubr.f32.mxu0 %v3362
        %3498 = vmatmul.mubr.f32.gmra.mxu0 %v3360
        %v3499 = vpop.f32.mrf.mxu0
        %v3500 = vadd.f32 0.0, %v3499
        %v3501 = vpop.f32.mrf.mxu0
        %v3502 = vadd.f32 0.0, %v3501
        %3503 = vmatprep.mubr.f32.mxu0 %v3366
        %3504 = vmatmul.mubr.f32.gmra.mxu0 %v3364
        %v3505 = vpop.f32.mrf.mxu0
        %v3506 = vadd.f32 0.0, %v3505
        %v3507 = vpop.f32.mrf.mxu0
        %v3508 = vadd.f32 0.0, %v3507
        %3509 = vmatprep.mubr.f32.mxu0 %v3370
        %3510 = vmatmul.mubr.f32.gmra.mxu0 %v3368
        %v3511 = vpop.f32.mrf.mxu0
        %v3512 = vadd.f32 0.0, %v3511
        %v3513 = vpop.f32.mrf.mxu0
        %v3514 = vadd.f32 0.0, %v3513
        %3515 = vdwg.mxu0
        %v3516 = vadd.f32 %v3197, %v3458
        %v3517 = vadd.f32 %v3199, %v3460
        %v3518 = vadd.f32 %v3203, %v3464
        %v3519 = vadd.f32 %v3205, %v3466
        %v3520 = vadd.f32 %v3209, %v3470
        %v3521 = vadd.f32 %v3211, %v3472
        %v3522 = vadd.f32 %v3215, %v3476
        %v3523 = vadd.f32 %v3217, %v3478
        %v3524 = vadd.f32 %v3221, %v3482
        %v3525 = vadd.f32 %v3223, %v3484
        %v3526 = vadd.f32 %v3227, %v3488
        %v3527 = vadd.f32 %v3229, %v3490
        %v3528 = vadd.f32 %v3233, %v3494
        %v3529 = vadd.f32 %v3235, %v3496
        %v3530 = vadd.f32 %v3239, %v3500
        %v3531 = vadd.f32 %v3241, %v3502
        %v3532 = vadd.f32 %v3245, %v3506
        %v3533 = vadd.f32 %v3247, %v3508
        %v3534 = vadd.f32 %v3251, %v3512
        %v3535 = vadd.f32 %v3253, %v3514
        %v3536 = vld [vmem:[#allocation2 + $0x10] sm:$0x80]
        %v3537 = vld [vmem:[#allocation2 + $0x18] sm:$0x80]
        %v3538 = vld [vmem:[#allocation2 + $0x20] sm:$0xff]
        %v3539 = vld [vmem:[#allocation2 + $0x28] sm:$0xff]
        %v3540 = vld [vmem:[#allocation2 + $0x30] sm:$0xff]
        %v3541 = vld [vmem:[#allocation2 + $0x38] sm:$0xff]
        %v3542 = vld [vmem:[#allocation2 + $0x40] sm:$0xff]
        %v3543 = vld [vmem:[#allocation2 + $0x48] sm:$0xff]
        %v3544 = vld [vmem:[#allocation2 + $0x50] sm:$0xff]
        %v3545 = vld [vmem:[#allocation2 + $0x58] sm:$0xff]
        %v3546 = vld [vmem:[#allocation2 + $0x60] sm:$0xff]
        %v3547 = vld [vmem:[#allocation2 + $0x68] sm:$0xff]
        %v3548 = vld [vmem:[#allocation2 + $0x70] sm:$0xff]
        %v3549 = vld [vmem:[#allocation2 + $0x78] sm:$0xff]
        %v3550 = vld [vmem:[#allocation2 + $0x80] sm:$0xff]
        %v3551 = vld [vmem:[#allocation2 + $0x88] sm:$0xff]
        %v3552 = vld [vmem:[#allocation2 + $0x90] sm:$0xff]
        %v3553 = vld [vmem:[#allocation2 + $0x98] sm:$0xff]
        %v3554 = vld [vmem:[#allocation2 + $0xa0] sm:$0xff]
        %v3555 = vld [vmem:[#allocation2 + $0xa8] sm:$0xff]
        %v3556 = vld [vmem:[#allocation2 + $0xb0] sm:$0x7f]
        %v3557 = vld [vmem:[#allocation2 + $0xb8] sm:$0x7f]
        %s3558 = scalar_lea.vmem %s572, 1536 [#allocation9]
        %v3559 = vld [vmem:[%s3558] sm:$0xff]
        %v3560 = vld [vmem:[%s3558 + $0x8] sm:$0xff]
        %v3561 = vld [vmem:[%s3558 + $0x10] sm:$0xff]
        %v3562 = vld [vmem:[%s3558 + $0x18] sm:$0xff]
        %v3563 = vld [vmem:[%s3558 + $0x20] sm:$0xff]
        %v3564 = vld [vmem:[%s3558 + $0x28] sm:$0xff]
        %v3565 = vld [vmem:[%s3558 + $0x30] sm:$0xff]
        %v3566 = vld [vmem:[%s3558 + $0x38] sm:$0xff]
        %v3567 = vld [vmem:[%s3558 + $0x40] sm:$0xff]
        %v3568 = vld [vmem:[%s3558 + $0x48] sm:$0xff]
        %v3569 = vld [vmem:[%s3558 + $0x50] sm:$0xff]
        %v3570 = vld [vmem:[%s3558 + $0x58] sm:$0xff]
        %v3571 = vld [vmem:[%s3558 + $0x60] sm:$0xff]
        %v3572 = vld [vmem:[%s3558 + $0x68] sm:$0xff]
        %v3573 = vld [vmem:[%s3558 + $0x70] sm:$0xff]
        %v3574 = vld [vmem:[%s3558 + $0x78] sm:$0xff]
        %v3575 = vld [vmem:[%s3558 + $0x80] sm:$0xff]
        %v3576 = vld [vmem:[%s3558 + $0x88] sm:$0xff]
        %v3577 = vld [vmem:[%s3558 + $0x90] sm:$0xff]
        %v3578 = vld [vmem:[%s3558 + $0x98] sm:$0xff]
        %v3579 = vld [vmem:[%s3558 + $0xa0] sm:$0xff]
        %v3580 = vld [vmem:[%s3558 + $0xa8] sm:$0xff]
        %v3581 = vld [vmem:[%s3558 + $0xb0] sm:$0xff]
        %v3582 = vld [vmem:[%s3558 + $0xb8] sm:$0xff]
        %v3583 = vld [vmem:[%s3558 + $0xc0] sm:$0xff]
        %v3584 = vld [vmem:[%s3558 + $0xc8] sm:$0xff]
        %v3585 = vld [vmem:[%s3558 + $0xd0] sm:$0xff]
        %v3586 = vld [vmem:[%s3558 + $0xd8] sm:$0xff]
        %v3587 = vld [vmem:[%s3558 + $0xe0] sm:$0xff]
        %v3588 = vld [vmem:[%s3558 + $0xe8] sm:$0xff]
        %v3589 = vld [vmem:[%s3558 + $0xf0] sm:$0xff]
        %v3590 = vld [vmem:[%s3558 + $0xf8] sm:$0xff]
        %v3591 = vld [vmem:[%s3558 + $0x100] sm:$0xff]
        %v3592 = vld [vmem:[%s3558 + $0x108] sm:$0xff]
        %v3593 = vld [vmem:[%s3558 + $0x110] sm:$0xff]
        %v3594 = vld [vmem:[%s3558 + $0x118] sm:$0xff]
        %v3595 = vld [vmem:[%s3558 + $0x120] sm:$0xff]
        %v3596 = vld [vmem:[%s3558 + $0x128] sm:$0xff]
        %v3597 = vld [vmem:[%s3558 + $0x130] sm:$0xff]
        %v3598 = vld [vmem:[%s3558 + $0x138] sm:$0xff]
        %v3599 = vld [vmem:[%s3558 + $0x140] sm:$0xff]
        %v3600 = vld [vmem:[%s3558 + $0x148] sm:$0xff]
        %v3601 = vld [vmem:[%s3558 + $0x150] sm:$0xff]
        %v3602 = vld [vmem:[%s3558 + $0x158] sm:$0xff]
        %v3603 = vld [vmem:[%s3558 + $0x160] sm:$0xff]
        %v3604 = vld [vmem:[%s3558 + $0x168] sm:$0xff]
        %v3605 = vld [vmem:[%s3558 + $0x170] sm:$0xff]
        %v3606 = vld [vmem:[%s3558 + $0x178] sm:$0xff]
        %v3607 = vld [vmem:[%s3558 + $0x180] sm:$0xff]
        %v3608 = vld [vmem:[%s3558 + $0x188] sm:$0xff]
        %v3609 = vld [vmem:[%s3558 + $0x190] sm:$0xff]
        %v3610 = vld [vmem:[%s3558 + $0x198] sm:$0xff]
        %v3611 = vld [vmem:[%s3558 + $0x1a0] sm:$0xff]
        %v3612 = vld [vmem:[%s3558 + $0x1a8] sm:$0xff]
        %v3613 = vld [vmem:[%s3558 + $0x1b0] sm:$0xff]
        %v3614 = vld [vmem:[%s3558 + $0x1b8] sm:$0xff]
        %v3615 = vld [vmem:[%s3558 + $0x1c0] sm:$0xff]
        %v3616 = vld [vmem:[%s3558 + $0x1c8] sm:$0xff]
        %v3617 = vld [vmem:[%s3558 + $0x1d0] sm:$0xff]
        %v3618 = vld [vmem:[%s3558 + $0x1d8] sm:$0xff]
        %v3619 = vld [vmem:[%s3558 + $0x1e0] sm:$0xff]
        %v3620 = vld [vmem:[%s3558 + $0x1e8] sm:$0xff]
        %v3621 = vld [vmem:[%s3558 + $0x1f0] sm:$0xff]
        %v3622 = vld [vmem:[%s3558 + $0x1f8] sm:$0xff]
        %v3645 = vrot.slane %v3536, 7
        %v3646 = vrot.slane %v3538, 7
        %v3647 = vsel %vm3328, %v3645, %v3646
        %v3648 = vrot.slane %v3537, 7
        %v3649 = vrot.slane %v3539, 7
        %v3650 = vsel %vm3328, %v3648, %v3649
        %v3651 = vrot.slane %v3540, 7
        %v3652 = vsel %vm3328, %v3646, %v3651
        %v3653 = vrot.slane %v3541, 7
        %v3654 = vsel %vm3328, %v3649, %v3653
        %v3655 = vrot.slane %v3542, 7
        %v3656 = vsel %vm3328, %v3651, %v3655
        %v3657 = vrot.slane %v3543, 7
        %v3658 = vsel %vm3328, %v3653, %v3657
        %v3659 = vrot.slane %v3544, 7
        %v3660 = vsel %vm3328, %v3655, %v3659
        %v3661 = vrot.slane %v3545, 7
        %v3662 = vsel %vm3328, %v3657, %v3661
        %v3663 = vrot.slane %v3546, 7
        %v3664 = vsel %vm3328, %v3659, %v3663
        %v3665 = vrot.slane %v3547, 7
        %v3666 = vsel %vm3328, %v3661, %v3665
        %v3667 = vrot.slane %v3548, 7
        %v3668 = vsel %vm3328, %v3663, %v3667
        %v3669 = vrot.slane %v3549, 7
        %v3670 = vsel %vm3328, %v3665, %v3669
        %v3671 = vrot.slane %v3550, 7
        %v3672 = vsel %vm3328, %v3667, %v3671
        %v3673 = vrot.slane %v3551, 7
        %v3674 = vsel %vm3328, %v3669, %v3673
        %v3675 = vrot.slane %v3552, 7
        %v3676 = vsel %vm3328, %v3671, %v3675
        %v3677 = vrot.slane %v3553, 7
        %v3678 = vsel %vm3328, %v3673, %v3677
        %v3679 = vrot.slane %v3554, 7
        %v3680 = vsel %vm3328, %v3675, %v3679
        %v3681 = vrot.slane %v3555, 7
        %v3682 = vsel %vm3328, %v3677, %v3681
        %v3683 = vrot.slane %v3556, 7
        %v3684 = vsel %vm3328, %v3679, %v3683
        %v3685 = vrot.slane %v3557, 7
        %v3686 = vsel %vm3328, %v3681, %v3685
        %3707 = vmatprep.subr.mxu0 %v3590
        %3708 = vmatpush1.msra.mxu0 %v3589
        %3709 = vmatprep.subr.mxu0 %v3588
        %3710 = vmatpush1.msra.mxu0 %v3587
        %3711 = vmatprep.subr.mxu0 %v3586
        %3712 = vmatpush1.msra.mxu0 %v3585
        %3713 = vmatprep.subr.mxu0 %v3584
        %3714 = vmatpush1.msra.mxu0 %v3583
        %3715 = vmatprep.subr.mxu0 %v3582
        %3716 = vmatpush1.msra.mxu0 %v3581
        %3717 = vmatprep.subr.mxu0 %v3580
        %3718 = vmatpush1.msra.mxu0 %v3579
        %3719 = vmatprep.subr.mxu0 %v3578
        %3720 = vmatpush1.msra.mxu0 %v3577
        %3721 = vmatprep.subr.mxu0 %v3576
        %3722 = vmatpush1.msra.mxu0 %v3575
        %3723 = vmatprep.subr.mxu0 %v3574
        %3724 = vmatpush1.msra.mxu0 %v3573
        %3725 = vmatprep.subr.mxu0 %v3572
        %3726 = vmatpush1.msra.mxu0 %v3571
        %3727 = vmatprep.subr.mxu0 %v3570
        %3728 = vmatpush1.msra.mxu0 %v3569
        %3729 = vmatprep.subr.mxu0 %v3568
        %3730 = vmatpush1.msra.mxu0 %v3567
        %3731 = vmatprep.subr.mxu0 %v3566
        %3732 = vmatpush1.msra.mxu0 %v3565
        %3733 = vmatprep.subr.mxu0 %v3564
        %3734 = vmatpush1.msra.mxu0 %v3563
        %3735 = vmatprep.subr.mxu0 %v3562
        %3736 = vmatpush1.msra.mxu0 %v3561
        %3737 = vmatprep.subr.mxu0 %v3560
        %3738 = vmatpush1.msra.mxu0 %v3559
        %3739 = vmatprep.subr.mxu0 %v3622
        %3740 = vmatpush2.msra.mxu0 %v3621
        %3741 = vmatprep.subr.mxu0 %v3620
        %3742 = vmatpush2.msra.mxu0 %v3619
        %3743 = vmatprep.subr.mxu0 %v3618
        %3744 = vmatpush2.msra.mxu0 %v3617
        %3745 = vmatprep.subr.mxu0 %v3616
        %3746 = vmatpush2.msra.mxu0 %v3615
        %3747 = vmatprep.subr.mxu0 %v3614
        %3748 = vmatpush2.msra.mxu0 %v3613
        %3749 = vmatprep.subr.mxu0 %v3612
        %3750 = vmatpush2.msra.mxu0 %v3611
        %3751 = vmatprep.subr.mxu0 %v3610
        %3752 = vmatpush2.msra.mxu0 %v3609
        %3753 = vmatprep.subr.mxu0 %v3608
        %3754 = vmatpush2.msra.mxu0 %v3607
        %3755 = vmatprep.subr.mxu0 %v3606
        %3756 = vmatpush2.msra.mxu0 %v3605
        %3757 = vmatprep.subr.mxu0 %v3604
        %3758 = vmatpush2.msra.mxu0 %v3603
        %3759 = vmatprep.subr.mxu0 %v3602
        %3760 = vmatpush2.msra.mxu0 %v3601
        %3761 = vmatprep.subr.mxu0 %v3600
        %3762 = vmatpush2.msra.mxu0 %v3599
        %3763 = vmatprep.subr.mxu0 %v3598
        %3764 = vmatpush2.msra.mxu0 %v3597
        %3765 = vmatprep.subr.mxu0 %v3596
        %3766 = vmatpush2.msra.mxu0 %v3595
        %3767 = vmatprep.subr.mxu0 %v3594
        %3768 = vmatpush2.msra.mxu0 %v3593
        %3769 = vmatprep.subr.mxu0 %v3592
        %3770 = vmatpush2.msra.mxu0 %v3591
        %3771 = vmatprep.mubr.f32.mxu0 %v3650
        %3772 = vmatmul.mubr.f32.gmra.mxu0 %v3647
        %v3773 = vpop.f32.mrf.mxu0
        %v3774 = vadd.f32 0.0, %v3773
        %v3775 = vpop.f32.mrf.mxu0
        %v3776 = vadd.f32 0.0, %v3775
        %3777 = vmatprep.mubr.f32.mxu0 %v3654
        %3778 = vmatmul.mubr.f32.gmra.mxu0 %v3652
        %v3779 = vpop.f32.mrf.mxu0
        %v3780 = vadd.f32 0.0, %v3779
        %v3781 = vpop.f32.mrf.mxu0
        %v3782 = vadd.f32 0.0, %v3781
        %3783 = vmatprep.mubr.f32.mxu0 %v3658
        %3784 = vmatmul.mubr.f32.gmra.mxu0 %v3656
        %v3785 = vpop.f32.mrf.mxu0
        %v3786 = vadd.f32 0.0, %v3785
        %v3787 = vpop.f32.mrf.mxu0
        %v3788 = vadd.f32 0.0, %v3787
        %3789 = vmatprep.mubr.f32.mxu0 %v3662
        %3790 = vmatmul.mubr.f32.gmra.mxu0 %v3660
        %v3791 = vpop.f32.mrf.mxu0
        %v3792 = vadd.f32 0.0, %v3791
        %v3793 = vpop.f32.mrf.mxu0
        %v3794 = vadd.f32 0.0, %v3793
        %3795 = vmatprep.mubr.f32.mxu0 %v3666
        %3796 = vmatmul.mubr.f32.gmra.mxu0 %v3664
        %v3797 = vpop.f32.mrf.mxu0
        %v3798 = vadd.f32 0.0, %v3797
        %v3799 = vpop.f32.mrf.mxu0
        %v3800 = vadd.f32 0.0, %v3799
        %3801 = vmatprep.mubr.f32.mxu0 %v3670
        %3802 = vmatmul.mubr.f32.gmra.mxu0 %v3668
        %v3803 = vpop.f32.mrf.mxu0
        %v3804 = vadd.f32 0.0, %v3803
        %v3805 = vpop.f32.mrf.mxu0
        %v3806 = vadd.f32 0.0, %v3805
        %3807 = vmatprep.mubr.f32.mxu0 %v3674
        %3808 = vmatmul.mubr.f32.gmra.mxu0 %v3672
        %v3809 = vpop.f32.mrf.mxu0
        %v3810 = vadd.f32 0.0, %v3809
        %v3811 = vpop.f32.mrf.mxu0
        %v3812 = vadd.f32 0.0, %v3811
        %3813 = vmatprep.mubr.f32.mxu0 %v3678
        %3814 = vmatmul.mubr.f32.gmra.mxu0 %v3676
        %v3815 = vpop.f32.mrf.mxu0
        %v3816 = vadd.f32 0.0, %v3815
        %v3817 = vpop.f32.mrf.mxu0
        %v3818 = vadd.f32 0.0, %v3817
        %3819 = vmatprep.mubr.f32.mxu0 %v3682
        %3820 = vmatmul.mubr.f32.gmra.mxu0 %v3680
        %v3821 = vpop.f32.mrf.mxu0
        %v3822 = vadd.f32 0.0, %v3821
        %v3823 = vpop.f32.mrf.mxu0
        %v3824 = vadd.f32 0.0, %v3823
        %3825 = vmatprep.mubr.f32.mxu0 %v3686
        %3826 = vmatmul.mubr.f32.gmra.mxu0 %v3684
        %v3827 = vpop.f32.mrf.mxu0
        %v3828 = vadd.f32 0.0, %v3827
        %v3829 = vpop.f32.mrf.mxu0
        %v3830 = vadd.f32 0.0, %v3829
        %3831 = vdwg.mxu0
        %v3832 = vadd.f32 %v3516, %v3774
        %v3833 = vadd.f32 %v3517, %v3776
        %v3834 = vadd.f32 %v3518, %v3780
        %v3835 = vadd.f32 %v3519, %v3782
        %v3836 = vadd.f32 %v3520, %v3786
        %v3837 = vadd.f32 %v3521, %v3788
        %v3838 = vadd.f32 %v3522, %v3792
        %v3839 = vadd.f32 %v3523, %v3794
        %v3840 = vadd.f32 %v3524, %v3798
        %v3841 = vadd.f32 %v3525, %v3800
        %v3842 = vadd.f32 %v3526, %v3804
        %v3843 = vadd.f32 %v3527, %v3806
        %v3844 = vadd.f32 %v3528, %v3810
        %v3845 = vadd.f32 %v3529, %v3812
        %v3846 = vadd.f32 %v3530, %v3816
        %v3847 = vadd.f32 %v3531, %v3818
        %v3848 = vadd.f32 %v3532, %v3822
        %v3849 = vadd.f32 %v3533, %v3824
        %v3850 = vadd.f32 %v3534, %v3828
        %v3851 = vadd.f32 %v3535, %v3830
        %v3852 = vld [vmem:[#allocation2 + $0xb0] sm:$0xff]
        %v3853 = vld [vmem:[#allocation2 + $0xb8] sm:$0xff]
        %s3854 = scalar_lea.vmem %s572, 2048 [#allocation9]
        %v3855 = vld [vmem:[%s3854] sm:$0xff]
        %v3856 = vld [vmem:[%s3854 + $0x8] sm:$0xff]
        %v3857 = vld [vmem:[%s3854 + $0x10] sm:$0xff]
        %v3858 = vld [vmem:[%s3854 + $0x18] sm:$0xff]
        %v3859 = vld [vmem:[%s3854 + $0x20] sm:$0xff]
        %v3860 = vld [vmem:[%s3854 + $0x28] sm:$0xff]
        %v3861 = vld [vmem:[%s3854 + $0x30] sm:$0xff]
        %v3862 = vld [vmem:[%s3854 + $0x38] sm:$0xff]
        %v3863 = vld [vmem:[%s3854 + $0x40] sm:$0xff]
        %v3864 = vld [vmem:[%s3854 + $0x48] sm:$0xff]
        %v3865 = vld [vmem:[%s3854 + $0x50] sm:$0xff]
        %v3866 = vld [vmem:[%s3854 + $0x58] sm:$0xff]
        %v3867 = vld [vmem:[%s3854 + $0x60] sm:$0xff]
        %v3868 = vld [vmem:[%s3854 + $0x68] sm:$0xff]
        %v3869 = vld [vmem:[%s3854 + $0x70] sm:$0xff]
        %v3870 = vld [vmem:[%s3854 + $0x78] sm:$0xff]
        %v3871 = vld [vmem:[%s3854 + $0x80] sm:$0xff]
        %v3872 = vld [vmem:[%s3854 + $0x88] sm:$0xff]
        %v3873 = vld [vmem:[%s3854 + $0x90] sm:$0xff]
        %v3874 = vld [vmem:[%s3854 + $0x98] sm:$0xff]
        %v3875 = vld [vmem:[%s3854 + $0xa0] sm:$0xff]
        %v3876 = vld [vmem:[%s3854 + $0xa8] sm:$0xff]
        %v3877 = vld [vmem:[%s3854 + $0xb0] sm:$0xff]
        %v3878 = vld [vmem:[%s3854 + $0xb8] sm:$0xff]
        %v3879 = vld [vmem:[%s3854 + $0xc0] sm:$0xff]
        %v3880 = vld [vmem:[%s3854 + $0xc8] sm:$0xff]
        %v3881 = vld [vmem:[%s3854 + $0xd0] sm:$0xff]
        %v3882 = vld [vmem:[%s3854 + $0xd8] sm:$0xff]
        %v3883 = vld [vmem:[%s3854 + $0xe0] sm:$0xff]
        %v3884 = vld [vmem:[%s3854 + $0xe8] sm:$0xff]
        %v3885 = vld [vmem:[%s3854 + $0xf0] sm:$0xff]
        %v3886 = vld [vmem:[%s3854 + $0xf8] sm:$0xff]
        %v3887 = vld [vmem:[%s3854 + $0x100] sm:$0xff]
        %v3888 = vld [vmem:[%s3854 + $0x108] sm:$0xff]
        %v3889 = vld [vmem:[%s3854 + $0x110] sm:$0xff]
        %v3890 = vld [vmem:[%s3854 + $0x118] sm:$0xff]
        %v3891 = vld [vmem:[%s3854 + $0x120] sm:$0xff]
        %v3892 = vld [vmem:[%s3854 + $0x128] sm:$0xff]
        %v3893 = vld [vmem:[%s3854 + $0x130] sm:$0xff]
        %v3894 = vld [vmem:[%s3854 + $0x138] sm:$0xff]
        %v3895 = vld [vmem:[%s3854 + $0x140] sm:$0xff]
        %v3896 = vld [vmem:[%s3854 + $0x148] sm:$0xff]
        %v3897 = vld [vmem:[%s3854 + $0x150] sm:$0xff]
        %v3898 = vld [vmem:[%s3854 + $0x158] sm:$0xff]
        %v3899 = vld [vmem:[%s3854 + $0x160] sm:$0xff]
        %v3900 = vld [vmem:[%s3854 + $0x168] sm:$0xff]
        %v3901 = vld [vmem:[%s3854 + $0x170] sm:$0xff]
        %v3902 = vld [vmem:[%s3854 + $0x178] sm:$0xff]
        %v3903 = vld [vmem:[%s3854 + $0x180] sm:$0xff]
        %v3904 = vld [vmem:[%s3854 + $0x188] sm:$0xff]
        %v3905 = vld [vmem:[%s3854 + $0x190] sm:$0xff]
        %v3906 = vld [vmem:[%s3854 + $0x198] sm:$0xff]
        %v3907 = vld [vmem:[%s3854 + $0x1a0] sm:$0xff]
        %v3908 = vld [vmem:[%s3854 + $0x1a8] sm:$0xff]
        %v3909 = vld [vmem:[%s3854 + $0x1b0] sm:$0xff]
        %v3910 = vld [vmem:[%s3854 + $0x1b8] sm:$0xff]
        %v3911 = vld [vmem:[%s3854 + $0x1c0] sm:$0xff]
        %v3912 = vld [vmem:[%s3854 + $0x1c8] sm:$0xff]
        %v3913 = vld [vmem:[%s3854 + $0x1d0] sm:$0xff]
        %v3914 = vld [vmem:[%s3854 + $0x1d8] sm:$0xff]
        %v3915 = vld [vmem:[%s3854 + $0x1e0] sm:$0xff]
        %v3916 = vld [vmem:[%s3854 + $0x1e8] sm:$0xff]
        %v3917 = vld [vmem:[%s3854 + $0x1f0] sm:$0xff]
        %v3918 = vld [vmem:[%s3854 + $0x1f8] sm:$0xff]
        %3919 = vmatprep.subr.mxu0 %v3886
        %3920 = vmatpush1.msra.mxu0 %v3885
        %3921 = vmatprep.subr.mxu0 %v3884
        %3922 = vmatpush1.msra.mxu0 %v3883
        %3923 = vmatprep.subr.mxu0 %v3882
        %3924 = vmatpush1.msra.mxu0 %v3881
        %3925 = vmatprep.subr.mxu0 %v3880
        %3926 = vmatpush1.msra.mxu0 %v3879
        %3927 = vmatprep.subr.mxu0 %v3878
        %3928 = vmatpush1.msra.mxu0 %v3877
        %3929 = vmatprep.subr.mxu0 %v3876
        %3930 = vmatpush1.msra.mxu0 %v3875
        %3931 = vmatprep.subr.mxu0 %v3874
        %3932 = vmatpush1.msra.mxu0 %v3873
        %3933 = vmatprep.subr.mxu0 %v3872
        %3934 = vmatpush1.msra.mxu0 %v3871
        %3935 = vmatprep.subr.mxu0 %v3870
        %3936 = vmatpush1.msra.mxu0 %v3869
        %3937 = vmatprep.subr.mxu0 %v3868
        %3938 = vmatpush1.msra.mxu0 %v3867
        %3939 = vmatprep.subr.mxu0 %v3866
        %3940 = vmatpush1.msra.mxu0 %v3865
        %3941 = vmatprep.subr.mxu0 %v3864
        %3942 = vmatpush1.msra.mxu0 %v3863
        %3943 = vmatprep.subr.mxu0 %v3862
        %3944 = vmatpush1.msra.mxu0 %v3861
        %3945 = vmatprep.subr.mxu0 %v3860
        %3946 = vmatpush1.msra.mxu0 %v3859
        %3947 = vmatprep.subr.mxu0 %v3858
        %3948 = vmatpush1.msra.mxu0 %v3857
        %3949 = vmatprep.subr.mxu0 %v3856
        %3950 = vmatpush1.msra.mxu0 %v3855
        %3951 = vmatprep.subr.mxu0 %v3918
        %3952 = vmatpush2.msra.mxu0 %v3917
        %3953 = vmatprep.subr.mxu0 %v3916
        %3954 = vmatpush2.msra.mxu0 %v3915
        %3955 = vmatprep.subr.mxu0 %v3914
        %3956 = vmatpush2.msra.mxu0 %v3913
        %3957 = vmatprep.subr.mxu0 %v3912
        %3958 = vmatpush2.msra.mxu0 %v3911
        %3959 = vmatprep.subr.mxu0 %v3910
        %3960 = vmatpush2.msra.mxu0 %v3909
        %3961 = vmatprep.subr.mxu0 %v3908
        %3962 = vmatpush2.msra.mxu0 %v3907
        %3963 = vmatprep.subr.mxu0 %v3906
        %3964 = vmatpush2.msra.mxu0 %v3905
        %3965 = vmatprep.subr.mxu0 %v3904
        %3966 = vmatpush2.msra.mxu0 %v3903
        %3967 = vmatprep.subr.mxu0 %v3902
        %3968 = vmatpush2.msra.mxu0 %v3901
        %3969 = vmatprep.subr.mxu0 %v3900
        %3970 = vmatpush2.msra.mxu0 %v3899
        %3971 = vmatprep.subr.mxu0 %v3898
        %3972 = vmatpush2.msra.mxu0 %v3897
        %3973 = vmatprep.subr.mxu0 %v3896
        %3974 = vmatpush2.msra.mxu0 %v3895
        %3975 = vmatprep.subr.mxu0 %v3894
        %3976 = vmatpush2.msra.mxu0 %v3893
        %3977 = vmatprep.subr.mxu0 %v3892
        %3978 = vmatpush2.msra.mxu0 %v3891
        %3979 = vmatprep.subr.mxu0 %v3890
        %3980 = vmatpush2.msra.mxu0 %v3889
        %3981 = vmatprep.subr.mxu0 %v3888
        %3982 = vmatpush2.msra.mxu0 %v3887
        %3983 = vmatprep.mubr.f32.mxu0 %v3539
        %3984 = vmatmul.mubr.f32.gmra.mxu0 %v3538
        %v3985 = vpop.f32.mrf.mxu0
        %v3986 = vadd.f32 0.0, %v3985
        %v3987 = vpop.f32.mrf.mxu0
        %v3988 = vadd.f32 0.0, %v3987
        %3989 = vmatprep.mubr.f32.mxu0 %v3541
        %3990 = vmatmul.mubr.f32.gmra.mxu0 %v3540
        %v3991 = vpop.f32.mrf.mxu0
        %v3992 = vadd.f32 0.0, %v3991
        %v3993 = vpop.f32.mrf.mxu0
        %v3994 = vadd.f32 0.0, %v3993
        %3995 = vmatprep.mubr.f32.mxu0 %v3543
        %3996 = vmatmul.mubr.f32.gmra.mxu0 %v3542
        %v3997 = vpop.f32.mrf.mxu0
        %v3998 = vadd.f32 0.0, %v3997
        %v3999 = vpop.f32.mrf.mxu0
        %v4000 = vadd.f32 0.0, %v3999
        %4001 = vmatprep.mubr.f32.mxu0 %v3545
        %4002 = vmatmul.mubr.f32.gmra.mxu0 %v3544
        %v4003 = vpop.f32.mrf.mxu0
        %v4004 = vadd.f32 0.0, %v4003
        %v4005 = vpop.f32.mrf.mxu0
        %v4006 = vadd.f32 0.0, %v4005
        %4007 = vmatprep.mubr.f32.mxu0 %v3547
        %4008 = vmatmul.mubr.f32.gmra.mxu0 %v3546
        %v4009 = vpop.f32.mrf.mxu0
        %v4010 = vadd.f32 0.0, %v4009
        %v4011 = vpop.f32.mrf.mxu0
        %v4012 = vadd.f32 0.0, %v4011
        %4013 = vmatprep.mubr.f32.mxu0 %v3549
        %4014 = vmatmul.mubr.f32.gmra.mxu0 %v3548
        %v4015 = vpop.f32.mrf.mxu0
        %v4016 = vadd.f32 0.0, %v4015
        %v4017 = vpop.f32.mrf.mxu0
        %v4018 = vadd.f32 0.0, %v4017
        %4019 = vmatprep.mubr.f32.mxu0 %v3551
        %4020 = vmatmul.mubr.f32.gmra.mxu0 %v3550
        %v4021 = vpop.f32.mrf.mxu0
        %v4022 = vadd.f32 0.0, %v4021
        %v4023 = vpop.f32.mrf.mxu0
        %v4024 = vadd.f32 0.0, %v4023
        %4025 = vmatprep.mubr.f32.mxu0 %v3553
        %4026 = vmatmul.mubr.f32.gmra.mxu0 %v3552
        %v4027 = vpop.f32.mrf.mxu0
        %v4028 = vadd.f32 0.0, %v4027
        %v4029 = vpop.f32.mrf.mxu0
        %v4030 = vadd.f32 0.0, %v4029
        %4031 = vmatprep.mubr.f32.mxu0 %v3555
        %4032 = vmatmul.mubr.f32.gmra.mxu0 %v3554
        %v4033 = vpop.f32.mrf.mxu0
        %v4034 = vadd.f32 0.0, %v4033
        %v4035 = vpop.f32.mrf.mxu0
        %v4036 = vadd.f32 0.0, %v4035
        %4037 = vmatprep.mubr.f32.mxu0 %v3853
        %4038 = vmatmul.mubr.f32.gmra.mxu0 %v3852
        %v4039 = vpop.f32.mrf.mxu0
        %v4040 = vadd.f32 0.0, %v4039
        %v4041 = vpop.f32.mrf.mxu0
        %v4042 = vadd.f32 0.0, %v4041
        %4043 = vdwg.mxu0
        %v4044 = vadd.f32 %v3832, %v3986
        %v4045 = vadd.f32 %v3833, %v3988
        %v4046 = vadd.f32 %v3834, %v3992
        %v4047 = vadd.f32 %v3835, %v3994
        %v4048 = vadd.f32 %v3836, %v3998
        %v4049 = vadd.f32 %v3837, %v4000
        %v4050 = vadd.f32 %v3838, %v4004
        %v4051 = vadd.f32 %v3839, %v4006
        %v4052 = vadd.f32 %v3840, %v4010
        %v4053 = vadd.f32 %v3841, %v4012
        %v4054 = vadd.f32 %v3842, %v4016
        %v4055 = vadd.f32 %v3843, %v4018
        %v4056 = vadd.f32 %v3844, %v4022
        %v4057 = vadd.f32 %v3845, %v4024
        %v4058 = vadd.f32 %v3846, %v4028
        %v4059 = vadd.f32 %v3847, %v4030
        %v4060 = vadd.f32 %v3848, %v4034
        %v4061 = vadd.f32 %v3849, %v4036
        %v4062 = vadd.f32 %v3850, %v4040
        %v4063 = vadd.f32 %v3851, %v4042
        %v4064 = vld [vmem:[#allocation2 + $0x20] sm:$0xfe]
        %v4065 = vld [vmem:[#allocation2 + $0x28] sm:$0xfe]
        %v4066 = vld [vmem:[#allocation2 + $0x30] sm:$0xff]
        %v4067 = vld [vmem:[#allocation2 + $0x38] sm:$0xff]
        %v4068 = vld [vmem:[#allocation2 + $0x40] sm:$0xff]
        %v4069 = vld [vmem:[#allocation2 + $0x48] sm:$0xff]
        %v4070 = vld [vmem:[#allocation2 + $0x50] sm:$0xff]
        %v4071 = vld [vmem:[#allocation2 + $0x58] sm:$0xff]
        %v4072 = vld [vmem:[#allocation2 + $0x60] sm:$0xff]
        %v4073 = vld [vmem:[#allocation2 + $0x68] sm:$0xff]
        %v4074 = vld [vmem:[#allocation2 + $0x70] sm:$0xff]
        %v4075 = vld [vmem:[#allocation2 + $0x78] sm:$0xff]
        %v4076 = vld [vmem:[#allocation2 + $0x80] sm:$0xff]
        %v4077 = vld [vmem:[#allocation2 + $0x88] sm:$0xff]
        %v4078 = vld [vmem:[#allocation2 + $0x90] sm:$0xff]
        %v4079 = vld [vmem:[#allocation2 + $0x98] sm:$0xff]
        %v4080 = vld [vmem:[#allocation2 + $0xa0] sm:$0xff]
        %v4081 = vld [vmem:[#allocation2 + $0xa8] sm:$0xff]
        %v4082 = vld [vmem:[#allocation2 + $0xb0] sm:$0xff]
        %v4083 = vld [vmem:[#allocation2 + $0xb8] sm:$0xff]
        %v4084 = vld [vmem:[#allocation2 + $0xc0] sm:$0x1]
        %v4085 = vld [vmem:[#allocation2 + $0xc8] sm:$0x1]
        %s4086 = scalar_lea.vmem %s572, 2560 [#allocation9]
        %v4087 = vld [vmem:[%s4086] sm:$0xff]
        %v4088 = vld [vmem:[%s4086 + $0x8] sm:$0xff]
        %v4089 = vld [vmem:[%s4086 + $0x10] sm:$0xff]
        %v4090 = vld [vmem:[%s4086 + $0x18] sm:$0xff]
        %v4091 = vld [vmem:[%s4086 + $0x20] sm:$0xff]
        %v4092 = vld [vmem:[%s4086 + $0x28] sm:$0xff]
        %v4093 = vld [vmem:[%s4086 + $0x30] sm:$0xff]
        %v4094 = vld [vmem:[%s4086 + $0x38] sm:$0xff]
        %v4095 = vld [vmem:[%s4086 + $0x40] sm:$0xff]
        %v4096 = vld [vmem:[%s4086 + $0x48] sm:$0xff]
        %v4097 = vld [vmem:[%s4086 + $0x50] sm:$0xff]
        %v4098 = vld [vmem:[%s4086 + $0x58] sm:$0xff]
        %v4099 = vld [vmem:[%s4086 + $0x60] sm:$0xff]
        %v4100 = vld [vmem:[%s4086 + $0x68] sm:$0xff]
        %v4101 = vld [vmem:[%s4086 + $0x70] sm:$0xff]
        %v4102 = vld [vmem:[%s4086 + $0x78] sm:$0xff]
        %v4103 = vld [vmem:[%s4086 + $0x80] sm:$0xff]
        %v4104 = vld [vmem:[%s4086 + $0x88] sm:$0xff]
        %v4105 = vld [vmem:[%s4086 + $0x90] sm:$0xff]
        %v4106 = vld [vmem:[%s4086 + $0x98] sm:$0xff]
        %v4107 = vld [vmem:[%s4086 + $0xa0] sm:$0xff]
        %v4108 = vld [vmem:[%s4086 + $0xa8] sm:$0xff]
        %v4109 = vld [vmem:[%s4086 + $0xb0] sm:$0xff]
        %v4110 = vld [vmem:[%s4086 + $0xb8] sm:$0xff]
        %v4111 = vld [vmem:[%s4086 + $0xc0] sm:$0xff]
        %v4112 = vld [vmem:[%s4086 + $0xc8] sm:$0xff]
        %v4113 = vld [vmem:[%s4086 + $0xd0] sm:$0xff]
        %v4114 = vld [vmem:[%s4086 + $0xd8] sm:$0xff]
        %v4115 = vld [vmem:[%s4086 + $0xe0] sm:$0xff]
        %v4116 = vld [vmem:[%s4086 + $0xe8] sm:$0xff]
        %v4117 = vld [vmem:[%s4086 + $0xf0] sm:$0xff]
        %v4118 = vld [vmem:[%s4086 + $0xf8] sm:$0xff]
        %v4119 = vld [vmem:[%s4086 + $0x100] sm:$0xff]
        %v4120 = vld [vmem:[%s4086 + $0x108] sm:$0xff]
        %v4121 = vld [vmem:[%s4086 + $0x110] sm:$0xff]
        %v4122 = vld [vmem:[%s4086 + $0x118] sm:$0xff]
        %v4123 = vld [vmem:[%s4086 + $0x120] sm:$0xff]
        %v4124 = vld [vmem:[%s4086 + $0x128] sm:$0xff]
        %v4125 = vld [vmem:[%s4086 + $0x130] sm:$0xff]
        %v4126 = vld [vmem:[%s4086 + $0x138] sm:$0xff]
        %v4127 = vld [vmem:[%s4086 + $0x140] sm:$0xff]
        %v4128 = vld [vmem:[%s4086 + $0x148] sm:$0xff]
        %v4129 = vld [vmem:[%s4086 + $0x150] sm:$0xff]
        %v4130 = vld [vmem:[%s4086 + $0x158] sm:$0xff]
        %v4131 = vld [vmem:[%s4086 + $0x160] sm:$0xff]
        %v4132 = vld [vmem:[%s4086 + $0x168] sm:$0xff]
        %v4133 = vld [vmem:[%s4086 + $0x170] sm:$0xff]
        %v4134 = vld [vmem:[%s4086 + $0x178] sm:$0xff]
        %v4135 = vld [vmem:[%s4086 + $0x180] sm:$0xff]
        %v4136 = vld [vmem:[%s4086 + $0x188] sm:$0xff]
        %v4137 = vld [vmem:[%s4086 + $0x190] sm:$0xff]
        %v4138 = vld [vmem:[%s4086 + $0x198] sm:$0xff]
        %v4139 = vld [vmem:[%s4086 + $0x1a0] sm:$0xff]
        %v4140 = vld [vmem:[%s4086 + $0x1a8] sm:$0xff]
        %v4141 = vld [vmem:[%s4086 + $0x1b0] sm:$0xff]
        %v4142 = vld [vmem:[%s4086 + $0x1b8] sm:$0xff]
        %v4143 = vld [vmem:[%s4086 + $0x1c0] sm:$0xff]
        %v4144 = vld [vmem:[%s4086 + $0x1c8] sm:$0xff]
        %v4145 = vld [vmem:[%s4086 + $0x1d0] sm:$0xff]
        %v4146 = vld [vmem:[%s4086 + $0x1d8] sm:$0xff]
        %v4147 = vld [vmem:[%s4086 + $0x1e0] sm:$0xff]
        %v4148 = vld [vmem:[%s4086 + $0x1e8] sm:$0xff]
        %v4149 = vld [vmem:[%s4086 + $0x1f0] sm:$0xff]
        %v4150 = vld [vmem:[%s4086 + $0x1f8] sm:$0xff]
        %vm4173 = vcmask 1046528
        %v4174 = vrot.slane %v4064, 1
        %v4175 = vrot.slane %v4066, 1
        %v4176 = vsel %vm4173, %v4174, %v4175
        %v4177 = vrot.slane %v4065, 1
        %v4178 = vrot.slane %v4067, 1
        %v4179 = vsel %vm4173, %v4177, %v4178
        %v4180 = vrot.slane %v4068, 1
        %v4181 = vsel %vm4173, %v4175, %v4180
        %v4182 = vrot.slane %v4069, 1
        %v4183 = vsel %vm4173, %v4178, %v4182
        %v4184 = vrot.slane %v4070, 1
        %v4185 = vsel %vm4173, %v4180, %v4184
        %v4186 = vrot.slane %v4071, 1
        %v4187 = vsel %vm4173, %v4182, %v4186
        %v4188 = vrot.slane %v4072, 1
        %v4189 = vsel %vm4173, %v4184, %v4188
        %v4190 = vrot.slane %v4073, 1
        %v4191 = vsel %vm4173, %v4186, %v4190
        %v4192 = vrot.slane %v4074, 1
        %v4193 = vsel %vm4173, %v4188, %v4192
        %v4194 = vrot.slane %v4075, 1
        %v4195 = vsel %vm4173, %v4190, %v4194
        %v4196 = vrot.slane %v4076, 1
        %v4197 = vsel %vm4173, %v4192, %v4196
        %v4198 = vrot.slane %v4077, 1
        %v4199 = vsel %vm4173, %v4194, %v4198
        %v4200 = vrot.slane %v4078, 1
        %v4201 = vsel %vm4173, %v4196, %v4200
        %v4202 = vrot.slane %v4079, 1
        %v4203 = vsel %vm4173, %v4198, %v4202
        %v4204 = vrot.slane %v4080, 1
        %v4205 = vsel %vm4173, %v4200, %v4204
        %v4206 = vrot.slane %v4081, 1
        %v4207 = vsel %vm4173, %v4202, %v4206
        %v4208 = vrot.slane %v4082, 1
        %v4209 = vsel %vm4173, %v4204, %v4208
        %v4210 = vrot.slane %v4083, 1
        %v4211 = vsel %vm4173, %v4206, %v4210
        %v4212 = vrot.slane %v4084, 1
        %v4213 = vsel %vm4173, %v4208, %v4212
        %v4214 = vrot.slane %v4085, 1
        %v4215 = vsel %vm4173, %v4210, %v4214
        %4236 = vmatprep.subr.mxu0 %v4118
        %4237 = vmatpush1.msra.mxu0 %v4117
        %4238 = vmatprep.subr.mxu0 %v4116
        %4239 = vmatpush1.msra.mxu0 %v4115
        %4240 = vmatprep.subr.mxu0 %v4114
        %4241 = vmatpush1.msra.mxu0 %v4113
        %4242 = vmatprep.subr.mxu0 %v4112
        %4243 = vmatpush1.msra.mxu0 %v4111
        %4244 = vmatprep.subr.mxu0 %v4110
        %4245 = vmatpush1.msra.mxu0 %v4109
        %4246 = vmatprep.subr.mxu0 %v4108
        %4247 = vmatpush1.msra.mxu0 %v4107
        %4248 = vmatprep.subr.mxu0 %v4106
        %4249 = vmatpush1.msra.mxu0 %v4105
        %4250 = vmatprep.subr.mxu0 %v4104
        %4251 = vmatpush1.msra.mxu0 %v4103
        %4252 = vmatprep.subr.mxu0 %v4102
        %4253 = vmatpush1.msra.mxu0 %v4101
        %4254 = vmatprep.subr.mxu0 %v4100
        %4255 = vmatpush1.msra.mxu0 %v4099
        %4256 = vmatprep.subr.mxu0 %v4098
        %4257 = vmatpush1.msra.mxu0 %v4097
        %4258 = vmatprep.subr.mxu0 %v4096
        %4259 = vmatpush1.msra.mxu0 %v4095
        %4260 = vmatprep.subr.mxu0 %v4094
        %4261 = vmatpush1.msra.mxu0 %v4093
        %4262 = vmatprep.subr.mxu0 %v4092
        %4263 = vmatpush1.msra.mxu0 %v4091
        %4264 = vmatprep.subr.mxu0 %v4090
        %4265 = vmatpush1.msra.mxu0 %v4089
        %4266 = vmatprep.subr.mxu0 %v4088
        %4267 = vmatpush1.msra.mxu0 %v4087
        %4268 = vmatprep.subr.mxu0 %v4150
        %4269 = vmatpush2.msra.mxu0 %v4149
        %4270 = vmatprep.subr.mxu0 %v4148
        %4271 = vmatpush2.msra.mxu0 %v4147
        %4272 = vmatprep.subr.mxu0 %v4146
        %4273 = vmatpush2.msra.mxu0 %v4145
        %4274 = vmatprep.subr.mxu0 %v4144
        %4275 = vmatpush2.msra.mxu0 %v4143
        %4276 = vmatprep.subr.mxu0 %v4142
        %4277 = vmatpush2.msra.mxu0 %v4141
        %4278 = vmatprep.subr.mxu0 %v4140
        %4279 = vmatpush2.msra.mxu0 %v4139
        %4280 = vmatprep.subr.mxu0 %v4138
        %4281 = vmatpush2.msra.mxu0 %v4137
        %4282 = vmatprep.subr.mxu0 %v4136
        %4283 = vmatpush2.msra.mxu0 %v4135
        %4284 = vmatprep.subr.mxu0 %v4134
        %4285 = vmatpush2.msra.mxu0 %v4133
        %4286 = vmatprep.subr.mxu0 %v4132
        %4287 = vmatpush2.msra.mxu0 %v4131
        %4288 = vmatprep.subr.mxu0 %v4130
        %4289 = vmatpush2.msra.mxu0 %v4129
        %4290 = vmatprep.subr.mxu0 %v4128
        %4291 = vmatpush2.msra.mxu0 %v4127
        %4292 = vmatprep.subr.mxu0 %v4126
        %4293 = vmatpush2.msra.mxu0 %v4125
        %4294 = vmatprep.subr.mxu0 %v4124
        %4295 = vmatpush2.msra.mxu0 %v4123
        %4296 = vmatprep.subr.mxu0 %v4122
        %4297 = vmatpush2.msra.mxu0 %v4121
        %4298 = vmatprep.subr.mxu0 %v4120
        %4299 = vmatpush2.msra.mxu0 %v4119
        %4300 = vmatprep.mubr.f32.mxu0 %v4179
        %4301 = vmatmul.mubr.f32.gmra.mxu0 %v4176
        %v4302 = vpop.f32.mrf.mxu0
        %v4303 = vadd.f32 0.0, %v4302
        %v4304 = vpop.f32.mrf.mxu0
        %v4305 = vadd.f32 0.0, %v4304
        %4306 = vmatprep.mubr.f32.mxu0 %v4183
        %4307 = vmatmul.mubr.f32.gmra.mxu0 %v4181
        %v4308 = vpop.f32.mrf.mxu0
        %v4309 = vadd.f32 0.0, %v4308
        %v4310 = vpop.f32.mrf.mxu0
        %v4311 = vadd.f32 0.0, %v4310
        %4312 = vmatprep.mubr.f32.mxu0 %v4187
        %4313 = vmatmul.mubr.f32.gmra.mxu0 %v4185
        %v4314 = vpop.f32.mrf.mxu0
        %v4315 = vadd.f32 0.0, %v4314
        %v4316 = vpop.f32.mrf.mxu0
        %v4317 = vadd.f32 0.0, %v4316
        %4318 = vmatprep.mubr.f32.mxu0 %v4191
        %4319 = vmatmul.mubr.f32.gmra.mxu0 %v4189
        %v4320 = vpop.f32.mrf.mxu0
        %v4321 = vadd.f32 0.0, %v4320
        %v4322 = vpop.f32.mrf.mxu0
        %v4323 = vadd.f32 0.0, %v4322
        %4324 = vmatprep.mubr.f32.mxu0 %v4195
        %4325 = vmatmul.mubr.f32.gmra.mxu0 %v4193
        %v4326 = vpop.f32.mrf.mxu0
        %v4327 = vadd.f32 0.0, %v4326
        %v4328 = vpop.f32.mrf.mxu0
        %v4329 = vadd.f32 0.0, %v4328
        %4330 = vmatprep.mubr.f32.mxu0 %v4199
        %4331 = vmatmul.mubr.f32.gmra.mxu0 %v4197
        %v4332 = vpop.f32.mrf.mxu0
        %v4333 = vadd.f32 0.0, %v4332
        %v4334 = vpop.f32.mrf.mxu0
        %v4335 = vadd.f32 0.0, %v4334
        %4336 = vmatprep.mubr.f32.mxu0 %v4203
        %4337 = vmatmul.mubr.f32.gmra.mxu0 %v4201
        %v4338 = vpop.f32.mrf.mxu0
        %v4339 = vadd.f32 0.0, %v4338
        %v4340 = vpop.f32.mrf.mxu0
        %v4341 = vadd.f32 0.0, %v4340
        %4342 = vmatprep.mubr.f32.mxu0 %v4207
        %4343 = vmatmul.mubr.f32.gmra.mxu0 %v4205
        %v4344 = vpop.f32.mrf.mxu0
        %v4345 = vadd.f32 0.0, %v4344
        %v4346 = vpop.f32.mrf.mxu0
        %v4347 = vadd.f32 0.0, %v4346
        %4348 = vmatprep.mubr.f32.mxu0 %v4211
        %4349 = vmatmul.mubr.f32.gmra.mxu0 %v4209
        %v4350 = vpop.f32.mrf.mxu0
        %v4351 = vadd.f32 0.0, %v4350
        %v4352 = vpop.f32.mrf.mxu0
        %v4353 = vadd.f32 0.0, %v4352
        %4354 = vmatprep.mubr.f32.mxu0 %v4215
        %4355 = vmatmul.mubr.f32.gmra.mxu0 %v4213
        %v4356 = vpop.f32.mrf.mxu0
        %v4357 = vadd.f32 0.0, %v4356
        %v4358 = vpop.f32.mrf.mxu0
        %v4359 = vadd.f32 0.0, %v4358
        %4360 = vdwg.mxu0
        %v4361 = vadd.f32 %v4044, %v4303
        %v4362 = vadd.f32 %v4045, %v4305
        %v4363 = vadd.f32 %v4046, %v4309
        %v4364 = vadd.f32 %v4047, %v4311
        %v4365 = vadd.f32 %v4048, %v4315
        %v4366 = vadd.f32 %v4049, %v4317
        %v4367 = vadd.f32 %v4050, %v4321
        %v4368 = vadd.f32 %v4051, %v4323
        %v4369 = vadd.f32 %v4052, %v4327
        %v4370 = vadd.f32 %v4053, %v4329
        %v4371 = vadd.f32 %v4054, %v4333
        %v4372 = vadd.f32 %v4055, %v4335
        %v4373 = vadd.f32 %v4056, %v4339
        %v4374 = vadd.f32 %v4057, %v4341
        %v4375 = vadd.f32 %v4058, %v4345
        %v4376 = vadd.f32 %v4059, %v4347
        %v4377 = vadd.f32 %v4060, %v4351
        %v4378 = vadd.f32 %v4061, %v4353
        %v4379 = vadd.f32 %v4062, %v4357
        %v4380 = vadd.f32 %v4063, %v4359
        %v4381 = vld [vmem:[#allocation2 + $0x30] sm:$0xfe]
        %v4382 = vld [vmem:[#allocation2 + $0x38] sm:$0xfe]
        %v4383 = vld [vmem:[#allocation2 + $0x40] sm:$0xff]
        %v4384 = vld [vmem:[#allocation2 + $0x48] sm:$0xff]
        %v4385 = vld [vmem:[#allocation2 + $0x50] sm:$0xff]
        %v4386 = vld [vmem:[#allocation2 + $0x58] sm:$0xff]
        %v4387 = vld [vmem:[#allocation2 + $0x60] sm:$0xff]
        %v4388 = vld [vmem:[#allocation2 + $0x68] sm:$0xff]
        %v4389 = vld [vmem:[#allocation2 + $0x70] sm:$0xff]
        %v4390 = vld [vmem:[#allocation2 + $0x78] sm:$0xff]
        %v4391 = vld [vmem:[#allocation2 + $0x80] sm:$0xff]
        %v4392 = vld [vmem:[#allocation2 + $0x88] sm:$0xff]
        %v4393 = vld [vmem:[#allocation2 + $0x90] sm:$0xff]
        %v4394 = vld [vmem:[#allocation2 + $0x98] sm:$0xff]
        %v4395 = vld [vmem:[#allocation2 + $0xa0] sm:$0xff]
        %v4396 = vld [vmem:[#allocation2 + $0xa8] sm:$0xff]
        %v4397 = vld [vmem:[#allocation2 + $0xb0] sm:$0xff]
        %v4398 = vld [vmem:[#allocation2 + $0xb8] sm:$0xff]
        %v4399 = vld [vmem:[#allocation2 + $0xc0] sm:$0xff]
        %v4400 = vld [vmem:[#allocation2 + $0xc8] sm:$0xff]
        %v4401 = vld [vmem:[#allocation2 + $0xd0] sm:$0x1]
        %v4402 = vld [vmem:[#allocation2 + $0xd8] sm:$0x1]
        %s4403 = scalar_lea.vmem %s572, 3072 [#allocation9]
        %v4404 = vld [vmem:[%s4403] sm:$0xff]
        %v4405 = vld [vmem:[%s4403 + $0x8] sm:$0xff]
        %v4406 = vld [vmem:[%s4403 + $0x10] sm:$0xff]
        %v4407 = vld [vmem:[%s4403 + $0x18] sm:$0xff]
        %v4408 = vld [vmem:[%s4403 + $0x20] sm:$0xff]
        %v4409 = vld [vmem:[%s4403 + $0x28] sm:$0xff]
        %v4410 = vld [vmem:[%s4403 + $0x30] sm:$0xff]
        %v4411 = vld [vmem:[%s4403 + $0x38] sm:$0xff]
        %v4412 = vld [vmem:[%s4403 + $0x40] sm:$0xff]
        %v4413 = vld [vmem:[%s4403 + $0x48] sm:$0xff]
        %v4414 = vld [vmem:[%s4403 + $0x50] sm:$0xff]
        %v4415 = vld [vmem:[%s4403 + $0x58] sm:$0xff]
        %v4416 = vld [vmem:[%s4403 + $0x60] sm:$0xff]
        %v4417 = vld [vmem:[%s4403 + $0x68] sm:$0xff]
        %v4418 = vld [vmem:[%s4403 + $0x70] sm:$0xff]
        %v4419 = vld [vmem:[%s4403 + $0x78] sm:$0xff]
        %v4420 = vld [vmem:[%s4403 + $0x80] sm:$0xff]
        %v4421 = vld [vmem:[%s4403 + $0x88] sm:$0xff]
        %v4422 = vld [vmem:[%s4403 + $0x90] sm:$0xff]
        %v4423 = vld [vmem:[%s4403 + $0x98] sm:$0xff]
        %v4424 = vld [vmem:[%s4403 + $0xa0] sm:$0xff]
        %v4425 = vld [vmem:[%s4403 + $0xa8] sm:$0xff]
        %v4426 = vld [vmem:[%s4403 + $0xb0] sm:$0xff]
        %v4427 = vld [vmem:[%s4403 + $0xb8] sm:$0xff]
        %v4428 = vld [vmem:[%s4403 + $0xc0] sm:$0xff]
        %v4429 = vld [vmem:[%s4403 + $0xc8] sm:$0xff]
        %v4430 = vld [vmem:[%s4403 + $0xd0] sm:$0xff]
        %v4431 = vld [vmem:[%s4403 + $0xd8] sm:$0xff]
        %v4432 = vld [vmem:[%s4403 + $0xe0] sm:$0xff]
        %v4433 = vld [vmem:[%s4403 + $0xe8] sm:$0xff]
        %v4434 = vld [vmem:[%s4403 + $0xf0] sm:$0xff]
        %v4435 = vld [vmem:[%s4403 + $0xf8] sm:$0xff]
        %v4436 = vld [vmem:[%s4403 + $0x100] sm:$0xff]
        %v4437 = vld [vmem:[%s4403 + $0x108] sm:$0xff]
        %v4438 = vld [vmem:[%s4403 + $0x110] sm:$0xff]
        %v4439 = vld [vmem:[%s4403 + $0x118] sm:$0xff]
        %v4440 = vld [vmem:[%s4403 + $0x120] sm:$0xff]
        %v4441 = vld [vmem:[%s4403 + $0x128] sm:$0xff]
        %v4442 = vld [vmem:[%s4403 + $0x130] sm:$0xff]
        %v4443 = vld [vmem:[%s4403 + $0x138] sm:$0xff]
        %v4444 = vld [vmem:[%s4403 + $0x140] sm:$0xff]
        %v4445 = vld [vmem:[%s4403 + $0x148] sm:$0xff]
        %v4446 = vld [vmem:[%s4403 + $0x150] sm:$0xff]
        %v4447 = vld [vmem:[%s4403 + $0x158] sm:$0xff]
        %v4448 = vld [vmem:[%s4403 + $0x160] sm:$0xff]
        %v4449 = vld [vmem:[%s4403 + $0x168] sm:$0xff]
        %v4450 = vld [vmem:[%s4403 + $0x170] sm:$0xff]
        %v4451 = vld [vmem:[%s4403 + $0x178] sm:$0xff]
        %v4452 = vld [vmem:[%s4403 + $0x180] sm:$0xff]
        %v4453 = vld [vmem:[%s4403 + $0x188] sm:$0xff]
        %v4454 = vld [vmem:[%s4403 + $0x190] sm:$0xff]
        %v4455 = vld [vmem:[%s4403 + $0x198] sm:$0xff]
        %v4456 = vld [vmem:[%s4403 + $0x1a0] sm:$0xff]
        %v4457 = vld [vmem:[%s4403 + $0x1a8] sm:$0xff]
        %v4458 = vld [vmem:[%s4403 + $0x1b0] sm:$0xff]
        %v4459 = vld [vmem:[%s4403 + $0x1b8] sm:$0xff]
        %v4460 = vld [vmem:[%s4403 + $0x1c0] sm:$0xff]
        %v4461 = vld [vmem:[%s4403 + $0x1c8] sm:$0xff]
        %v4462 = vld [vmem:[%s4403 + $0x1d0] sm:$0xff]
        %v4463 = vld [vmem:[%s4403 + $0x1d8] sm:$0xff]
        %v4464 = vld [vmem:[%s4403 + $0x1e0] sm:$0xff]
        %v4465 = vld [vmem:[%s4403 + $0x1e8] sm:$0xff]
        %v4466 = vld [vmem:[%s4403 + $0x1f0] sm:$0xff]
        %v4467 = vld [vmem:[%s4403 + $0x1f8] sm:$0xff]
        %v4490 = vrot.slane %v4381, 1
        %v4491 = vrot.slane %v4383, 1
        %v4492 = vsel %vm4173, %v4490, %v4491
        %v4493 = vrot.slane %v4382, 1
        %v4494 = vrot.slane %v4384, 1
        %v4495 = vsel %vm4173, %v4493, %v4494
        %v4496 = vrot.slane %v4385, 1
        %v4497 = vsel %vm4173, %v4491, %v4496
        %v4498 = vrot.slane %v4386, 1
        %v4499 = vsel %vm4173, %v4494, %v4498
        %v4500 = vrot.slane %v4387, 1
        %v4501 = vsel %vm4173, %v4496, %v4500
        %v4502 = vrot.slane %v4388, 1
        %v4503 = vsel %vm4173, %v4498, %v4502
        %v4504 = vrot.slane %v4389, 1
        %v4505 = vsel %vm4173, %v4500, %v4504
        %v4506 = vrot.slane %v4390, 1
        %v4507 = vsel %vm4173, %v4502, %v4506
        %v4508 = vrot.slane %v4391, 1
        %v4509 = vsel %vm4173, %v4504, %v4508
        %v4510 = vrot.slane %v4392, 1
        %v4511 = vsel %vm4173, %v4506, %v4510
        %v4512 = vrot.slane %v4393, 1
        %v4513 = vsel %vm4173, %v4508, %v4512
        %v4514 = vrot.slane %v4394, 1
        %v4515 = vsel %vm4173, %v4510, %v4514
        %v4516 = vrot.slane %v4395, 1
        %v4517 = vsel %vm4173, %v4512, %v4516
        %v4518 = vrot.slane %v4396, 1
        %v4519 = vsel %vm4173, %v4514, %v4518
        %v4520 = vrot.slane %v4397, 1
        %v4521 = vsel %vm4173, %v4516, %v4520
        %v4522 = vrot.slane %v4398, 1
        %v4523 = vsel %vm4173, %v4518, %v4522
        %v4524 = vrot.slane %v4399, 1
        %v4525 = vsel %vm4173, %v4520, %v4524
        %v4526 = vrot.slane %v4400, 1
        %v4527 = vsel %vm4173, %v4522, %v4526
        %v4528 = vrot.slane %v4401, 1
        %v4529 = vsel %vm4173, %v4524, %v4528
        %v4530 = vrot.slane %v4402, 1
        %v4531 = vsel %vm4173, %v4526, %v4530
        %4552 = vmatprep.subr.mxu0 %v4435
        %4553 = vmatpush1.msra.mxu0 %v4434
        %4554 = vmatprep.subr.mxu0 %v4433
        %4555 = vmatpush1.msra.mxu0 %v4432
        %4556 = vmatprep.subr.mxu0 %v4431
        %4557 = vmatpush1.msra.mxu0 %v4430
        %4558 = vmatprep.subr.mxu0 %v4429
        %4559 = vmatpush1.msra.mxu0 %v4428
        %4560 = vmatprep.subr.mxu0 %v4427
        %4561 = vmatpush1.msra.mxu0 %v4426
        %4562 = vmatprep.subr.mxu0 %v4425
        %4563 = vmatpush1.msra.mxu0 %v4424
        %4564 = vmatprep.subr.mxu0 %v4423
        %4565 = vmatpush1.msra.mxu0 %v4422
        %4566 = vmatprep.subr.mxu0 %v4421
        %4567 = vmatpush1.msra.mxu0 %v4420
        %4568 = vmatprep.subr.mxu0 %v4419
        %4569 = vmatpush1.msra.mxu0 %v4418
        %4570 = vmatprep.subr.mxu0 %v4417
        %4571 = vmatpush1.msra.mxu0 %v4416
        %4572 = vmatprep.subr.mxu0 %v4415
        %4573 = vmatpush1.msra.mxu0 %v4414
        %4574 = vmatprep.subr.mxu0 %v4413
        %4575 = vmatpush1.msra.mxu0 %v4412
        %4576 = vmatprep.subr.mxu0 %v4411
        %4577 = vmatpush1.msra.mxu0 %v4410
        %4578 = vmatprep.subr.mxu0 %v4409
        %4579 = vmatpush1.msra.mxu0 %v4408
        %4580 = vmatprep.subr.mxu0 %v4407
        %4581 = vmatpush1.msra.mxu0 %v4406
        %4582 = vmatprep.subr.mxu0 %v4405
        %4583 = vmatpush1.msra.mxu0 %v4404
        %4584 = vmatprep.subr.mxu0 %v4467
        %4585 = vmatpush2.msra.mxu0 %v4466
        %4586 = vmatprep.subr.mxu0 %v4465
        %4587 = vmatpush2.msra.mxu0 %v4464
        %4588 = vmatprep.subr.mxu0 %v4463
        %4589 = vmatpush2.msra.mxu0 %v4462
        %4590 = vmatprep.subr.mxu0 %v4461
        %4591 = vmatpush2.msra.mxu0 %v4460
        %4592 = vmatprep.subr.mxu0 %v4459
        %4593 = vmatpush2.msra.mxu0 %v4458
        %4594 = vmatprep.subr.mxu0 %v4457
        %4595 = vmatpush2.msra.mxu0 %v4456
        %4596 = vmatprep.subr.mxu0 %v4455
        %4597 = vmatpush2.msra.mxu0 %v4454
        %4598 = vmatprep.subr.mxu0 %v4453
        %4599 = vmatpush2.msra.mxu0 %v4452
        %4600 = vmatprep.subr.mxu0 %v4451
        %4601 = vmatpush2.msra.mxu0 %v4450
        %4602 = vmatprep.subr.mxu0 %v4449
        %4603 = vmatpush2.msra.mxu0 %v4448
        %4604 = vmatprep.subr.mxu0 %v4447
        %4605 = vmatpush2.msra.mxu0 %v4446
        %4606 = vmatprep.subr.mxu0 %v4445
        %4607 = vmatpush2.msra.mxu0 %v4444
        %4608 = vmatprep.subr.mxu0 %v4443
        %4609 = vmatpush2.msra.mxu0 %v4442
        %4610 = vmatprep.subr.mxu0 %v4441
        %4611 = vmatpush2.msra.mxu0 %v4440
        %4612 = vmatprep.subr.mxu0 %v4439
        %4613 = vmatpush2.msra.mxu0 %v4438
        %4614 = vmatprep.subr.mxu0 %v4437
        %4615 = vmatpush2.msra.mxu0 %v4436
        %4616 = vmatprep.mubr.f32.mxu0 %v4495
        %4617 = vmatmul.mubr.f32.gmra.mxu0 %v4492
        %v4618 = vpop.f32.mrf.mxu0
        %v4619 = vadd.f32 0.0, %v4618
        %v4620 = vpop.f32.mrf.mxu0
        %v4621 = vadd.f32 0.0, %v4620
        %4622 = vmatprep.mubr.f32.mxu0 %v4499
        %4623 = vmatmul.mubr.f32.gmra.mxu0 %v4497
        %v4624 = vpop.f32.mrf.mxu0
        %v4625 = vadd.f32 0.0, %v4624
        %v4626 = vpop.f32.mrf.mxu0
        %v4627 = vadd.f32 0.0, %v4626
        %4628 = vmatprep.mubr.f32.mxu0 %v4503
        %4629 = vmatmul.mubr.f32.gmra.mxu0 %v4501
        %v4630 = vpop.f32.mrf.mxu0
        %v4631 = vadd.f32 0.0, %v4630
        %v4632 = vpop.f32.mrf.mxu0
        %v4633 = vadd.f32 0.0, %v4632
        %4634 = vmatprep.mubr.f32.mxu0 %v4507
        %4635 = vmatmul.mubr.f32.gmra.mxu0 %v4505
        %v4636 = vpop.f32.mrf.mxu0
        %v4637 = vadd.f32 0.0, %v4636
        %v4638 = vpop.f32.mrf.mxu0
        %v4639 = vadd.f32 0.0, %v4638
        %4640 = vmatprep.mubr.f32.mxu0 %v4511
        %4641 = vmatmul.mubr.f32.gmra.mxu0 %v4509
        %v4642 = vpop.f32.mrf.mxu0
        %v4643 = vadd.f32 0.0, %v4642
        %v4644 = vpop.f32.mrf.mxu0
        %v4645 = vadd.f32 0.0, %v4644
        %4646 = vmatprep.mubr.f32.mxu0 %v4515
        %4647 = vmatmul.mubr.f32.gmra.mxu0 %v4513
        %v4648 = vpop.f32.mrf.mxu0
        %v4649 = vadd.f32 0.0, %v4648
        %v4650 = vpop.f32.mrf.mxu0
        %v4651 = vadd.f32 0.0, %v4650
        %4652 = vmatprep.mubr.f32.mxu0 %v4519
        %4653 = vmatmul.mubr.f32.gmra.mxu0 %v4517
        %v4654 = vpop.f32.mrf.mxu0
        %v4655 = vadd.f32 0.0, %v4654
        %v4656 = vpop.f32.mrf.mxu0
        %v4657 = vadd.f32 0.0, %v4656
        %4658 = vmatprep.mubr.f32.mxu0 %v4523
        %4659 = vmatmul.mubr.f32.gmra.mxu0 %v4521
        %v4660 = vpop.f32.mrf.mxu0
        %v4661 = vadd.f32 0.0, %v4660
        %v4662 = vpop.f32.mrf.mxu0
        %v4663 = vadd.f32 0.0, %v4662
        %4664 = vmatprep.mubr.f32.mxu0 %v4527
        %4665 = vmatmul.mubr.f32.gmra.mxu0 %v4525
        %v4666 = vpop.f32.mrf.mxu0
        %v4667 = vadd.f32 0.0, %v4666
        %v4668 = vpop.f32.mrf.mxu0
        %v4669 = vadd.f32 0.0, %v4668
        %4670 = vmatprep.mubr.f32.mxu0 %v4531
        %4671 = vmatmul.mubr.f32.gmra.mxu0 %v4529
        %v4672 = vpop.f32.mrf.mxu0
        %v4673 = vadd.f32 0.0, %v4672
        %v4674 = vpop.f32.mrf.mxu0
        %v4675 = vadd.f32 0.0, %v4674
        %4676 = vdwg.mxu0
        %v4677 = vadd.f32 %v4361, %v4619
        %v4678 = vadd.f32 %v4362, %v4621
        %v4679 = vadd.f32 %v4363, %v4625
        %v4680 = vadd.f32 %v4364, %v4627
        %v4681 = vadd.f32 %v4365, %v4631
        %v4682 = vadd.f32 %v4366, %v4633
        %v4683 = vadd.f32 %v4367, %v4637
        %v4684 = vadd.f32 %v4368, %v4639
        %v4685 = vadd.f32 %v4369, %v4643
        %v4686 = vadd.f32 %v4370, %v4645
        %v4687 = vadd.f32 %v4371, %v4649
        %v4688 = vadd.f32 %v4372, %v4651
        %v4689 = vadd.f32 %v4373, %v4655
        %v4690 = vadd.f32 %v4374, %v4657
        %v4691 = vadd.f32 %v4375, %v4661
        %v4692 = vadd.f32 %v4376, %v4663
        %v4693 = vadd.f32 %v4377, %v4667
        %v4694 = vadd.f32 %v4378, %v4669
        %v4695 = vadd.f32 %v4379, %v4673
        %v4696 = vadd.f32 %v4380, %v4675
        %v4697 = vld [vmem:[#allocation2 + $0x30] sm:$0xfc]
        %v4698 = vld [vmem:[#allocation2 + $0x38] sm:$0xfc]
        %v4699 = vld [vmem:[#allocation2 + $0xd0] sm:$0x3]
        %v4700 = vld [vmem:[#allocation2 + $0xd8] sm:$0x3]
        %s4701 = scalar_lea.vmem %s572, 3584 [#allocation9]
        %v4702 = vld [vmem:[%s4701] sm:$0xff]
        %v4703 = vld [vmem:[%s4701 + $0x8] sm:$0xff]
        %v4704 = vld [vmem:[%s4701 + $0x10] sm:$0xff]
        %v4705 = vld [vmem:[%s4701 + $0x18] sm:$0xff]
        %v4706 = vld [vmem:[%s4701 + $0x20] sm:$0xff]
        %v4707 = vld [vmem:[%s4701 + $0x28] sm:$0xff]
        %v4708 = vld [vmem:[%s4701 + $0x30] sm:$0xff]
        %v4709 = vld [vmem:[%s4701 + $0x38] sm:$0xff]
        %v4710 = vld [vmem:[%s4701 + $0x40] sm:$0xff]
        %v4711 = vld [vmem:[%s4701 + $0x48] sm:$0xff]
        %v4712 = vld [vmem:[%s4701 + $0x50] sm:$0xff]
        %v4713 = vld [vmem:[%s4701 + $0x58] sm:$0xff]
        %v4714 = vld [vmem:[%s4701 + $0x60] sm:$0xff]
        %v4715 = vld [vmem:[%s4701 + $0x68] sm:$0xff]
        %v4716 = vld [vmem:[%s4701 + $0x70] sm:$0xff]
        %v4717 = vld [vmem:[%s4701 + $0x78] sm:$0xff]
        %v4718 = vld [vmem:[%s4701 + $0x80] sm:$0xff]
        %v4719 = vld [vmem:[%s4701 + $0x88] sm:$0xff]
        %v4720 = vld [vmem:[%s4701 + $0x90] sm:$0xff]
        %v4721 = vld [vmem:[%s4701 + $0x98] sm:$0xff]
        %v4722 = vld [vmem:[%s4701 + $0xa0] sm:$0xff]
        %v4723 = vld [vmem:[%s4701 + $0xa8] sm:$0xff]
        %v4724 = vld [vmem:[%s4701 + $0xb0] sm:$0xff]
        %v4725 = vld [vmem:[%s4701 + $0xb8] sm:$0xff]
        %v4726 = vld [vmem:[%s4701 + $0xc0] sm:$0xff]
        %v4727 = vld [vmem:[%s4701 + $0xc8] sm:$0xff]
        %v4728 = vld [vmem:[%s4701 + $0xd0] sm:$0xff]
        %v4729 = vld [vmem:[%s4701 + $0xd8] sm:$0xff]
        %v4730 = vld [vmem:[%s4701 + $0xe0] sm:$0xff]
        %v4731 = vld [vmem:[%s4701 + $0xe8] sm:$0xff]
        %v4732 = vld [vmem:[%s4701 + $0xf0] sm:$0xff]
        %v4733 = vld [vmem:[%s4701 + $0xf8] sm:$0xff]
        %v4734 = vld [vmem:[%s4701 + $0x100] sm:$0xff]
        %v4735 = vld [vmem:[%s4701 + $0x108] sm:$0xff]
        %v4736 = vld [vmem:[%s4701 + $0x110] sm:$0xff]
        %v4737 = vld [vmem:[%s4701 + $0x118] sm:$0xff]
        %v4738 = vld [vmem:[%s4701 + $0x120] sm:$0xff]
        %v4739 = vld [vmem:[%s4701 + $0x128] sm:$0xff]
        %v4740 = vld [vmem:[%s4701 + $0x130] sm:$0xff]
        %v4741 = vld [vmem:[%s4701 + $0x138] sm:$0xff]
        %v4742 = vld [vmem:[%s4701 + $0x140] sm:$0xff]
        %v4743 = vld [vmem:[%s4701 + $0x148] sm:$0xff]
        %v4744 = vld [vmem:[%s4701 + $0x150] sm:$0xff]
        %v4745 = vld [vmem:[%s4701 + $0x158] sm:$0xff]
        %v4746 = vld [vmem:[%s4701 + $0x160] sm:$0xff]
        %v4747 = vld [vmem:[%s4701 + $0x168] sm:$0xff]
        %v4748 = vld [vmem:[%s4701 + $0x170] sm:$0xff]
        %v4749 = vld [vmem:[%s4701 + $0x178] sm:$0xff]
        %v4750 = vld [vmem:[%s4701 + $0x180] sm:$0xff]
        %v4751 = vld [vmem:[%s4701 + $0x188] sm:$0xff]
        %v4752 = vld [vmem:[%s4701 + $0x190] sm:$0xff]
        %v4753 = vld [vmem:[%s4701 + $0x198] sm:$0xff]
        %v4754 = vld [vmem:[%s4701 + $0x1a0] sm:$0xff]
        %v4755 = vld [vmem:[%s4701 + $0x1a8] sm:$0xff]
        %v4756 = vld [vmem:[%s4701 + $0x1b0] sm:$0xff]
        %v4757 = vld [vmem:[%s4701 + $0x1b8] sm:$0xff]
        %v4758 = vld [vmem:[%s4701 + $0x1c0] sm:$0xff]
        %v4759 = vld [vmem:[%s4701 + $0x1c8] sm:$0xff]
        %v4760 = vld [vmem:[%s4701 + $0x1d0] sm:$0xff]
        %v4761 = vld [vmem:[%s4701 + $0x1d8] sm:$0xff]
        %v4762 = vld [vmem:[%s4701 + $0x1e0] sm:$0xff]
        %v4763 = vld [vmem:[%s4701 + $0x1e8] sm:$0xff]
        %v4764 = vld [vmem:[%s4701 + $0x1f0] sm:$0xff]
        %v4765 = vld [vmem:[%s4701 + $0x1f8] sm:$0xff]
        %vm4770 = vcmask 1045504
        %v4771 = vrot.slane %v4697, 2
        %v4772 = vrot.slane %v4383, 2
        %v4773 = vsel %vm4770, %v4771, %v4772
        %v4774 = vrot.slane %v4698, 2
        %v4775 = vrot.slane %v4384, 2
        %v4776 = vsel %vm4770, %v4774, %v4775
        %v4777 = vrot.slane %v4385, 2
        %v4778 = vsel %vm4770, %v4772, %v4777
        %v4779 = vrot.slane %v4386, 2
        %v4780 = vsel %vm4770, %v4775, %v4779
        %v4781 = vrot.slane %v4387, 2
        %v4782 = vsel %vm4770, %v4777, %v4781
        %v4783 = vrot.slane %v4388, 2
        %v4784 = vsel %vm4770, %v4779, %v4783
        %v4785 = vrot.slane %v4389, 2
        %v4786 = vsel %vm4770, %v4781, %v4785
        %v4787 = vrot.slane %v4390, 2
        %v4788 = vsel %vm4770, %v4783, %v4787
        %v4789 = vrot.slane %v4391, 2
        %v4790 = vsel %vm4770, %v4785, %v4789
        %v4791 = vrot.slane %v4392, 2
        %v4792 = vsel %vm4770, %v4787, %v4791
        %v4793 = vrot.slane %v4393, 2
        %v4794 = vsel %vm4770, %v4789, %v4793
        %v4795 = vrot.slane %v4394, 2
        %v4796 = vsel %vm4770, %v4791, %v4795
        %v4797 = vrot.slane %v4395, 2
        %v4798 = vsel %vm4770, %v4793, %v4797
        %v4799 = vrot.slane %v4396, 2
        %v4800 = vsel %vm4770, %v4795, %v4799
        %v4801 = vrot.slane %v4397, 2
        %v4802 = vsel %vm4770, %v4797, %v4801
        %v4803 = vrot.slane %v4398, 2
        %v4804 = vsel %vm4770, %v4799, %v4803
        %v4805 = vrot.slane %v4399, 2
        %v4806 = vsel %vm4770, %v4801, %v4805
        %v4807 = vrot.slane %v4400, 2
        %v4808 = vsel %vm4770, %v4803, %v4807
        %v4809 = vrot.slane %v4699, 2
        %v4810 = vsel %vm4770, %v4805, %v4809
        %v4811 = vrot.slane %v4700, 2
        %v4812 = vsel %vm4770, %v4807, %v4811
        %4833 = vmatprep.subr.mxu0 %v4733
        %4834 = vmatpush1.msra.mxu0 %v4732
        %4835 = vmatprep.subr.mxu0 %v4731
        %4836 = vmatpush1.msra.mxu0 %v4730
        %4837 = vmatprep.subr.mxu0 %v4729
        %4838 = vmatpush1.msra.mxu0 %v4728
        %4839 = vmatprep.subr.mxu0 %v4727
        %4840 = vmatpush1.msra.mxu0 %v4726
        %4841 = vmatprep.subr.mxu0 %v4725
        %4842 = vmatpush1.msra.mxu0 %v4724
        %4843 = vmatprep.subr.mxu0 %v4723
        %4844 = vmatpush1.msra.mxu0 %v4722
        %4845 = vmatprep.subr.mxu0 %v4721
        %4846 = vmatpush1.msra.mxu0 %v4720
        %4847 = vmatprep.subr.mxu0 %v4719
        %4848 = vmatpush1.msra.mxu0 %v4718
        %4849 = vmatprep.subr.mxu0 %v4717
        %4850 = vmatpush1.msra.mxu0 %v4716
        %4851 = vmatprep.subr.mxu0 %v4715
        %4852 = vmatpush1.msra.mxu0 %v4714
        %4853 = vmatprep.subr.mxu0 %v4713
        %4854 = vmatpush1.msra.mxu0 %v4712
        %4855 = vmatprep.subr.mxu0 %v4711
        %4856 = vmatpush1.msra.mxu0 %v4710
        %4857 = vmatprep.subr.mxu0 %v4709
        %4858 = vmatpush1.msra.mxu0 %v4708
        %4859 = vmatprep.subr.mxu0 %v4707
        %4860 = vmatpush1.msra.mxu0 %v4706
        %4861 = vmatprep.subr.mxu0 %v4705
        %4862 = vmatpush1.msra.mxu0 %v4704
        %4863 = vmatprep.subr.mxu0 %v4703
        %4864 = vmatpush1.msra.mxu0 %v4702
        %4865 = vmatprep.subr.mxu0 %v4765
        %4866 = vmatpush2.msra.mxu0 %v4764
        %4867 = vmatprep.subr.mxu0 %v4763
        %4868 = vmatpush2.msra.mxu0 %v4762
        %4869 = vmatprep.subr.mxu0 %v4761
        %4870 = vmatpush2.msra.mxu0 %v4760
        %4871 = vmatprep.subr.mxu0 %v4759
        %4872 = vmatpush2.msra.mxu0 %v4758
        %4873 = vmatprep.subr.mxu0 %v4757
        %4874 = vmatpush2.msra.mxu0 %v4756
        %4875 = vmatprep.subr.mxu0 %v4755
        %4876 = vmatpush2.msra.mxu0 %v4754
        %4877 = vmatprep.subr.mxu0 %v4753
        %4878 = vmatpush2.msra.mxu0 %v4752
        %4879 = vmatprep.subr.mxu0 %v4751
        %4880 = vmatpush2.msra.mxu0 %v4750
        %4881 = vmatprep.subr.mxu0 %v4749
        %4882 = vmatpush2.msra.mxu0 %v4748
        %4883 = vmatprep.subr.mxu0 %v4747
        %4884 = vmatpush2.msra.mxu0 %v4746
        %4885 = vmatprep.subr.mxu0 %v4745
        %4886 = vmatpush2.msra.mxu0 %v4744
        %4887 = vmatprep.subr.mxu0 %v4743
        %4888 = vmatpush2.msra.mxu0 %v4742
        %4889 = vmatprep.subr.mxu0 %v4741
        %4890 = vmatpush2.msra.mxu0 %v4740
        %4891 = vmatprep.subr.mxu0 %v4739
        %4892 = vmatpush2.msra.mxu0 %v4738
        %4893 = vmatprep.subr.mxu0 %v4737
        %4894 = vmatpush2.msra.mxu0 %v4736
        %4895 = vmatprep.subr.mxu0 %v4735
        %4896 = vmatpush2.msra.mxu0 %v4734
        %4897 = vmatprep.mubr.f32.mxu0 %v4776
        %4898 = vmatmul.mubr.f32.gmra.mxu0 %v4773
        %v4899 = vpop.f32.mrf.mxu0
        %v4900 = vadd.f32 0.0, %v4899
        %v4901 = vpop.f32.mrf.mxu0
        %v4902 = vadd.f32 0.0, %v4901
        %4903 = vmatprep.mubr.f32.mxu0 %v4780
        %4904 = vmatmul.mubr.f32.gmra.mxu0 %v4778
        %v4905 = vpop.f32.mrf.mxu0
        %v4906 = vadd.f32 0.0, %v4905
        %v4907 = vpop.f32.mrf.mxu0
        %v4908 = vadd.f32 0.0, %v4907
        %4909 = vmatprep.mubr.f32.mxu0 %v4784
        %4910 = vmatmul.mubr.f32.gmra.mxu0 %v4782
        %v4911 = vpop.f32.mrf.mxu0
        %v4912 = vadd.f32 0.0, %v4911
        %v4913 = vpop.f32.mrf.mxu0
        %v4914 = vadd.f32 0.0, %v4913
        %4915 = vmatprep.mubr.f32.mxu0 %v4788
        %4916 = vmatmul.mubr.f32.gmra.mxu0 %v4786
        %v4917 = vpop.f32.mrf.mxu0
        %v4918 = vadd.f32 0.0, %v4917
        %v4919 = vpop.f32.mrf.mxu0
        %v4920 = vadd.f32 0.0, %v4919
        %4921 = vmatprep.mubr.f32.mxu0 %v4792
        %4922 = vmatmul.mubr.f32.gmra.mxu0 %v4790
        %v4923 = vpop.f32.mrf.mxu0
        %v4924 = vadd.f32 0.0, %v4923
        %v4925 = vpop.f32.mrf.mxu0
        %v4926 = vadd.f32 0.0, %v4925
        %4927 = vmatprep.mubr.f32.mxu0 %v4796
        %4928 = vmatmul.mubr.f32.gmra.mxu0 %v4794
        %v4929 = vpop.f32.mrf.mxu0
        %v4930 = vadd.f32 0.0, %v4929
        %v4931 = vpop.f32.mrf.mxu0
        %v4932 = vadd.f32 0.0, %v4931
        %4933 = vmatprep.mubr.f32.mxu0 %v4800
        %4934 = vmatmul.mubr.f32.gmra.mxu0 %v4798
        %v4935 = vpop.f32.mrf.mxu0
        %v4936 = vadd.f32 0.0, %v4935
        %v4937 = vpop.f32.mrf.mxu0
        %v4938 = vadd.f32 0.0, %v4937
        %4939 = vmatprep.mubr.f32.mxu0 %v4804
        %4940 = vmatmul.mubr.f32.gmra.mxu0 %v4802
        %v4941 = vpop.f32.mrf.mxu0
        %v4942 = vadd.f32 0.0, %v4941
        %v4943 = vpop.f32.mrf.mxu0
        %v4944 = vadd.f32 0.0, %v4943
        %4945 = vmatprep.mubr.f32.mxu0 %v4808
        %4946 = vmatmul.mubr.f32.gmra.mxu0 %v4806
        %v4947 = vpop.f32.mrf.mxu0
        %v4948 = vadd.f32 0.0, %v4947
        %v4949 = vpop.f32.mrf.mxu0
        %v4950 = vadd.f32 0.0, %v4949
        %4951 = vmatprep.mubr.f32.mxu0 %v4812
        %4952 = vmatmul.mubr.f32.gmra.mxu0 %v4810
        %v4953 = vpop.f32.mrf.mxu0
        %v4954 = vadd.f32 0.0, %v4953
        %v4955 = vpop.f32.mrf.mxu0
        %v4956 = vadd.f32 0.0, %v4955
        %4957 = vdwg.mxu0
        %v4958 = vadd.f32 %v4677, %v4900
        %v4959 = vadd.f32 %v4678, %v4902
        %v4960 = vadd.f32 %v4679, %v4906
        %v4961 = vadd.f32 %v4680, %v4908
        %v4962 = vadd.f32 %v4681, %v4912
        %v4963 = vadd.f32 %v4682, %v4914
        %v4964 = vadd.f32 %v4683, %v4918
        %v4965 = vadd.f32 %v4684, %v4920
        %v4966 = vadd.f32 %v4685, %v4924
        %v4967 = vadd.f32 %v4686, %v4926
        %v4968 = vadd.f32 %v4687, %v4930
        %v4969 = vadd.f32 %v4688, %v4932
        %v4970 = vadd.f32 %v4689, %v4936
        %v4971 = vadd.f32 %v4690, %v4938
        %v4972 = vadd.f32 %v4691, %v4942
        %v4973 = vadd.f32 %v4692, %v4944
        %v4974 = vadd.f32 %v4693, %v4948
        %v4975 = vadd.f32 %v4694, %v4950
        %v4976 = vadd.f32 %v4695, %v4954
        %v4977 = vadd.f32 %v4696, %v4956
        %v4978 = vld [vmem:[#allocation2 + $0x30] sm:$0xf8]
        %v4979 = vld [vmem:[#allocation2 + $0x38] sm:$0xf8]
        %v4980 = vld [vmem:[#allocation2 + $0xd0] sm:$0x7]
        %v4981 = vld [vmem:[#allocation2 + $0xd8] sm:$0x7]
        %s4982 = scalar_lea.vmem %s572, 4096 [#allocation9]
        %v4983 = vld [vmem:[%s4982] sm:$0xff]
        %v4984 = vld [vmem:[%s4982 + $0x8] sm:$0xff]
        %v4985 = vld [vmem:[%s4982 + $0x10] sm:$0xff]
        %v4986 = vld [vmem:[%s4982 + $0x18] sm:$0xff]
        %v4987 = vld [vmem:[%s4982 + $0x20] sm:$0xff]
        %v4988 = vld [vmem:[%s4982 + $0x28] sm:$0xff]
        %v4989 = vld [vmem:[%s4982 + $0x30] sm:$0xff]
        %v4990 = vld [vmem:[%s4982 + $0x38] sm:$0xff]
        %v4991 = vld [vmem:[%s4982 + $0x40] sm:$0xff]
        %v4992 = vld [vmem:[%s4982 + $0x48] sm:$0xff]
        %v4993 = vld [vmem:[%s4982 + $0x50] sm:$0xff]
        %v4994 = vld [vmem:[%s4982 + $0x58] sm:$0xff]
        %v4995 = vld [vmem:[%s4982 + $0x60] sm:$0xff]
        %v4996 = vld [vmem:[%s4982 + $0x68] sm:$0xff]
        %v4997 = vld [vmem:[%s4982 + $0x70] sm:$0xff]
        %v4998 = vld [vmem:[%s4982 + $0x78] sm:$0xff]
        %v4999 = vld [vmem:[%s4982 + $0x80] sm:$0xff]
        %v5000 = vld [vmem:[%s4982 + $0x88] sm:$0xff]
        %v5001 = vld [vmem:[%s4982 + $0x90] sm:$0xff]
        %v5002 = vld [vmem:[%s4982 + $0x98] sm:$0xff]
        %v5003 = vld [vmem:[%s4982 + $0xa0] sm:$0xff]
        %v5004 = vld [vmem:[%s4982 + $0xa8] sm:$0xff]
        %v5005 = vld [vmem:[%s4982 + $0xb0] sm:$0xff]
        %v5006 = vld [vmem:[%s4982 + $0xb8] sm:$0xff]
        %v5007 = vld [vmem:[%s4982 + $0xc0] sm:$0xff]
        %v5008 = vld [vmem:[%s4982 + $0xc8] sm:$0xff]
        %v5009 = vld [vmem:[%s4982 + $0xd0] sm:$0xff]
        %v5010 = vld [vmem:[%s4982 + $0xd8] sm:$0xff]
        %v5011 = vld [vmem:[%s4982 + $0xe0] sm:$0xff]
        %v5012 = vld [vmem:[%s4982 + $0xe8] sm:$0xff]
        %v5013 = vld [vmem:[%s4982 + $0xf0] sm:$0xff]
        %v5014 = vld [vmem:[%s4982 + $0xf8] sm:$0xff]
        %v5015 = vld [vmem:[%s4982 + $0x100] sm:$0xff]
        %v5016 = vld [vmem:[%s4982 + $0x108] sm:$0xff]
        %v5017 = vld [vmem:[%s4982 + $0x110] sm:$0xff]
        %v5018 = vld [vmem:[%s4982 + $0x118] sm:$0xff]
        %v5019 = vld [vmem:[%s4982 + $0x120] sm:$0xff]
        %v5020 = vld [vmem:[%s4982 + $0x128] sm:$0xff]
        %v5021 = vld [vmem:[%s4982 + $0x130] sm:$0xff]
        %v5022 = vld [vmem:[%s4982 + $0x138] sm:$0xff]
        %v5023 = vld [vmem:[%s4982 + $0x140] sm:$0xff]
        %v5024 = vld [vmem:[%s4982 + $0x148] sm:$0xff]
        %v5025 = vld [vmem:[%s4982 + $0x150] sm:$0xff]
        %v5026 = vld [vmem:[%s4982 + $0x158] sm:$0xff]
        %v5027 = vld [vmem:[%s4982 + $0x160] sm:$0xff]
        %v5028 = vld [vmem:[%s4982 + $0x168] sm:$0xff]
        %v5029 = vld [vmem:[%s4982 + $0x170] sm:$0xff]
        %v5030 = vld [vmem:[%s4982 + $0x178] sm:$0xff]
        %v5031 = vld [vmem:[%s4982 + $0x180] sm:$0xff]
        %v5032 = vld [vmem:[%s4982 + $0x188] sm:$0xff]
        %v5033 = vld [vmem:[%s4982 + $0x190] sm:$0xff]
        %v5034 = vld [vmem:[%s4982 + $0x198] sm:$0xff]
        %v5035 = vld [vmem:[%s4982 + $0x1a0] sm:$0xff]
        %v5036 = vld [vmem:[%s4982 + $0x1a8] sm:$0xff]
        %v5037 = vld [vmem:[%s4982 + $0x1b0] sm:$0xff]
        %v5038 = vld [vmem:[%s4982 + $0x1b8] sm:$0xff]
        %v5039 = vld [vmem:[%s4982 + $0x1c0] sm:$0xff]
        %v5040 = vld [vmem:[%s4982 + $0x1c8] sm:$0xff]
        %v5041 = vld [vmem:[%s4982 + $0x1d0] sm:$0xff]
        %v5042 = vld [vmem:[%s4982 + $0x1d8] sm:$0xff]
        %v5043 = vld [vmem:[%s4982 + $0x1e0] sm:$0xff]
        %v5044 = vld [vmem:[%s4982 + $0x1e8] sm:$0xff]
        %v5045 = vld [vmem:[%s4982 + $0x1f0] sm:$0xff]
        %v5046 = vld [vmem:[%s4982 + $0x1f8] sm:$0xff]
        %vm5051 = vcmask 1044480
        %v5052 = vrot.slane %v4978, 3
        %v5053 = vrot.slane %v4383, 3
        %v5054 = vsel %vm5051, %v5052, %v5053
        %v5055 = vrot.slane %v4979, 3
        %v5056 = vrot.slane %v4384, 3
        %v5057 = vsel %vm5051, %v5055, %v5056
        %v5058 = vrot.slane %v4385, 3
        %v5059 = vsel %vm5051, %v5053, %v5058
        %v5060 = vrot.slane %v4386, 3
        %v5061 = vsel %vm5051, %v5056, %v5060
        %v5062 = vrot.slane %v4387, 3
        %v5063 = vsel %vm5051, %v5058, %v5062
        %v5064 = vrot.slane %v4388, 3
        %v5065 = vsel %vm5051, %v5060, %v5064
        %v5066 = vrot.slane %v4389, 3
        %v5067 = vsel %vm5051, %v5062, %v5066
        %v5068 = vrot.slane %v4390, 3
        %v5069 = vsel %vm5051, %v5064, %v5068
        %v5070 = vrot.slane %v4391, 3
        %v5071 = vsel %vm5051, %v5066, %v5070
        %v5072 = vrot.slane %v4392, 3
        %v5073 = vsel %vm5051, %v5068, %v5072
        %v5074 = vrot.slane %v4393, 3
        %v5075 = vsel %vm5051, %v5070, %v5074
        %v5076 = vrot.slane %v4394, 3
        %v5077 = vsel %vm5051, %v5072, %v5076
        %v5078 = vrot.slane %v4395, 3
        %v5079 = vsel %vm5051, %v5074, %v5078
        %v5080 = vrot.slane %v4396, 3
        %v5081 = vsel %vm5051, %v5076, %v5080
        %v5082 = vrot.slane %v4397, 3
        %v5083 = vsel %vm5051, %v5078, %v5082
        %v5084 = vrot.slane %v4398, 3
        %v5085 = vsel %vm5051, %v5080, %v5084
        %v5086 = vrot.slane %v4399, 3
        %v5087 = vsel %vm5051, %v5082, %v5086
        %v5088 = vrot.slane %v4400, 3
        %v5089 = vsel %vm5051, %v5084, %v5088
        %v5090 = vrot.slane %v4980, 3
        %v5091 = vsel %vm5051, %v5086, %v5090
        %v5092 = vrot.slane %v4981, 3
        %v5093 = vsel %vm5051, %v5088, %v5092
        %5114 = vmatprep.subr.mxu0 %v5014
        %5115 = vmatpush1.msra.mxu0 %v5013
        %5116 = vmatprep.subr.mxu0 %v5012
        %5117 = vmatpush1.msra.mxu0 %v5011
        %5118 = vmatprep.subr.mxu0 %v5010
        %5119 = vmatpush1.msra.mxu0 %v5009
        %5120 = vmatprep.subr.mxu0 %v5008
        %5121 = vmatpush1.msra.mxu0 %v5007
        %5122 = vmatprep.subr.mxu0 %v5006
        %5123 = vmatpush1.msra.mxu0 %v5005
        %5124 = vmatprep.subr.mxu0 %v5004
        %5125 = vmatpush1.msra.mxu0 %v5003
        %5126 = vmatprep.subr.mxu0 %v5002
        %5127 = vmatpush1.msra.mxu0 %v5001
        %5128 = vmatprep.subr.mxu0 %v5000
        %5129 = vmatpush1.msra.mxu0 %v4999
        %5130 = vmatprep.subr.mxu0 %v4998
        %5131 = vmatpush1.msra.mxu0 %v4997
        %5132 = vmatprep.subr.mxu0 %v4996
        %5133 = vmatpush1.msra.mxu0 %v4995
        %5134 = vmatprep.subr.mxu0 %v4994
        %5135 = vmatpush1.msra.mxu0 %v4993
        %5136 = vmatprep.subr.mxu0 %v4992
        %5137 = vmatpush1.msra.mxu0 %v4991
        %5138 = vmatprep.subr.mxu0 %v4990
        %5139 = vmatpush1.msra.mxu0 %v4989
        %5140 = vmatprep.subr.mxu0 %v4988
        %5141 = vmatpush1.msra.mxu0 %v4987
        %5142 = vmatprep.subr.mxu0 %v4986
        %5143 = vmatpush1.msra.mxu0 %v4985
        %5144 = vmatprep.subr.mxu0 %v4984
        %5145 = vmatpush1.msra.mxu0 %v4983
        %5146 = vmatprep.subr.mxu0 %v5046
        %5147 = vmatpush2.msra.mxu0 %v5045
        %5148 = vmatprep.subr.mxu0 %v5044
        %5149 = vmatpush2.msra.mxu0 %v5043
        %5150 = vmatprep.subr.mxu0 %v5042
        %5151 = vmatpush2.msra.mxu0 %v5041
        %5152 = vmatprep.subr.mxu0 %v5040
        %5153 = vmatpush2.msra.mxu0 %v5039
        %5154 = vmatprep.subr.mxu0 %v5038
        %5155 = vmatpush2.msra.mxu0 %v5037
        %5156 = vmatprep.subr.mxu0 %v5036
        %5157 = vmatpush2.msra.mxu0 %v5035
        %5158 = vmatprep.subr.mxu0 %v5034
        %5159 = vmatpush2.msra.mxu0 %v5033
        %5160 = vmatprep.subr.mxu0 %v5032
        %5161 = vmatpush2.msra.mxu0 %v5031
        %5162 = vmatprep.subr.mxu0 %v5030
        %5163 = vmatpush2.msra.mxu0 %v5029
        %5164 = vmatprep.subr.mxu0 %v5028
        %5165 = vmatpush2.msra.mxu0 %v5027
        %5166 = vmatprep.subr.mxu0 %v5026
        %5167 = vmatpush2.msra.mxu0 %v5025
        %5168 = vmatprep.subr.mxu0 %v5024
        %5169 = vmatpush2.msra.mxu0 %v5023
        %5170 = vmatprep.subr.mxu0 %v5022
        %5171 = vmatpush2.msra.mxu0 %v5021
        %5172 = vmatprep.subr.mxu0 %v5020
        %5173 = vmatpush2.msra.mxu0 %v5019
        %5174 = vmatprep.subr.mxu0 %v5018
        %5175 = vmatpush2.msra.mxu0 %v5017
        %5176 = vmatprep.subr.mxu0 %v5016
        %5177 = vmatpush2.msra.mxu0 %v5015
        %5178 = vmatprep.mubr.f32.mxu0 %v5057
        %5179 = vmatmul.mubr.f32.gmra.mxu0 %v5054
        %v5180 = vpop.f32.mrf.mxu0
        %v5181 = vadd.f32 0.0, %v5180
        %v5182 = vpop.f32.mrf.mxu0
        %v5183 = vadd.f32 0.0, %v5182
        %5184 = vmatprep.mubr.f32.mxu0 %v5061
        %5185 = vmatmul.mubr.f32.gmra.mxu0 %v5059
        %v5186 = vpop.f32.mrf.mxu0
        %v5187 = vadd.f32 0.0, %v5186
        %v5188 = vpop.f32.mrf.mxu0
        %v5189 = vadd.f32 0.0, %v5188
        %5190 = vmatprep.mubr.f32.mxu0 %v5065
        %5191 = vmatmul.mubr.f32.gmra.mxu0 %v5063
        %v5192 = vpop.f32.mrf.mxu0
        %v5193 = vadd.f32 0.0, %v5192
        %v5194 = vpop.f32.mrf.mxu0
        %v5195 = vadd.f32 0.0, %v5194
        %5196 = vmatprep.mubr.f32.mxu0 %v5069
        %5197 = vmatmul.mubr.f32.gmra.mxu0 %v5067
        %v5198 = vpop.f32.mrf.mxu0
        %v5199 = vadd.f32 0.0, %v5198
        %v5200 = vpop.f32.mrf.mxu0
        %v5201 = vadd.f32 0.0, %v5200
        %5202 = vmatprep.mubr.f32.mxu0 %v5073
        %5203 = vmatmul.mubr.f32.gmra.mxu0 %v5071
        %v5204 = vpop.f32.mrf.mxu0
        %v5205 = vadd.f32 0.0, %v5204
        %v5206 = vpop.f32.mrf.mxu0
        %v5207 = vadd.f32 0.0, %v5206
        %5208 = vmatprep.mubr.f32.mxu0 %v5077
        %5209 = vmatmul.mubr.f32.gmra.mxu0 %v5075
        %v5210 = vpop.f32.mrf.mxu0
        %v5211 = vadd.f32 0.0, %v5210
        %v5212 = vpop.f32.mrf.mxu0
        %v5213 = vadd.f32 0.0, %v5212
        %5214 = vmatprep.mubr.f32.mxu0 %v5081
        %5215 = vmatmul.mubr.f32.gmra.mxu0 %v5079
        %v5216 = vpop.f32.mrf.mxu0
        %v5217 = vadd.f32 0.0, %v5216
        %v5218 = vpop.f32.mrf.mxu0
        %v5219 = vadd.f32 0.0, %v5218
        %5220 = vmatprep.mubr.f32.mxu0 %v5085
        %5221 = vmatmul.mubr.f32.gmra.mxu0 %v5083
        %v5222 = vpop.f32.mrf.mxu0
        %v5223 = vadd.f32 0.0, %v5222
        %v5224 = vpop.f32.mrf.mxu0
        %v5225 = vadd.f32 0.0, %v5224
        %5226 = vmatprep.mubr.f32.mxu0 %v5089
        %5227 = vmatmul.mubr.f32.gmra.mxu0 %v5087
        %v5228 = vpop.f32.mrf.mxu0
        %v5229 = vadd.f32 0.0, %v5228
        %v5230 = vpop.f32.mrf.mxu0
        %v5231 = vadd.f32 0.0, %v5230
        %5232 = vmatprep.mubr.f32.mxu0 %v5093
        %5233 = vmatmul.mubr.f32.gmra.mxu0 %v5091
        %v5234 = vpop.f32.mrf.mxu0
        %v5235 = vadd.f32 0.0, %v5234
        %v5236 = vpop.f32.mrf.mxu0
        %v5237 = vadd.f32 0.0, %v5236
        %5238 = vdwg.mxu0
        %v5239 = vadd.f32 %v4958, %v5181
        %v5240 = vadd.f32 %v4959, %v5183
        %v5241 = vadd.f32 %v4960, %v5187
        %v5242 = vadd.f32 %v4961, %v5189
        %v5243 = vadd.f32 %v4962, %v5193
        %v5244 = vadd.f32 %v4963, %v5195
        %v5245 = vadd.f32 %v4964, %v5199
        %v5246 = vadd.f32 %v4965, %v5201
        %v5247 = vadd.f32 %v4966, %v5205
        %v5248 = vadd.f32 %v4967, %v5207
        %v5249 = vadd.f32 %v4968, %v5211
        %v5250 = vadd.f32 %v4969, %v5213
        %v5251 = vadd.f32 %v4970, %v5217
        %v5252 = vadd.f32 %v4971, %v5219
        %v5253 = vadd.f32 %v4972, %v5223
        %v5254 = vadd.f32 %v4973, %v5225
        %v5255 = vadd.f32 %v4974, %v5229
        %v5256 = vadd.f32 %v4975, %v5231
        %v5257 = vadd.f32 %v4976, %v5235
        %v5258 = vadd.f32 %v4977, %v5237
        %v5259 = vld [vmem:[%s581] sm:$0x3]
        %v5261 = vlaneseq
        %v5262 = vshrl.u32 %v5261, 7
        %v5263 = vsub.s32 0, %v5262
        %v5264 = vrot.slane %v5259, %v5263
        %v5265 = vlaneseq
        %v5266 = vshrl.u32 %v5265, 7
        %v5267 = vsub.s32 1, %v5266
        %v5268 = vrot.slane %v5259, %v5267
        %v5271 = vmul.f32 %v5239, %v5264
        %v5272 = vmul.f32 %v5240, %v5268
        %v5273 = vmul.f32 %v5241, %v5264
        %v5274 = vmul.f32 %v5242, %v5268
        %v5275 = vmul.f32 %v5243, %v5264
        %v5276 = vmul.f32 %v5244, %v5268
        %v5277 = vmul.f32 %v5245, %v5264
        %v5278 = vmul.f32 %v5246, %v5268
        %v5279 = vmul.f32 %v5247, %v5264
        %v5280 = vmul.f32 %v5248, %v5268
        %v5281 = vmul.f32 %v5249, %v5264
        %v5282 = vmul.f32 %v5250, %v5268
        %v5283 = vmul.f32 %v5251, %v5264
        %v5284 = vmul.f32 %v5252, %v5268
        %v5285 = vmul.f32 %v5253, %v5264
        %v5286 = vmul.f32 %v5254, %v5268
        %v5287 = vmul.f32 %v5255, %v5264
        %v5288 = vmul.f32 %v5256, %v5268
        %v5289 = vmul.f32 %v5257, %v5264
        %v5290 = vmul.f32 %v5258, %v5268
        %v5291 = vld [vmem:[%s590] sm:$0x3]
        %v5293 = vlaneseq
        %v5294 = vshrl.u32 %v5293, 7
        %v5295 = vsub.s32 0, %v5294
        %v5296 = vrot.slane %v5291, %v5295
        %v5297 = vlaneseq
        %v5298 = vshrl.u32 %v5297, 7
        %v5299 = vsub.s32 1, %v5298
        %v5300 = vrot.slane %v5291, %v5299
        %v5303 = vadd.f32 %v5271, %v5296
        %v5304 = vadd.f32 %v5272, %v5300
        %v5305 = vadd.f32 %v5273, %v5296
        %v5306 = vadd.f32 %v5274, %v5300
        %v5307 = vadd.f32 %v5275, %v5296
        %v5308 = vadd.f32 %v5276, %v5300
        %v5309 = vadd.f32 %v5277, %v5296
        %v5310 = vadd.f32 %v5278, %v5300
        %v5311 = vadd.f32 %v5279, %v5296
        %v5312 = vadd.f32 %v5280, %v5300
        %v5313 = vadd.f32 %v5281, %v5296
        %v5314 = vadd.f32 %v5282, %v5300
        %v5315 = vadd.f32 %v5283, %v5296
        %v5316 = vadd.f32 %v5284, %v5300
        %v5317 = vadd.f32 %v5285, %v5296
        %v5318 = vadd.f32 %v5286, %v5300
        %v5319 = vadd.f32 %v5287, %v5296
        %v5320 = vadd.f32 %v5288, %v5300
        %v5321 = vadd.f32 %v5289, %v5296
        %v5322 = vadd.f32 %v5290, %v5300
        %v5323 = vmax.f32 %v5303, 0.0
        %v5324 = vmax.f32 %v5304, 0.0
        %v5325 = vmax.f32 %v5305, 0.0
        %v5326 = vmax.f32 %v5306, 0.0
        %v5327 = vmax.f32 %v5307, 0.0
        %v5328 = vmax.f32 %v5308, 0.0
        %v5329 = vmax.f32 %v5309, 0.0
        %v5330 = vmax.f32 %v5310, 0.0
        %v5331 = vmax.f32 %v5311, 0.0
        %v5332 = vmax.f32 %v5312, 0.0
        %v5333 = vmax.f32 %v5313, 0.0
        %v5334 = vmax.f32 %v5314, 0.0
        %v5335 = vmax.f32 %v5315, 0.0
        %v5336 = vmax.f32 %v5316, 0.0
        %v5337 = vmax.f32 %v5317, 0.0
        %v5338 = vmax.f32 %v5318, 0.0
        %v5339 = vmax.f32 %v5319, 0.0
        %v5340 = vmax.f32 %v5320, 0.0
        %v5341 = vmax.f32 %v5321, 0.0
        %v5342 = vmax.f32 %v5322, 0.0
        %v5343 = vsel %vm873, 1, 0
        %v5344 = vsel %vm874, 1, 0
        %v5345 = vsel %vm875, 1, 0
        %v5346 = vsel %vm876, 1, 0
        %v5347 = vsel %vm877, 1, 0
        %v5348 = vsel %vm878, 1, 0
        %v5349 = vsel %vm879, 1, 0
        %v5350 = vsel %vm880, 1, 0
        %v5351 = vsel %vm881, 1, 0
        %v5352 = vsel %vm882, 1, 0
        %vm5353 = vcmp.eq.s32.totalorder %v5343, 1
        %vm5354 = vcmp.eq.s32.totalorder %v5344, 1
        %vm5355 = vcmp.eq.s32.totalorder %v5345, 1
        %vm5356 = vcmp.eq.s32.totalorder %v5346, 1
        %vm5357 = vcmp.eq.s32.totalorder %v5347, 1
        %vm5358 = vcmp.eq.s32.totalorder %v5348, 1
        %vm5359 = vcmp.eq.s32.totalorder %v5349, 1
        %vm5360 = vcmp.eq.s32.totalorder %v5350, 1
        %vm5361 = vcmp.eq.s32.totalorder %v5351, 1
        %vm5362 = vcmp.eq.s32.totalorder %v5352, 1
        %v5363 = vsel %vm5353, %v5323, 0.0
        %v5364 = vsel %vm5353, %v5324, 0.0
        %v5365 = vsel %vm5354, %v5325, 0.0
        %v5366 = vsel %vm5354, %v5326, 0.0
        %v5367 = vsel %vm5355, %v5327, 0.0
        %v5368 = vsel %vm5355, %v5328, 0.0
        %v5369 = vsel %vm5356, %v5329, 0.0
        %v5370 = vsel %vm5356, %v5330, 0.0
        %v5371 = vsel %vm5357, %v5331, 0.0
        %v5372 = vsel %vm5357, %v5332, 0.0
        %v5373 = vsel %vm5358, %v5333, 0.0
        %v5374 = vsel %vm5358, %v5334, 0.0
        %v5375 = vsel %vm5359, %v5335, 0.0
        %v5376 = vsel %vm5359, %v5336, 0.0
        %v5377 = vsel %vm5360, %v5337, 0.0
        %v5378 = vsel %vm5360, %v5338, 0.0
        %v5379 = vsel %vm5361, %v5339, 0.0
        %v5380 = vsel %vm5361, %v5340, 0.0
        %v5381 = vsel %vm5362, %v5341, 0.0
        %v5382 = vsel %vm5362, %v5342, 0.0
        %5383 = vst [vmem:[#allocation3 + $0x20] sm:$0xff] %v5363
        %5384 = vst [vmem:[#allocation3 + $0x28] sm:$0xff] %v5364
        %5385 = vst [vmem:[#allocation3 + $0x30] sm:$0xff] %v5365
        %5386 = vst [vmem:[#allocation3 + $0x38] sm:$0xff] %v5366
        %5387 = vst [vmem:[#allocation3 + $0x40] sm:$0xff] %v5367
        %5388 = vst [vmem:[#allocation3 + $0x48] sm:$0xff] %v5368
        %5389 = vst [vmem:[#allocation3 + $0x50] sm:$0xff] %v5369
        %5390 = vst [vmem:[#allocation3 + $0x58] sm:$0xff] %v5370
        %5391 = vst [vmem:[#allocation3 + $0x60] sm:$0xff] %v5371
        %5392 = vst [vmem:[#allocation3 + $0x68] sm:$0xff] %v5372
        %5393 = vst [vmem:[#allocation3 + $0x70] sm:$0xff] %v5373
        %5394 = vst [vmem:[#allocation3 + $0x78] sm:$0xff] %v5374
        %5395 = vst [vmem:[#allocation3 + $0x80] sm:$0xff] %v5375
        %5396 = vst [vmem:[#allocation3 + $0x88] sm:$0xff] %v5376
        %5397 = vst [vmem:[#allocation3 + $0x90] sm:$0xff] %v5377
        %5398 = vst [vmem:[#allocation3 + $0x98] sm:$0xff] %v5378
        %5399 = vst [vmem:[#allocation3 + $0xa0] sm:$0xff] %v5379
        %5400 = vst [vmem:[#allocation3 + $0xa8] sm:$0xff] %v5380
        %5401 = vst [vmem:[#allocation3 + $0xb0] sm:$0xff] %v5381
        %5402 = vst [vmem:[#allocation3 + $0xb8] sm:$0xff] %v5382
        %v5403 = vld [vmem:[#allocation3] sm:$0xe0]
        %v5404 = vld [vmem:[#allocation3 + $0x8] sm:$0xe0]
        %v5405 = vld [vmem:[#allocation3 + $0x10] sm:$0xff]
        %v5406 = vld [vmem:[#allocation3 + $0x18] sm:$0xff]
        %v5407 = vld [vmem:[#allocation3 + $0x20] sm:$0xff]
        %v5408 = vld [vmem:[#allocation3 + $0x28] sm:$0xff]
        %v5409 = vld [vmem:[#allocation3 + $0x30] sm:$0xff]
        %v5410 = vld [vmem:[#allocation3 + $0x38] sm:$0xff]
        %v5411 = vld [vmem:[#allocation3 + $0x40] sm:$0xff]
        %v5412 = vld [vmem:[#allocation3 + $0x48] sm:$0xff]
        %v5413 = vld [vmem:[#allocation3 + $0x50] sm:$0xff]
        %v5414 = vld [vmem:[#allocation3 + $0x58] sm:$0xff]
        %v5415 = vld [vmem:[#allocation3 + $0x60] sm:$0xff]
        %v5416 = vld [vmem:[#allocation3 + $0x68] sm:$0xff]
        %v5417 = vld [vmem:[#allocation3 + $0x70] sm:$0xff]
        %v5418 = vld [vmem:[#allocation3 + $0x78] sm:$0xff]
        %v5419 = vld [vmem:[#allocation3 + $0x80] sm:$0xff]
        %v5420 = vld [vmem:[#allocation3 + $0x88] sm:$0xff]
        %v5421 = vld [vmem:[#allocation3 + $0x90] sm:$0xff]
        %v5422 = vld [vmem:[#allocation3 + $0x98] sm:$0xff]
        %v5423 = vld [vmem:[#allocation3 + $0xa0] sm:$0x1f]
        %v5424 = vld [vmem:[#allocation3 + $0xa8] sm:$0x1f]
        %v5425 = vld [vmem:[%s599] sm:$0xff]
        %v5426 = vld [vmem:[%s599 + $0x8] sm:$0xff]
        %v5427 = vld [vmem:[%s599 + $0x10] sm:$0xff]
        %v5428 = vld [vmem:[%s599 + $0x18] sm:$0xff]
        %v5429 = vld [vmem:[%s599 + $0x20] sm:$0xff]
        %v5430 = vld [vmem:[%s599 + $0x28] sm:$0xff]
        %v5431 = vld [vmem:[%s599 + $0x30] sm:$0xff]
        %v5432 = vld [vmem:[%s599 + $0x38] sm:$0xff]
        %v5433 = vld [vmem:[%s599 + $0x40] sm:$0xff]
        %v5434 = vld [vmem:[%s599 + $0x48] sm:$0xff]
        %v5435 = vld [vmem:[%s599 + $0x50] sm:$0xff]
        %v5436 = vld [vmem:[%s599 + $0x58] sm:$0xff]
        %v5437 = vld [vmem:[%s599 + $0x60] sm:$0xff]
        %v5438 = vld [vmem:[%s599 + $0x68] sm:$0xff]
        %v5439 = vld [vmem:[%s599 + $0x70] sm:$0xff]
        %v5440 = vld [vmem:[%s599 + $0x78] sm:$0xff]
        %v5441 = vld [vmem:[%s599 + $0x80] sm:$0xff]
        %v5442 = vld [vmem:[%s599 + $0x88] sm:$0xff]
        %v5443 = vld [vmem:[%s599 + $0x90] sm:$0xff]
        %v5444 = vld [vmem:[%s599 + $0x98] sm:$0xff]
        %v5445 = vld [vmem:[%s599 + $0xa0] sm:$0xff]
        %v5446 = vld [vmem:[%s599 + $0xa8] sm:$0xff]
        %v5447 = vld [vmem:[%s599 + $0xb0] sm:$0xff]
        %v5448 = vld [vmem:[%s599 + $0xb8] sm:$0xff]
        %v5449 = vld [vmem:[%s599 + $0xc0] sm:$0xff]
        %v5450 = vld [vmem:[%s599 + $0xc8] sm:$0xff]
        %v5451 = vld [vmem:[%s599 + $0xd0] sm:$0xff]
        %v5452 = vld [vmem:[%s599 + $0xd8] sm:$0xff]
        %v5453 = vld [vmem:[%s599 + $0xe0] sm:$0xff]
        %v5454 = vld [vmem:[%s599 + $0xe8] sm:$0xff]
        %v5455 = vld [vmem:[%s599 + $0xf0] sm:$0xff]
        %v5456 = vld [vmem:[%s599 + $0xf8] sm:$0xff]
        %v5457 = vld [vmem:[%s599 + $0x100] sm:$0xff]
        %v5458 = vld [vmem:[%s599 + $0x108] sm:$0xff]
        %v5459 = vld [vmem:[%s599 + $0x110] sm:$0xff]
        %v5460 = vld [vmem:[%s599 + $0x118] sm:$0xff]
        %v5461 = vld [vmem:[%s599 + $0x120] sm:$0xff]
        %v5462 = vld [vmem:[%s599 + $0x128] sm:$0xff]
        %v5463 = vld [vmem:[%s599 + $0x130] sm:$0xff]
        %v5464 = vld [vmem:[%s599 + $0x138] sm:$0xff]
        %v5465 = vld [vmem:[%s599 + $0x140] sm:$0xff]
        %v5466 = vld [vmem:[%s599 + $0x148] sm:$0xff]
        %v5467 = vld [vmem:[%s599 + $0x150] sm:$0xff]
        %v5468 = vld [vmem:[%s599 + $0x158] sm:$0xff]
        %v5469 = vld [vmem:[%s599 + $0x160] sm:$0xff]
        %v5470 = vld [vmem:[%s599 + $0x168] sm:$0xff]
        %v5471 = vld [vmem:[%s599 + $0x170] sm:$0xff]
        %v5472 = vld [vmem:[%s599 + $0x178] sm:$0xff]
        %v5473 = vld [vmem:[%s599 + $0x180] sm:$0xff]
        %v5474 = vld [vmem:[%s599 + $0x188] sm:$0xff]
        %v5475 = vld [vmem:[%s599 + $0x190] sm:$0xff]
        %v5476 = vld [vmem:[%s599 + $0x198] sm:$0xff]
        %v5477 = vld [vmem:[%s599 + $0x1a0] sm:$0xff]
        %v5478 = vld [vmem:[%s599 + $0x1a8] sm:$0xff]
        %v5479 = vld [vmem:[%s599 + $0x1b0] sm:$0xff]
        %v5480 = vld [vmem:[%s599 + $0x1b8] sm:$0xff]
        %v5481 = vld [vmem:[%s599 + $0x1c0] sm:$0xff]
        %v5482 = vld [vmem:[%s599 + $0x1c8] sm:$0xff]
        %v5483 = vld [vmem:[%s599 + $0x1d0] sm:$0xff]
        %v5484 = vld [vmem:[%s599 + $0x1d8] sm:$0xff]
        %v5485 = vld [vmem:[%s599 + $0x1e0] sm:$0xff]
        %v5486 = vld [vmem:[%s599 + $0x1e8] sm:$0xff]
        %v5487 = vld [vmem:[%s599 + $0x1f0] sm:$0xff]
        %v5488 = vld [vmem:[%s599 + $0x1f8] sm:$0xff]
        %v5489 = vld [vmem:[#allocation3] sm:$0xc0]
        %v5490 = vld [vmem:[#allocation3 + $0x8] sm:$0xc0]
        %v5491 = vld [vmem:[#allocation3 + $0xa0] sm:$0x3f]
        %v5492 = vld [vmem:[#allocation3 + $0xa8] sm:$0x3f]
        %s5493 = scalar_lea.vmem %s599, 512 [#allocation14]
        %v5494 = vld [vmem:[%s5493] sm:$0xff]
        %v5495 = vld [vmem:[%s5493 + $0x8] sm:$0xff]
        %v5496 = vld [vmem:[%s5493 + $0x10] sm:$0xff]
        %v5497 = vld [vmem:[%s5493 + $0x18] sm:$0xff]
        %v5498 = vld [vmem:[%s5493 + $0x20] sm:$0xff]
        %v5499 = vld [vmem:[%s5493 + $0x28] sm:$0xff]
        %v5500 = vld [vmem:[%s5493 + $0x30] sm:$0xff]
        %v5501 = vld [vmem:[%s5493 + $0x38] sm:$0xff]
        %v5502 = vld [vmem:[%s5493 + $0x40] sm:$0xff]
        %v5503 = vld [vmem:[%s5493 + $0x48] sm:$0xff]
        %v5504 = vld [vmem:[%s5493 + $0x50] sm:$0xff]
        %v5505 = vld [vmem:[%s5493 + $0x58] sm:$0xff]
        %v5506 = vld [vmem:[%s5493 + $0x60] sm:$0xff]
        %v5507 = vld [vmem:[%s5493 + $0x68] sm:$0xff]
        %v5508 = vld [vmem:[%s5493 + $0x70] sm:$0xff]
        %v5509 = vld [vmem:[%s5493 + $0x78] sm:$0xff]
        %v5510 = vld [vmem:[%s5493 + $0x80] sm:$0xff]
        %v5511 = vld [vmem:[%s5493 + $0x88] sm:$0xff]
        %v5512 = vld [vmem:[%s5493 + $0x90] sm:$0xff]
        %v5513 = vld [vmem:[%s5493 + $0x98] sm:$0xff]
        %v5514 = vld [vmem:[%s5493 + $0xa0] sm:$0xff]
        %v5515 = vld [vmem:[%s5493 + $0xa8] sm:$0xff]
        %v5516 = vld [vmem:[%s5493 + $0xb0] sm:$0xff]
        %v5517 = vld [vmem:[%s5493 + $0xb8] sm:$0xff]
        %v5518 = vld [vmem:[%s5493 + $0xc0] sm:$0xff]
        %v5519 = vld [vmem:[%s5493 + $0xc8] sm:$0xff]
        %v5520 = vld [vmem:[%s5493 + $0xd0] sm:$0xff]
        %v5521 = vld [vmem:[%s5493 + $0xd8] sm:$0xff]
        %v5522 = vld [vmem:[%s5493 + $0xe0] sm:$0xff]
        %v5523 = vld [vmem:[%s5493 + $0xe8] sm:$0xff]
        %v5524 = vld [vmem:[%s5493 + $0xf0] sm:$0xff]
        %v5525 = vld [vmem:[%s5493 + $0xf8] sm:$0xff]
        %v5526 = vld [vmem:[%s5493 + $0x100] sm:$0xff]
        %v5527 = vld [vmem:[%s5493 + $0x108] sm:$0xff]
        %v5528 = vld [vmem:[%s5493 + $0x110] sm:$0xff]
        %v5529 = vld [vmem:[%s5493 + $0x118] sm:$0xff]
        %v5530 = vld [vmem:[%s5493 + $0x120] sm:$0xff]
        %v5531 = vld [vmem:[%s5493 + $0x128] sm:$0xff]
        %v5532 = vld [vmem:[%s5493 + $0x130] sm:$0xff]
        %v5533 = vld [vmem:[%s5493 + $0x138] sm:$0xff]
        %v5534 = vld [vmem:[%s5493 + $0x140] sm:$0xff]
        %v5535 = vld [vmem:[%s5493 + $0x148] sm:$0xff]
        %v5536 = vld [vmem:[%s5493 + $0x150] sm:$0xff]
        %v5537 = vld [vmem:[%s5493 + $0x158] sm:$0xff]
        %v5538 = vld [vmem:[%s5493 + $0x160] sm:$0xff]
        %v5539 = vld [vmem:[%s5493 + $0x168] sm:$0xff]
        %v5540 = vld [vmem:[%s5493 + $0x170] sm:$0xff]
        %v5541 = vld [vmem:[%s5493 + $0x178] sm:$0xff]
        %v5542 = vld [vmem:[%s5493 + $0x180] sm:$0xff]
        %v5543 = vld [vmem:[%s5493 + $0x188] sm:$0xff]
        %v5544 = vld [vmem:[%s5493 + $0x190] sm:$0xff]
        %v5545 = vld [vmem:[%s5493 + $0x198] sm:$0xff]
        %v5546 = vld [vmem:[%s5493 + $0x1a0] sm:$0xff]
        %v5547 = vld [vmem:[%s5493 + $0x1a8] sm:$0xff]
        %v5548 = vld [vmem:[%s5493 + $0x1b0] sm:$0xff]
        %v5549 = vld [vmem:[%s5493 + $0x1b8] sm:$0xff]
        %v5550 = vld [vmem:[%s5493 + $0x1c0] sm:$0xff]
        %v5551 = vld [vmem:[%s5493 + $0x1c8] sm:$0xff]
        %v5552 = vld [vmem:[%s5493 + $0x1d0] sm:$0xff]
        %v5553 = vld [vmem:[%s5493 + $0x1d8] sm:$0xff]
        %v5554 = vld [vmem:[%s5493 + $0x1e0] sm:$0xff]
        %v5555 = vld [vmem:[%s5493 + $0x1e8] sm:$0xff]
        %v5556 = vld [vmem:[%s5493 + $0x1f0] sm:$0xff]
        %v5557 = vld [vmem:[%s5493 + $0x1f8] sm:$0xff]
        %v5580 = vrot.slane %v5489, 6
        %v5581 = vrot.slane %v5405, 6
        %v5582 = vsel %vm2875, %v5580, %v5581
        %v5583 = vrot.slane %v5490, 6
        %v5584 = vrot.slane %v5406, 6
        %v5585 = vsel %vm2875, %v5583, %v5584
        %v5586 = vrot.slane %v5407, 6
        %v5587 = vsel %vm2875, %v5581, %v5586
        %v5588 = vrot.slane %v5408, 6
        %v5589 = vsel %vm2875, %v5584, %v5588
        %v5590 = vrot.slane %v5409, 6
        %v5591 = vsel %vm2875, %v5586, %v5590
        %v5592 = vrot.slane %v5410, 6
        %v5593 = vsel %vm2875, %v5588, %v5592
        %v5594 = vrot.slane %v5411, 6
        %v5595 = vsel %vm2875, %v5590, %v5594
        %v5596 = vrot.slane %v5412, 6
        %v5597 = vsel %vm2875, %v5592, %v5596
        %v5598 = vrot.slane %v5413, 6
        %v5599 = vsel %vm2875, %v5594, %v5598
        %v5600 = vrot.slane %v5414, 6
        %v5601 = vsel %vm2875, %v5596, %v5600
        %v5602 = vrot.slane %v5415, 6
        %v5603 = vsel %vm2875, %v5598, %v5602
        %v5604 = vrot.slane %v5416, 6
        %v5605 = vsel %vm2875, %v5600, %v5604
        %v5606 = vrot.slane %v5417, 6
        %v5607 = vsel %vm2875, %v5602, %v5606
        %v5608 = vrot.slane %v5418, 6
        %v5609 = vsel %vm2875, %v5604, %v5608
        %v5610 = vrot.slane %v5419, 6
        %v5611 = vsel %vm2875, %v5606, %v5610
        %v5612 = vrot.slane %v5420, 6
        %v5613 = vsel %vm2875, %v5608, %v5612
        %v5614 = vrot.slane %v5421, 6
        %v5615 = vsel %vm2875, %v5610, %v5614
        %v5616 = vrot.slane %v5422, 6
        %v5617 = vsel %vm2875, %v5612, %v5616
        %v5618 = vrot.slane %v5491, 6
        %v5619 = vsel %vm2875, %v5614, %v5618
        %v5620 = vrot.slane %v5492, 6
        %v5621 = vsel %vm2875, %v5616, %v5620
        %5642 = vmatprep.subr.mxu0 %v5525
        %5643 = vmatpush1.msra.mxu0 %v5524
        %5644 = vmatprep.subr.mxu0 %v5523
        %5645 = vmatpush1.msra.mxu0 %v5522
        %5646 = vmatprep.subr.mxu0 %v5521
        %5647 = vmatpush1.msra.mxu0 %v5520
        %5648 = vmatprep.subr.mxu0 %v5519
        %5649 = vmatpush1.msra.mxu0 %v5518
        %5650 = vmatprep.subr.mxu0 %v5517
        %5651 = vmatpush1.msra.mxu0 %v5516
        %5652 = vmatprep.subr.mxu0 %v5515
        %5653 = vmatpush1.msra.mxu0 %v5514
        %5654 = vmatprep.subr.mxu0 %v5513
        %5655 = vmatpush1.msra.mxu0 %v5512
        %5656 = vmatprep.subr.mxu0 %v5511
        %5657 = vmatpush1.msra.mxu0 %v5510
        %5658 = vmatprep.subr.mxu0 %v5509
        %5659 = vmatpush1.msra.mxu0 %v5508
        %5660 = vmatprep.subr.mxu0 %v5507
        %5661 = vmatpush1.msra.mxu0 %v5506
        %5662 = vmatprep.subr.mxu0 %v5505
        %5663 = vmatpush1.msra.mxu0 %v5504
        %5664 = vmatprep.subr.mxu0 %v5503
        %5665 = vmatpush1.msra.mxu0 %v5502
        %5666 = vmatprep.subr.mxu0 %v5501
        %5667 = vmatpush1.msra.mxu0 %v5500
        %5668 = vmatprep.subr.mxu0 %v5499
        %5669 = vmatpush1.msra.mxu0 %v5498
        %5670 = vmatprep.subr.mxu0 %v5497
        %5671 = vmatpush1.msra.mxu0 %v5496
        %5672 = vmatprep.subr.mxu0 %v5495
        %5673 = vmatpush1.msra.mxu0 %v5494
        %5674 = vmatprep.subr.mxu0 %v5557
        %5675 = vmatpush2.msra.mxu0 %v5556
        %5676 = vmatprep.subr.mxu0 %v5555
        %5677 = vmatpush2.msra.mxu0 %v5554
        %5678 = vmatprep.subr.mxu0 %v5553
        %5679 = vmatpush2.msra.mxu0 %v5552
        %5680 = vmatprep.subr.mxu0 %v5551
        %5681 = vmatpush2.msra.mxu0 %v5550
        %5682 = vmatprep.subr.mxu0 %v5549
        %5683 = vmatpush2.msra.mxu0 %v5548
        %5684 = vmatprep.subr.mxu0 %v5547
        %5685 = vmatpush2.msra.mxu0 %v5546
        %5686 = vmatprep.subr.mxu0 %v5545
        %5687 = vmatpush2.msra.mxu0 %v5544
        %5688 = vmatprep.subr.mxu0 %v5543
        %5689 = vmatpush2.msra.mxu0 %v5542
        %5690 = vmatprep.subr.mxu0 %v5541
        %5691 = vmatpush2.msra.mxu0 %v5540
        %5692 = vmatprep.subr.mxu0 %v5539
        %5693 = vmatpush2.msra.mxu0 %v5538
        %5694 = vmatprep.subr.mxu0 %v5537
        %5695 = vmatpush2.msra.mxu0 %v5536
        %5696 = vmatprep.subr.mxu0 %v5535
        %5697 = vmatpush2.msra.mxu0 %v5534
        %5698 = vmatprep.subr.mxu0 %v5533
        %5699 = vmatpush2.msra.mxu0 %v5532
        %5700 = vmatprep.subr.mxu0 %v5531
        %5701 = vmatpush2.msra.mxu0 %v5530
        %5702 = vmatprep.subr.mxu0 %v5529
        %5703 = vmatpush2.msra.mxu0 %v5528
        %5704 = vmatprep.subr.mxu0 %v5527
        %5705 = vmatpush2.msra.mxu0 %v5526
        %5706 = vmatprep.mubr.f32.mxu0 %v5585
        %5707 = vmatmul.mubr.f32.gmra.mxu0 %v5582
        %v5708 = vpop.f32.mrf.mxu0
        %v5709 = vadd.f32 0.0, %v5708
        %v5710 = vpop.f32.mrf.mxu0
        %v5711 = vadd.f32 0.0, %v5710
        %5712 = vmatprep.mubr.f32.mxu0 %v5589
        %5713 = vmatmul.mubr.f32.gmra.mxu0 %v5587
        %v5714 = vpop.f32.mrf.mxu0
        %v5715 = vadd.f32 0.0, %v5714
        %v5716 = vpop.f32.mrf.mxu0
        %v5717 = vadd.f32 0.0, %v5716
        %5718 = vmatprep.mubr.f32.mxu0 %v5593
        %5719 = vmatmul.mubr.f32.gmra.mxu0 %v5591
        %v5720 = vpop.f32.mrf.mxu0
        %v5721 = vadd.f32 0.0, %v5720
        %v5722 = vpop.f32.mrf.mxu0
        %v5723 = vadd.f32 0.0, %v5722
        %5724 = vmatprep.mubr.f32.mxu0 %v5597
        %5725 = vmatmul.mubr.f32.gmra.mxu0 %v5595
        %v5726 = vpop.f32.mrf.mxu0
        %v5727 = vadd.f32 0.0, %v5726
        %v5728 = vpop.f32.mrf.mxu0
        %v5729 = vadd.f32 0.0, %v5728
        %5730 = vmatprep.mubr.f32.mxu0 %v5601
        %5731 = vmatmul.mubr.f32.gmra.mxu0 %v5599
        %v5732 = vpop.f32.mrf.mxu0
        %v5733 = vadd.f32 0.0, %v5732
        %v5734 = vpop.f32.mrf.mxu0
        %v5735 = vadd.f32 0.0, %v5734
        %5736 = vmatprep.mubr.f32.mxu0 %v5605
        %5737 = vmatmul.mubr.f32.gmra.mxu0 %v5603
        %v5738 = vpop.f32.mrf.mxu0
        %v5739 = vadd.f32 0.0, %v5738
        %v5740 = vpop.f32.mrf.mxu0
        %v5741 = vadd.f32 0.0, %v5740
        %5742 = vmatprep.mubr.f32.mxu0 %v5609
        %5743 = vmatmul.mubr.f32.gmra.mxu0 %v5607
        %v5744 = vpop.f32.mrf.mxu0
        %v5745 = vadd.f32 0.0, %v5744
        %v5746 = vpop.f32.mrf.mxu0
        %v5747 = vadd.f32 0.0, %v5746
        %5748 = vmatprep.mubr.f32.mxu0 %v5613
        %5749 = vmatmul.mubr.f32.gmra.mxu0 %v5611
        %v5750 = vpop.f32.mrf.mxu0
        %v5751 = vadd.f32 0.0, %v5750
        %v5752 = vpop.f32.mrf.mxu0
        %v5753 = vadd.f32 0.0, %v5752
        %5754 = vmatprep.mubr.f32.mxu0 %v5617
        %5755 = vmatmul.mubr.f32.gmra.mxu0 %v5615
        %v5756 = vpop.f32.mrf.mxu0
        %v5757 = vadd.f32 0.0, %v5756
        %v5758 = vpop.f32.mrf.mxu0
        %v5759 = vadd.f32 0.0, %v5758
        %5760 = vmatprep.mubr.f32.mxu0 %v5621
        %5761 = vmatmul.mubr.f32.gmra.mxu0 %v5619
        %v5762 = vpop.f32.mrf.mxu0
        %v5763 = vadd.f32 0.0, %v5762
        %v5764 = vpop.f32.mrf.mxu0
        %v5765 = vadd.f32 0.0, %v5764
        %5766 = vdwg.mxu0
        %v5771 = vrot.slane %v5403, 5
        %v5772 = vrot.slane %v5405, 5
        %v5773 = vsel %vm3067, %v5771, %v5772
        %v5774 = vrot.slane %v5404, 5
        %v5775 = vrot.slane %v5406, 5
        %v5776 = vsel %vm3067, %v5774, %v5775
        %v5777 = vrot.slane %v5407, 5
        %v5778 = vsel %vm3067, %v5772, %v5777
        %v5779 = vrot.slane %v5408, 5
        %v5780 = vsel %vm3067, %v5775, %v5779
        %v5781 = vrot.slane %v5409, 5
        %v5782 = vsel %vm3067, %v5777, %v5781
        %v5783 = vrot.slane %v5410, 5
        %v5784 = vsel %vm3067, %v5779, %v5783
        %v5785 = vrot.slane %v5411, 5
        %v5786 = vsel %vm3067, %v5781, %v5785
        %v5787 = vrot.slane %v5412, 5
        %v5788 = vsel %vm3067, %v5783, %v5787
        %v5789 = vrot.slane %v5413, 5
        %v5790 = vsel %vm3067, %v5785, %v5789
        %v5791 = vrot.slane %v5414, 5
        %v5792 = vsel %vm3067, %v5787, %v5791
        %v5793 = vrot.slane %v5415, 5
        %v5794 = vsel %vm3067, %v5789, %v5793
        %v5795 = vrot.slane %v5416, 5
        %v5796 = vsel %vm3067, %v5791, %v5795
        %v5797 = vrot.slane %v5417, 5
        %v5798 = vsel %vm3067, %v5793, %v5797
        %v5799 = vrot.slane %v5418, 5
        %v5800 = vsel %vm3067, %v5795, %v5799
        %v5801 = vrot.slane %v5419, 5
        %v5802 = vsel %vm3067, %v5797, %v5801
        %v5803 = vrot.slane %v5420, 5
        %v5804 = vsel %vm3067, %v5799, %v5803
        %v5805 = vrot.slane %v5421, 5
        %v5806 = vsel %vm3067, %v5801, %v5805
        %v5807 = vrot.slane %v5422, 5
        %v5808 = vsel %vm3067, %v5803, %v5807
        %v5809 = vrot.slane %v5423, 5
        %v5810 = vsel %vm3067, %v5805, %v5809
        %v5811 = vrot.slane %v5424, 5
        %v5812 = vsel %vm3067, %v5807, %v5811
        %5833 = vmatprep.subr.mxu0 %v5456
        %5834 = vmatpush1.msra.mxu0 %v5455
        %5835 = vmatprep.subr.mxu0 %v5454
        %5836 = vmatpush1.msra.mxu0 %v5453
        %5837 = vmatprep.subr.mxu0 %v5452
        %5838 = vmatpush1.msra.mxu0 %v5451
        %5839 = vmatprep.subr.mxu0 %v5450
        %5840 = vmatpush1.msra.mxu0 %v5449
        %5841 = vmatprep.subr.mxu0 %v5448
        %5842 = vmatpush1.msra.mxu0 %v5447
        %5843 = vmatprep.subr.mxu0 %v5446
        %5844 = vmatpush1.msra.mxu0 %v5445
        %5845 = vmatprep.subr.mxu0 %v5444
        %5846 = vmatpush1.msra.mxu0 %v5443
        %5847 = vmatprep.subr.mxu0 %v5442
        %5848 = vmatpush1.msra.mxu0 %v5441
        %5849 = vmatprep.subr.mxu0 %v5440
        %5850 = vmatpush1.msra.mxu0 %v5439
        %5851 = vmatprep.subr.mxu0 %v5438
        %5852 = vmatpush1.msra.mxu0 %v5437
        %5853 = vmatprep.subr.mxu0 %v5436
        %5854 = vmatpush1.msra.mxu0 %v5435
        %5855 = vmatprep.subr.mxu0 %v5434
        %5856 = vmatpush1.msra.mxu0 %v5433
        %5857 = vmatprep.subr.mxu0 %v5432
        %5858 = vmatpush1.msra.mxu0 %v5431
        %5859 = vmatprep.subr.mxu0 %v5430
        %5860 = vmatpush1.msra.mxu0 %v5429
        %5861 = vmatprep.subr.mxu0 %v5428
        %5862 = vmatpush1.msra.mxu0 %v5427
        %5863 = vmatprep.subr.mxu0 %v5426
        %5864 = vmatpush1.msra.mxu0 %v5425
        %5865 = vmatprep.subr.mxu0 %v5488
        %5866 = vmatpush2.msra.mxu0 %v5487
        %5867 = vmatprep.subr.mxu0 %v5486
        %5868 = vmatpush2.msra.mxu0 %v5485
        %5869 = vmatprep.subr.mxu0 %v5484
        %5870 = vmatpush2.msra.mxu0 %v5483
        %5871 = vmatprep.subr.mxu0 %v5482
        %5872 = vmatpush2.msra.mxu0 %v5481
        %5873 = vmatprep.subr.mxu0 %v5480
        %5874 = vmatpush2.msra.mxu0 %v5479
        %5875 = vmatprep.subr.mxu0 %v5478
        %5876 = vmatpush2.msra.mxu0 %v5477
        %5877 = vmatprep.subr.mxu0 %v5476
        %5878 = vmatpush2.msra.mxu0 %v5475
        %5879 = vmatprep.subr.mxu0 %v5474
        %5880 = vmatpush2.msra.mxu0 %v5473
        %5881 = vmatprep.subr.mxu0 %v5472
        %5882 = vmatpush2.msra.mxu0 %v5471
        %5883 = vmatprep.subr.mxu0 %v5470
        %5884 = vmatpush2.msra.mxu0 %v5469
        %5885 = vmatprep.subr.mxu0 %v5468
        %5886 = vmatpush2.msra.mxu0 %v5467
        %5887 = vmatprep.subr.mxu0 %v5466
        %5888 = vmatpush2.msra.mxu0 %v5465
        %5889 = vmatprep.subr.mxu0 %v5464
        %5890 = vmatpush2.msra.mxu0 %v5463
        %5891 = vmatprep.subr.mxu0 %v5462
        %5892 = vmatpush2.msra.mxu0 %v5461
        %5893 = vmatprep.subr.mxu0 %v5460
        %5894 = vmatpush2.msra.mxu0 %v5459
        %5895 = vmatprep.subr.mxu0 %v5458
        %5896 = vmatpush2.msra.mxu0 %v5457
        %5897 = vmatprep.mubr.f32.mxu0 %v5776
        %5898 = vmatmul.mubr.f32.gmra.mxu0 %v5773
        %v5899 = vpop.f32.mrf.mxu0
        %v5900 = vadd.f32 %v5709, %v5899
        %v5901 = vpop.f32.mrf.mxu0
        %v5902 = vadd.f32 %v5711, %v5901
        %5903 = vmatprep.mubr.f32.mxu0 %v5780
        %5904 = vmatmul.mubr.f32.gmra.mxu0 %v5778
        %v5905 = vpop.f32.mrf.mxu0
        %v5906 = vadd.f32 %v5715, %v5905
        %v5907 = vpop.f32.mrf.mxu0
        %v5908 = vadd.f32 %v5717, %v5907
        %5909 = vmatprep.mubr.f32.mxu0 %v5784
        %5910 = vmatmul.mubr.f32.gmra.mxu0 %v5782
        %v5911 = vpop.f32.mrf.mxu0
        %v5912 = vadd.f32 %v5721, %v5911
        %v5913 = vpop.f32.mrf.mxu0
        %v5914 = vadd.f32 %v5723, %v5913
        %5915 = vmatprep.mubr.f32.mxu0 %v5788
        %5916 = vmatmul.mubr.f32.gmra.mxu0 %v5786
        %v5917 = vpop.f32.mrf.mxu0
        %v5918 = vadd.f32 %v5727, %v5917
        %v5919 = vpop.f32.mrf.mxu0
        %v5920 = vadd.f32 %v5729, %v5919
        %5921 = vmatprep.mubr.f32.mxu0 %v5792
        %5922 = vmatmul.mubr.f32.gmra.mxu0 %v5790
        %v5923 = vpop.f32.mrf.mxu0
        %v5924 = vadd.f32 %v5733, %v5923
        %v5925 = vpop.f32.mrf.mxu0
        %v5926 = vadd.f32 %v5735, %v5925
        %5927 = vmatprep.mubr.f32.mxu0 %v5796
        %5928 = vmatmul.mubr.f32.gmra.mxu0 %v5794
        %v5929 = vpop.f32.mrf.mxu0
        %v5930 = vadd.f32 %v5739, %v5929
        %v5931 = vpop.f32.mrf.mxu0
        %v5932 = vadd.f32 %v5741, %v5931
        %5933 = vmatprep.mubr.f32.mxu0 %v5800
        %5934 = vmatmul.mubr.f32.gmra.mxu0 %v5798
        %v5935 = vpop.f32.mrf.mxu0
        %v5936 = vadd.f32 %v5745, %v5935
        %v5937 = vpop.f32.mrf.mxu0
        %v5938 = vadd.f32 %v5747, %v5937
        %5939 = vmatprep.mubr.f32.mxu0 %v5804
        %5940 = vmatmul.mubr.f32.gmra.mxu0 %v5802
        %v5941 = vpop.f32.mrf.mxu0
        %v5942 = vadd.f32 %v5751, %v5941
        %v5943 = vpop.f32.mrf.mxu0
        %v5944 = vadd.f32 %v5753, %v5943
        %5945 = vmatprep.mubr.f32.mxu0 %v5808
        %5946 = vmatmul.mubr.f32.gmra.mxu0 %v5806
        %v5947 = vpop.f32.mrf.mxu0
        %v5948 = vadd.f32 %v5757, %v5947
        %v5949 = vpop.f32.mrf.mxu0
        %v5950 = vadd.f32 %v5759, %v5949
        %5951 = vmatprep.mubr.f32.mxu0 %v5812
        %5952 = vmatmul.mubr.f32.gmra.mxu0 %v5810
        %v5953 = vpop.f32.mrf.mxu0
        %v5954 = vadd.f32 %v5763, %v5953
        %v5955 = vpop.f32.mrf.mxu0
        %v5956 = vadd.f32 %v5765, %v5955
        %5957 = vdwg.mxu0
        %v5958 = vld [vmem:[#allocation3] sm:$0x80]
        %v5959 = vld [vmem:[#allocation3 + $0x8] sm:$0x80]
        %v5960 = vld [vmem:[#allocation3 + $0xa0] sm:$0x7f]
        %v5961 = vld [vmem:[#allocation3 + $0xa8] sm:$0x7f]
        %s5962 = scalar_lea.vmem %s599, 1024 [#allocation14]
        %v5963 = vld [vmem:[%s5962] sm:$0xff]
        %v5964 = vld [vmem:[%s5962 + $0x8] sm:$0xff]
        %v5965 = vld [vmem:[%s5962 + $0x10] sm:$0xff]
        %v5966 = vld [vmem:[%s5962 + $0x18] sm:$0xff]
        %v5967 = vld [vmem:[%s5962 + $0x20] sm:$0xff]
        %v5968 = vld [vmem:[%s5962 + $0x28] sm:$0xff]
        %v5969 = vld [vmem:[%s5962 + $0x30] sm:$0xff]
        %v5970 = vld [vmem:[%s5962 + $0x38] sm:$0xff]
        %v5971 = vld [vmem:[%s5962 + $0x40] sm:$0xff]
        %v5972 = vld [vmem:[%s5962 + $0x48] sm:$0xff]
        %v5973 = vld [vmem:[%s5962 + $0x50] sm:$0xff]
        %v5974 = vld [vmem:[%s5962 + $0x58] sm:$0xff]
        %v5975 = vld [vmem:[%s5962 + $0x60] sm:$0xff]
        %v5976 = vld [vmem:[%s5962 + $0x68] sm:$0xff]
        %v5977 = vld [vmem:[%s5962 + $0x70] sm:$0xff]
        %v5978 = vld [vmem:[%s5962 + $0x78] sm:$0xff]
        %v5979 = vld [vmem:[%s5962 + $0x80] sm:$0xff]
        %v5980 = vld [vmem:[%s5962 + $0x88] sm:$0xff]
        %v5981 = vld [vmem:[%s5962 + $0x90] sm:$0xff]
        %v5982 = vld [vmem:[%s5962 + $0x98] sm:$0xff]
        %v5983 = vld [vmem:[%s5962 + $0xa0] sm:$0xff]
        %v5984 = vld [vmem:[%s5962 + $0xa8] sm:$0xff]
        %v5985 = vld [vmem:[%s5962 + $0xb0] sm:$0xff]
        %v5986 = vld [vmem:[%s5962 + $0xb8] sm:$0xff]
        %v5987 = vld [vmem:[%s5962 + $0xc0] sm:$0xff]
        %v5988 = vld [vmem:[%s5962 + $0xc8] sm:$0xff]
        %v5989 = vld [vmem:[%s5962 + $0xd0] sm:$0xff]
        %v5990 = vld [vmem:[%s5962 + $0xd8] sm:$0xff]
        %v5991 = vld [vmem:[%s5962 + $0xe0] sm:$0xff]
        %v5992 = vld [vmem:[%s5962 + $0xe8] sm:$0xff]
        %v5993 = vld [vmem:[%s5962 + $0xf0] sm:$0xff]
        %v5994 = vld [vmem:[%s5962 + $0xf8] sm:$0xff]
        %v5995 = vld [vmem:[%s5962 + $0x100] sm:$0xff]
        %v5996 = vld [vmem:[%s5962 + $0x108] sm:$0xff]
        %v5997 = vld [vmem:[%s5962 + $0x110] sm:$0xff]
        %v5998 = vld [vmem:[%s5962 + $0x118] sm:$0xff]
        %v5999 = vld [vmem:[%s5962 + $0x120] sm:$0xff]
        %v6000 = vld [vmem:[%s5962 + $0x128] sm:$0xff]
        %v6001 = vld [vmem:[%s5962 + $0x130] sm:$0xff]
        %v6002 = vld [vmem:[%s5962 + $0x138] sm:$0xff]
        %v6003 = vld [vmem:[%s5962 + $0x140] sm:$0xff]
        %v6004 = vld [vmem:[%s5962 + $0x148] sm:$0xff]
        %v6005 = vld [vmem:[%s5962 + $0x150] sm:$0xff]
        %v6006 = vld [vmem:[%s5962 + $0x158] sm:$0xff]
        %v6007 = vld [vmem:[%s5962 + $0x160] sm:$0xff]
        %v6008 = vld [vmem:[%s5962 + $0x168] sm:$0xff]
        %v6009 = vld [vmem:[%s5962 + $0x170] sm:$0xff]
        %v6010 = vld [vmem:[%s5962 + $0x178] sm:$0xff]
        %v6011 = vld [vmem:[%s5962 + $0x180] sm:$0xff]
        %v6012 = vld [vmem:[%s5962 + $0x188] sm:$0xff]
        %v6013 = vld [vmem:[%s5962 + $0x190] sm:$0xff]
        %v6014 = vld [vmem:[%s5962 + $0x198] sm:$0xff]
        %v6015 = vld [vmem:[%s5962 + $0x1a0] sm:$0xff]
        %v6016 = vld [vmem:[%s5962 + $0x1a8] sm:$0xff]
        %v6017 = vld [vmem:[%s5962 + $0x1b0] sm:$0xff]
        %v6018 = vld [vmem:[%s5962 + $0x1b8] sm:$0xff]
        %v6019 = vld [vmem:[%s5962 + $0x1c0] sm:$0xff]
        %v6020 = vld [vmem:[%s5962 + $0x1c8] sm:$0xff]
        %v6021 = vld [vmem:[%s5962 + $0x1d0] sm:$0xff]
        %v6022 = vld [vmem:[%s5962 + $0x1d8] sm:$0xff]
        %v6023 = vld [vmem:[%s5962 + $0x1e0] sm:$0xff]
        %v6024 = vld [vmem:[%s5962 + $0x1e8] sm:$0xff]
        %v6025 = vld [vmem:[%s5962 + $0x1f0] sm:$0xff]
        %v6026 = vld [vmem:[%s5962 + $0x1f8] sm:$0xff]
        %v6031 = vrot.slane %v5958, 7
        %v6032 = vrot.slane %v5405, 7
        %v6033 = vsel %vm3328, %v6031, %v6032
        %v6034 = vrot.slane %v5959, 7
        %v6035 = vrot.slane %v5406, 7
        %v6036 = vsel %vm3328, %v6034, %v6035
        %v6037 = vrot.slane %v5407, 7
        %v6038 = vsel %vm3328, %v6032, %v6037
        %v6039 = vrot.slane %v5408, 7
        %v6040 = vsel %vm3328, %v6035, %v6039
        %v6041 = vrot.slane %v5409, 7
        %v6042 = vsel %vm3328, %v6037, %v6041
        %v6043 = vrot.slane %v5410, 7
        %v6044 = vsel %vm3328, %v6039, %v6043
        %v6045 = vrot.slane %v5411, 7
        %v6046 = vsel %vm3328, %v6041, %v6045
        %v6047 = vrot.slane %v5412, 7
        %v6048 = vsel %vm3328, %v6043, %v6047
        %v6049 = vrot.slane %v5413, 7
        %v6050 = vsel %vm3328, %v6045, %v6049
        %v6051 = vrot.slane %v5414, 7
        %v6052 = vsel %vm3328, %v6047, %v6051
        %v6053 = vrot.slane %v5415, 7
        %v6054 = vsel %vm3328, %v6049, %v6053
        %v6055 = vrot.slane %v5416, 7
        %v6056 = vsel %vm3328, %v6051, %v6055
        %v6057 = vrot.slane %v5417, 7
        %v6058 = vsel %vm3328, %v6053, %v6057
        %v6059 = vrot.slane %v5418, 7
        %v6060 = vsel %vm3328, %v6055, %v6059
        %v6061 = vrot.slane %v5419, 7
        %v6062 = vsel %vm3328, %v6057, %v6061
        %v6063 = vrot.slane %v5420, 7
        %v6064 = vsel %vm3328, %v6059, %v6063
        %v6065 = vrot.slane %v5421, 7
        %v6066 = vsel %vm3328, %v6061, %v6065
        %v6067 = vrot.slane %v5422, 7
        %v6068 = vsel %vm3328, %v6063, %v6067
        %v6069 = vrot.slane %v5960, 7
        %v6070 = vsel %vm3328, %v6065, %v6069
        %v6071 = vrot.slane %v5961, 7
        %v6072 = vsel %vm3328, %v6067, %v6071
        %6093 = vmatprep.subr.mxu0 %v5994
        %6094 = vmatpush1.msra.mxu0 %v5993
        %6095 = vmatprep.subr.mxu0 %v5992
        %6096 = vmatpush1.msra.mxu0 %v5991
        %6097 = vmatprep.subr.mxu0 %v5990
        %6098 = vmatpush1.msra.mxu0 %v5989
        %6099 = vmatprep.subr.mxu0 %v5988
        %6100 = vmatpush1.msra.mxu0 %v5987
        %6101 = vmatprep.subr.mxu0 %v5986
        %6102 = vmatpush1.msra.mxu0 %v5985
        %6103 = vmatprep.subr.mxu0 %v5984
        %6104 = vmatpush1.msra.mxu0 %v5983
        %6105 = vmatprep.subr.mxu0 %v5982
        %6106 = vmatpush1.msra.mxu0 %v5981
        %6107 = vmatprep.subr.mxu0 %v5980
        %6108 = vmatpush1.msra.mxu0 %v5979
        %6109 = vmatprep.subr.mxu0 %v5978
        %6110 = vmatpush1.msra.mxu0 %v5977
        %6111 = vmatprep.subr.mxu0 %v5976
        %6112 = vmatpush1.msra.mxu0 %v5975
        %6113 = vmatprep.subr.mxu0 %v5974
        %6114 = vmatpush1.msra.mxu0 %v5973
        %6115 = vmatprep.subr.mxu0 %v5972
        %6116 = vmatpush1.msra.mxu0 %v5971
        %6117 = vmatprep.subr.mxu0 %v5970
        %6118 = vmatpush1.msra.mxu0 %v5969
        %6119 = vmatprep.subr.mxu0 %v5968
        %6120 = vmatpush1.msra.mxu0 %v5967
        %6121 = vmatprep.subr.mxu0 %v5966
        %6122 = vmatpush1.msra.mxu0 %v5965
        %6123 = vmatprep.subr.mxu0 %v5964
        %6124 = vmatpush1.msra.mxu0 %v5963
        %6125 = vmatprep.subr.mxu0 %v6026
        %6126 = vmatpush2.msra.mxu0 %v6025
        %6127 = vmatprep.subr.mxu0 %v6024
        %6128 = vmatpush2.msra.mxu0 %v6023
        %6129 = vmatprep.subr.mxu0 %v6022
        %6130 = vmatpush2.msra.mxu0 %v6021
        %6131 = vmatprep.subr.mxu0 %v6020
        %6132 = vmatpush2.msra.mxu0 %v6019
        %6133 = vmatprep.subr.mxu0 %v6018
        %6134 = vmatpush2.msra.mxu0 %v6017
        %6135 = vmatprep.subr.mxu0 %v6016
        %6136 = vmatpush2.msra.mxu0 %v6015
        %6137 = vmatprep.subr.mxu0 %v6014
        %6138 = vmatpush2.msra.mxu0 %v6013
        %6139 = vmatprep.subr.mxu0 %v6012
        %6140 = vmatpush2.msra.mxu0 %v6011
        %6141 = vmatprep.subr.mxu0 %v6010
        %6142 = vmatpush2.msra.mxu0 %v6009
        %6143 = vmatprep.subr.mxu0 %v6008
        %6144 = vmatpush2.msra.mxu0 %v6007
        %6145 = vmatprep.subr.mxu0 %v6006
        %6146 = vmatpush2.msra.mxu0 %v6005
        %6147 = vmatprep.subr.mxu0 %v6004
        %6148 = vmatpush2.msra.mxu0 %v6003
        %6149 = vmatprep.subr.mxu0 %v6002
        %6150 = vmatpush2.msra.mxu0 %v6001
        %6151 = vmatprep.subr.mxu0 %v6000
        %6152 = vmatpush2.msra.mxu0 %v5999
        %6153 = vmatprep.subr.mxu0 %v5998
        %6154 = vmatpush2.msra.mxu0 %v5997
        %6155 = vmatprep.subr.mxu0 %v5996
        %6156 = vmatpush2.msra.mxu0 %v5995
        %6157 = vmatprep.mubr.f32.mxu0 %v6036
        %6158 = vmatmul.mubr.f32.gmra.mxu0 %v6033
        %v6159 = vpop.f32.mrf.mxu0
        %v6160 = vadd.f32 0.0, %v6159
        %v6161 = vpop.f32.mrf.mxu0
        %v6162 = vadd.f32 0.0, %v6161
        %6163 = vmatprep.mubr.f32.mxu0 %v6040
        %6164 = vmatmul.mubr.f32.gmra.mxu0 %v6038
        %v6165 = vpop.f32.mrf.mxu0
        %v6166 = vadd.f32 0.0, %v6165
        %v6167 = vpop.f32.mrf.mxu0
        %v6168 = vadd.f32 0.0, %v6167
        %6169 = vmatprep.mubr.f32.mxu0 %v6044
        %6170 = vmatmul.mubr.f32.gmra.mxu0 %v6042
        %v6171 = vpop.f32.mrf.mxu0
        %v6172 = vadd.f32 0.0, %v6171
        %v6173 = vpop.f32.mrf.mxu0
        %v6174 = vadd.f32 0.0, %v6173
        %6175 = vmatprep.mubr.f32.mxu0 %v6048
        %6176 = vmatmul.mubr.f32.gmra.mxu0 %v6046
        %v6177 = vpop.f32.mrf.mxu0
        %v6178 = vadd.f32 0.0, %v6177
        %v6179 = vpop.f32.mrf.mxu0
        %v6180 = vadd.f32 0.0, %v6179
        %6181 = vmatprep.mubr.f32.mxu0 %v6052
        %6182 = vmatmul.mubr.f32.gmra.mxu0 %v6050
        %v6183 = vpop.f32.mrf.mxu0
        %v6184 = vadd.f32 0.0, %v6183
        %v6185 = vpop.f32.mrf.mxu0
        %v6186 = vadd.f32 0.0, %v6185
        %6187 = vmatprep.mubr.f32.mxu0 %v6056
        %6188 = vmatmul.mubr.f32.gmra.mxu0 %v6054
        %v6189 = vpop.f32.mrf.mxu0
        %v6190 = vadd.f32 0.0, %v6189
        %v6191 = vpop.f32.mrf.mxu0
        %v6192 = vadd.f32 0.0, %v6191
        %6193 = vmatprep.mubr.f32.mxu0 %v6060
        %6194 = vmatmul.mubr.f32.gmra.mxu0 %v6058
        %v6195 = vpop.f32.mrf.mxu0
        %v6196 = vadd.f32 0.0, %v6195
        %v6197 = vpop.f32.mrf.mxu0
        %v6198 = vadd.f32 0.0, %v6197
        %6199 = vmatprep.mubr.f32.mxu0 %v6064
        %6200 = vmatmul.mubr.f32.gmra.mxu0 %v6062
        %v6201 = vpop.f32.mrf.mxu0
        %v6202 = vadd.f32 0.0, %v6201
        %v6203 = vpop.f32.mrf.mxu0
        %v6204 = vadd.f32 0.0, %v6203
        %6205 = vmatprep.mubr.f32.mxu0 %v6068
        %6206 = vmatmul.mubr.f32.gmra.mxu0 %v6066
        %v6207 = vpop.f32.mrf.mxu0
        %v6208 = vadd.f32 0.0, %v6207
        %v6209 = vpop.f32.mrf.mxu0
        %v6210 = vadd.f32 0.0, %v6209
        %6211 = vmatprep.mubr.f32.mxu0 %v6072
        %6212 = vmatmul.mubr.f32.gmra.mxu0 %v6070
        %v6213 = vpop.f32.mrf.mxu0
        %v6214 = vadd.f32 0.0, %v6213
        %v6215 = vpop.f32.mrf.mxu0
        %v6216 = vadd.f32 0.0, %v6215
        %6217 = vdwg.mxu0
        %v6218 = vadd.f32 %v5900, %v6160
        %v6219 = vadd.f32 %v5902, %v6162
        %v6220 = vadd.f32 %v5906, %v6166
        %v6221 = vadd.f32 %v5908, %v6168
        %v6222 = vadd.f32 %v5912, %v6172
        %v6223 = vadd.f32 %v5914, %v6174
        %v6224 = vadd.f32 %v5918, %v6178
        %v6225 = vadd.f32 %v5920, %v6180
        %v6226 = vadd.f32 %v5924, %v6184
        %v6227 = vadd.f32 %v5926, %v6186
        %v6228 = vadd.f32 %v5930, %v6190
        %v6229 = vadd.f32 %v5932, %v6192
        %v6230 = vadd.f32 %v5936, %v6196
        %v6231 = vadd.f32 %v5938, %v6198
        %v6232 = vadd.f32 %v5942, %v6202
        %v6233 = vadd.f32 %v5944, %v6204
        %v6234 = vadd.f32 %v5948, %v6208
        %v6235 = vadd.f32 %v5950, %v6210
        %v6236 = vadd.f32 %v5954, %v6214
        %v6237 = vadd.f32 %v5956, %v6216
        %v6238 = vld [vmem:[#allocation3 + $0x10] sm:$0x80]
        %v6239 = vld [vmem:[#allocation3 + $0x18] sm:$0x80]
        %v6240 = vld [vmem:[#allocation3 + $0x20] sm:$0xff]
        %v6241 = vld [vmem:[#allocation3 + $0x28] sm:$0xff]
        %v6242 = vld [vmem:[#allocation3 + $0x30] sm:$0xff]
        %v6243 = vld [vmem:[#allocation3 + $0x38] sm:$0xff]
        %v6244 = vld [vmem:[#allocation3 + $0x40] sm:$0xff]
        %v6245 = vld [vmem:[#allocation3 + $0x48] sm:$0xff]
        %v6246 = vld [vmem:[#allocation3 + $0x50] sm:$0xff]
        %v6247 = vld [vmem:[#allocation3 + $0x58] sm:$0xff]
        %v6248 = vld [vmem:[#allocation3 + $0x60] sm:$0xff]
        %v6249 = vld [vmem:[#allocation3 + $0x68] sm:$0xff]
        %v6250 = vld [vmem:[#allocation3 + $0x70] sm:$0xff]
        %v6251 = vld [vmem:[#allocation3 + $0x78] sm:$0xff]
        %v6252 = vld [vmem:[#allocation3 + $0x80] sm:$0xff]
        %v6253 = vld [vmem:[#allocation3 + $0x88] sm:$0xff]
        %v6254 = vld [vmem:[#allocation3 + $0x90] sm:$0xff]
        %v6255 = vld [vmem:[#allocation3 + $0x98] sm:$0xff]
        %v6256 = vld [vmem:[#allocation3 + $0xa0] sm:$0xff]
        %v6257 = vld [vmem:[#allocation3 + $0xa8] sm:$0xff]
        %v6258 = vld [vmem:[#allocation3 + $0xb0] sm:$0x7f]
        %v6259 = vld [vmem:[#allocation3 + $0xb8] sm:$0x7f]
        %s6260 = scalar_lea.vmem %s599, 1536 [#allocation14]
        %v6261 = vld [vmem:[%s6260] sm:$0xff]
        %v6262 = vld [vmem:[%s6260 + $0x8] sm:$0xff]
        %v6263 = vld [vmem:[%s6260 + $0x10] sm:$0xff]
        %v6264 = vld [vmem:[%s6260 + $0x18] sm:$0xff]
        %v6265 = vld [vmem:[%s6260 + $0x20] sm:$0xff]
        %v6266 = vld [vmem:[%s6260 + $0x28] sm:$0xff]
        %v6267 = vld [vmem:[%s6260 + $0x30] sm:$0xff]
        %v6268 = vld [vmem:[%s6260 + $0x38] sm:$0xff]
        %v6269 = vld [vmem:[%s6260 + $0x40] sm:$0xff]
        %v6270 = vld [vmem:[%s6260 + $0x48] sm:$0xff]
        %v6271 = vld [vmem:[%s6260 + $0x50] sm:$0xff]
        %v6272 = vld [vmem:[%s6260 + $0x58] sm:$0xff]
        %v6273 = vld [vmem:[%s6260 + $0x60] sm:$0xff]
        %v6274 = vld [vmem:[%s6260 + $0x68] sm:$0xff]
        %v6275 = vld [vmem:[%s6260 + $0x70] sm:$0xff]
        %v6276 = vld [vmem:[%s6260 + $0x78] sm:$0xff]
        %v6277 = vld [vmem:[%s6260 + $0x80] sm:$0xff]
        %v6278 = vld [vmem:[%s6260 + $0x88] sm:$0xff]
        %v6279 = vld [vmem:[%s6260 + $0x90] sm:$0xff]
        %v6280 = vld [vmem:[%s6260 + $0x98] sm:$0xff]
        %v6281 = vld [vmem:[%s6260 + $0xa0] sm:$0xff]
        %v6282 = vld [vmem:[%s6260 + $0xa8] sm:$0xff]
        %v6283 = vld [vmem:[%s6260 + $0xb0] sm:$0xff]
        %v6284 = vld [vmem:[%s6260 + $0xb8] sm:$0xff]
        %v6285 = vld [vmem:[%s6260 + $0xc0] sm:$0xff]
        %v6286 = vld [vmem:[%s6260 + $0xc8] sm:$0xff]
        %v6287 = vld [vmem:[%s6260 + $0xd0] sm:$0xff]
        %v6288 = vld [vmem:[%s6260 + $0xd8] sm:$0xff]
        %v6289 = vld [vmem:[%s6260 + $0xe0] sm:$0xff]
        %v6290 = vld [vmem:[%s6260 + $0xe8] sm:$0xff]
        %v6291 = vld [vmem:[%s6260 + $0xf0] sm:$0xff]
        %v6292 = vld [vmem:[%s6260 + $0xf8] sm:$0xff]
        %v6293 = vld [vmem:[%s6260 + $0x100] sm:$0xff]
        %v6294 = vld [vmem:[%s6260 + $0x108] sm:$0xff]
        %v6295 = vld [vmem:[%s6260 + $0x110] sm:$0xff]
        %v6296 = vld [vmem:[%s6260 + $0x118] sm:$0xff]
        %v6297 = vld [vmem:[%s6260 + $0x120] sm:$0xff]
        %v6298 = vld [vmem:[%s6260 + $0x128] sm:$0xff]
        %v6299 = vld [vmem:[%s6260 + $0x130] sm:$0xff]
        %v6300 = vld [vmem:[%s6260 + $0x138] sm:$0xff]
        %v6301 = vld [vmem:[%s6260 + $0x140] sm:$0xff]
        %v6302 = vld [vmem:[%s6260 + $0x148] sm:$0xff]
        %v6303 = vld [vmem:[%s6260 + $0x150] sm:$0xff]
        %v6304 = vld [vmem:[%s6260 + $0x158] sm:$0xff]
        %v6305 = vld [vmem:[%s6260 + $0x160] sm:$0xff]
        %v6306 = vld [vmem:[%s6260 + $0x168] sm:$0xff]
        %v6307 = vld [vmem:[%s6260 + $0x170] sm:$0xff]
        %v6308 = vld [vmem:[%s6260 + $0x178] sm:$0xff]
        %v6309 = vld [vmem:[%s6260 + $0x180] sm:$0xff]
        %v6310 = vld [vmem:[%s6260 + $0x188] sm:$0xff]
        %v6311 = vld [vmem:[%s6260 + $0x190] sm:$0xff]
        %v6312 = vld [vmem:[%s6260 + $0x198] sm:$0xff]
        %v6313 = vld [vmem:[%s6260 + $0x1a0] sm:$0xff]
        %v6314 = vld [vmem:[%s6260 + $0x1a8] sm:$0xff]
        %v6315 = vld [vmem:[%s6260 + $0x1b0] sm:$0xff]
        %v6316 = vld [vmem:[%s6260 + $0x1b8] sm:$0xff]
        %v6317 = vld [vmem:[%s6260 + $0x1c0] sm:$0xff]
        %v6318 = vld [vmem:[%s6260 + $0x1c8] sm:$0xff]
        %v6319 = vld [vmem:[%s6260 + $0x1d0] sm:$0xff]
        %v6320 = vld [vmem:[%s6260 + $0x1d8] sm:$0xff]
        %v6321 = vld [vmem:[%s6260 + $0x1e0] sm:$0xff]
        %v6322 = vld [vmem:[%s6260 + $0x1e8] sm:$0xff]
        %v6323 = vld [vmem:[%s6260 + $0x1f0] sm:$0xff]
        %v6324 = vld [vmem:[%s6260 + $0x1f8] sm:$0xff]
        %v6347 = vrot.slane %v6238, 7
        %v6348 = vrot.slane %v6240, 7
        %v6349 = vsel %vm3328, %v6347, %v6348
        %v6350 = vrot.slane %v6239, 7
        %v6351 = vrot.slane %v6241, 7
        %v6352 = vsel %vm3328, %v6350, %v6351
        %v6353 = vrot.slane %v6242, 7
        %v6354 = vsel %vm3328, %v6348, %v6353
        %v6355 = vrot.slane %v6243, 7
        %v6356 = vsel %vm3328, %v6351, %v6355
        %v6357 = vrot.slane %v6244, 7
        %v6358 = vsel %vm3328, %v6353, %v6357
        %v6359 = vrot.slane %v6245, 7
        %v6360 = vsel %vm3328, %v6355, %v6359
        %v6361 = vrot.slane %v6246, 7
        %v6362 = vsel %vm3328, %v6357, %v6361
        %v6363 = vrot.slane %v6247, 7
        %v6364 = vsel %vm3328, %v6359, %v6363
        %v6365 = vrot.slane %v6248, 7
        %v6366 = vsel %vm3328, %v6361, %v6365
        %v6367 = vrot.slane %v6249, 7
        %v6368 = vsel %vm3328, %v6363, %v6367
        %v6369 = vrot.slane %v6250, 7
        %v6370 = vsel %vm3328, %v6365, %v6369
        %v6371 = vrot.slane %v6251, 7
        %v6372 = vsel %vm3328, %v6367, %v6371
        %v6373 = vrot.slane %v6252, 7
        %v6374 = vsel %vm3328, %v6369, %v6373
        %v6375 = vrot.slane %v6253, 7
        %v6376 = vsel %vm3328, %v6371, %v6375
        %v6377 = vrot.slane %v6254, 7
        %v6378 = vsel %vm3328, %v6373, %v6377
        %v6379 = vrot.slane %v6255, 7
        %v6380 = vsel %vm3328, %v6375, %v6379
        %v6381 = vrot.slane %v6256, 7
        %v6382 = vsel %vm3328, %v6377, %v6381
        %v6383 = vrot.slane %v6257, 7
        %v6384 = vsel %vm3328, %v6379, %v6383
        %v6385 = vrot.slane %v6258, 7
        %v6386 = vsel %vm3328, %v6381, %v6385
        %v6387 = vrot.slane %v6259, 7
        %v6388 = vsel %vm3328, %v6383, %v6387
        %6409 = vmatprep.subr.mxu0 %v6292
        %6410 = vmatpush1.msra.mxu0 %v6291
        %6411 = vmatprep.subr.mxu0 %v6290
        %6412 = vmatpush1.msra.mxu0 %v6289
        %6413 = vmatprep.subr.mxu0 %v6288
        %6414 = vmatpush1.msra.mxu0 %v6287
        %6415 = vmatprep.subr.mxu0 %v6286
        %6416 = vmatpush1.msra.mxu0 %v6285
        %6417 = vmatprep.subr.mxu0 %v6284
        %6418 = vmatpush1.msra.mxu0 %v6283
        %6419 = vmatprep.subr.mxu0 %v6282
        %6420 = vmatpush1.msra.mxu0 %v6281
        %6421 = vmatprep.subr.mxu0 %v6280
        %6422 = vmatpush1.msra.mxu0 %v6279
        %6423 = vmatprep.subr.mxu0 %v6278
        %6424 = vmatpush1.msra.mxu0 %v6277
        %6425 = vmatprep.subr.mxu0 %v6276
        %6426 = vmatpush1.msra.mxu0 %v6275
        %6427 = vmatprep.subr.mxu0 %v6274
        %6428 = vmatpush1.msra.mxu0 %v6273
        %6429 = vmatprep.subr.mxu0 %v6272
        %6430 = vmatpush1.msra.mxu0 %v6271
        %6431 = vmatprep.subr.mxu0 %v6270
        %6432 = vmatpush1.msra.mxu0 %v6269
        %6433 = vmatprep.subr.mxu0 %v6268
        %6434 = vmatpush1.msra.mxu0 %v6267
        %6435 = vmatprep.subr.mxu0 %v6266
        %6436 = vmatpush1.msra.mxu0 %v6265
        %6437 = vmatprep.subr.mxu0 %v6264
        %6438 = vmatpush1.msra.mxu0 %v6263
        %6439 = vmatprep.subr.mxu0 %v6262
        %6440 = vmatpush1.msra.mxu0 %v6261
        %6441 = vmatprep.subr.mxu0 %v6324
        %6442 = vmatpush2.msra.mxu0 %v6323
        %6443 = vmatprep.subr.mxu0 %v6322
        %6444 = vmatpush2.msra.mxu0 %v6321
        %6445 = vmatprep.subr.mxu0 %v6320
        %6446 = vmatpush2.msra.mxu0 %v6319
        %6447 = vmatprep.subr.mxu0 %v6318
        %6448 = vmatpush2.msra.mxu0 %v6317
        %6449 = vmatprep.subr.mxu0 %v6316
        %6450 = vmatpush2.msra.mxu0 %v6315
        %6451 = vmatprep.subr.mxu0 %v6314
        %6452 = vmatpush2.msra.mxu0 %v6313
        %6453 = vmatprep.subr.mxu0 %v6312
        %6454 = vmatpush2.msra.mxu0 %v6311
        %6455 = vmatprep.subr.mxu0 %v6310
        %6456 = vmatpush2.msra.mxu0 %v6309
        %6457 = vmatprep.subr.mxu0 %v6308
        %6458 = vmatpush2.msra.mxu0 %v6307
        %6459 = vmatprep.subr.mxu0 %v6306
        %6460 = vmatpush2.msra.mxu0 %v6305
        %6461 = vmatprep.subr.mxu0 %v6304
        %6462 = vmatpush2.msra.mxu0 %v6303
        %6463 = vmatprep.subr.mxu0 %v6302
        %6464 = vmatpush2.msra.mxu0 %v6301
        %6465 = vmatprep.subr.mxu0 %v6300
        %6466 = vmatpush2.msra.mxu0 %v6299
        %6467 = vmatprep.subr.mxu0 %v6298
        %6468 = vmatpush2.msra.mxu0 %v6297
        %6469 = vmatprep.subr.mxu0 %v6296
        %6470 = vmatpush2.msra.mxu0 %v6295
        %6471 = vmatprep.subr.mxu0 %v6294
        %6472 = vmatpush2.msra.mxu0 %v6293
        %6473 = vmatprep.mubr.f32.mxu0 %v6352
        %6474 = vmatmul.mubr.f32.gmra.mxu0 %v6349
        %v6475 = vpop.f32.mrf.mxu0
        %v6476 = vadd.f32 0.0, %v6475
        %v6477 = vpop.f32.mrf.mxu0
        %v6478 = vadd.f32 0.0, %v6477
        %6479 = vmatprep.mubr.f32.mxu0 %v6356
        %6480 = vmatmul.mubr.f32.gmra.mxu0 %v6354
        %v6481 = vpop.f32.mrf.mxu0
        %v6482 = vadd.f32 0.0, %v6481
        %v6483 = vpop.f32.mrf.mxu0
        %v6484 = vadd.f32 0.0, %v6483
        %6485 = vmatprep.mubr.f32.mxu0 %v6360
        %6486 = vmatmul.mubr.f32.gmra.mxu0 %v6358
        %v6487 = vpop.f32.mrf.mxu0
        %v6488 = vadd.f32 0.0, %v6487
        %v6489 = vpop.f32.mrf.mxu0
        %v6490 = vadd.f32 0.0, %v6489
        %6491 = vmatprep.mubr.f32.mxu0 %v6364
        %6492 = vmatmul.mubr.f32.gmra.mxu0 %v6362
        %v6493 = vpop.f32.mrf.mxu0
        %v6494 = vadd.f32 0.0, %v6493
        %v6495 = vpop.f32.mrf.mxu0
        %v6496 = vadd.f32 0.0, %v6495
        %6497 = vmatprep.mubr.f32.mxu0 %v6368
        %6498 = vmatmul.mubr.f32.gmra.mxu0 %v6366
        %v6499 = vpop.f32.mrf.mxu0
        %v6500 = vadd.f32 0.0, %v6499
        %v6501 = vpop.f32.mrf.mxu0
        %v6502 = vadd.f32 0.0, %v6501
        %6503 = vmatprep.mubr.f32.mxu0 %v6372
        %6504 = vmatmul.mubr.f32.gmra.mxu0 %v6370
        %v6505 = vpop.f32.mrf.mxu0
        %v6506 = vadd.f32 0.0, %v6505
        %v6507 = vpop.f32.mrf.mxu0
        %v6508 = vadd.f32 0.0, %v6507
        %6509 = vmatprep.mubr.f32.mxu0 %v6376
        %6510 = vmatmul.mubr.f32.gmra.mxu0 %v6374
        %v6511 = vpop.f32.mrf.mxu0
        %v6512 = vadd.f32 0.0, %v6511
        %v6513 = vpop.f32.mrf.mxu0
        %v6514 = vadd.f32 0.0, %v6513
        %6515 = vmatprep.mubr.f32.mxu0 %v6380
        %6516 = vmatmul.mubr.f32.gmra.mxu0 %v6378
        %v6517 = vpop.f32.mrf.mxu0
        %v6518 = vadd.f32 0.0, %v6517
        %v6519 = vpop.f32.mrf.mxu0
        %v6520 = vadd.f32 0.0, %v6519
        %6521 = vmatprep.mubr.f32.mxu0 %v6384
        %6522 = vmatmul.mubr.f32.gmra.mxu0 %v6382
        %v6523 = vpop.f32.mrf.mxu0
        %v6524 = vadd.f32 0.0, %v6523
        %v6525 = vpop.f32.mrf.mxu0
        %v6526 = vadd.f32 0.0, %v6525
        %6527 = vmatprep.mubr.f32.mxu0 %v6388
        %6528 = vmatmul.mubr.f32.gmra.mxu0 %v6386
        %v6529 = vpop.f32.mrf.mxu0
        %v6530 = vadd.f32 0.0, %v6529
        %v6531 = vpop.f32.mrf.mxu0
        %v6532 = vadd.f32 0.0, %v6531
        %6533 = vdwg.mxu0
        %v6534 = vadd.f32 %v6218, %v6476
        %v6535 = vadd.f32 %v6219, %v6478
        %v6536 = vadd.f32 %v6220, %v6482
        %v6537 = vadd.f32 %v6221, %v6484
        %v6538 = vadd.f32 %v6222, %v6488
        %v6539 = vadd.f32 %v6223, %v6490
        %v6540 = vadd.f32 %v6224, %v6494
        %v6541 = vadd.f32 %v6225, %v6496
        %v6542 = vadd.f32 %v6226, %v6500
        %v6543 = vadd.f32 %v6227, %v6502
        %v6544 = vadd.f32 %v6228, %v6506
        %v6545 = vadd.f32 %v6229, %v6508
        %v6546 = vadd.f32 %v6230, %v6512
        %v6547 = vadd.f32 %v6231, %v6514
        %v6548 = vadd.f32 %v6232, %v6518
        %v6549 = vadd.f32 %v6233, %v6520
        %v6550 = vadd.f32 %v6234, %v6524
        %v6551 = vadd.f32 %v6235, %v6526
        %v6552 = vadd.f32 %v6236, %v6530
        %v6553 = vadd.f32 %v6237, %v6532
        %v6554 = vld [vmem:[#allocation3 + $0xb0] sm:$0xff]
        %v6555 = vld [vmem:[#allocation3 + $0xb8] sm:$0xff]
        %s6556 = scalar_lea.vmem %s599, 2048 [#allocation14]
        %v6557 = vld [vmem:[%s6556] sm:$0xff]
        %v6558 = vld [vmem:[%s6556 + $0x8] sm:$0xff]
        %v6559 = vld [vmem:[%s6556 + $0x10] sm:$0xff]
        %v6560 = vld [vmem:[%s6556 + $0x18] sm:$0xff]
        %v6561 = vld [vmem:[%s6556 + $0x20] sm:$0xff]
        %v6562 = vld [vmem:[%s6556 + $0x28] sm:$0xff]
        %v6563 = vld [vmem:[%s6556 + $0x30] sm:$0xff]
        %v6564 = vld [vmem:[%s6556 + $0x38] sm:$0xff]
        %v6565 = vld [vmem:[%s6556 + $0x40] sm:$0xff]
        %v6566 = vld [vmem:[%s6556 + $0x48] sm:$0xff]
        %v6567 = vld [vmem:[%s6556 + $0x50] sm:$0xff]
        %v6568 = vld [vmem:[%s6556 + $0x58] sm:$0xff]
        %v6569 = vld [vmem:[%s6556 + $0x60] sm:$0xff]
        %v6570 = vld [vmem:[%s6556 + $0x68] sm:$0xff]
        %v6571 = vld [vmem:[%s6556 + $0x70] sm:$0xff]
        %v6572 = vld [vmem:[%s6556 + $0x78] sm:$0xff]
        %v6573 = vld [vmem:[%s6556 + $0x80] sm:$0xff]
        %v6574 = vld [vmem:[%s6556 + $0x88] sm:$0xff]
        %v6575 = vld [vmem:[%s6556 + $0x90] sm:$0xff]
        %v6576 = vld [vmem:[%s6556 + $0x98] sm:$0xff]
        %v6577 = vld [vmem:[%s6556 + $0xa0] sm:$0xff]
        %v6578 = vld [vmem:[%s6556 + $0xa8] sm:$0xff]
        %v6579 = vld [vmem:[%s6556 + $0xb0] sm:$0xff]
        %v6580 = vld [vmem:[%s6556 + $0xb8] sm:$0xff]
        %v6581 = vld [vmem:[%s6556 + $0xc0] sm:$0xff]
        %v6582 = vld [vmem:[%s6556 + $0xc8] sm:$0xff]
        %v6583 = vld [vmem:[%s6556 + $0xd0] sm:$0xff]
        %v6584 = vld [vmem:[%s6556 + $0xd8] sm:$0xff]
        %v6585 = vld [vmem:[%s6556 + $0xe0] sm:$0xff]
        %v6586 = vld [vmem:[%s6556 + $0xe8] sm:$0xff]
        %v6587 = vld [vmem:[%s6556 + $0xf0] sm:$0xff]
        %v6588 = vld [vmem:[%s6556 + $0xf8] sm:$0xff]
        %v6589 = vld [vmem:[%s6556 + $0x100] sm:$0xff]
        %v6590 = vld [vmem:[%s6556 + $0x108] sm:$0xff]
        %v6591 = vld [vmem:[%s6556 + $0x110] sm:$0xff]
        %v6592 = vld [vmem:[%s6556 + $0x118] sm:$0xff]
        %v6593 = vld [vmem:[%s6556 + $0x120] sm:$0xff]
        %v6594 = vld [vmem:[%s6556 + $0x128] sm:$0xff]
        %v6595 = vld [vmem:[%s6556 + $0x130] sm:$0xff]
        %v6596 = vld [vmem:[%s6556 + $0x138] sm:$0xff]
        %v6597 = vld [vmem:[%s6556 + $0x140] sm:$0xff]
        %v6598 = vld [vmem:[%s6556 + $0x148] sm:$0xff]
        %v6599 = vld [vmem:[%s6556 + $0x150] sm:$0xff]
        %v6600 = vld [vmem:[%s6556 + $0x158] sm:$0xff]
        %v6601 = vld [vmem:[%s6556 + $0x160] sm:$0xff]
        %v6602 = vld [vmem:[%s6556 + $0x168] sm:$0xff]
        %v6603 = vld [vmem:[%s6556 + $0x170] sm:$0xff]
        %v6604 = vld [vmem:[%s6556 + $0x178] sm:$0xff]
        %v6605 = vld [vmem:[%s6556 + $0x180] sm:$0xff]
        %v6606 = vld [vmem:[%s6556 + $0x188] sm:$0xff]
        %v6607 = vld [vmem:[%s6556 + $0x190] sm:$0xff]
        %v6608 = vld [vmem:[%s6556 + $0x198] sm:$0xff]
        %v6609 = vld [vmem:[%s6556 + $0x1a0] sm:$0xff]
        %v6610 = vld [vmem:[%s6556 + $0x1a8] sm:$0xff]
        %v6611 = vld [vmem:[%s6556 + $0x1b0] sm:$0xff]
        %v6612 = vld [vmem:[%s6556 + $0x1b8] sm:$0xff]
        %v6613 = vld [vmem:[%s6556 + $0x1c0] sm:$0xff]
        %v6614 = vld [vmem:[%s6556 + $0x1c8] sm:$0xff]
        %v6615 = vld [vmem:[%s6556 + $0x1d0] sm:$0xff]
        %v6616 = vld [vmem:[%s6556 + $0x1d8] sm:$0xff]
        %v6617 = vld [vmem:[%s6556 + $0x1e0] sm:$0xff]
        %v6618 = vld [vmem:[%s6556 + $0x1e8] sm:$0xff]
        %v6619 = vld [vmem:[%s6556 + $0x1f0] sm:$0xff]
        %v6620 = vld [vmem:[%s6556 + $0x1f8] sm:$0xff]
        %6621 = vmatprep.subr.mxu0 %v6588
        %6622 = vmatpush1.msra.mxu0 %v6587
        %6623 = vmatprep.subr.mxu0 %v6586
        %6624 = vmatpush1.msra.mxu0 %v6585
        %6625 = vmatprep.subr.mxu0 %v6584
        %6626 = vmatpush1.msra.mxu0 %v6583
        %6627 = vmatprep.subr.mxu0 %v6582
        %6628 = vmatpush1.msra.mxu0 %v6581
        %6629 = vmatprep.subr.mxu0 %v6580
        %6630 = vmatpush1.msra.mxu0 %v6579
        %6631 = vmatprep.subr.mxu0 %v6578
        %6632 = vmatpush1.msra.mxu0 %v6577
        %6633 = vmatprep.subr.mxu0 %v6576
        %6634 = vmatpush1.msra.mxu0 %v6575
        %6635 = vmatprep.subr.mxu0 %v6574
        %6636 = vmatpush1.msra.mxu0 %v6573
        %6637 = vmatprep.subr.mxu0 %v6572
        %6638 = vmatpush1.msra.mxu0 %v6571
        %6639 = vmatprep.subr.mxu0 %v6570
        %6640 = vmatpush1.msra.mxu0 %v6569
        %6641 = vmatprep.subr.mxu0 %v6568
        %6642 = vmatpush1.msra.mxu0 %v6567
        %6643 = vmatprep.subr.mxu0 %v6566
        %6644 = vmatpush1.msra.mxu0 %v6565
        %6645 = vmatprep.subr.mxu0 %v6564
        %6646 = vmatpush1.msra.mxu0 %v6563
        %6647 = vmatprep.subr.mxu0 %v6562
        %6648 = vmatpush1.msra.mxu0 %v6561
        %6649 = vmatprep.subr.mxu0 %v6560
        %6650 = vmatpush1.msra.mxu0 %v6559
        %6651 = vmatprep.subr.mxu0 %v6558
        %6652 = vmatpush1.msra.mxu0 %v6557
        %6653 = vmatprep.subr.mxu0 %v6620
        %6654 = vmatpush2.msra.mxu0 %v6619
        %6655 = vmatprep.subr.mxu0 %v6618
        %6656 = vmatpush2.msra.mxu0 %v6617
        %6657 = vmatprep.subr.mxu0 %v6616
        %6658 = vmatpush2.msra.mxu0 %v6615
        %6659 = vmatprep.subr.mxu0 %v6614
        %6660 = vmatpush2.msra.mxu0 %v6613
        %6661 = vmatprep.subr.mxu0 %v6612
        %6662 = vmatpush2.msra.mxu0 %v6611
        %6663 = vmatprep.subr.mxu0 %v6610
        %6664 = vmatpush2.msra.mxu0 %v6609
        %6665 = vmatprep.subr.mxu0 %v6608
        %6666 = vmatpush2.msra.mxu0 %v6607
        %6667 = vmatprep.subr.mxu0 %v6606
        %6668 = vmatpush2.msra.mxu0 %v6605
        %6669 = vmatprep.subr.mxu0 %v6604
        %6670 = vmatpush2.msra.mxu0 %v6603
        %6671 = vmatprep.subr.mxu0 %v6602
        %6672 = vmatpush2.msra.mxu0 %v6601
        %6673 = vmatprep.subr.mxu0 %v6600
        %6674 = vmatpush2.msra.mxu0 %v6599
        %6675 = vmatprep.subr.mxu0 %v6598
        %6676 = vmatpush2.msra.mxu0 %v6597
        %6677 = vmatprep.subr.mxu0 %v6596
        %6678 = vmatpush2.msra.mxu0 %v6595
        %6679 = vmatprep.subr.mxu0 %v6594
        %6680 = vmatpush2.msra.mxu0 %v6593
        %6681 = vmatprep.subr.mxu0 %v6592
        %6682 = vmatpush2.msra.mxu0 %v6591
        %6683 = vmatprep.subr.mxu0 %v6590
        %6684 = vmatpush2.msra.mxu0 %v6589
        %6685 = vmatprep.mubr.f32.mxu0 %v6241
        %6686 = vmatmul.mubr.f32.gmra.mxu0 %v6240
        %v6687 = vpop.f32.mrf.mxu0
        %v6688 = vadd.f32 0.0, %v6687
        %v6689 = vpop.f32.mrf.mxu0
        %v6690 = vadd.f32 0.0, %v6689
        %6691 = vmatprep.mubr.f32.mxu0 %v6243
        %6692 = vmatmul.mubr.f32.gmra.mxu0 %v6242
        %v6693 = vpop.f32.mrf.mxu0
        %v6694 = vadd.f32 0.0, %v6693
        %v6695 = vpop.f32.mrf.mxu0
        %v6696 = vadd.f32 0.0, %v6695
        %6697 = vmatprep.mubr.f32.mxu0 %v6245
        %6698 = vmatmul.mubr.f32.gmra.mxu0 %v6244
        %v6699 = vpop.f32.mrf.mxu0
        %v6700 = vadd.f32 0.0, %v6699
        %v6701 = vpop.f32.mrf.mxu0
        %v6702 = vadd.f32 0.0, %v6701
        %6703 = vmatprep.mubr.f32.mxu0 %v6247
        %6704 = vmatmul.mubr.f32.gmra.mxu0 %v6246
        %v6705 = vpop.f32.mrf.mxu0
        %v6706 = vadd.f32 0.0, %v6705
        %v6707 = vpop.f32.mrf.mxu0
        %v6708 = vadd.f32 0.0, %v6707
        %6709 = vmatprep.mubr.f32.mxu0 %v6249
        %6710 = vmatmul.mubr.f32.gmra.mxu0 %v6248
        %v6711 = vpop.f32.mrf.mxu0
        %v6712 = vadd.f32 0.0, %v6711
        %v6713 = vpop.f32.mrf.mxu0
        %v6714 = vadd.f32 0.0, %v6713
        %6715 = vmatprep.mubr.f32.mxu0 %v6251
        %6716 = vmatmul.mubr.f32.gmra.mxu0 %v6250
        %v6717 = vpop.f32.mrf.mxu0
        %v6718 = vadd.f32 0.0, %v6717
        %v6719 = vpop.f32.mrf.mxu0
        %v6720 = vadd.f32 0.0, %v6719
        %6721 = vmatprep.mubr.f32.mxu0 %v6253
        %6722 = vmatmul.mubr.f32.gmra.mxu0 %v6252
        %v6723 = vpop.f32.mrf.mxu0
        %v6724 = vadd.f32 0.0, %v6723
        %v6725 = vpop.f32.mrf.mxu0
        %v6726 = vadd.f32 0.0, %v6725
        %6727 = vmatprep.mubr.f32.mxu0 %v6255
        %6728 = vmatmul.mubr.f32.gmra.mxu0 %v6254
        %v6729 = vpop.f32.mrf.mxu0
        %v6730 = vadd.f32 0.0, %v6729
        %v6731 = vpop.f32.mrf.mxu0
        %v6732 = vadd.f32 0.0, %v6731
        %6733 = vmatprep.mubr.f32.mxu0 %v6257
        %6734 = vmatmul.mubr.f32.gmra.mxu0 %v6256
        %v6735 = vpop.f32.mrf.mxu0
        %v6736 = vadd.f32 0.0, %v6735
        %v6737 = vpop.f32.mrf.mxu0
        %v6738 = vadd.f32 0.0, %v6737
        %6739 = vmatprep.mubr.f32.mxu0 %v6555
        %6740 = vmatmul.mubr.f32.gmra.mxu0 %v6554
        %v6741 = vpop.f32.mrf.mxu0
        %v6742 = vadd.f32 0.0, %v6741
        %v6743 = vpop.f32.mrf.mxu0
        %v6744 = vadd.f32 0.0, %v6743
        %6745 = vdwg.mxu0
        %v6746 = vadd.f32 %v6534, %v6688
        %v6747 = vadd.f32 %v6535, %v6690
        %v6748 = vadd.f32 %v6536, %v6694
        %v6749 = vadd.f32 %v6537, %v6696
        %v6750 = vadd.f32 %v6538, %v6700
        %v6751 = vadd.f32 %v6539, %v6702
        %v6752 = vadd.f32 %v6540, %v6706
        %v6753 = vadd.f32 %v6541, %v6708
        %v6754 = vadd.f32 %v6542, %v6712
        %v6755 = vadd.f32 %v6543, %v6714
        %v6756 = vadd.f32 %v6544, %v6718
        %v6757 = vadd.f32 %v6545, %v6720
        %v6758 = vadd.f32 %v6546, %v6724
        %v6759 = vadd.f32 %v6547, %v6726
        %v6760 = vadd.f32 %v6548, %v6730
        %v6761 = vadd.f32 %v6549, %v6732
        %v6762 = vadd.f32 %v6550, %v6736
        %v6763 = vadd.f32 %v6551, %v6738
        %v6764 = vadd.f32 %v6552, %v6742
        %v6765 = vadd.f32 %v6553, %v6744
        %v6766 = vld [vmem:[#allocation3 + $0x20] sm:$0xfe]
        %v6767 = vld [vmem:[#allocation3 + $0x28] sm:$0xfe]
        %v6768 = vld [vmem:[#allocation3 + $0x30] sm:$0xff]
        %v6769 = vld [vmem:[#allocation3 + $0x38] sm:$0xff]
        %v6770 = vld [vmem:[#allocation3 + $0x40] sm:$0xff]
        %v6771 = vld [vmem:[#allocation3 + $0x48] sm:$0xff]
        %v6772 = vld [vmem:[#allocation3 + $0x50] sm:$0xff]
        %v6773 = vld [vmem:[#allocation3 + $0x58] sm:$0xff]
        %v6774 = vld [vmem:[#allocation3 + $0x60] sm:$0xff]
        %v6775 = vld [vmem:[#allocation3 + $0x68] sm:$0xff]
        %v6776 = vld [vmem:[#allocation3 + $0x70] sm:$0xff]
        %v6777 = vld [vmem:[#allocation3 + $0x78] sm:$0xff]
        %v6778 = vld [vmem:[#allocation3 + $0x80] sm:$0xff]
        %v6779 = vld [vmem:[#allocation3 + $0x88] sm:$0xff]
        %v6780 = vld [vmem:[#allocation3 + $0x90] sm:$0xff]
        %v6781 = vld [vmem:[#allocation3 + $0x98] sm:$0xff]
        %v6782 = vld [vmem:[#allocation3 + $0xa0] sm:$0xff]
        %v6783 = vld [vmem:[#allocation3 + $0xa8] sm:$0xff]
        %v6784 = vld [vmem:[#allocation3 + $0xb0] sm:$0xff]
        %v6785 = vld [vmem:[#allocation3 + $0xb8] sm:$0xff]
        %v6786 = vld [vmem:[#allocation3 + $0xc0] sm:$0x1]
        %v6787 = vld [vmem:[#allocation3 + $0xc8] sm:$0x1]
        %s6788 = scalar_lea.vmem %s599, 2560 [#allocation14]
        %v6789 = vld [vmem:[%s6788] sm:$0xff]
        %v6790 = vld [vmem:[%s6788 + $0x8] sm:$0xff]
        %v6791 = vld [vmem:[%s6788 + $0x10] sm:$0xff]
        %v6792 = vld [vmem:[%s6788 + $0x18] sm:$0xff]
        %v6793 = vld [vmem:[%s6788 + $0x20] sm:$0xff]
        %v6794 = vld [vmem:[%s6788 + $0x28] sm:$0xff]
        %v6795 = vld [vmem:[%s6788 + $0x30] sm:$0xff]
        %v6796 = vld [vmem:[%s6788 + $0x38] sm:$0xff]
        %v6797 = vld [vmem:[%s6788 + $0x40] sm:$0xff]
        %v6798 = vld [vmem:[%s6788 + $0x48] sm:$0xff]
        %v6799 = vld [vmem:[%s6788 + $0x50] sm:$0xff]
        %v6800 = vld [vmem:[%s6788 + $0x58] sm:$0xff]
        %v6801 = vld [vmem:[%s6788 + $0x60] sm:$0xff]
        %v6802 = vld [vmem:[%s6788 + $0x68] sm:$0xff]
        %v6803 = vld [vmem:[%s6788 + $0x70] sm:$0xff]
        %v6804 = vld [vmem:[%s6788 + $0x78] sm:$0xff]
        %v6805 = vld [vmem:[%s6788 + $0x80] sm:$0xff]
        %v6806 = vld [vmem:[%s6788 + $0x88] sm:$0xff]
        %v6807 = vld [vmem:[%s6788 + $0x90] sm:$0xff]
        %v6808 = vld [vmem:[%s6788 + $0x98] sm:$0xff]
        %v6809 = vld [vmem:[%s6788 + $0xa0] sm:$0xff]
        %v6810 = vld [vmem:[%s6788 + $0xa8] sm:$0xff]
        %v6811 = vld [vmem:[%s6788 + $0xb0] sm:$0xff]
        %v6812 = vld [vmem:[%s6788 + $0xb8] sm:$0xff]
        %v6813 = vld [vmem:[%s6788 + $0xc0] sm:$0xff]
        %v6814 = vld [vmem:[%s6788 + $0xc8] sm:$0xff]
        %v6815 = vld [vmem:[%s6788 + $0xd0] sm:$0xff]
        %v6816 = vld [vmem:[%s6788 + $0xd8] sm:$0xff]
        %v6817 = vld [vmem:[%s6788 + $0xe0] sm:$0xff]
        %v6818 = vld [vmem:[%s6788 + $0xe8] sm:$0xff]
        %v6819 = vld [vmem:[%s6788 + $0xf0] sm:$0xff]
        %v6820 = vld [vmem:[%s6788 + $0xf8] sm:$0xff]
        %v6821 = vld [vmem:[%s6788 + $0x100] sm:$0xff]
        %v6822 = vld [vmem:[%s6788 + $0x108] sm:$0xff]
        %v6823 = vld [vmem:[%s6788 + $0x110] sm:$0xff]
        %v6824 = vld [vmem:[%s6788 + $0x118] sm:$0xff]
        %v6825 = vld [vmem:[%s6788 + $0x120] sm:$0xff]
        %v6826 = vld [vmem:[%s6788 + $0x128] sm:$0xff]
        %v6827 = vld [vmem:[%s6788 + $0x130] sm:$0xff]
        %v6828 = vld [vmem:[%s6788 + $0x138] sm:$0xff]
        %v6829 = vld [vmem:[%s6788 + $0x140] sm:$0xff]
        %v6830 = vld [vmem:[%s6788 + $0x148] sm:$0xff]
        %v6831 = vld [vmem:[%s6788 + $0x150] sm:$0xff]
        %v6832 = vld [vmem:[%s6788 + $0x158] sm:$0xff]
        %v6833 = vld [vmem:[%s6788 + $0x160] sm:$0xff]
        %v6834 = vld [vmem:[%s6788 + $0x168] sm:$0xff]
        %v6835 = vld [vmem:[%s6788 + $0x170] sm:$0xff]
        %v6836 = vld [vmem:[%s6788 + $0x178] sm:$0xff]
        %v6837 = vld [vmem:[%s6788 + $0x180] sm:$0xff]
        %v6838 = vld [vmem:[%s6788 + $0x188] sm:$0xff]
        %v6839 = vld [vmem:[%s6788 + $0x190] sm:$0xff]
        %v6840 = vld [vmem:[%s6788 + $0x198] sm:$0xff]
        %v6841 = vld [vmem:[%s6788 + $0x1a0] sm:$0xff]
        %v6842 = vld [vmem:[%s6788 + $0x1a8] sm:$0xff]
        %v6843 = vld [vmem:[%s6788 + $0x1b0] sm:$0xff]
        %v6844 = vld [vmem:[%s6788 + $0x1b8] sm:$0xff]
        %v6845 = vld [vmem:[%s6788 + $0x1c0] sm:$0xff]
        %v6846 = vld [vmem:[%s6788 + $0x1c8] sm:$0xff]
        %v6847 = vld [vmem:[%s6788 + $0x1d0] sm:$0xff]
        %v6848 = vld [vmem:[%s6788 + $0x1d8] sm:$0xff]
        %v6849 = vld [vmem:[%s6788 + $0x1e0] sm:$0xff]
        %v6850 = vld [vmem:[%s6788 + $0x1e8] sm:$0xff]
        %v6851 = vld [vmem:[%s6788 + $0x1f0] sm:$0xff]
        %v6852 = vld [vmem:[%s6788 + $0x1f8] sm:$0xff]
        %v6875 = vrot.slane %v6766, 1
        %v6876 = vrot.slane %v6768, 1
        %v6877 = vsel %vm4173, %v6875, %v6876
        %v6878 = vrot.slane %v6767, 1
        %v6879 = vrot.slane %v6769, 1
        %v6880 = vsel %vm4173, %v6878, %v6879
        %v6881 = vrot.slane %v6770, 1
        %v6882 = vsel %vm4173, %v6876, %v6881
        %v6883 = vrot.slane %v6771, 1
        %v6884 = vsel %vm4173, %v6879, %v6883
        %v6885 = vrot.slane %v6772, 1
        %v6886 = vsel %vm4173, %v6881, %v6885
        %v6887 = vrot.slane %v6773, 1
        %v6888 = vsel %vm4173, %v6883, %v6887
        %v6889 = vrot.slane %v6774, 1
        %v6890 = vsel %vm4173, %v6885, %v6889
        %v6891 = vrot.slane %v6775, 1
        %v6892 = vsel %vm4173, %v6887, %v6891
        %v6893 = vrot.slane %v6776, 1
        %v6894 = vsel %vm4173, %v6889, %v6893
        %v6895 = vrot.slane %v6777, 1
        %v6896 = vsel %vm4173, %v6891, %v6895
        %v6897 = vrot.slane %v6778, 1
        %v6898 = vsel %vm4173, %v6893, %v6897
        %v6899 = vrot.slane %v6779, 1
        %v6900 = vsel %vm4173, %v6895, %v6899
        %v6901 = vrot.slane %v6780, 1
        %v6902 = vsel %vm4173, %v6897, %v6901
        %v6903 = vrot.slane %v6781, 1
        %v6904 = vsel %vm4173, %v6899, %v6903
        %v6905 = vrot.slane %v6782, 1
        %v6906 = vsel %vm4173, %v6901, %v6905
        %v6907 = vrot.slane %v6783, 1
        %v6908 = vsel %vm4173, %v6903, %v6907
        %v6909 = vrot.slane %v6784, 1
        %v6910 = vsel %vm4173, %v6905, %v6909
        %v6911 = vrot.slane %v6785, 1
        %v6912 = vsel %vm4173, %v6907, %v6911
        %v6913 = vrot.slane %v6786, 1
        %v6914 = vsel %vm4173, %v6909, %v6913
        %v6915 = vrot.slane %v6787, 1
        %v6916 = vsel %vm4173, %v6911, %v6915
        %6937 = vmatprep.subr.mxu0 %v6820
        %6938 = vmatpush1.msra.mxu0 %v6819
        %6939 = vmatprep.subr.mxu0 %v6818
        %6940 = vmatpush1.msra.mxu0 %v6817
        %6941 = vmatprep.subr.mxu0 %v6816
        %6942 = vmatpush1.msra.mxu0 %v6815
        %6943 = vmatprep.subr.mxu0 %v6814
        %6944 = vmatpush1.msra.mxu0 %v6813
        %6945 = vmatprep.subr.mxu0 %v6812
        %6946 = vmatpush1.msra.mxu0 %v6811
        %6947 = vmatprep.subr.mxu0 %v6810
        %6948 = vmatpush1.msra.mxu0 %v6809
        %6949 = vmatprep.subr.mxu0 %v6808
        %6950 = vmatpush1.msra.mxu0 %v6807
        %6951 = vmatprep.subr.mxu0 %v6806
        %6952 = vmatpush1.msra.mxu0 %v6805
        %6953 = vmatprep.subr.mxu0 %v6804
        %6954 = vmatpush1.msra.mxu0 %v6803
        %6955 = vmatprep.subr.mxu0 %v6802
        %6956 = vmatpush1.msra.mxu0 %v6801
        %6957 = vmatprep.subr.mxu0 %v6800
        %6958 = vmatpush1.msra.mxu0 %v6799
        %6959 = vmatprep.subr.mxu0 %v6798
        %6960 = vmatpush1.msra.mxu0 %v6797
        %6961 = vmatprep.subr.mxu0 %v6796
        %6962 = vmatpush1.msra.mxu0 %v6795
        %6963 = vmatprep.subr.mxu0 %v6794
        %6964 = vmatpush1.msra.mxu0 %v6793
        %6965 = vmatprep.subr.mxu0 %v6792
        %6966 = vmatpush1.msra.mxu0 %v6791
        %6967 = vmatprep.subr.mxu0 %v6790
        %6968 = vmatpush1.msra.mxu0 %v6789
        %6969 = vmatprep.subr.mxu0 %v6852
        %6970 = vmatpush2.msra.mxu0 %v6851
        %6971 = vmatprep.subr.mxu0 %v6850
        %6972 = vmatpush2.msra.mxu0 %v6849
        %6973 = vmatprep.subr.mxu0 %v6848
        %6974 = vmatpush2.msra.mxu0 %v6847
        %6975 = vmatprep.subr.mxu0 %v6846
        %6976 = vmatpush2.msra.mxu0 %v6845
        %6977 = vmatprep.subr.mxu0 %v6844
        %6978 = vmatpush2.msra.mxu0 %v6843
        %6979 = vmatprep.subr.mxu0 %v6842
        %6980 = vmatpush2.msra.mxu0 %v6841
        %6981 = vmatprep.subr.mxu0 %v6840
        %6982 = vmatpush2.msra.mxu0 %v6839
        %6983 = vmatprep.subr.mxu0 %v6838
        %6984 = vmatpush2.msra.mxu0 %v6837
        %6985 = vmatprep.subr.mxu0 %v6836
        %6986 = vmatpush2.msra.mxu0 %v6835
        %6987 = vmatprep.subr.mxu0 %v6834
        %6988 = vmatpush2.msra.mxu0 %v6833
        %6989 = vmatprep.subr.mxu0 %v6832
        %6990 = vmatpush2.msra.mxu0 %v6831
        %6991 = vmatprep.subr.mxu0 %v6830
        %6992 = vmatpush2.msra.mxu0 %v6829
        %6993 = vmatprep.subr.mxu0 %v6828
        %6994 = vmatpush2.msra.mxu0 %v6827
        %6995 = vmatprep.subr.mxu0 %v6826
        %6996 = vmatpush2.msra.mxu0 %v6825
        %6997 = vmatprep.subr.mxu0 %v6824
        %6998 = vmatpush2.msra.mxu0 %v6823
        %6999 = vmatprep.subr.mxu0 %v6822
        %7000 = vmatpush2.msra.mxu0 %v6821
        %7001 = vmatprep.mubr.f32.mxu0 %v6880
        %7002 = vmatmul.mubr.f32.gmra.mxu0 %v6877
        %v7003 = vpop.f32.mrf.mxu0
        %v7004 = vadd.f32 0.0, %v7003
        %v7005 = vpop.f32.mrf.mxu0
        %v7006 = vadd.f32 0.0, %v7005
        %7007 = vmatprep.mubr.f32.mxu0 %v6884
        %7008 = vmatmul.mubr.f32.gmra.mxu0 %v6882
        %v7009 = vpop.f32.mrf.mxu0
        %v7010 = vadd.f32 0.0, %v7009
        %v7011 = vpop.f32.mrf.mxu0
        %v7012 = vadd.f32 0.0, %v7011
        %7013 = vmatprep.mubr.f32.mxu0 %v6888
        %7014 = vmatmul.mubr.f32.gmra.mxu0 %v6886
        %v7015 = vpop.f32.mrf.mxu0
        %v7016 = vadd.f32 0.0, %v7015
        %v7017 = vpop.f32.mrf.mxu0
        %v7018 = vadd.f32 0.0, %v7017
        %7019 = vmatprep.mubr.f32.mxu0 %v6892
        %7020 = vmatmul.mubr.f32.gmra.mxu0 %v6890
        %v7021 = vpop.f32.mrf.mxu0
        %v7022 = vadd.f32 0.0, %v7021
        %v7023 = vpop.f32.mrf.mxu0
        %v7024 = vadd.f32 0.0, %v7023
        %7025 = vmatprep.mubr.f32.mxu0 %v6896
        %7026 = vmatmul.mubr.f32.gmra.mxu0 %v6894
        %v7027 = vpop.f32.mrf.mxu0
        %v7028 = vadd.f32 0.0, %v7027
        %v7029 = vpop.f32.mrf.mxu0
        %v7030 = vadd.f32 0.0, %v7029
        %7031 = vmatprep.mubr.f32.mxu0 %v6900
        %7032 = vmatmul.mubr.f32.gmra.mxu0 %v6898
        %v7033 = vpop.f32.mrf.mxu0
        %v7034 = vadd.f32 0.0, %v7033
        %v7035 = vpop.f32.mrf.mxu0
        %v7036 = vadd.f32 0.0, %v7035
        %7037 = vmatprep.mubr.f32.mxu0 %v6904
        %7038 = vmatmul.mubr.f32.gmra.mxu0 %v6902
        %v7039 = vpop.f32.mrf.mxu0
        %v7040 = vadd.f32 0.0, %v7039
        %v7041 = vpop.f32.mrf.mxu0
        %v7042 = vadd.f32 0.0, %v7041
        %7043 = vmatprep.mubr.f32.mxu0 %v6908
        %7044 = vmatmul.mubr.f32.gmra.mxu0 %v6906
        %v7045 = vpop.f32.mrf.mxu0
        %v7046 = vadd.f32 0.0, %v7045
        %v7047 = vpop.f32.mrf.mxu0
        %v7048 = vadd.f32 0.0, %v7047
        %7049 = vmatprep.mubr.f32.mxu0 %v6912
        %7050 = vmatmul.mubr.f32.gmra.mxu0 %v6910
        %v7051 = vpop.f32.mrf.mxu0
        %v7052 = vadd.f32 0.0, %v7051
        %v7053 = vpop.f32.mrf.mxu0
        %v7054 = vadd.f32 0.0, %v7053
        %7055 = vmatprep.mubr.f32.mxu0 %v6916
        %7056 = vmatmul.mubr.f32.gmra.mxu0 %v6914
        %v7057 = vpop.f32.mrf.mxu0
        %v7058 = vadd.f32 0.0, %v7057
        %v7059 = vpop.f32.mrf.mxu0
        %v7060 = vadd.f32 0.0, %v7059
        %7061 = vdwg.mxu0
        %v7062 = vadd.f32 %v6746, %v7004
        %v7063 = vadd.f32 %v6747, %v7006
        %v7064 = vadd.f32 %v6748, %v7010
        %v7065 = vadd.f32 %v6749, %v7012
        %v7066 = vadd.f32 %v6750, %v7016
        %v7067 = vadd.f32 %v6751, %v7018
        %v7068 = vadd.f32 %v6752, %v7022
        %v7069 = vadd.f32 %v6753, %v7024
        %v7070 = vadd.f32 %v6754, %v7028
        %v7071 = vadd.f32 %v6755, %v7030
        %v7072 = vadd.f32 %v6756, %v7034
        %v7073 = vadd.f32 %v6757, %v7036
        %v7074 = vadd.f32 %v6758, %v7040
        %v7075 = vadd.f32 %v6759, %v7042
        %v7076 = vadd.f32 %v6760, %v7046
        %v7077 = vadd.f32 %v6761, %v7048
        %v7078 = vadd.f32 %v6762, %v7052
        %v7079 = vadd.f32 %v6763, %v7054
        %v7080 = vadd.f32 %v6764, %v7058
        %v7081 = vadd.f32 %v6765, %v7060
        %v7082 = vld [vmem:[#allocation3 + $0x30] sm:$0xfe]
        %v7083 = vld [vmem:[#allocation3 + $0x38] sm:$0xfe]
        %v7084 = vld [vmem:[#allocation3 + $0x40] sm:$0xff]
        %v7085 = vld [vmem:[#allocation3 + $0x48] sm:$0xff]
        %v7086 = vld [vmem:[#allocation3 + $0x50] sm:$0xff]
        %v7087 = vld [vmem:[#allocation3 + $0x58] sm:$0xff]
        %v7088 = vld [vmem:[#allocation3 + $0x60] sm:$0xff]
        %v7089 = vld [vmem:[#allocation3 + $0x68] sm:$0xff]
        %v7090 = vld [vmem:[#allocation3 + $0x70] sm:$0xff]
        %v7091 = vld [vmem:[#allocation3 + $0x78] sm:$0xff]
        %v7092 = vld [vmem:[#allocation3 + $0x80] sm:$0xff]
        %v7093 = vld [vmem:[#allocation3 + $0x88] sm:$0xff]
        %v7094 = vld [vmem:[#allocation3 + $0x90] sm:$0xff]
        %v7095 = vld [vmem:[#allocation3 + $0x98] sm:$0xff]
        %v7096 = vld [vmem:[#allocation3 + $0xa0] sm:$0xff]
        %v7097 = vld [vmem:[#allocation3 + $0xa8] sm:$0xff]
        %v7098 = vld [vmem:[#allocation3 + $0xb0] sm:$0xff]
        %v7099 = vld [vmem:[#allocation3 + $0xb8] sm:$0xff]
        %v7100 = vld [vmem:[#allocation3 + $0xc0] sm:$0xff]
        %v7101 = vld [vmem:[#allocation3 + $0xc8] sm:$0xff]
        %v7102 = vld [vmem:[#allocation3 + $0xd0] sm:$0x1]
        %v7103 = vld [vmem:[#allocation3 + $0xd8] sm:$0x1]
        %s7104 = scalar_lea.vmem %s599, 3072 [#allocation14]
        %v7105 = vld [vmem:[%s7104] sm:$0xff]
        %v7106 = vld [vmem:[%s7104 + $0x8] sm:$0xff]
        %v7107 = vld [vmem:[%s7104 + $0x10] sm:$0xff]
        %v7108 = vld [vmem:[%s7104 + $0x18] sm:$0xff]
        %v7109 = vld [vmem:[%s7104 + $0x20] sm:$0xff]
        %v7110 = vld [vmem:[%s7104 + $0x28] sm:$0xff]
        %v7111 = vld [vmem:[%s7104 + $0x30] sm:$0xff]
        %v7112 = vld [vmem:[%s7104 + $0x38] sm:$0xff]
        %v7113 = vld [vmem:[%s7104 + $0x40] sm:$0xff]
        %v7114 = vld [vmem:[%s7104 + $0x48] sm:$0xff]
        %v7115 = vld [vmem:[%s7104 + $0x50] sm:$0xff]
        %v7116 = vld [vmem:[%s7104 + $0x58] sm:$0xff]
        %v7117 = vld [vmem:[%s7104 + $0x60] sm:$0xff]
        %v7118 = vld [vmem:[%s7104 + $0x68] sm:$0xff]
        %v7119 = vld [vmem:[%s7104 + $0x70] sm:$0xff]
        %v7120 = vld [vmem:[%s7104 + $0x78] sm:$0xff]
        %v7121 = vld [vmem:[%s7104 + $0x80] sm:$0xff]
        %v7122 = vld [vmem:[%s7104 + $0x88] sm:$0xff]
        %v7123 = vld [vmem:[%s7104 + $0x90] sm:$0xff]
        %v7124 = vld [vmem:[%s7104 + $0x98] sm:$0xff]
        %v7125 = vld [vmem:[%s7104 + $0xa0] sm:$0xff]
        %v7126 = vld [vmem:[%s7104 + $0xa8] sm:$0xff]
        %v7127 = vld [vmem:[%s7104 + $0xb0] sm:$0xff]
        %v7128 = vld [vmem:[%s7104 + $0xb8] sm:$0xff]
        %v7129 = vld [vmem:[%s7104 + $0xc0] sm:$0xff]
        %v7130 = vld [vmem:[%s7104 + $0xc8] sm:$0xff]
        %v7131 = vld [vmem:[%s7104 + $0xd0] sm:$0xff]
        %v7132 = vld [vmem:[%s7104 + $0xd8] sm:$0xff]
        %v7133 = vld [vmem:[%s7104 + $0xe0] sm:$0xff]
        %v7134 = vld [vmem:[%s7104 + $0xe8] sm:$0xff]
        %v7135 = vld [vmem:[%s7104 + $0xf0] sm:$0xff]
        %v7136 = vld [vmem:[%s7104 + $0xf8] sm:$0xff]
        %v7137 = vld [vmem:[%s7104 + $0x100] sm:$0xff]
        %v7138 = vld [vmem:[%s7104 + $0x108] sm:$0xff]
        %v7139 = vld [vmem:[%s7104 + $0x110] sm:$0xff]
        %v7140 = vld [vmem:[%s7104 + $0x118] sm:$0xff]
        %v7141 = vld [vmem:[%s7104 + $0x120] sm:$0xff]
        %v7142 = vld [vmem:[%s7104 + $0x128] sm:$0xff]
        %v7143 = vld [vmem:[%s7104 + $0x130] sm:$0xff]
        %v7144 = vld [vmem:[%s7104 + $0x138] sm:$0xff]
        %v7145 = vld [vmem:[%s7104 + $0x140] sm:$0xff]
        %v7146 = vld [vmem:[%s7104 + $0x148] sm:$0xff]
        %v7147 = vld [vmem:[%s7104 + $0x150] sm:$0xff]
        %v7148 = vld [vmem:[%s7104 + $0x158] sm:$0xff]
        %v7149 = vld [vmem:[%s7104 + $0x160] sm:$0xff]
        %v7150 = vld [vmem:[%s7104 + $0x168] sm:$0xff]
        %v7151 = vld [vmem:[%s7104 + $0x170] sm:$0xff]
        %v7152 = vld [vmem:[%s7104 + $0x178] sm:$0xff]
        %v7153 = vld [vmem:[%s7104 + $0x180] sm:$0xff]
        %v7154 = vld [vmem:[%s7104 + $0x188] sm:$0xff]
        %v7155 = vld [vmem:[%s7104 + $0x190] sm:$0xff]
        %v7156 = vld [vmem:[%s7104 + $0x198] sm:$0xff]
        %v7157 = vld [vmem:[%s7104 + $0x1a0] sm:$0xff]
        %v7158 = vld [vmem:[%s7104 + $0x1a8] sm:$0xff]
        %v7159 = vld [vmem:[%s7104 + $0x1b0] sm:$0xff]
        %v7160 = vld [vmem:[%s7104 + $0x1b8] sm:$0xff]
        %v7161 = vld [vmem:[%s7104 + $0x1c0] sm:$0xff]
        %v7162 = vld [vmem:[%s7104 + $0x1c8] sm:$0xff]
        %v7163 = vld [vmem:[%s7104 + $0x1d0] sm:$0xff]
        %v7164 = vld [vmem:[%s7104 + $0x1d8] sm:$0xff]
        %v7165 = vld [vmem:[%s7104 + $0x1e0] sm:$0xff]
        %v7166 = vld [vmem:[%s7104 + $0x1e8] sm:$0xff]
        %v7167 = vld [vmem:[%s7104 + $0x1f0] sm:$0xff]
        %v7168 = vld [vmem:[%s7104 + $0x1f8] sm:$0xff]
        %v7191 = vrot.slane %v7082, 1
        %v7192 = vrot.slane %v7084, 1
        %v7193 = vsel %vm4173, %v7191, %v7192
        %v7194 = vrot.slane %v7083, 1
        %v7195 = vrot.slane %v7085, 1
        %v7196 = vsel %vm4173, %v7194, %v7195
        %v7197 = vrot.slane %v7086, 1
        %v7198 = vsel %vm4173, %v7192, %v7197
        %v7199 = vrot.slane %v7087, 1
        %v7200 = vsel %vm4173, %v7195, %v7199
        %v7201 = vrot.slane %v7088, 1
        %v7202 = vsel %vm4173, %v7197, %v7201
        %v7203 = vrot.slane %v7089, 1
        %v7204 = vsel %vm4173, %v7199, %v7203
        %v7205 = vrot.slane %v7090, 1
        %v7206 = vsel %vm4173, %v7201, %v7205
        %v7207 = vrot.slane %v7091, 1
        %v7208 = vsel %vm4173, %v7203, %v7207
        %v7209 = vrot.slane %v7092, 1
        %v7210 = vsel %vm4173, %v7205, %v7209
        %v7211 = vrot.slane %v7093, 1
        %v7212 = vsel %vm4173, %v7207, %v7211
        %v7213 = vrot.slane %v7094, 1
        %v7214 = vsel %vm4173, %v7209, %v7213
        %v7215 = vrot.slane %v7095, 1
        %v7216 = vsel %vm4173, %v7211, %v7215
        %v7217 = vrot.slane %v7096, 1
        %v7218 = vsel %vm4173, %v7213, %v7217
        %v7219 = vrot.slane %v7097, 1
        %v7220 = vsel %vm4173, %v7215, %v7219
        %v7221 = vrot.slane %v7098, 1
        %v7222 = vsel %vm4173, %v7217, %v7221
        %v7223 = vrot.slane %v7099, 1
        %v7224 = vsel %vm4173, %v7219, %v7223
        %v7225 = vrot.slane %v7100, 1
        %v7226 = vsel %vm4173, %v7221, %v7225
        %v7227 = vrot.slane %v7101, 1
        %v7228 = vsel %vm4173, %v7223, %v7227
        %v7229 = vrot.slane %v7102, 1
        %v7230 = vsel %vm4173, %v7225, %v7229
        %v7231 = vrot.slane %v7103, 1
        %v7232 = vsel %vm4173, %v7227, %v7231
        %7253 = vmatprep.subr.mxu0 %v7136
        %7254 = vmatpush1.msra.mxu0 %v7135
        %7255 = vmatprep.subr.mxu0 %v7134
        %7256 = vmatpush1.msra.mxu0 %v7133
        %7257 = vmatprep.subr.mxu0 %v7132
        %7258 = vmatpush1.msra.mxu0 %v7131
        %7259 = vmatprep.subr.mxu0 %v7130
        %7260 = vmatpush1.msra.mxu0 %v7129
        %7261 = vmatprep.subr.mxu0 %v7128
        %7262 = vmatpush1.msra.mxu0 %v7127
        %7263 = vmatprep.subr.mxu0 %v7126
        %7264 = vmatpush1.msra.mxu0 %v7125
        %7265 = vmatprep.subr.mxu0 %v7124
        %7266 = vmatpush1.msra.mxu0 %v7123
        %7267 = vmatprep.subr.mxu0 %v7122
        %7268 = vmatpush1.msra.mxu0 %v7121
        %7269 = vmatprep.subr.mxu0 %v7120
        %7270 = vmatpush1.msra.mxu0 %v7119
        %7271 = vmatprep.subr.mxu0 %v7118
        %7272 = vmatpush1.msra.mxu0 %v7117
        %7273 = vmatprep.subr.mxu0 %v7116
        %7274 = vmatpush1.msra.mxu0 %v7115
        %7275 = vmatprep.subr.mxu0 %v7114
        %7276 = vmatpush1.msra.mxu0 %v7113
        %7277 = vmatprep.subr.mxu0 %v7112
        %7278 = vmatpush1.msra.mxu0 %v7111
        %7279 = vmatprep.subr.mxu0 %v7110
        %7280 = vmatpush1.msra.mxu0 %v7109
        %7281 = vmatprep.subr.mxu0 %v7108
        %7282 = vmatpush1.msra.mxu0 %v7107
        %7283 = vmatprep.subr.mxu0 %v7106
        %7284 = vmatpush1.msra.mxu0 %v7105
        %7285 = vmatprep.subr.mxu0 %v7168
        %7286 = vmatpush2.msra.mxu0 %v7167
        %7287 = vmatprep.subr.mxu0 %v7166
        %7288 = vmatpush2.msra.mxu0 %v7165
        %7289 = vmatprep.subr.mxu0 %v7164
        %7290 = vmatpush2.msra.mxu0 %v7163
        %7291 = vmatprep.subr.mxu0 %v7162
        %7292 = vmatpush2.msra.mxu0 %v7161
        %7293 = vmatprep.subr.mxu0 %v7160
        %7294 = vmatpush2.msra.mxu0 %v7159
        %7295 = vmatprep.subr.mxu0 %v7158
        %7296 = vmatpush2.msra.mxu0 %v7157
        %7297 = vmatprep.subr.mxu0 %v7156
        %7298 = vmatpush2.msra.mxu0 %v7155
        %7299 = vmatprep.subr.mxu0 %v7154
        %7300 = vmatpush2.msra.mxu0 %v7153
        %7301 = vmatprep.subr.mxu0 %v7152
        %7302 = vmatpush2.msra.mxu0 %v7151
        %7303 = vmatprep.subr.mxu0 %v7150
        %7304 = vmatpush2.msra.mxu0 %v7149
        %7305 = vmatprep.subr.mxu0 %v7148
        %7306 = vmatpush2.msra.mxu0 %v7147
        %7307 = vmatprep.subr.mxu0 %v7146
        %7308 = vmatpush2.msra.mxu0 %v7145
        %7309 = vmatprep.subr.mxu0 %v7144
        %7310 = vmatpush2.msra.mxu0 %v7143
        %7311 = vmatprep.subr.mxu0 %v7142
        %7312 = vmatpush2.msra.mxu0 %v7141
        %7313 = vmatprep.subr.mxu0 %v7140
        %7314 = vmatpush2.msra.mxu0 %v7139
        %7315 = vmatprep.subr.mxu0 %v7138
        %7316 = vmatpush2.msra.mxu0 %v7137
        %7317 = vmatprep.mubr.f32.mxu0 %v7196
        %7318 = vmatmul.mubr.f32.gmra.mxu0 %v7193
        %v7319 = vpop.f32.mrf.mxu0
        %v7320 = vadd.f32 0.0, %v7319
        %v7321 = vpop.f32.mrf.mxu0
        %v7322 = vadd.f32 0.0, %v7321
        %7323 = vmatprep.mubr.f32.mxu0 %v7200
        %7324 = vmatmul.mubr.f32.gmra.mxu0 %v7198
        %v7325 = vpop.f32.mrf.mxu0
        %v7326 = vadd.f32 0.0, %v7325
        %v7327 = vpop.f32.mrf.mxu0
        %v7328 = vadd.f32 0.0, %v7327
        %7329 = vmatprep.mubr.f32.mxu0 %v7204
        %7330 = vmatmul.mubr.f32.gmra.mxu0 %v7202
        %v7331 = vpop.f32.mrf.mxu0
        %v7332 = vadd.f32 0.0, %v7331
        %v7333 = vpop.f32.mrf.mxu0
        %v7334 = vadd.f32 0.0, %v7333
        %7335 = vmatprep.mubr.f32.mxu0 %v7208
        %7336 = vmatmul.mubr.f32.gmra.mxu0 %v7206
        %v7337 = vpop.f32.mrf.mxu0
        %v7338 = vadd.f32 0.0, %v7337
        %v7339 = vpop.f32.mrf.mxu0
        %v7340 = vadd.f32 0.0, %v7339
        %7341 = vmatprep.mubr.f32.mxu0 %v7212
        %7342 = vmatmul.mubr.f32.gmra.mxu0 %v7210
        %v7343 = vpop.f32.mrf.mxu0
        %v7344 = vadd.f32 0.0, %v7343
        %v7345 = vpop.f32.mrf.mxu0
        %v7346 = vadd.f32 0.0, %v7345
        %7347 = vmatprep.mubr.f32.mxu0 %v7216
        %7348 = vmatmul.mubr.f32.gmra.mxu0 %v7214
        %v7349 = vpop.f32.mrf.mxu0
        %v7350 = vadd.f32 0.0, %v7349
        %v7351 = vpop.f32.mrf.mxu0
        %v7352 = vadd.f32 0.0, %v7351
        %7353 = vmatprep.mubr.f32.mxu0 %v7220
        %7354 = vmatmul.mubr.f32.gmra.mxu0 %v7218
        %v7355 = vpop.f32.mrf.mxu0
        %v7356 = vadd.f32 0.0, %v7355
        %v7357 = vpop.f32.mrf.mxu0
        %v7358 = vadd.f32 0.0, %v7357
        %7359 = vmatprep.mubr.f32.mxu0 %v7224
        %7360 = vmatmul.mubr.f32.gmra.mxu0 %v7222
        %v7361 = vpop.f32.mrf.mxu0
        %v7362 = vadd.f32 0.0, %v7361
        %v7363 = vpop.f32.mrf.mxu0
        %v7364 = vadd.f32 0.0, %v7363
        %7365 = vmatprep.mubr.f32.mxu0 %v7228
        %7366 = vmatmul.mubr.f32.gmra.mxu0 %v7226
        %v7367 = vpop.f32.mrf.mxu0
        %v7368 = vadd.f32 0.0, %v7367
        %v7369 = vpop.f32.mrf.mxu0
        %v7370 = vadd.f32 0.0, %v7369
        %7371 = vmatprep.mubr.f32.mxu0 %v7232
        %7372 = vmatmul.mubr.f32.gmra.mxu0 %v7230
        %v7373 = vpop.f32.mrf.mxu0
        %v7374 = vadd.f32 0.0, %v7373
        %v7375 = vpop.f32.mrf.mxu0
        %v7376 = vadd.f32 0.0, %v7375
        %7377 = vdwg.mxu0
        %v7378 = vadd.f32 %v7062, %v7320
        %v7379 = vadd.f32 %v7063, %v7322
        %v7380 = vadd.f32 %v7064, %v7326
        %v7381 = vadd.f32 %v7065, %v7328
        %v7382 = vadd.f32 %v7066, %v7332
        %v7383 = vadd.f32 %v7067, %v7334
        %v7384 = vadd.f32 %v7068, %v7338
        %v7385 = vadd.f32 %v7069, %v7340
        %v7386 = vadd.f32 %v7070, %v7344
        %v7387 = vadd.f32 %v7071, %v7346
        %v7388 = vadd.f32 %v7072, %v7350
        %v7389 = vadd.f32 %v7073, %v7352
        %v7390 = vadd.f32 %v7074, %v7356
        %v7391 = vadd.f32 %v7075, %v7358
        %v7392 = vadd.f32 %v7076, %v7362
        %v7393 = vadd.f32 %v7077, %v7364
        %v7394 = vadd.f32 %v7078, %v7368
        %v7395 = vadd.f32 %v7079, %v7370
        %v7396 = vadd.f32 %v7080, %v7374
        %v7397 = vadd.f32 %v7081, %v7376
        %v7398 = vld [vmem:[#allocation3 + $0x30] sm:$0xfc]
        %v7399 = vld [vmem:[#allocation3 + $0x38] sm:$0xfc]
        %v7400 = vld [vmem:[#allocation3 + $0xd0] sm:$0x3]
        %v7401 = vld [vmem:[#allocation3 + $0xd8] sm:$0x3]
        %s7402 = scalar_lea.vmem %s599, 3584 [#allocation14]
        %v7403 = vld [vmem:[%s7402] sm:$0xff]
        %v7404 = vld [vmem:[%s7402 + $0x8] sm:$0xff]
        %v7405 = vld [vmem:[%s7402 + $0x10] sm:$0xff]
        %v7406 = vld [vmem:[%s7402 + $0x18] sm:$0xff]
        %v7407 = vld [vmem:[%s7402 + $0x20] sm:$0xff]
        %v7408 = vld [vmem:[%s7402 + $0x28] sm:$0xff]
        %v7409 = vld [vmem:[%s7402 + $0x30] sm:$0xff]
        %v7410 = vld [vmem:[%s7402 + $0x38] sm:$0xff]
        %v7411 = vld [vmem:[%s7402 + $0x40] sm:$0xff]
        %v7412 = vld [vmem:[%s7402 + $0x48] sm:$0xff]
        %v7413 = vld [vmem:[%s7402 + $0x50] sm:$0xff]
        %v7414 = vld [vmem:[%s7402 + $0x58] sm:$0xff]
        %v7415 = vld [vmem:[%s7402 + $0x60] sm:$0xff]
        %v7416 = vld [vmem:[%s7402 + $0x68] sm:$0xff]
        %v7417 = vld [vmem:[%s7402 + $0x70] sm:$0xff]
        %v7418 = vld [vmem:[%s7402 + $0x78] sm:$0xff]
        %v7419 = vld [vmem:[%s7402 + $0x80] sm:$0xff]
        %v7420 = vld [vmem:[%s7402 + $0x88] sm:$0xff]
        %v7421 = vld [vmem:[%s7402 + $0x90] sm:$0xff]
        %v7422 = vld [vmem:[%s7402 + $0x98] sm:$0xff]
        %v7423 = vld [vmem:[%s7402 + $0xa0] sm:$0xff]
        %v7424 = vld [vmem:[%s7402 + $0xa8] sm:$0xff]
        %v7425 = vld [vmem:[%s7402 + $0xb0] sm:$0xff]
        %v7426 = vld [vmem:[%s7402 + $0xb8] sm:$0xff]
        %v7427 = vld [vmem:[%s7402 + $0xc0] sm:$0xff]
        %v7428 = vld [vmem:[%s7402 + $0xc8] sm:$0xff]
        %v7429 = vld [vmem:[%s7402 + $0xd0] sm:$0xff]
        %v7430 = vld [vmem:[%s7402 + $0xd8] sm:$0xff]
        %v7431 = vld [vmem:[%s7402 + $0xe0] sm:$0xff]
        %v7432 = vld [vmem:[%s7402 + $0xe8] sm:$0xff]
        %v7433 = vld [vmem:[%s7402 + $0xf0] sm:$0xff]
        %v7434 = vld [vmem:[%s7402 + $0xf8] sm:$0xff]
        %v7435 = vld [vmem:[%s7402 + $0x100] sm:$0xff]
        %v7436 = vld [vmem:[%s7402 + $0x108] sm:$0xff]
        %v7437 = vld [vmem:[%s7402 + $0x110] sm:$0xff]
        %v7438 = vld [vmem:[%s7402 + $0x118] sm:$0xff]
        %v7439 = vld [vmem:[%s7402 + $0x120] sm:$0xff]
        %v7440 = vld [vmem:[%s7402 + $0x128] sm:$0xff]
        %v7441 = vld [vmem:[%s7402 + $0x130] sm:$0xff]
        %v7442 = vld [vmem:[%s7402 + $0x138] sm:$0xff]
        %v7443 = vld [vmem:[%s7402 + $0x140] sm:$0xff]
        %v7444 = vld [vmem:[%s7402 + $0x148] sm:$0xff]
        %v7445 = vld [vmem:[%s7402 + $0x150] sm:$0xff]
        %v7446 = vld [vmem:[%s7402 + $0x158] sm:$0xff]
        %v7447 = vld [vmem:[%s7402 + $0x160] sm:$0xff]
        %v7448 = vld [vmem:[%s7402 + $0x168] sm:$0xff]
        %v7449 = vld [vmem:[%s7402 + $0x170] sm:$0xff]
        %v7450 = vld [vmem:[%s7402 + $0x178] sm:$0xff]
        %v7451 = vld [vmem:[%s7402 + $0x180] sm:$0xff]
        %v7452 = vld [vmem:[%s7402 + $0x188] sm:$0xff]
        %v7453 = vld [vmem:[%s7402 + $0x190] sm:$0xff]
        %v7454 = vld [vmem:[%s7402 + $0x198] sm:$0xff]
        %v7455 = vld [vmem:[%s7402 + $0x1a0] sm:$0xff]
        %v7456 = vld [vmem:[%s7402 + $0x1a8] sm:$0xff]
        %v7457 = vld [vmem:[%s7402 + $0x1b0] sm:$0xff]
        %v7458 = vld [vmem:[%s7402 + $0x1b8] sm:$0xff]
        %v7459 = vld [vmem:[%s7402 + $0x1c0] sm:$0xff]
        %v7460 = vld [vmem:[%s7402 + $0x1c8] sm:$0xff]
        %v7461 = vld [vmem:[%s7402 + $0x1d0] sm:$0xff]
        %v7462 = vld [vmem:[%s7402 + $0x1d8] sm:$0xff]
        %v7463 = vld [vmem:[%s7402 + $0x1e0] sm:$0xff]
        %v7464 = vld [vmem:[%s7402 + $0x1e8] sm:$0xff]
        %v7465 = vld [vmem:[%s7402 + $0x1f0] sm:$0xff]
        %v7466 = vld [vmem:[%s7402 + $0x1f8] sm:$0xff]
        %v7471 = vrot.slane %v7398, 2
        %v7472 = vrot.slane %v7084, 2
        %v7473 = vsel %vm4770, %v7471, %v7472
        %v7474 = vrot.slane %v7399, 2
        %v7475 = vrot.slane %v7085, 2
        %v7476 = vsel %vm4770, %v7474, %v7475
        %v7477 = vrot.slane %v7086, 2
        %v7478 = vsel %vm4770, %v7472, %v7477
        %v7479 = vrot.slane %v7087, 2
        %v7480 = vsel %vm4770, %v7475, %v7479
        %v7481 = vrot.slane %v7088, 2
        %v7482 = vsel %vm4770, %v7477, %v7481
        %v7483 = vrot.slane %v7089, 2
        %v7484 = vsel %vm4770, %v7479, %v7483
        %v7485 = vrot.slane %v7090, 2
        %v7486 = vsel %vm4770, %v7481, %v7485
        %v7487 = vrot.slane %v7091, 2
        %v7488 = vsel %vm4770, %v7483, %v7487
        %v7489 = vrot.slane %v7092, 2
        %v7490 = vsel %vm4770, %v7485, %v7489
        %v7491 = vrot.slane %v7093, 2
        %v7492 = vsel %vm4770, %v7487, %v7491
        %v7493 = vrot.slane %v7094, 2
        %v7494 = vsel %vm4770, %v7489, %v7493
        %v7495 = vrot.slane %v7095, 2
        %v7496 = vsel %vm4770, %v7491, %v7495
        %v7497 = vrot.slane %v7096, 2
        %v7498 = vsel %vm4770, %v7493, %v7497
        %v7499 = vrot.slane %v7097, 2
        %v7500 = vsel %vm4770, %v7495, %v7499
        %v7501 = vrot.slane %v7098, 2
        %v7502 = vsel %vm4770, %v7497, %v7501
        %v7503 = vrot.slane %v7099, 2
        %v7504 = vsel %vm4770, %v7499, %v7503
        %v7505 = vrot.slane %v7100, 2
        %v7506 = vsel %vm4770, %v7501, %v7505
        %v7507 = vrot.slane %v7101, 2
        %v7508 = vsel %vm4770, %v7503, %v7507
        %v7509 = vrot.slane %v7400, 2
        %v7510 = vsel %vm4770, %v7505, %v7509
        %v7511 = vrot.slane %v7401, 2
        %v7512 = vsel %vm4770, %v7507, %v7511
        %7533 = vmatprep.subr.mxu0 %v7434
        %7534 = vmatpush1.msra.mxu0 %v7433
        %7535 = vmatprep.subr.mxu0 %v7432
        %7536 = vmatpush1.msra.mxu0 %v7431
        %7537 = vmatprep.subr.mxu0 %v7430
        %7538 = vmatpush1.msra.mxu0 %v7429
        %7539 = vmatprep.subr.mxu0 %v7428
        %7540 = vmatpush1.msra.mxu0 %v7427
        %7541 = vmatprep.subr.mxu0 %v7426
        %7542 = vmatpush1.msra.mxu0 %v7425
        %7543 = vmatprep.subr.mxu0 %v7424
        %7544 = vmatpush1.msra.mxu0 %v7423
        %7545 = vmatprep.subr.mxu0 %v7422
        %7546 = vmatpush1.msra.mxu0 %v7421
        %7547 = vmatprep.subr.mxu0 %v7420
        %7548 = vmatpush1.msra.mxu0 %v7419
        %7549 = vmatprep.subr.mxu0 %v7418
        %7550 = vmatpush1.msra.mxu0 %v7417
        %7551 = vmatprep.subr.mxu0 %v7416
        %7552 = vmatpush1.msra.mxu0 %v7415
        %7553 = vmatprep.subr.mxu0 %v7414
        %7554 = vmatpush1.msra.mxu0 %v7413
        %7555 = vmatprep.subr.mxu0 %v7412
        %7556 = vmatpush1.msra.mxu0 %v7411
        %7557 = vmatprep.subr.mxu0 %v7410
        %7558 = vmatpush1.msra.mxu0 %v7409
        %7559 = vmatprep.subr.mxu0 %v7408
        %7560 = vmatpush1.msra.mxu0 %v7407
        %7561 = vmatprep.subr.mxu0 %v7406
        %7562 = vmatpush1.msra.mxu0 %v7405
        %7563 = vmatprep.subr.mxu0 %v7404
        %7564 = vmatpush1.msra.mxu0 %v7403
        %7565 = vmatprep.subr.mxu0 %v7466
        %7566 = vmatpush2.msra.mxu0 %v7465
        %7567 = vmatprep.subr.mxu0 %v7464
        %7568 = vmatpush2.msra.mxu0 %v7463
        %7569 = vmatprep.subr.mxu0 %v7462
        %7570 = vmatpush2.msra.mxu0 %v7461
        %7571 = vmatprep.subr.mxu0 %v7460
        %7572 = vmatpush2.msra.mxu0 %v7459
        %7573 = vmatprep.subr.mxu0 %v7458
        %7574 = vmatpush2.msra.mxu0 %v7457
        %7575 = vmatprep.subr.mxu0 %v7456
        %7576 = vmatpush2.msra.mxu0 %v7455
        %7577 = vmatprep.subr.mxu0 %v7454
        %7578 = vmatpush2.msra.mxu0 %v7453
        %7579 = vmatprep.subr.mxu0 %v7452
        %7580 = vmatpush2.msra.mxu0 %v7451
        %7581 = vmatprep.subr.mxu0 %v7450
        %7582 = vmatpush2.msra.mxu0 %v7449
        %7583 = vmatprep.subr.mxu0 %v7448
        %7584 = vmatpush2.msra.mxu0 %v7447
        %7585 = vmatprep.subr.mxu0 %v7446
        %7586 = vmatpush2.msra.mxu0 %v7445
        %7587 = vmatprep.subr.mxu0 %v7444
        %7588 = vmatpush2.msra.mxu0 %v7443
        %7589 = vmatprep.subr.mxu0 %v7442
        %7590 = vmatpush2.msra.mxu0 %v7441
        %7591 = vmatprep.subr.mxu0 %v7440
        %7592 = vmatpush2.msra.mxu0 %v7439
        %7593 = vmatprep.subr.mxu0 %v7438
        %7594 = vmatpush2.msra.mxu0 %v7437
        %7595 = vmatprep.subr.mxu0 %v7436
        %7596 = vmatpush2.msra.mxu0 %v7435
        %7597 = vmatprep.mubr.f32.mxu0 %v7476
        %7598 = vmatmul.mubr.f32.gmra.mxu0 %v7473
        %v7599 = vpop.f32.mrf.mxu0
        %v7600 = vadd.f32 0.0, %v7599
        %v7601 = vpop.f32.mrf.mxu0
        %v7602 = vadd.f32 0.0, %v7601
        %7603 = vmatprep.mubr.f32.mxu0 %v7480
        %7604 = vmatmul.mubr.f32.gmra.mxu0 %v7478
        %v7605 = vpop.f32.mrf.mxu0
        %v7606 = vadd.f32 0.0, %v7605
        %v7607 = vpop.f32.mrf.mxu0
        %v7608 = vadd.f32 0.0, %v7607
        %7609 = vmatprep.mubr.f32.mxu0 %v7484
        %7610 = vmatmul.mubr.f32.gmra.mxu0 %v7482
        %v7611 = vpop.f32.mrf.mxu0
        %v7612 = vadd.f32 0.0, %v7611
        %v7613 = vpop.f32.mrf.mxu0
        %v7614 = vadd.f32 0.0, %v7613
        %7615 = vmatprep.mubr.f32.mxu0 %v7488
        %7616 = vmatmul.mubr.f32.gmra.mxu0 %v7486
        %v7617 = vpop.f32.mrf.mxu0
        %v7618 = vadd.f32 0.0, %v7617
        %v7619 = vpop.f32.mrf.mxu0
        %v7620 = vadd.f32 0.0, %v7619
        %7621 = vmatprep.mubr.f32.mxu0 %v7492
        %7622 = vmatmul.mubr.f32.gmra.mxu0 %v7490
        %v7623 = vpop.f32.mrf.mxu0
        %v7624 = vadd.f32 0.0, %v7623
        %v7625 = vpop.f32.mrf.mxu0
        %v7626 = vadd.f32 0.0, %v7625
        %7627 = vmatprep.mubr.f32.mxu0 %v7496
        %7628 = vmatmul.mubr.f32.gmra.mxu0 %v7494
        %v7629 = vpop.f32.mrf.mxu0
        %v7630 = vadd.f32 0.0, %v7629
        %v7631 = vpop.f32.mrf.mxu0
        %v7632 = vadd.f32 0.0, %v7631
        %7633 = vmatprep.mubr.f32.mxu0 %v7500
        %7634 = vmatmul.mubr.f32.gmra.mxu0 %v7498
        %v7635 = vpop.f32.mrf.mxu0
        %v7636 = vadd.f32 0.0, %v7635
        %v7637 = vpop.f32.mrf.mxu0
        %v7638 = vadd.f32 0.0, %v7637
        %7639 = vmatprep.mubr.f32.mxu0 %v7504
        %7640 = vmatmul.mubr.f32.gmra.mxu0 %v7502
        %v7641 = vpop.f32.mrf.mxu0
        %v7642 = vadd.f32 0.0, %v7641
        %v7643 = vpop.f32.mrf.mxu0
        %v7644 = vadd.f32 0.0, %v7643
        %7645 = vmatprep.mubr.f32.mxu0 %v7508
        %7646 = vmatmul.mubr.f32.gmra.mxu0 %v7506
        %v7647 = vpop.f32.mrf.mxu0
        %v7648 = vadd.f32 0.0, %v7647
        %v7649 = vpop.f32.mrf.mxu0
        %v7650 = vadd.f32 0.0, %v7649
        %7651 = vmatprep.mubr.f32.mxu0 %v7512
        %7652 = vmatmul.mubr.f32.gmra.mxu0 %v7510
        %v7653 = vpop.f32.mrf.mxu0
        %v7654 = vadd.f32 0.0, %v7653
        %v7655 = vpop.f32.mrf.mxu0
        %v7656 = vadd.f32 0.0, %v7655
        %7657 = vdwg.mxu0
        %v7658 = vadd.f32 %v7378, %v7600
        %v7659 = vadd.f32 %v7379, %v7602
        %v7660 = vadd.f32 %v7380, %v7606
        %v7661 = vadd.f32 %v7381, %v7608
        %v7662 = vadd.f32 %v7382, %v7612
        %v7663 = vadd.f32 %v7383, %v7614
        %v7664 = vadd.f32 %v7384, %v7618
        %v7665 = vadd.f32 %v7385, %v7620
        %v7666 = vadd.f32 %v7386, %v7624
        %v7667 = vadd.f32 %v7387, %v7626
        %v7668 = vadd.f32 %v7388, %v7630
        %v7669 = vadd.f32 %v7389, %v7632
        %v7670 = vadd.f32 %v7390, %v7636
        %v7671 = vadd.f32 %v7391, %v7638
        %v7672 = vadd.f32 %v7392, %v7642
        %v7673 = vadd.f32 %v7393, %v7644
        %v7674 = vadd.f32 %v7394, %v7648
        %v7675 = vadd.f32 %v7395, %v7650
        %v7676 = vadd.f32 %v7396, %v7654
        %v7677 = vadd.f32 %v7397, %v7656
        %v7678 = vld [vmem:[#allocation3 + $0x30] sm:$0xf8]
        %v7679 = vld [vmem:[#allocation3 + $0x38] sm:$0xf8]
        %v7680 = vld [vmem:[#allocation3 + $0xd0] sm:$0x7]
        %v7681 = vld [vmem:[#allocation3 + $0xd8] sm:$0x7]
        %s7682 = scalar_lea.vmem %s599, 4096 [#allocation14]
        %v7683 = vld [vmem:[%s7682] sm:$0xff]
        %v7684 = vld [vmem:[%s7682 + $0x8] sm:$0xff]
        %v7685 = vld [vmem:[%s7682 + $0x10] sm:$0xff]
        %v7686 = vld [vmem:[%s7682 + $0x18] sm:$0xff]
        %v7687 = vld [vmem:[%s7682 + $0x20] sm:$0xff]
        %v7688 = vld [vmem:[%s7682 + $0x28] sm:$0xff]
        %v7689 = vld [vmem:[%s7682 + $0x30] sm:$0xff]
        %v7690 = vld [vmem:[%s7682 + $0x38] sm:$0xff]
        %v7691 = vld [vmem:[%s7682 + $0x40] sm:$0xff]
        %v7692 = vld [vmem:[%s7682 + $0x48] sm:$0xff]
        %v7693 = vld [vmem:[%s7682 + $0x50] sm:$0xff]
        %v7694 = vld [vmem:[%s7682 + $0x58] sm:$0xff]
        %v7695 = vld [vmem:[%s7682 + $0x60] sm:$0xff]
        %v7696 = vld [vmem:[%s7682 + $0x68] sm:$0xff]
        %v7697 = vld [vmem:[%s7682 + $0x70] sm:$0xff]
        %v7698 = vld [vmem:[%s7682 + $0x78] sm:$0xff]
        %v7699 = vld [vmem:[%s7682 + $0x80] sm:$0xff]
        %v7700 = vld [vmem:[%s7682 + $0x88] sm:$0xff]
        %v7701 = vld [vmem:[%s7682 + $0x90] sm:$0xff]
        %v7702 = vld [vmem:[%s7682 + $0x98] sm:$0xff]
        %v7703 = vld [vmem:[%s7682 + $0xa0] sm:$0xff]
        %v7704 = vld [vmem:[%s7682 + $0xa8] sm:$0xff]
        %v7705 = vld [vmem:[%s7682 + $0xb0] sm:$0xff]
        %v7706 = vld [vmem:[%s7682 + $0xb8] sm:$0xff]
        %v7707 = vld [vmem:[%s7682 + $0xc0] sm:$0xff]
        %v7708 = vld [vmem:[%s7682 + $0xc8] sm:$0xff]
        %v7709 = vld [vmem:[%s7682 + $0xd0] sm:$0xff]
        %v7710 = vld [vmem:[%s7682 + $0xd8] sm:$0xff]
        %v7711 = vld [vmem:[%s7682 + $0xe0] sm:$0xff]
        %v7712 = vld [vmem:[%s7682 + $0xe8] sm:$0xff]
        %v7713 = vld [vmem:[%s7682 + $0xf0] sm:$0xff]
        %v7714 = vld [vmem:[%s7682 + $0xf8] sm:$0xff]
        %v7715 = vld [vmem:[%s7682 + $0x100] sm:$0xff]
        %v7716 = vld [vmem:[%s7682 + $0x108] sm:$0xff]
        %v7717 = vld [vmem:[%s7682 + $0x110] sm:$0xff]
        %v7718 = vld [vmem:[%s7682 + $0x118] sm:$0xff]
        %v7719 = vld [vmem:[%s7682 + $0x120] sm:$0xff]
        %v7720 = vld [vmem:[%s7682 + $0x128] sm:$0xff]
        %v7721 = vld [vmem:[%s7682 + $0x130] sm:$0xff]
        %v7722 = vld [vmem:[%s7682 + $0x138] sm:$0xff]
        %v7723 = vld [vmem:[%s7682 + $0x140] sm:$0xff]
        %v7724 = vld [vmem:[%s7682 + $0x148] sm:$0xff]
        %v7725 = vld [vmem:[%s7682 + $0x150] sm:$0xff]
        %v7726 = vld [vmem:[%s7682 + $0x158] sm:$0xff]
        %v7727 = vld [vmem:[%s7682 + $0x160] sm:$0xff]
        %v7728 = vld [vmem:[%s7682 + $0x168] sm:$0xff]
        %v7729 = vld [vmem:[%s7682 + $0x170] sm:$0xff]
        %v7730 = vld [vmem:[%s7682 + $0x178] sm:$0xff]
        %v7731 = vld [vmem:[%s7682 + $0x180] sm:$0xff]
        %v7732 = vld [vmem:[%s7682 + $0x188] sm:$0xff]
        %v7733 = vld [vmem:[%s7682 + $0x190] sm:$0xff]
        %v7734 = vld [vmem:[%s7682 + $0x198] sm:$0xff]
        %v7735 = vld [vmem:[%s7682 + $0x1a0] sm:$0xff]
        %v7736 = vld [vmem:[%s7682 + $0x1a8] sm:$0xff]
        %v7737 = vld [vmem:[%s7682 + $0x1b0] sm:$0xff]
        %v7738 = vld [vmem:[%s7682 + $0x1b8] sm:$0xff]
        %v7739 = vld [vmem:[%s7682 + $0x1c0] sm:$0xff]
        %v7740 = vld [vmem:[%s7682 + $0x1c8] sm:$0xff]
        %v7741 = vld [vmem:[%s7682 + $0x1d0] sm:$0xff]
        %v7742 = vld [vmem:[%s7682 + $0x1d8] sm:$0xff]
        %v7743 = vld [vmem:[%s7682 + $0x1e0] sm:$0xff]
        %v7744 = vld [vmem:[%s7682 + $0x1e8] sm:$0xff]
        %v7745 = vld [vmem:[%s7682 + $0x1f0] sm:$0xff]
        %v7746 = vld [vmem:[%s7682 + $0x1f8] sm:$0xff]
        %v7751 = vrot.slane %v7678, 3
        %v7752 = vrot.slane %v7084, 3
        %v7753 = vsel %vm5051, %v7751, %v7752
        %v7754 = vrot.slane %v7679, 3
        %v7755 = vrot.slane %v7085, 3
        %v7756 = vsel %vm5051, %v7754, %v7755
        %v7757 = vrot.slane %v7086, 3
        %v7758 = vsel %vm5051, %v7752, %v7757
        %v7759 = vrot.slane %v7087, 3
        %v7760 = vsel %vm5051, %v7755, %v7759
        %v7761 = vrot.slane %v7088, 3
        %v7762 = vsel %vm5051, %v7757, %v7761
        %v7763 = vrot.slane %v7089, 3
        %v7764 = vsel %vm5051, %v7759, %v7763
        %v7765 = vrot.slane %v7090, 3
        %v7766 = vsel %vm5051, %v7761, %v7765
        %v7767 = vrot.slane %v7091, 3
        %v7768 = vsel %vm5051, %v7763, %v7767
        %v7769 = vrot.slane %v7092, 3
        %v7770 = vsel %vm5051, %v7765, %v7769
        %v7771 = vrot.slane %v7093, 3
        %v7772 = vsel %vm5051, %v7767, %v7771
        %v7773 = vrot.slane %v7094, 3
        %v7774 = vsel %vm5051, %v7769, %v7773
        %v7775 = vrot.slane %v7095, 3
        %v7776 = vsel %vm5051, %v7771, %v7775
        %v7777 = vrot.slane %v7096, 3
        %v7778 = vsel %vm5051, %v7773, %v7777
        %v7779 = vrot.slane %v7097, 3
        %v7780 = vsel %vm5051, %v7775, %v7779
        %v7781 = vrot.slane %v7098, 3
        %v7782 = vsel %vm5051, %v7777, %v7781
        %v7783 = vrot.slane %v7099, 3
        %v7784 = vsel %vm5051, %v7779, %v7783
        %v7785 = vrot.slane %v7100, 3
        %v7786 = vsel %vm5051, %v7781, %v7785
        %v7787 = vrot.slane %v7101, 3
        %v7788 = vsel %vm5051, %v7783, %v7787
        %v7789 = vrot.slane %v7680, 3
        %v7790 = vsel %vm5051, %v7785, %v7789
        %v7791 = vrot.slane %v7681, 3
        %v7792 = vsel %vm5051, %v7787, %v7791
        %7813 = vmatprep.subr.mxu0 %v7714
        %7814 = vmatpush1.msra.mxu0 %v7713
        %7815 = vmatprep.subr.mxu0 %v7712
        %7816 = vmatpush1.msra.mxu0 %v7711
        %7817 = vmatprep.subr.mxu0 %v7710
        %7818 = vmatpush1.msra.mxu0 %v7709
        %7819 = vmatprep.subr.mxu0 %v7708
        %7820 = vmatpush1.msra.mxu0 %v7707
        %7821 = vmatprep.subr.mxu0 %v7706
        %7822 = vmatpush1.msra.mxu0 %v7705
        %7823 = vmatprep.subr.mxu0 %v7704
        %7824 = vmatpush1.msra.mxu0 %v7703
        %7825 = vmatprep.subr.mxu0 %v7702
        %7826 = vmatpush1.msra.mxu0 %v7701
        %7827 = vmatprep.subr.mxu0 %v7700
        %7828 = vmatpush1.msra.mxu0 %v7699
        %7829 = vmatprep.subr.mxu0 %v7698
        %7830 = vmatpush1.msra.mxu0 %v7697
        %7831 = vmatprep.subr.mxu0 %v7696
        %7832 = vmatpush1.msra.mxu0 %v7695
        %7833 = vmatprep.subr.mxu0 %v7694
        %7834 = vmatpush1.msra.mxu0 %v7693
        %7835 = vmatprep.subr.mxu0 %v7692
        %7836 = vmatpush1.msra.mxu0 %v7691
        %7837 = vmatprep.subr.mxu0 %v7690
        %7838 = vmatpush1.msra.mxu0 %v7689
        %7839 = vmatprep.subr.mxu0 %v7688
        %7840 = vmatpush1.msra.mxu0 %v7687
        %7841 = vmatprep.subr.mxu0 %v7686
        %7842 = vmatpush1.msra.mxu0 %v7685
        %7843 = vmatprep.subr.mxu0 %v7684
        %7844 = vmatpush1.msra.mxu0 %v7683
        %7845 = vmatprep.subr.mxu0 %v7746
        %7846 = vmatpush2.msra.mxu0 %v7745
        %7847 = vmatprep.subr.mxu0 %v7744
        %7848 = vmatpush2.msra.mxu0 %v7743
        %7849 = vmatprep.subr.mxu0 %v7742
        %7850 = vmatpush2.msra.mxu0 %v7741
        %7851 = vmatprep.subr.mxu0 %v7740
        %7852 = vmatpush2.msra.mxu0 %v7739
        %7853 = vmatprep.subr.mxu0 %v7738
        %7854 = vmatpush2.msra.mxu0 %v7737
        %7855 = vmatprep.subr.mxu0 %v7736
        %7856 = vmatpush2.msra.mxu0 %v7735
        %7857 = vmatprep.subr.mxu0 %v7734
        %7858 = vmatpush2.msra.mxu0 %v7733
        %7859 = vmatprep.subr.mxu0 %v7732
        %7860 = vmatpush2.msra.mxu0 %v7731
        %7861 = vmatprep.subr.mxu0 %v7730
        %7862 = vmatpush2.msra.mxu0 %v7729
        %7863 = vmatprep.subr.mxu0 %v7728
        %7864 = vmatpush2.msra.mxu0 %v7727
        %7865 = vmatprep.subr.mxu0 %v7726
        %7866 = vmatpush2.msra.mxu0 %v7725
        %7867 = vmatprep.subr.mxu0 %v7724
        %7868 = vmatpush2.msra.mxu0 %v7723
        %7869 = vmatprep.subr.mxu0 %v7722
        %7870 = vmatpush2.msra.mxu0 %v7721
        %7871 = vmatprep.subr.mxu0 %v7720
        %7872 = vmatpush2.msra.mxu0 %v7719
        %7873 = vmatprep.subr.mxu0 %v7718
        %7874 = vmatpush2.msra.mxu0 %v7717
        %7875 = vmatprep.subr.mxu0 %v7716
        %7876 = vmatpush2.msra.mxu0 %v7715
        %7877 = vmatprep.mubr.f32.mxu0 %v7756
        %7878 = vmatmul.mubr.f32.gmra.mxu0 %v7753
        %v7879 = vpop.f32.mrf.mxu0
        %v7880 = vadd.f32 0.0, %v7879
        %v7881 = vpop.f32.mrf.mxu0
        %v7882 = vadd.f32 0.0, %v7881
        %7883 = vmatprep.mubr.f32.mxu0 %v7760
        %7884 = vmatmul.mubr.f32.gmra.mxu0 %v7758
        %v7885 = vpop.f32.mrf.mxu0
        %v7886 = vadd.f32 0.0, %v7885
        %v7887 = vpop.f32.mrf.mxu0
        %v7888 = vadd.f32 0.0, %v7887
        %7889 = vmatprep.mubr.f32.mxu0 %v7764
        %7890 = vmatmul.mubr.f32.gmra.mxu0 %v7762
        %v7891 = vpop.f32.mrf.mxu0
        %v7892 = vadd.f32 0.0, %v7891
        %v7893 = vpop.f32.mrf.mxu0
        %v7894 = vadd.f32 0.0, %v7893
        %7895 = vmatprep.mubr.f32.mxu0 %v7768
        %7896 = vmatmul.mubr.f32.gmra.mxu0 %v7766
        %v7897 = vpop.f32.mrf.mxu0
        %v7898 = vadd.f32 0.0, %v7897
        %v7899 = vpop.f32.mrf.mxu0
        %v7900 = vadd.f32 0.0, %v7899
        %7901 = vmatprep.mubr.f32.mxu0 %v7772
        %7902 = vmatmul.mubr.f32.gmra.mxu0 %v7770
        %v7903 = vpop.f32.mrf.mxu0
        %v7904 = vadd.f32 0.0, %v7903
        %v7905 = vpop.f32.mrf.mxu0
        %v7906 = vadd.f32 0.0, %v7905
        %7907 = vmatprep.mubr.f32.mxu0 %v7776
        %7908 = vmatmul.mubr.f32.gmra.mxu0 %v7774
        %v7909 = vpop.f32.mrf.mxu0
        %v7910 = vadd.f32 0.0, %v7909
        %v7911 = vpop.f32.mrf.mxu0
        %v7912 = vadd.f32 0.0, %v7911
        %7913 = vmatprep.mubr.f32.mxu0 %v7780
        %7914 = vmatmul.mubr.f32.gmra.mxu0 %v7778
        %v7915 = vpop.f32.mrf.mxu0
        %v7916 = vadd.f32 0.0, %v7915
        %v7917 = vpop.f32.mrf.mxu0
        %v7918 = vadd.f32 0.0, %v7917
        %7919 = vmatprep.mubr.f32.mxu0 %v7784
        %7920 = vmatmul.mubr.f32.gmra.mxu0 %v7782
        %v7921 = vpop.f32.mrf.mxu0
        %v7922 = vadd.f32 0.0, %v7921
        %v7923 = vpop.f32.mrf.mxu0
        %v7924 = vadd.f32 0.0, %v7923
        %7925 = vmatprep.mubr.f32.mxu0 %v7788
        %7926 = vmatmul.mubr.f32.gmra.mxu0 %v7786
        %v7927 = vpop.f32.mrf.mxu0
        %v7928 = vadd.f32 0.0, %v7927
        %v7929 = vpop.f32.mrf.mxu0
        %v7930 = vadd.f32 0.0, %v7929
        %7931 = vmatprep.mubr.f32.mxu0 %v7792
        %7932 = vmatmul.mubr.f32.gmra.mxu0 %v7790
        %v7933 = vpop.f32.mrf.mxu0
        %v7934 = vadd.f32 0.0, %v7933
        %v7935 = vpop.f32.mrf.mxu0
        %v7936 = vadd.f32 0.0, %v7935
        %7937 = vdwg.mxu0
        %v7938 = vadd.f32 %v7658, %v7880
        %v7939 = vadd.f32 %v7659, %v7882
        %v7940 = vadd.f32 %v7660, %v7886
        %v7941 = vadd.f32 %v7661, %v7888
        %v7942 = vadd.f32 %v7662, %v7892
        %v7943 = vadd.f32 %v7663, %v7894
        %v7944 = vadd.f32 %v7664, %v7898
        %v7945 = vadd.f32 %v7665, %v7900
        %v7946 = vadd.f32 %v7666, %v7904
        %v7947 = vadd.f32 %v7667, %v7906
        %v7948 = vadd.f32 %v7668, %v7910
        %v7949 = vadd.f32 %v7669, %v7912
        %v7950 = vadd.f32 %v7670, %v7916
        %v7951 = vadd.f32 %v7671, %v7918
        %v7952 = vadd.f32 %v7672, %v7922
        %v7953 = vadd.f32 %v7673, %v7924
        %v7954 = vadd.f32 %v7674, %v7928
        %v7955 = vadd.f32 %v7675, %v7930
        %v7956 = vadd.f32 %v7676, %v7934
        %v7957 = vadd.f32 %v7677, %v7936
        %v7958 = vld [vmem:[%s608] sm:$0x3]
        %v7960 = vlaneseq
        %v7961 = vshrl.u32 %v7960, 7
        %v7962 = vsub.s32 0, %v7961
        %v7963 = vrot.slane %v7958, %v7962
        %v7964 = vlaneseq
        %v7965 = vshrl.u32 %v7964, 7
        %v7966 = vsub.s32 1, %v7965
        %v7967 = vrot.slane %v7958, %v7966
        %v7970 = vmul.f32 %v7938, %v7963
        %v7971 = vmul.f32 %v7939, %v7967
        %v7972 = vmul.f32 %v7940, %v7963
        %v7973 = vmul.f32 %v7941, %v7967
        %v7974 = vmul.f32 %v7942, %v7963
        %v7975 = vmul.f32 %v7943, %v7967
        %v7976 = vmul.f32 %v7944, %v7963
        %v7977 = vmul.f32 %v7945, %v7967
        %v7978 = vmul.f32 %v7946, %v7963
        %v7979 = vmul.f32 %v7947, %v7967
        %v7980 = vmul.f32 %v7948, %v7963
        %v7981 = vmul.f32 %v7949, %v7967
        %v7982 = vmul.f32 %v7950, %v7963
        %v7983 = vmul.f32 %v7951, %v7967
        %v7984 = vmul.f32 %v7952, %v7963
        %v7985 = vmul.f32 %v7953, %v7967
        %v7986 = vmul.f32 %v7954, %v7963
        %v7987 = vmul.f32 %v7955, %v7967
        %v7988 = vmul.f32 %v7956, %v7963
        %v7989 = vmul.f32 %v7957, %v7967
        %v7990 = vld [vmem:[%s617] sm:$0x3]
        %v7992 = vlaneseq
        %v7993 = vshrl.u32 %v7992, 7
        %v7994 = vsub.s32 0, %v7993
        %v7995 = vrot.slane %v7990, %v7994
        %v7996 = vlaneseq
        %v7997 = vshrl.u32 %v7996, 7
        %v7998 = vsub.s32 1, %v7997
        %v7999 = vrot.slane %v7990, %v7998
        %v8002 = vadd.f32 %v7970, %v7995
        %v8003 = vadd.f32 %v7971, %v7999
        %v8004 = vadd.f32 %v7972, %v7995
        %v8005 = vadd.f32 %v7973, %v7999
        %v8006 = vadd.f32 %v7974, %v7995
        %v8007 = vadd.f32 %v7975, %v7999
        %v8008 = vadd.f32 %v7976, %v7995
        %v8009 = vadd.f32 %v7977, %v7999
        %v8010 = vadd.f32 %v7978, %v7995
        %v8011 = vadd.f32 %v7979, %v7999
        %v8012 = vadd.f32 %v7980, %v7995
        %v8013 = vadd.f32 %v7981, %v7999
        %v8014 = vadd.f32 %v7982, %v7995
        %v8015 = vadd.f32 %v7983, %v7999
        %v8016 = vadd.f32 %v7984, %v7995
        %v8017 = vadd.f32 %v7985, %v7999
        %v8018 = vadd.f32 %v7986, %v7995
        %v8019 = vadd.f32 %v7987, %v7999
        %v8020 = vadd.f32 %v7988, %v7995
        %v8021 = vadd.f32 %v7989, %v7999
        %v8022 = vmax.f32 %v8002, 0.0
        %v8023 = vmax.f32 %v8003, 0.0
        %v8024 = vmax.f32 %v8004, 0.0
        %v8025 = vmax.f32 %v8005, 0.0
        %v8026 = vmax.f32 %v8006, 0.0
        %v8027 = vmax.f32 %v8007, 0.0
        %v8028 = vmax.f32 %v8008, 0.0
        %v8029 = vmax.f32 %v8009, 0.0
        %v8030 = vmax.f32 %v8010, 0.0
        %v8031 = vmax.f32 %v8011, 0.0
        %v8032 = vmax.f32 %v8012, 0.0
        %v8033 = vmax.f32 %v8013, 0.0
        %v8034 = vmax.f32 %v8014, 0.0
        %v8035 = vmax.f32 %v8015, 0.0
        %v8036 = vmax.f32 %v8016, 0.0
        %v8037 = vmax.f32 %v8017, 0.0
        %v8038 = vmax.f32 %v8018, 0.0
        %v8039 = vmax.f32 %v8019, 0.0
        %v8040 = vmax.f32 %v8020, 0.0
        %v8041 = vmax.f32 %v8021, 0.0
        %v8042 = vsel %vm5353, %v8022, 0.0
        %v8043 = vsel %vm5353, %v8023, 0.0
        %v8044 = vsel %vm5354, %v8024, 0.0
        %v8045 = vsel %vm5354, %v8025, 0.0
        %v8046 = vsel %vm5355, %v8026, 0.0
        %v8047 = vsel %vm5355, %v8027, 0.0
        %v8048 = vsel %vm5356, %v8028, 0.0
        %v8049 = vsel %vm5356, %v8029, 0.0
        %v8050 = vsel %vm5357, %v8030, 0.0
        %v8051 = vsel %vm5357, %v8031, 0.0
        %v8052 = vsel %vm5358, %v8032, 0.0
        %v8053 = vsel %vm5358, %v8033, 0.0
        %v8054 = vsel %vm5359, %v8034, 0.0
        %v8055 = vsel %vm5359, %v8035, 0.0
        %v8056 = vsel %vm5360, %v8036, 0.0
        %v8057 = vsel %vm5360, %v8037, 0.0
        %v8058 = vsel %vm5361, %v8038, 0.0
        %v8059 = vsel %vm5361, %v8039, 0.0
        %v8060 = vsel %vm5362, %v8040, 0.0
        %v8061 = vsel %vm5362, %v8041, 0.0
        %v8062 = vld [vmem:[#allocation2 + $0x20] sm:$0xff]
        %v8063 = vld [vmem:[#allocation2 + $0x28] sm:$0xff]
        %v8064 = vld [vmem:[#allocation2 + $0x30] sm:$0xff]
        %v8065 = vld [vmem:[#allocation2 + $0x38] sm:$0xff]
        %v8066 = vld [vmem:[#allocation2 + $0x40] sm:$0xff]
        %v8067 = vld [vmem:[#allocation2 + $0x48] sm:$0xff]
        %v8068 = vld [vmem:[#allocation2 + $0x50] sm:$0xff]
        %v8069 = vld [vmem:[#allocation2 + $0x58] sm:$0xff]
        %v8070 = vld [vmem:[#allocation2 + $0x60] sm:$0xff]
        %v8071 = vld [vmem:[#allocation2 + $0x68] sm:$0xff]
        %v8072 = vld [vmem:[#allocation2 + $0x70] sm:$0xff]
        %v8073 = vld [vmem:[#allocation2 + $0x78] sm:$0xff]
        %v8074 = vld [vmem:[#allocation2 + $0x80] sm:$0xff]
        %v8075 = vld [vmem:[#allocation2 + $0x88] sm:$0xff]
        %v8076 = vld [vmem:[#allocation2 + $0x90] sm:$0xff]
        %v8077 = vld [vmem:[#allocation2 + $0x98] sm:$0xff]
        %v8078 = vld [vmem:[#allocation2 + $0xa0] sm:$0xff]
        %v8079 = vld [vmem:[#allocation2 + $0xa8] sm:$0xff]
        %v8080 = vld [vmem:[#allocation2 + $0xb0] sm:$0xff]
        %v8081 = vld [vmem:[#allocation2 + $0xb8] sm:$0xff]
        %v8082 = vadd.f32 %v8042, %v8062
        %v8083 = vadd.f32 %v8043, %v8063
        %v8084 = vadd.f32 %v8044, %v8064
        %v8085 = vadd.f32 %v8045, %v8065
        %v8086 = vadd.f32 %v8046, %v8066
        %v8087 = vadd.f32 %v8047, %v8067
        %v8088 = vadd.f32 %v8048, %v8068
        %v8089 = vadd.f32 %v8049, %v8069
        %v8090 = vadd.f32 %v8050, %v8070
        %v8091 = vadd.f32 %v8051, %v8071
        %v8092 = vadd.f32 %v8052, %v8072
        %v8093 = vadd.f32 %v8053, %v8073
        %v8094 = vadd.f32 %v8054, %v8074
        %v8095 = vadd.f32 %v8055, %v8075
        %v8096 = vadd.f32 %v8056, %v8076
        %v8097 = vadd.f32 %v8057, %v8077
        %v8098 = vadd.f32 %v8058, %v8078
        %v8099 = vadd.f32 %v8059, %v8079
        %v8100 = vadd.f32 %v8060, %v8080
        %v8101 = vadd.f32 %v8061, %v8081
        %v8102 = vmax.f32 %v8082, 0.0
        %v8103 = vmax.f32 %v8083, 0.0
        %v8104 = vmax.f32 %v8084, 0.0
        %v8105 = vmax.f32 %v8085, 0.0
        %v8106 = vmax.f32 %v8086, 0.0
        %v8107 = vmax.f32 %v8087, 0.0
        %v8108 = vmax.f32 %v8088, 0.0
        %v8109 = vmax.f32 %v8089, 0.0
        %v8110 = vmax.f32 %v8090, 0.0
        %v8111 = vmax.f32 %v8091, 0.0
        %v8112 = vmax.f32 %v8092, 0.0
        %v8113 = vmax.f32 %v8093, 0.0
        %v8114 = vmax.f32 %v8094, 0.0
        %v8115 = vmax.f32 %v8095, 0.0
        %v8116 = vmax.f32 %v8096, 0.0
        %v8117 = vmax.f32 %v8097, 0.0
        %v8118 = vmax.f32 %v8098, 0.0
        %v8119 = vmax.f32 %v8099, 0.0
        %v8120 = vmax.f32 %v8100, 0.0
        %v8121 = vmax.f32 %v8101, 0.0
        %8122 = vst [vmem:[#allocation2 + $0x20] sm:$0xff] %v8102
        %8123 = vst [vmem:[#allocation2 + $0x28] sm:$0xff] %v8103
        %8124 = vst [vmem:[#allocation2 + $0x30] sm:$0xff] %v8104
        %8125 = vst [vmem:[#allocation2 + $0x38] sm:$0xff] %v8105
        %8126 = vst [vmem:[#allocation2 + $0x40] sm:$0xff] %v8106
        %8127 = vst [vmem:[#allocation2 + $0x48] sm:$0xff] %v8107
        %8128 = vst [vmem:[#allocation2 + $0x50] sm:$0xff] %v8108
        %8129 = vst [vmem:[#allocation2 + $0x58] sm:$0xff] %v8109
        %8130 = vst [vmem:[#allocation2 + $0x60] sm:$0xff] %v8110
        %8131 = vst [vmem:[#allocation2 + $0x68] sm:$0xff] %v8111
        %8132 = vst [vmem:[#allocation2 + $0x70] sm:$0xff] %v8112
        %8133 = vst [vmem:[#allocation2 + $0x78] sm:$0xff] %v8113
        %8134 = vst [vmem:[#allocation2 + $0x80] sm:$0xff] %v8114
        %8135 = vst [vmem:[#allocation2 + $0x88] sm:$0xff] %v8115
        %8136 = vst [vmem:[#allocation2 + $0x90] sm:$0xff] %v8116
        %8137 = vst [vmem:[#allocation2 + $0x98] sm:$0xff] %v8117
        %8138 = vst [vmem:[#allocation2 + $0xa0] sm:$0xff] %v8118
        %8139 = vst [vmem:[#allocation2 + $0xa8] sm:$0xff] %v8119
        %8140 = vst [vmem:[#allocation2 + $0xb0] sm:$0xff] %v8120
        %8141 = vst [vmem:[#allocation2 + $0xb8] sm:$0xff] %v8121
        %p8142 = scmp.eq.s32.totalorder %s40, 1
        // Predicated region
        $region113: #{residual_tower.1} parent=67 // pred_check
          %p8143 = pneg %p8142
        $region114: #{residual_tower.1} parent=67 // pred_check_branch
          %8145 = sbr.rel (%p8143) target = $region116
        $region115: #{residual_tower.1} parent=67 // pred_region
          %v8146 = vld [vmem:[%s10] sm:$0xff]
          %v8147 = vld [vmem:[%s10 + $0x8] sm:$0xff]
          %v8148 = vld [vmem:[%s10 + $0x10] sm:$0xff]
          %v8149 = vld [vmem:[%s10 + $0x18] sm:$0xff]
          %v8150 = vld [vmem:[%s10 + $0x20] sm:$0xff]
          %v8151 = vld [vmem:[%s10 + $0x28] sm:$0xff]
          %v8152 = vld [vmem:[%s10 + $0x30] sm:$0xff]
          %v8153 = vld [vmem:[%s10 + $0x38] sm:$0xff]
          %v8154 = vld [vmem:[%s10 + $0x40] sm:$0xff]
          %v8155 = vld [vmem:[%s10 + $0x48] sm:$0xff]
          %v8156 = vld [vmem:[%s10 + $0x50] sm:$0xff]
          %v8157 = vld [vmem:[%s10 + $0x58] sm:$0xff]
          %v8158 = vld [vmem:[%s10 + $0x60] sm:$0xff]
          %v8159 = vld [vmem:[%s10 + $0x68] sm:$0xff]
          %v8160 = vld [vmem:[%s10 + $0x70] sm:$0xff]
          %v8161 = vld [vmem:[%s10 + $0x78] sm:$0xff]
          %v8162 = vld [vmem:[%s10 + $0x80] sm:$0xff]
          %v8163 = vld [vmem:[%s10 + $0x88] sm:$0xff]
          %v8164 = vld [vmem:[%s10 + $0x90] sm:$0xff]
          %v8165 = vld [vmem:[%s10 + $0x98] sm:$0xff]
          %v8166 = vld [vmem:[%s10 + $0xa0] sm:$0xff]
          %v8167 = vld [vmem:[%s10 + $0xa8] sm:$0xff]
          %v8168 = vld [vmem:[%s10 + $0xb0] sm:$0xff]
          %v8169 = vld [vmem:[%s10 + $0xb8] sm:$0xff]
          %v8170 = vld [vmem:[%s10 + $0xc0] sm:$0xff]
          %v8171 = vld [vmem:[%s10 + $0xc8] sm:$0xff]
          %v8172 = vld [vmem:[%s10 + $0xd0] sm:$0xff]
          %v8173 = vld [vmem:[%s10 + $0xd8] sm:$0xff]
          %v8174 = vld [vmem:[%s10 + $0xe0] sm:$0xff]
          %v8175 = vld [vmem:[%s10 + $0xe8] sm:$0xff]
          %v8176 = vld [vmem:[%s10 + $0xf0] sm:$0xff]
          %v8177 = vld [vmem:[%s10 + $0xf8] sm:$0xff]
          %v8178 = vld [vmem:[#allocation18] sm:$0x1]
          %v8180 = vlaneseq
          %v8181 = vshrl.u32 %v8180, 7
          %v8182 = vsub.s32 0, %v8181
          %v8183 = vrot.slane %v8178, %v8182
          %8185 = vmatprep.subr.mxu0 0.0
          %8186 = vmatpush1.msra.mxu0 %v8161
          %8187 = vmatprep.subr.mxu0 0.0
          %8188 = vmatpush1.msra.mxu0 %v8160
          %8189 = vmatprep.subr.mxu0 0.0
          %8190 = vmatpush1.msra.mxu0 %v8159
          %8191 = vmatprep.subr.mxu0 0.0
          %8192 = vmatpush1.msra.mxu0 %v8158
          %8193 = vmatprep.subr.mxu0 0.0
          %8194 = vmatpush1.msra.mxu0 %v8157
          %8195 = vmatprep.subr.mxu0 0.0
          %8196 = vmatpush1.msra.mxu0 %v8156
          %8197 = vmatprep.subr.mxu0 0.0
          %8198 = vmatpush1.msra.mxu0 %v8155
          %8199 = vmatprep.subr.mxu0 0.0
          %8200 = vmatpush1.msra.mxu0 %v8154
          %8201 = vmatprep.subr.mxu0 0.0
          %8202 = vmatpush1.msra.mxu0 %v8153
          %8203 = vmatprep.subr.mxu0 0.0
          %8204 = vmatpush1.msra.mxu0 %v8152
          %8205 = vmatprep.subr.mxu0 0.0
          %8206 = vmatpush1.msra.mxu0 %v8151
          %8207 = vmatprep.subr.mxu0 0.0
          %8208 = vmatpush1.msra.mxu0 %v8150
          %8209 = vmatprep.subr.mxu0 0.0
          %8210 = vmatpush1.msra.mxu0 %v8149
          %8211 = vmatprep.subr.mxu0 0.0
          %8212 = vmatpush1.msra.mxu0 %v8148
          %8213 = vmatprep.subr.mxu0 0.0
          %8214 = vmatpush1.msra.mxu0 %v8147
          %8215 = vmatprep.subr.mxu0 0.0
          %8216 = vmatpush1.msra.mxu0 %v8146
          %8217 = vmatprep.subr.mxu0 0.0
          %8218 = vmatpush2.msra.mxu0 %v8177
          %8219 = vmatprep.subr.mxu0 0.0
          %8220 = vmatpush2.msra.mxu0 %v8176
          %8221 = vmatprep.subr.mxu0 0.0
          %8222 = vmatpush2.msra.mxu0 %v8175
          %8223 = vmatprep.subr.mxu0 0.0
          %8224 = vmatpush2.msra.mxu0 %v8174
          %8225 = vmatprep.subr.mxu0 0.0
          %8226 = vmatpush2.msra.mxu0 %v8173
          %8227 = vmatprep.subr.mxu0 0.0
          %8228 = vmatpush2.msra.mxu0 %v8172
          %8229 = vmatprep.subr.mxu0 0.0
          %8230 = vmatpush2.msra.mxu0 %v8171
          %8231 = vmatprep.subr.mxu0 0.0
          %8232 = vmatpush2.msra.mxu0 %v8170
          %8233 = vmatprep.subr.mxu0 0.0
          %8234 = vmatpush2.msra.mxu0 %v8169
          %8235 = vmatprep.subr.mxu0 0.0
          %8236 = vmatpush2.msra.mxu0 %v8168
          %8237 = vmatprep.subr.mxu0 0.0
          %8238 = vmatpush2.msra.mxu0 %v8167
          %8239 = vmatprep.subr.mxu0 0.0
          %8240 = vmatpush2.msra.mxu0 %v8166
          %8241 = vmatprep.subr.mxu0 0.0
          %8242 = vmatpush2.msra.mxu0 %v8165
          %8243 = vmatprep.subr.mxu0 0.0
          %8244 = vmatpush2.msra.mxu0 %v8164
          %8245 = vmatprep.subr.mxu0 0.0
          %8246 = vmatpush2.msra.mxu0 %v8163
          %8247 = vmatprep.subr.mxu0 0.0
          %8248 = vmatpush2.msra.mxu0 %v8162
          %8249 = vmatprep.mubr.f32.mxu0 %v8103
          %8250 = vmatmul.mubr.f32.gmra.mxu0 %v8102
          %v8251 = vpop.f32.mrf.mxu0
          %v8252 = vadd.f32 %v8183, %v8251
          %v8253 = vpop.f32.mrf.mxu0
          %8254 = vmatprep.mubr.f32.mxu0 %v8105
          %8255 = vmatmul.mubr.f32.gmra.mxu0 %v8104
          %v8256 = vpop.f32.mrf.mxu0
          %v8257 = vadd.f32 %v8183, %v8256
          %v8258 = vpop.f32.mrf.mxu0
          %8259 = vmatprep.mubr.f32.mxu0 %v8107
          %8260 = vmatmul.mubr.f32.gmra.mxu0 %v8106
          %v8261 = vpop.f32.mrf.mxu0
          %v8262 = vadd.f32 %v8183, %v8261
          %v8263 = vpop.f32.mrf.mxu0
          %8264 = vmatprep.mubr.f32.mxu0 %v8109
          %8265 = vmatmul.mubr.f32.gmra.mxu0 %v8108
          %v8266 = vpop.f32.mrf.mxu0
          %v8267 = vadd.f32 %v8183, %v8266
          %v8268 = vpop.f32.mrf.mxu0
          %8269 = vmatprep.mubr.f32.mxu0 %v8111
          %8270 = vmatmul.mubr.f32.gmra.mxu0 %v8110
          %v8271 = vpop.f32.mrf.mxu0
          %v8272 = vadd.f32 %v8183, %v8271
          %v8273 = vpop.f32.mrf.mxu0
          %8274 = vmatprep.mubr.f32.mxu0 %v8113
          %8275 = vmatmul.mubr.f32.gmra.mxu0 %v8112
          %v8276 = vpop.f32.mrf.mxu0
          %v8277 = vadd.f32 %v8183, %v8276
          %v8278 = vpop.f32.mrf.mxu0
          %8279 = vmatprep.mubr.f32.mxu0 %v8115
          %8280 = vmatmul.mubr.f32.gmra.mxu0 %v8114
          %v8281 = vpop.f32.mrf.mxu0
          %v8282 = vadd.f32 %v8183, %v8281
          %v8283 = vpop.f32.mrf.mxu0
          %8284 = vmatprep.mubr.f32.mxu0 %v8117
          %8285 = vmatmul.mubr.f32.gmra.mxu0 %v8116
          %v8286 = vpop.f32.mrf.mxu0
          %v8287 = vadd.f32 %v8183, %v8286
          %v8288 = vpop.f32.mrf.mxu0
          %8289 = vmatprep.mubr.f32.mxu0 %v8119
          %8290 = vmatmul.mubr.f32.gmra.mxu0 %v8118
          %v8291 = vpop.f32.mrf.mxu0
          %v8292 = vadd.f32 %v8183, %v8291
          %v8293 = vpop.f32.mrf.mxu0
          %8294 = vmatprep.mubr.f32.mxu0 %v8121
          %8295 = vmatmul.mubr.f32.gmra.mxu0 %v8120
          %v8296 = vpop.f32.mrf.mxu0
          %v8297 = vadd.f32 %v8183, %v8296
          %v8298 = vpop.f32.mrf.mxu0
          %8299 = vdwg.mxu0
          %vm8300 = vcmask 31744
          %8301 = vst.msk [vmem:[%s701] sm:$0xff] %vm8300, %v8252
          %8302 = vst.msk [vmem:[%s701 + $0x8] sm:$0xff] %vm8300, %v8257
          %8303 = vst.msk [vmem:[%s701 + $0x10] sm:$0xff] %vm8300, %v8262
          %8304 = vst.msk [vmem:[%s701 + $0x18] sm:$0xff] %vm8300, %v8267
          %8305 = vst.msk [vmem:[%s701 + $0x20] sm:$0xff] %vm8300, %v8272
          %8306 = vst.msk [vmem:[%s701 + $0x28] sm:$0xff] %vm8300, %v8277
          %8307 = vst.msk [vmem:[%s701 + $0x30] sm:$0xff] %vm8300, %v8282
          %8308 = vst.msk [vmem:[%s701 + $0x38] sm:$0xff] %vm8300, %v8287
          %8309 = vst.msk [vmem:[%s701 + $0x40] sm:$0xff] %vm8300, %v8292
          %8310 = vst.msk [vmem:[%s701 + $0x48] sm:$0xff] %vm8300, %v8297
        $region116: #{residual_tower.1} parent=67 // pred_fallthru
          _
        %p8311 = scmp.lt.s32.totalorder %s39, 1
        %s8312 = scalar_select %p8311, %s39, 1
        %s8313 = smul.addr %s8312, 10
        %s8314 = smul.addr %s8313, 8
        %s8315 = scalar_lea.vmem %s12, %s8314
        // Predicated region
        $region117: #{residual_tower.1} parent=67 // pred_check
          %p8316 = pneg %p352
        $region118: #{residual_tower.1} parent=67 // pred_check_branch
          %8318 = sbr.rel (%p8316) target = $region120
        $region119: #{residual_tower.1} parent=67 // pred_region
          _
        $region120: #{residual_tower.1} parent=67 // pred_fallthru
          _
      $region68: #{residual_tower.1} parent=5 // pred_fallthru
        _
      %p8319 = scmp.le.s32.totalorder 2, %s30
      // Predicated region
      $region121: #{residual_tower.1} parent=5 // pred_check
        %p8320 = pneg %p8319
      $region122: #{residual_tower.1} parent=5 // pred_check_branch
        %8322 = sbr.rel (%p8320) target = $region124
      $region123: #{residual_tower.1} parent=5 // pred_region
        %s8323 = ssub.s32 %s30, 2
        // Predicated region
        $region125: #{residual_tower.1} parent=123 // pred_check
          %p8324 = pneg %p358
        $region126: #{residual_tower.1} parent=123 // pred_check_branch
          %8326 = sbr.rel (%p8324) target = $region128
        $region127: #{residual_tower.1} parent=123 // pred_region
          %p8327 = scmp.lt.s32.totalorder %s41, 1
          %s8328 = scalar_select %p8327, %s41, 1
          %s8329 = smul.addr %s8328, 10
          %s8330 = smul.addr %s8329, 8
          %s8331 = scalar_lea.vmem %s12, %s8330
        $region128: #{residual_tower.1} parent=123 // pred_fallthru
          _
      $region124: #{residual_tower.1} parent=5 // pred_fallthru
        _
    $region6: #{residual_tower.1} parent=1 // loop_footer
      %s34 = sadd.s32 1, %s30
    $region7: #{residual_tower.1} parent=1 // loop_footer_branch
      %29 = sbr.rel target = $region3
    $region8: #{residual_tower.1} parent=1 // loop_exit
      _
    %8332 = vsyncpa [#allocation5], 1
    %s8333 = scalar_lea.sflag [#allocation5], 1
    %8334 = vsyncpa %s8333, 1
    %8335 = vsyncpa [#allocation7], 1
    %8336 = vsyncpa [#allocation10], 1
    %s8337 = scalar_lea.sflag [#allocation10], 1
    %8338 = vsyncpa %s8337, 1
    %8339 = vsyncpa [#allocation13], 1
    %s8340 = scalar_lea.sflag [#allocation13], 1
    %8341 = vsyncpa %s8340, 1
    %8342 = vsyncpa [#allocation16], 1
    %s8343 = scalar_lea.sflag [#allocation16], 1
    %8344 = vsyncpa %s8343, 1
    %8345 = vsyncpa [#allocation19], 1

</llo_original>
